<compile_context>
chip_gen: v5e
topology: v5e:2x2
jax: 0.10.0
libtpu: 0.0.40
codegen_flags: <defaults>
</compile_context>

<pallas_src>
import functools
import math
from decimal import Decimal, getcontext

import numpy as np
import jax
import jax.numpy as jnp
from jax import lax
from jax.experimental import pallas as pl
from jax.experimental.pallas import tpu as pltpu

_BN_EPS = 1e-5


def _pad128(n):
    return ((int(n) + 127) // 128) * 128


def _const_spec(shape):
    origin = (0,) * len(shape)
    return pl.BlockSpec(tuple(shape), lambda b: origin)


# --------------------------------------------------------------------------- fused kernel

def _fused_forward_kernel(*refs, n_conv, n_flat, n_out, flat_bn, out_bn):
    pos = [0]

    def nxt():
        r = refs[pos[0]]
        pos[0] += 1
        return r

    x_ref = nxt()
    conv_layers = [tuple(nxt() for _ in range(5)) for _ in range(n_conv)]   # G, W, b, gamma, beta
    flat_layers = [tuple(nxt() for _ in range(4)) for _ in range(n_flat)]   # gamma, beta, W, b
    w_ih_ref, w_hh_ref, b_ih_ref, b_hh_ref, h0_ref = (nxt() for _ in range(5))
    out_layers = [tuple(nxt() for _ in range(4)) for _ in range(n_out)]     # gamma, beta, W, b
    out_ref = nxt()
    hid_ref = nxt()

    def _bn_train(v, gamma, beta, count):
        # training-mode BatchNorm: biased variance, one pass (sum & sum-of-squares)
        inv = 1.0 / count
        mean = jnp.sum(v, axis=0, keepdims=True) * inv
        ex2 = jnp.sum(v * v, axis=0, keepdims=True) * inv
        var = jnp.maximum(ex2 - mean * mean, 0.0)
        return (v - mean) * (gamma * lax.rsqrt(var + _BN_EPS)) + beta

    # ---- conv stack: [BN2d -> Conv2d -> ReLU] x n_conv, all in VMEM ----
    # activation slab: rows = (h * W + w) * seq + s, lanes = channels (padded to 128)
    act = x_ref[...]
    for g_ref, w_ref, b_ref, gm_ref, bt_ref in conv_layers:
        act = _bn_train(act, gm_ref[...], bt_ref[...], act.shape[0])
        kk, n_out_rows, _ = g_ref.shape
        c_out_p = w_ref.shape[2]
        acc = jnp.zeros((n_out_rows, c_out_p), jnp.float32)
        for o in range(kk):   # static unroll over kernel offsets: row-select matmul + weight matmul
            rows = jnp.dot(g_ref[o], act, preferred_element_type=jnp.float32)
            acc = acc + jnp.dot(rows, w_ref[o], preferred_element_type=jnp.float32)
        act = jnp.maximum(acc + b_ref[...], 0.0)
    # last conv layer collapses spatial dims to 1x1 -> act is (seq, conv_out_pad)

    def _linear_stack(v, layers, bn_flags):
        # SpecificLinearToLinearModule.forward, training mode
        for i, (gm_ref, bt_ref, w_ref, b_ref) in enumerate(layers):
            if i != 0:
                v = jnp.maximum(v, 0.0)
            if bn_flags[i]:
                v = _bn_train(v, gm_ref[...], bt_ref[...], v.shape[0])
            v = jnp.dot(v, w_ref[...], preferred_element_type=jnp.float32) + b_ref[...]
        return v

    z = _linear_stack(act, flat_layers, flat_bn)          # (seq, rnn_in_pad)

    # ---- RNN (tanh): hoist x-projection off the serial chain, unroll the recurrence ----
    pre = (jnp.dot(z, w_ih_ref[...], preferred_element_type=jnp.float32)
           + b_ih_ref[...] + b_hh_ref[...])
    w_hh = w_hh_ref[...]
    h = h0_ref[...]
    for t in range(z.shape[0]):                           # static, short -> unrolled
        h = jnp.tanh(pre[t:t + 1, :]
                     + jnp.dot(h, w_hh, preferred_element_type=jnp.float32))

    # ---- output linear stack (rows == 1 -> training BN1d statically skipped) ----
    out = _linear_stack(h, out_layers, out_bn)

    out_ref[...] = out                                    # lane-dense (1, 128) stores
    hid_ref[...] = h


# --------------------------------------------------------------------------- geometry
# (host-side replication of Conv2dToLinearModule._get_expected_output_sizes / __initialize)

def _expected_outputs_1d(dim_size, layer_total):
    getcontext().prec = 100
    min_c = None
    max_c = Decimal(1.0)
    two = Decimal(2.0)
    found = False
    outs = []
    while not found:
        outs = []
        if layer_total >= dim_size:
            for o in np.linspace(dim_size, 1, layer_total):
                outs.append(int(o))
            found = True
        else:
            prev = dim_size
            cur = max_c if min_c is None else (max_c + min_c) / two
            for li in range(layer_total):
                nxt = math.floor(prev / pow(cur, Decimal(li))) - 1
                outs.append(nxt)
                prev = nxt
            if outs[-1] > 1:
                if min_c is None:
                    max_c *= two
                else:
                    min_c = cur
            elif outs[-1] < 1:
                if min_c is None:
                    min_c = cur / two
                else:
                    max_c = cur
            else:
                found = True
    return outs


def _conv_geometry(input_size, layer_total):
    widths = _expected_outputs_1d(input_size[0], layer_total)
    heights = _expected_outputs_1d(input_size[1], layer_total)
    sizes = list(zip(widths, heights))
    sizes.insert(0, tuple(input_size))
    prev = sizes.pop()
    pairs = []
    for exp in reversed(sizes):
        pw = []
        s = 1
        while True:
            k = exp[0] - s * (prev[0] - 1)
            if k >= s * 2 or (k == 1 and s == 1):
                pw.append((s, k))
                if prev[0] == 1:
                    break
            else:
                break
            s += 1
        ph = []
        s = 1
        while True:
            k = exp[1] - s * (prev[1] - 1)
            if k >= s * 2 or (k == 1 and s == 1):
                ph.append((s, k))
                if prev[1] == 1:
                    break
            else:
                break
            s += 1
        pairs.append((pw[-1], ph[-1]))
        prev = exp
    pairs.reverse()
    return pairs  # per layer: ((stride_w, kernel_w), (stride_h, kernel_h))


def _selection_matrices(hin, win, kh, kw, sh, sw, seq):
    """Constant 0/1 row-selection matrices G_o, one per kernel offset o = i*kw + j.

    Slab row index = (h * W + w) * seq + s; (G_o @ A)[r_out] is the input pixel row
    feeding output row r_out at offset (i, j), so  sum_o G_o @ A @ W_o  is the conv.
    """
    hout = (hin - kh) // sh + 1
    wout = (win - kw) // sw + 1
    nin = hin * win * seq
    nout = hout * wout * seq
    g = np.zeros((kh * kw, nout, nin), np.float32)
    ho = np.arange(hout).reshape(-1, 1, 1)
    wo = np.arange(wout).reshape(1, -1, 1)
    s = np.arange(seq).reshape(1, 1, -1)
    for i in range(kh):
        for j in range(kw):
            out_idx = ((ho * wout + wo) * seq + s).ravel()
            in_idx = (((ho * sh + i) * win + (wo * sw + j)) * seq + s).ravel()
            g[i * kw + j, out_idx, in_idx] = 1.0
    return jnp.asarray(g), hout, wout


# --------------------------------------------------------------------------- parameters

def _uniform(key, shape, fan_in):
    bound = 1.0 / math.sqrt(fan_in)
    return jax.random.uniform(key, shape, jnp.float32, minval=-bound, maxval=bound)


def init_params(key, *, input_size, channels_total, input_to_flat_layers_total,
                flat_to_recurrent_lengths, recurrent_hidden_length,
                recurrent_to_output_lengths):
    if recurrent_hidden_length != recurrent_to_output_lengths[0]:
        raise ValueError("recurrent_hidden_length must equal recurrent_to_output_lengths[0]")

    pairs = _conv_geometry(input_size, input_to_flat_layers_total)
    channels = [int(c) for c in np.linspace(channels_total, flat_to_recurrent_lengths[0],
                                            num=input_to_flat_layers_total + 1)]

    conv_layers = []
    for li in range(input_to_flat_layers_total):
        cin, cout = channels[li], channels[li + 1]
        # Reference quirk kept: kernel/stride tuples are (width-derived, height-derived)
        # but torch.nn.Conv2d applies them to (H, W).  Exact match for square inputs.
        kh, kw = pairs[li][0][1], pairs[li][1][1]
        sh, sw = pairs[li][0][0], pairs[li][1][0]
        cinp, coutp = _pad128(cin), _pad128(cout)
        key, k1, k2 = jax.random.split(key, 3)
        fan_in = cin * kh * kw
        w_torch = _uniform(k1, (cout, cin, kh, kw), fan_in)        # PyTorch Conv2d layout
        w_hwio = jnp.transpose(w_torch, (2, 3, 1, 0)).reshape(kh * kw, cin, cout)
        w_blocks = jnp.zeros((kh * kw, cinp, coutp), jnp.float32).at[:, :cin, :cout].set(w_hwio)
        b = jnp.zeros((1, coutp), jnp.float32).at[:, :cout].set(_uniform(k2, (1, cout), fan_in))
        gamma = jnp.zeros((1, cinp), jnp.float32).at[:, :cin].set(1.0)
        beta = jnp.zeros((1, cinp), jnp.float32)
        conv_layers.append(dict(kh=kh, kw=kw, sh=sh, sw=sw, cin=cin, cout=cout,
                                cinp=cinp, coutp=coutp, w_blocks=w_blocks, b=b,
                                gamma=gamma, beta=beta))

    def _linear_stack(key, sizes):
        layers = []
        for i in range(len(sizes) - 1):
            fin, fout = int(sizes[i]), int(sizes[i + 1])
            finp, foutp = _pad128(fin), _pad128(fout)
            key, k1, k2 = jax.random.split(key, 3)
            w = jnp.zeros((finp, foutp), jnp.float32).at[:fin, :fout].set(
                _uniform(k1, (fout, fin), fin).T)
            b = jnp.zeros((1, foutp), jnp.float32).at[:, :fout].set(_uniform(k2, (1, fout), fin))
            gamma = jnp.zeros((1, finp), jnp.float32).at[:, :fin].set(1.0)
            beta = jnp.zeros((1, finp), jnp.float32)
            layers.append(dict(fin=fin, fout=fout, finp=finp, foutp=foutp,
                               w=w, b=b, gamma=gamma, beta=beta))
        return key, layers

    key, flat_layers = _linear_stack(key, flat_to_recurrent_lengths)
    key, out_layers = _linear_stack(key, recurrent_to_output_lengths)

    rnn_in = int(flat_to_recurrent_lengths[-1])
    hid = int(recurrent_hidden_length)
    rinp, hp = _pad128(rnn_in), _pad128(hid)
    key, k1, k2, k3, k4 = jax.random.split(key, 5)
    rnn = dict(
        w_ih=jnp.zeros((rinp, hp), jnp.float32).at[:rnn_in, :hid].set(
            _uniform(k1, (hid, rnn_in), hid).T),
        w_hh=jnp.zeros((hp, hp), jnp.float32).at[:hid, :hid].set(
            _uniform(k2, (hid, hid), hid).T),
        b_ih=jnp.zeros((1, hp), jnp.float32).at[:, :hid].set(_uniform(k3, (1, hid), hid)),
        b_hh=jnp.zeros((1, hp), jnp.float32).at[:, :hid].set(_uniform(k4, (1, hid), hid)),
    )

    return dict(conv_layers=conv_layers, flat_layers=flat_layers, out_layers=out_layers,
                rnn=rnn, hidden=hid, hidden_pad=hp, channels_total=int(channels_total))


# --------------------------------------------------------------------------- forward

def forward(params, module_input, hidden_input=None):
    """module_input: (batch, seq, channels, height, width) float32, training-mode forward.

    Reference quirks kept: a provided hidden_input is shared by every outer-batch element,
    and the geometry's width/height swap matches PyTorch exactly only for square inputs.
    """
    x = jnp.asarray(module_input, jnp.float32)
    batch, seq, chans, height, width = x.shape
    conv_layers = params["conv_layers"]
    c0p = conv_layers[0]["cinp"]

    # Host-side layout plumbing only: channels-last slab, rows ordered (h, w, s), lanes -> 128.
    slab = jnp.transpose(x, (0, 3, 4, 1, 2)).reshape(batch, height * width * seq, chans)
    x0 = jnp.zeros((batch, height * width * seq, c0p), jnp.float32).at[:, :, :chans].set(slab)

    # Constant per-layer offset-selection matrices (depend on spatial geometry and seq).
    g_mats = []
    hin, win = height, width
    for layer in conv_layers:
        g, hin, win = _selection_matrices(hin, win, layer["kh"], layer["kw"],
                                          layer["sh"], layer["sw"], seq)
        g_mats.append(g)
    assert hin == 1 and win == 1, "conv stack must collapse spatial dims to 1x1"

    hp = params["hidden_pad"]
    if hidden_input is None:
        h0 = jnp.zeros((1, hp), jnp.float32)    # allocated once, shared across batch (ref. semantics)
    else:
        hi = jnp.asarray(hidden_input, jnp.float32).reshape(1, -1)
        h0 = jnp.zeros((1, hp), jnp.float32).at[:, :hi.shape[1]].set(hi)

    n0 = height * width * seq
    inputs = [x0]
    in_specs = [pl.BlockSpec((None, n0, c0p), lambda b: (b, 0, 0))]

    def _add_const(arr):
        inputs.append(arr)
        in_specs.append(_const_spec(arr.shape))

    for layer, g in zip(conv_layers, g_mats):
        for arr in (g, layer["w_blocks"], layer["b"], layer["gamma"], layer["beta"]):
            _add_const(arr)
    for layer in params["flat_layers"]:
        for arr in (layer["gamma"], layer["beta"], layer["w"], layer["b"]):
            _add_const(arr)
    rnn = params["rnn"]
    for arr in (rnn["w_ih"], rnn["w_hh"], rnn["b_ih"], rnn["b_hh"], h0):
        _add_const(arr)
    for layer in params["out_layers"]:
        for arr in (layer["gamma"], layer["beta"], layer["w"], layer["b"]):
            _add_const(arr)

    out_dim = params["out_layers"][-1]["fout"]
    outp = params["out_layers"][-1]["foutp"]
    hidden = params["hidden"]

    kernel = functools.partial(
        _fused_forward_kernel,
        n_conv=len(conv_layers),
        n_flat=len(params["flat_layers"]),
        n_out=len(params["out_layers"]),
        flat_bn=tuple(seq != 1 for _ in params["flat_layers"]),   # training BN1d gate (rows != 1)
        out_bn=tuple(False for _ in params["out_layers"]),        # rows == 1 -> skipped
    )

    out_pad, hid_pad = pl.pallas_call(
        kernel,
        out_shape=(jax.ShapeDtypeStruct((batch, 1, outp), jnp.float32),
                   jax.ShapeDtypeStruct((batch, 1, hp), jnp.float32)),
        grid_spec=pltpu.PrefetchScalarGridSpec(
            num_scalar_prefetch=0,
            grid=(batch,),
            in_specs=in_specs,
            out_specs=(pl.BlockSpec((None, 1, outp), lambda b: (b, 0, 0)),
                       pl.BlockSpec((None, 1, hp), lambda b: (b, 0, 0))),
        ),
        compiler_params=pltpu.CompilerParams(
            dimension_semantics=("parallel",),        # v7x: split batch across both TensorCores
            vmem_limit_bytes=48 * 1024 * 1024,        # sized under v7x's 64 MiB VMEM
        ),
    )(*inputs)

    out = out_pad[:, :, :out_dim]
    hid = hid_pad[:, :, :hidden]
    if batch == 1:                                    # torch .squeeze(dim=0)
        out, hid = out[0], hid[0]
    return out, hid


# --------------------------------------------------------------------------- demo

if __name__ == "__main__":
    input_size = (8, 8)              # square, so the reference's width/height quirk is moot
    channels_total = 2
    input_to_flat_layers_total = 2
    flat_to_recurrent_lengths = [16, 12]
    recurrent_hidden_length = 24
    recurrent_to_output_lengths = [24, 10]
    batch, seq = 1, 4                # reference nn.RNN path requires outer batch == 1

    key = jax.random.PRNGKey(0)
    pkey, xkey = jax.random.split(key)
    params = init_params(
        pkey,
        input_size=input_size,
        channels_total=channels_total,
        input_to_flat_layers_total=input_to_flat_layers_total,
        flat_to_recurrent_lengths=flat_to_recurrent_lengths,
        recurrent_hidden_length=recurrent_hidden_length,
        recurrent_to_output_lengths=recurrent_to_output_lengths,
    )

    x = jax.random.normal(
        xkey, (batch, seq, channels_total, input_size[1], input_size[0]), jnp.float32)

    out, hidden = forward(params, x)
    out = jax.block_until_ready(out)
    hidden = jax.block_until_ready(hidden)

    assert out.shape == (1, recurrent_to_output_lengths[-1]), out.shape
    assert hidden.shape == (1, recurrent_hidden_length), hidden.shape
    assert bool(jnp.all(jnp.isfinite(out))) and bool(jnp.all(jnp.isfinite(hidden)))
    print("KERNEL_OK")
</pallas_src>

<mosaic_0001>
module attributes {stable_mosaic.version = 11 : i64} {
  func.func @_fused_forward_kernel(%arg0: i32, %arg1: memref<1x256x128xf32, #tpu.memory_space<vmem>>, %arg2: memref<4x196x256xf32, #tpu.memory_space<vmem>>, %arg3: memref<4x128x128xf32, #tpu.memory_space<vmem>>, %arg4: memref<1x128xf32, #tpu.memory_space<vmem>>, %arg5: memref<1x128xf32, #tpu.memory_space<vmem>>, %arg6: memref<1x128xf32, #tpu.memory_space<vmem>>, %arg7: memref<49x4x196xf32, #tpu.memory_space<vmem>>, %arg8: memref<49x128x128xf32, #tpu.memory_space<vmem>>, %arg9: memref<1x128xf32, #tpu.memory_space<vmem>>, %arg10: memref<1x128xf32, #tpu.memory_space<vmem>>, %arg11: memref<1x128xf32, #tpu.memory_space<vmem>>, %arg12: memref<1x128xf32, #tpu.memory_space<vmem>>, %arg13: memref<1x128xf32, #tpu.memory_space<vmem>>, %arg14: memref<128x128xf32, #tpu.memory_space<vmem>>, %arg15: memref<1x128xf32, #tpu.memory_space<vmem>>, %arg16: memref<128x128xf32, #tpu.memory_space<vmem>>, %arg17: memref<128x128xf32, #tpu.memory_space<vmem>>, %arg18: memref<1x128xf32, #tpu.memory_space<vmem>>, %arg19: memref<1x128xf32, #tpu.memory_space<vmem>>, %arg20: memref<1x128xf32, #tpu.memory_space<vmem>>, %arg21: memref<1x128xf32, #tpu.memory_space<vmem>>, %arg22: memref<1x128xf32, #tpu.memory_space<vmem>>, %arg23: memref<128x128xf32, #tpu.memory_space<vmem>>, %arg24: memref<1x128xf32, #tpu.memory_space<vmem>>, %arg25: memref<1x1x128xf32, #tpu.memory_space<vmem>>, %arg26: memref<1x1x128xf32, #tpu.memory_space<vmem>>) attributes {dimension_semantics = [#tpu.dimension_semantics<parallel>], iteration_bounds = array<i64: 1>, scalar_prefetch = 0 : i64, scratch_operands = 0 : i64, tpu.core_type = #tpu.core_type<tc>, window_params = [{transform_indices = @transform_0, window_bounds = array<i64: 1, 256, 128>}, {pipeline_mode = #tpu.pipeline_mode<synchronous>, transform_indices = @transform_1, window_bounds = array<i64: 4, 196, 256>}, {pipeline_mode = #tpu.pipeline_mode<synchronous>, transform_indices = @transform_2, window_bounds = array<i64: 4, 128, 128>}, {pipeline_mode = #tpu.pipeline_mode<synchronous>, transform_indices = @transform_3, window_bounds = array<i64: 1, 128>}, {pipeline_mode = #tpu.pipeline_mode<synchronous>, transform_indices = @transform_4, window_bounds = array<i64: 1, 128>}, {pipeline_mode = #tpu.pipeline_mode<synchronous>, transform_indices = @transform_5, window_bounds = array<i64: 1, 128>}, {pipeline_mode = #tpu.pipeline_mode<synchronous>, transform_indices = @transform_6, window_bounds = array<i64: 49, 4, 196>}, {pipeline_mode = #tpu.pipeline_mode<synchronous>, transform_indices = @transform_7, window_bounds = array<i64: 49, 128, 128>}, {pipeline_mode = #tpu.pipeline_mode<synchronous>, transform_indices = @transform_8, window_bounds = array<i64: 1, 128>}, {pipeline_mode = #tpu.pipeline_mode<synchronous>, transform_indices = @transform_9, window_bounds = array<i64: 1, 128>}, {pipeline_mode = #tpu.pipeline_mode<synchronous>, transform_indices = @transform_10, window_bounds = array<i64: 1, 128>}, {pipeline_mode = #tpu.pipeline_mode<synchronous>, transform_indices = @transform_11, window_bounds = array<i64: 1, 128>}, {pipeline_mode = #tpu.pipeline_mode<synchronous>, transform_indices = @transform_12, window_bounds = array<i64: 1, 128>}, {pipeline_mode = #tpu.pipeline_mode<synchronous>, transform_indices = @transform_13, window_bounds = array<i64: 128, 128>}, {pipeline_mode = #tpu.pipeline_mode<synchronous>, transform_indices = @transform_14, window_bounds = array<i64: 1, 128>}, {pipeline_mode = #tpu.pipeline_mode<synchronous>, transform_indices = @transform_15, window_bounds = array<i64: 128, 128>}, {pipeline_mode = #tpu.pipeline_mode<synchronous>, transform_indices = @transform_16, window_bounds = array<i64: 128, 128>}, {pipeline_mode = #tpu.pipeline_mode<synchronous>, transform_indices = @transform_17, window_bounds = array<i64: 1, 128>}, {pipeline_mode = #tpu.pipeline_mode<synchronous>, transform_indices = @transform_18, window_bounds = array<i64: 1, 128>}, {pipeline_mode = #tpu.pipeline_mode<synchronous>, transform_indices = @transform_19, window_bounds = array<i64: 1, 128>}, {pipeline_mode = #tpu.pipeline_mode<synchronous>, transform_indices = @transform_20, window_bounds = array<i64: 1, 128>}, {pipeline_mode = #tpu.pipeline_mode<synchronous>, transform_indices = @transform_21, window_bounds = array<i64: 1, 128>}, {pipeline_mode = #tpu.pipeline_mode<synchronous>, transform_indices = @transform_22, window_bounds = array<i64: 128, 128>}, {pipeline_mode = #tpu.pipeline_mode<synchronous>, transform_indices = @transform_23, window_bounds = array<i64: 1, 128>}, {transform_indices = @transform_24, window_bounds = array<i64: 1, 1, 128>}, {transform_indices = @transform_25, window_bounds = array<i64: 1, 1, 128>}]} {
    %c0 = arith.constant 0 : index
    %c0_0 = arith.constant 0 : index
    %c0_1 = arith.constant 0 : index
    %0 = vector.load %arg1[%c0, %c0_0, %c0_1] : memref<1x256x128xf32, #tpu.memory_space<vmem>>, vector<1x256x128xf32>
    %1 = vector.shape_cast %0 : vector<1x256x128xf32> to vector<256x128xf32>
    %c0_2 = arith.constant 0 : index
    %c0_3 = arith.constant 0 : index
    %2 = vector.load %arg5[%c0_2, %c0_3] : memref<1x128xf32, #tpu.memory_space<vmem>>, vector<1x128xf32>
    %c0_4 = arith.constant 0 : index
    %c0_5 = arith.constant 0 : index
    %3 = vector.load %arg6[%c0_4, %c0_5] : memref<1x128xf32, #tpu.memory_space<vmem>>, vector<1x128xf32>
    %cst = arith.constant dense<0.000000e+00> : vector<128xf32>
    %4 = vector.multi_reduction <add>, %1, %cst [0] : vector<256x128xf32> to vector<128xf32>
    %5 = vector.shape_cast %4 : vector<128xf32> to vector<1x128xf32>
    %cst_6 = arith.constant 3.906250e-03 : f32
    %6 = vector.broadcast %cst_6 : f32 to vector<1x128xf32>
    %7 = arith.mulf %5, %6 : vector<1x128xf32>
    %8 = arith.mulf %1, %1 : vector<256x128xf32>
    %cst_7 = arith.constant dense<0.000000e+00> : vector<128xf32>
    %9 = vector.multi_reduction <add>, %8, %cst_7 [0] : vector<256x128xf32> to vector<128xf32>
    %10 = vector.shape_cast %9 : vector<128xf32> to vector<1x128xf32>
    %cst_8 = arith.constant 3.906250e-03 : f32
    %11 = vector.broadcast %cst_8 : f32 to vector<1x128xf32>
    %12 = arith.mulf %10, %11 : vector<1x128xf32>
    %13 = arith.mulf %7, %7 : vector<1x128xf32>
    %14 = arith.subf %12, %13 : vector<1x128xf32>
    %cst_9 = arith.constant 0.000000e+00 : f32
    %15 = vector.broadcast %cst_9 : f32 to vector<1x128xf32>
    %16 = arith.maximumf %14, %15 : vector<1x128xf32>
    %17 = vector.broadcast %7 : vector<1x128xf32> to vector<256x128xf32>
    %18 = arith.subf %1, %17 : vector<256x128xf32>
    %cst_10 = arith.constant 9.99999974E-6 : f32
    %19 = vector.broadcast %cst_10 : f32 to vector<1x128xf32>
    %20 = arith.addf %16, %19 : vector<1x128xf32>
    %21 = math.rsqrt %20 : vector<1x128xf32>
    %22 = arith.mulf %2, %21 : vector<1x128xf32>
    %23 = vector.broadcast %22 : vector<1x128xf32> to vector<256x128xf32>
    %24 = arith.mulf %18, %23 : vector<256x128xf32>
    %25 = vector.broadcast %3 : vector<1x128xf32> to vector<256x128xf32>
    %26 = arith.addf %24, %25 : vector<256x128xf32>
    %cst_11 = arith.constant 0.000000e+00 : f32
    %27 = vector.broadcast %cst_11 : f32 to vector<196x128xf32>
    %c0_12 = arith.constant 0 : index
    %c0_13 = arith.constant 0 : index
    %c0_14 = arith.constant 0 : index
    %28 = vector.load %arg2[%c0_12, %c0_13, %c0_14] : memref<4x196x256xf32, #tpu.memory_space<vmem>>, vector<1x196x256xf32>
    %29 = vector.shape_cast %28 : vector<1x196x256xf32> to vector<196x256xf32>
    %cst_15 = arith.constant dense<0.000000e+00> : vector<196x128xf32>
    %30 = tpu.matmul %29, %26, %cst_15 {dimension_numbers = #tpu.dot_dimension_numbers<[1], [0], [0], [1], [0, 0, 1, 1], [], []>} : vector<196x256xf32>, vector<256x128xf32>, vector<196x128xf32> -> vector<196x128xf32>
    %c0_16 = arith.constant 0 : index
    %c0_17 = arith.constant 0 : index
    %c0_18 = arith.constant 0 : index
    %31 = vector.load %arg3[%c0_16, %c0_17, %c0_18] : memref<4x128x128xf32, #tpu.memory_space<vmem>>, vector<1x128x128xf32>
    %32 = vector.shape_cast %31 : vector<1x128x128xf32> to vector<128x128xf32>
    %cst_19 = arith.constant dense<0.000000e+00> : vector<196x128xf32>
    %33 = tpu.matmul %30, %32, %cst_19 {dimension_numbers = #tpu.dot_dimension_numbers<[1], [0], [0], [1], [0, 0, 1, 1], [], []>} : vector<196x128xf32>, vector<128x128xf32>, vector<196x128xf32> -> vector<196x128xf32>
    %34 = arith.addf %27, %33 : vector<196x128xf32>
    %c1 = arith.constant 1 : index
    %c0_20 = arith.constant 0 : index
    %c0_21 = arith.constant 0 : index
    %35 = vector.load %arg2[%c1, %c0_20, %c0_21] : memref<4x196x256xf32, #tpu.memory_space<vmem>>, vector<1x196x256xf32>
    %36 = vector.shape_cast %35 : vector<1x196x256xf32> to vector<196x256xf32>
    %cst_22 = arith.constant dense<0.000000e+00> : vector<196x128xf32>
    %37 = tpu.matmul %36, %26, %cst_22 {dimension_numbers = #tpu.dot_dimension_numbers<[1], [0], [0], [1], [0, 0, 1, 1], [], []>} : vector<196x256xf32>, vector<256x128xf32>, vector<196x128xf32> -> vector<196x128xf32>
    %c1_23 = arith.constant 1 : index
    %c0_24 = arith.constant 0 : index
    %c0_25 = arith.constant 0 : index
    %38 = vector.load %arg3[%c1_23, %c0_24, %c0_25] : memref<4x128x128xf32, #tpu.memory_space<vmem>>, vector<1x128x128xf32>
    %39 = vector.shape_cast %38 : vector<1x128x128xf32> to vector<128x128xf32>
    %cst_26 = arith.constant dense<0.000000e+00> : vector<196x128xf32>
    %40 = tpu.matmul %37, %39, %cst_26 {dimension_numbers = #tpu.dot_dimension_numbers<[1], [0], [0], [1], [0, 0, 1, 1], [], []>} : vector<196x128xf32>, vector<128x128xf32>, vector<196x128xf32> -> vector<196x128xf32>
    %41 = arith.addf %34, %40 : vector<196x128xf32>
    %c2 = arith.constant 2 : index
    %c0_27 = arith.constant 0 : index
    %c0_28 = arith.constant 0 : index
    %42 = vector.load %arg2[%c2, %c0_27, %c0_28] : memref<4x196x256xf32, #tpu.memory_space<vmem>>, vector<1x196x256xf32>
    %43 = vector.shape_cast %42 : vector<1x196x256xf32> to vector<196x256xf32>
    %cst_29 = arith.constant dense<0.000000e+00> : vector<196x128xf32>
    %44 = tpu.matmul %43, %26, %cst_29 {dimension_numbers = #tpu.dot_dimension_numbers<[1], [0], [0], [1], [0, 0, 1, 1], [], []>} : vector<196x256xf32>, vector<256x128xf32>, vector<196x128xf32> -> vector<196x128xf32>
    %c2_30 = arith.constant 2 : index
    %c0_31 = arith.constant 0 : index
    %c0_32 = arith.constant 0 : index
    %45 = vector.load %arg3[%c2_30, %c0_31, %c0_32] : memref<4x128x128xf32, #tpu.memory_space<vmem>>, vector<1x128x128xf32>
    %46 = vector.shape_cast %45 : vector<1x128x128xf32> to vector<128x128xf32>
    %cst_33 = arith.constant dense<0.000000e+00> : vector<196x128xf32>
    %47 = tpu.matmul %44, %46, %cst_33 {dimension_numbers = #tpu.dot_dimension_numbers<[1], [0], [0], [1], [0, 0, 1, 1], [], []>} : vector<196x128xf32>, vector<128x128xf32>, vector<196x128xf32> -> vector<196x128xf32>
    %48 = arith.addf %41, %47 : vector<196x128xf32>
    %c3 = arith.constant 3 : index
    %c0_34 = arith.constant 0 : index
    %c0_35 = arith.constant 0 : index
    %49 = vector.load %arg2[%c3, %c0_34, %c0_35] : memref<4x196x256xf32, #tpu.memory_space<vmem>>, vector<1x196x256xf32>
    %50 = vector.shape_cast %49 : vector<1x196x256xf32> to vector<196x256xf32>
    %cst_36 = arith.constant dense<0.000000e+00> : vector<196x128xf32>
    %51 = tpu.matmul %50, %26, %cst_36 {dimension_numbers = #tpu.dot_dimension_numbers<[1], [0], [0], [1], [0, 0, 1, 1], [], []>} : vector<196x256xf32>, vector<256x128xf32>, vector<196x128xf32> -> vector<196x128xf32>
    %c3_37 = arith.constant 3 : index
    %c0_38 = arith.constant 0 : index
    %c0_39 = arith.constant 0 : index
    %52 = vector.load %arg3[%c3_37, %c0_38, %c0_39] : memref<4x128x128xf32, #tpu.memory_space<vmem>>, vector<1x128x128xf32>
    %53 = vector.shape_cast %52 : vector<1x128x128xf32> to vector<128x128xf32>
    %cst_40 = arith.constant dense<0.000000e+00> : vector<196x128xf32>
    %54 = tpu.matmul %51, %53, %cst_40 {dimension_numbers = #tpu.dot_dimension_numbers<[1], [0], [0], [1], [0, 0, 1, 1], [], []>} : vector<196x128xf32>, vector<128x128xf32>, vector<196x128xf32> -> vector<196x128xf32>
    %55 = arith.addf %48, %54 : vector<196x128xf32>
    %c0_41 = arith.constant 0 : index
    %c0_42 = arith.constant 0 : index
    %56 = vector.load %arg4[%c0_41, %c0_42] : memref<1x128xf32, #tpu.memory_space<vmem>>, vector<1x128xf32>
    %57 = vector.broadcast %56 : vector<1x128xf32> to vector<196x128xf32>
    %58 = arith.addf %55, %57 : vector<196x128xf32>
    %cst_43 = arith.constant 0.000000e+00 : f32
    %59 = vector.broadcast %cst_43 : f32 to vector<196x128xf32>
    %60 = arith.maximumf %58, %59 : vector<196x128xf32>
    %c0_44 = arith.constant 0 : index
    %c0_45 = arith.constant 0 : index
    %61 = vector.load %arg10[%c0_44, %c0_45] : memref<1x128xf32, #tpu.memory_space<vmem>>, vector<1x128xf32>
    %c0_46 = arith.constant 0 : index
    %c0_47 = arith.constant 0 : index
    %62 = vector.load %arg11[%c0_46, %c0_47] : memref<1x128xf32, #tpu.memory_space<vmem>>, vector<1x128xf32>
    %cst_48 = arith.constant dense<0.000000e+00> : vector<128xf32>
    %63 = vector.multi_reduction <add>, %60, %cst_48 [0] : vector<196x128xf32> to vector<128xf32>
    %64 = vector.shape_cast %63 : vector<128xf32> to vector<1x128xf32>
    %cst_49 = arith.constant 0.00510204071 : f32
    %65 = vector.broadcast %cst_49 : f32 to vector<1x128xf32>
    %66 = arith.mulf %64, %65 : vector<1x128xf32>
    %67 = arith.mulf %60, %60 : vector<196x128xf32>
    %cst_50 = arith.constant dense<0.000000e+00> : vector<128xf32>
    %68 = vector.multi_reduction <add>, %67, %cst_50 [0] : vector<196x128xf32> to vector<128xf32>
    %69 = vector.shape_cast %68 : vector<128xf32> to vector<1x128xf32>
    %cst_51 = arith.constant 0.00510204071 : f32
    %70 = vector.broadcast %cst_51 : f32 to vector<1x128xf32>
    %71 = arith.mulf %69, %70 : vector<1x128xf32>
    %72 = arith.mulf %66, %66 : vector<1x128xf32>
    %73 = arith.subf %71, %72 : vector<1x128xf32>
    %cst_52 = arith.constant 0.000000e+00 : f32
    %74 = vector.broadcast %cst_52 : f32 to vector<1x128xf32>
    %75 = arith.maximumf %73, %74 : vector<1x128xf32>
    %76 = vector.broadcast %66 : vector<1x128xf32> to vector<196x128xf32>
    %77 = arith.subf %60, %76 : vector<196x128xf32>
    %cst_53 = arith.constant 9.99999974E-6 : f32
    %78 = vector.broadcast %cst_53 : f32 to vector<1x128xf32>
    %79 = arith.addf %75, %78 : vector<1x128xf32>
    %80 = math.rsqrt %79 : vector<1x128xf32>
    %81 = arith.mulf %61, %80 : vector<1x128xf32>
    %82 = vector.broadcast %81 : vector<1x128xf32> to vector<196x128xf32>
    %83 = arith.mulf %77, %82 : vector<196x128xf32>
    %84 = vector.broadcast %62 : vector<1x128xf32> to vector<196x128xf32>
    %85 = arith.addf %83, %84 : vector<196x128xf32>
    %cst_54 = arith.constant 0.000000e+00 : f32
    %86 = vector.broadcast %cst_54 : f32 to vector<4x128xf32>
    %c0_55 = arith.constant 0 : index
    %c0_56 = arith.constant 0 : index
    %c0_57 = arith.constant 0 : index
    %87 = vector.load %arg7[%c0_55, %c0_56, %c0_57] : memref<49x4x196xf32, #tpu.memory_space<vmem>>, vector<1x4x196xf32>
    %88 = vector.shape_cast %87 : vector<1x4x196xf32> to vector<4x196xf32>
    %cst_58 = arith.constant dense<0.000000e+00> : vector<4x128xf32>
    %89 = tpu.matmul %88, %85, %cst_58 {dimension_numbers = #tpu.dot_dimension_numbers<[1], [0], [0], [1], [0, 0, 1, 1], [], []>} : vector<4x196xf32>, vector<196x128xf32>, vector<4x128xf32> -> vector<4x128xf32>
    %c0_59 = arith.constant 0 : index
    %c0_60 = arith.constant 0 : index
    %c0_61 = arith.constant 0 : index
    %90 = vector.load %arg8[%c0_59, %c0_60, %c0_61] : memref<49x128x128xf32, #tpu.memory_space<vmem>>, vector<1x128x128xf32>
    %91 = vector.shape_cast %90 : vector<1x128x128xf32> to vector<128x128xf32>
    %cst_62 = arith.constant dense<0.000000e+00> : vector<4x128xf32>
    %92 = tpu.matmul %89, %91, %cst_62 {dimension_numbers = #tpu.dot_dimension_numbers<[1], [0], [0], [1], [0, 0, 1, 1], [], []>} : vector<4x128xf32>, vector<128x128xf32>, vector<4x128xf32> -> vector<4x128xf32>
    %93 = arith.addf %86, %92 : vector<4x128xf32>
    %c1_63 = arith.constant 1 : index
    %c0_64 = arith.constant 0 : index
    %c0_65 = arith.constant 0 : index
    %94 = vector.load %arg7[%c1_63, %c0_64, %c0_65] : memref<49x4x196xf32, #tpu.memory_space<vmem>>, vector<1x4x196xf32>
    %95 = vector.shape_cast %94 : vector<1x4x196xf32> to vector<4x196xf32>
    %cst_66 = arith.constant dense<0.000000e+00> : vector<4x128xf32>
    %96 = tpu.matmul %95, %85, %cst_66 {dimension_numbers = #tpu.dot_dimension_numbers<[1], [0], [0], [1], [0, 0, 1, 1], [], []>} : vector<4x196xf32>, vector<196x128xf32>, vector<4x128xf32> -> vector<4x128xf32>
    %c1_67 = arith.constant 1 : index
    %c0_68 = arith.constant 0 : index
    %c0_69 = arith.constant 0 : index
    %97 = vector.load %arg8[%c1_67, %c0_68, %c0_69] : memref<49x128x128xf32, #tpu.memory_space<vmem>>, vector<1x128x128xf32>
    %98 = vector.shape_cast %97 : vector<1x128x128xf32> to vector<128x128xf32>
    %cst_70 = arith.constant dense<0.000000e+00> : vector<4x128xf32>
    %99 = tpu.matmul %96, %98, %cst_70 {dimension_numbers = #tpu.dot_dimension_numbers<[1], [0], [0], [1], [0, 0, 1, 1], [], []>} : vector<4x128xf32>, vector<128x128xf32>, vector<4x128xf32> -> vector<4x128xf32>
    %100 = arith.addf %93, %99 : vector<4x128xf32>
    %c2_71 = arith.constant 2 : index
    %c0_72 = arith.constant 0 : index
    %c0_73 = arith.constant 0 : index
    %101 = vector.load %arg7[%c2_71, %c0_72, %c0_73] : memref<49x4x196xf32, #tpu.memory_space<vmem>>, vector<1x4x196xf32>
    %102 = vector.shape_cast %101 : vector<1x4x196xf32> to vector<4x196xf32>
    %cst_74 = arith.constant dense<0.000000e+00> : vector<4x128xf32>
    %103 = tpu.matmul %102, %85, %cst_74 {dimension_numbers = #tpu.dot_dimension_numbers<[1], [0], [0], [1], [0, 0, 1, 1], [], []>} : vector<4x196xf32>, vector<196x128xf32>, vector<4x128xf32> -> vector<4x128xf32>
    %c2_75 = arith.constant 2 : index
    %c0_76 = arith.constant 0 : index
    %c0_77 = arith.constant 0 : index
    %104 = vector.load %arg8[%c2_75, %c0_76, %c0_77] : memref<49x128x128xf32, #tpu.memory_space<vmem>>, vector<1x128x128xf32>
    %105 = vector.shape_cast %104 : vector<1x128x128xf32> to vector<128x128xf32>
    %cst_78 = arith.constant dense<0.000000e+00> : vector<4x128xf32>
    %106 = tpu.matmul %103, %105, %cst_78 {dimension_numbers = #tpu.dot_dimension_numbers<[1], [0], [0], [1], [0, 0, 1, 1], [], []>} : vector<4x128xf32>, vector<128x128xf32>, vector<4x128xf32> -> vector<4x128xf32>
    %107 = arith.addf %100, %106 : vector<4x128xf32>
    %c3_79 = arith.constant 3 : index
    %c0_80 = arith.constant 0 : index
    %c0_81 = arith.constant 0 : index
    %108 = vector.load %arg7[%c3_79, %c0_80, %c0_81] : memref<49x4x196xf32, #tpu.memory_space<vmem>>, vector<1x4x196xf32>
    %109 = vector.shape_cast %108 : vector<1x4x196xf32> to vector<4x196xf32>
    %cst_82 = arith.constant dense<0.000000e+00> : vector<4x128xf32>
    %110 = tpu.matmul %109, %85, %cst_82 {dimension_numbers = #tpu.dot_dimension_numbers<[1], [0], [0], [1], [0, 0, 1, 1], [], []>} : vector<4x196xf32>, vector<196x128xf32>, vector<4x128xf32> -> vector<4x128xf32>
    %c3_83 = arith.constant 3 : index
    %c0_84 = arith.constant 0 : index
    %c0_85 = arith.constant 0 : index
    %111 = vector.load %arg8[%c3_83, %c0_84, %c0_85] : memref<49x128x128xf32, #tpu.memory_space<vmem>>, vector<1x128x128xf32>
    %112 = vector.shape_cast %111 : vector<1x128x128xf32> to vector<128x128xf32>
    %cst_86 = arith.constant dense<0.000000e+00> : vector<4x128xf32>
    %113 = tpu.matmul %110, %112, %cst_86 {dimension_numbers = #tpu.dot_dimension_numbers<[1], [0], [0], [1], [0, 0, 1, 1], [], []>} : vector<4x128xf32>, vector<128x128xf32>, vector<4x128xf32> -> vector<4x128xf32>
    %114 = arith.addf %107, %113 : vector<4x128xf32>
    %c4 = arith.constant 4 : index
    %c0_87 = arith.constant 0 : index
    %c0_88 = arith.constant 0 : index
    %115 = vector.load %arg7[%c4, %c0_87, %c0_88] : memref<49x4x196xf32, #tpu.memory_space<vmem>>, vector<1x4x196xf32>
    %116 = vector.shape_cast %115 : vector<1x4x196xf32> to vector<4x196xf32>
    %cst_89 = arith.constant dense<0.000000e+00> : vector<4x128xf32>
    %117 = tpu.matmul %116, %85, %cst_89 {dimension_numbers = #tpu.dot_dimension_numbers<[1], [0], [0], [1], [0, 0, 1, 1], [], []>} : vector<4x196xf32>, vector<196x128xf32>, vector<4x128xf32> -> vector<4x128xf32>
    %c4_90 = arith.constant 4 : index
    %c0_91 = arith.constant 0 : index
    %c0_92 = arith.constant 0 : index
    %118 = vector.load %arg8[%c4_90, %c0_91, %c0_92] : memref<49x128x128xf32, #tpu.memory_space<vmem>>, vector<1x128x128xf32>
    %119 = vector.shape_cast %118 : vector<1x128x128xf32> to vector<128x128xf32>
    %cst_93 = arith.constant dense<0.000000e+00> : vector<4x128xf32>
    %120 = tpu.matmul %117, %119, %cst_93 {dimension_numbers = #tpu.dot_dimension_numbers<[1], [0], [0], [1], [0, 0, 1, 1], [], []>} : vector<4x128xf32>, vector<128x128xf32>, vector<4x128xf32> -> vector<4x128xf32>
    %121 = arith.addf %114, %120 : vector<4x128xf32>
    %c5 = arith.constant 5 : index
    %c0_94 = arith.constant 0 : index
    %c0_95 = arith.constant 0 : index
    %122 = vector.load %arg7[%c5, %c0_94, %c0_95] : memref<49x4x196xf32, #tpu.memory_space<vmem>>, vector<1x4x196xf32>
    %123 = vector.shape_cast %122 : vector<1x4x196xf32> to vector<4x196xf32>
    %cst_96 = arith.constant dense<0.000000e+00> : vector<4x128xf32>
    %124 = tpu.matmul %123, %85, %cst_96 {dimension_numbers = #tpu.dot_dimension_numbers<[1], [0], [0], [1], [0, 0, 1, 1], [], []>} : vector<4x196xf32>, vector<196x128xf32>, vector<4x128xf32> -> vector<4x128xf32>
    %c5_97 = arith.constant 5 : index
    %c0_98 = arith.constant 0 : index
    %c0_99 = arith.constant 0 : index
    %125 = vector.load %arg8[%c5_97, %c0_98, %c0_99] : memref<49x128x128xf32, #tpu.memory_space<vmem>>, vector<1x128x128xf32>
    %126 = vector.shape_cast %125 : vector<1x128x128xf32> to vector<128x128xf32>
    %cst_100 = arith.constant dense<0.000000e+00> : vector<4x128xf32>
    %127 = tpu.matmul %124, %126, %cst_100 {dimension_numbers = #tpu.dot_dimension_numbers<[1], [0], [0], [1], [0, 0, 1, 1], [], []>} : vector<4x128xf32>, vector<128x128xf32>, vector<4x128xf32> -> vector<4x128xf32>
    %128 = arith.addf %121, %127 : vector<4x128xf32>
    %c6 = arith.constant 6 : index
    %c0_101 = arith.constant 0 : index
    %c0_102 = arith.constant 0 : index
    %129 = vector.load %arg7[%c6, %c0_101, %c0_102] : memref<49x4x196xf32, #tpu.memory_space<vmem>>, vector<1x4x196xf32>
    %130 = vector.shape_cast %129 : vector<1x4x196xf32> to vector<4x196xf32>
    %cst_103 = arith.constant dense<0.000000e+00> : vector<4x128xf32>
    %131 = tpu.matmul %130, %85, %cst_103 {dimension_numbers = #tpu.dot_dimension_numbers<[1], [0], [0], [1], [0, 0, 1, 1], [], []>} : vector<4x196xf32>, vector<196x128xf32>, vector<4x128xf32> -> vector<4x128xf32>
    %c6_104 = arith.constant 6 : index
    %c0_105 = arith.constant 0 : index
    %c0_106 = arith.constant 0 : index
    %132 = vector.load %arg8[%c6_104, %c0_105, %c0_106] : memref<49x128x128xf32, #tpu.memory_space<vmem>>, vector<1x128x128xf32>
    %133 = vector.shape_cast %132 : vector<1x128x128xf32> to vector<128x128xf32>
    %cst_107 = arith.constant dense<0.000000e+00> : vector<4x128xf32>
    %134 = tpu.matmul %131, %133, %cst_107 {dimension_numbers = #tpu.dot_dimension_numbers<[1], [0], [0], [1], [0, 0, 1, 1], [], []>} : vector<4x128xf32>, vector<128x128xf32>, vector<4x128xf32> -> vector<4x128xf32>
    %135 = arith.addf %128, %134 : vector<4x128xf32>
    %c7 = arith.constant 7 : index
    %c0_108 = arith.constant 0 : index
    %c0_109 = arith.constant 0 : index
    %136 = vector.load %arg7[%c7, %c0_108, %c0_109] : memref<49x4x196xf32, #tpu.memory_space<vmem>>, vector<1x4x196xf32>
    %137 = vector.shape_cast %136 : vector<1x4x196xf32> to vector<4x196xf32>
    %cst_110 = arith.constant dense<0.000000e+00> : vector<4x128xf32>
    %138 = tpu.matmul %137, %85, %cst_110 {dimension_numbers = #tpu.dot_dimension_numbers<[1], [0], [0], [1], [0, 0, 1, 1], [], []>} : vector<4x196xf32>, vector<196x128xf32>, vector<4x128xf32> -> vector<4x128xf32>
    %c7_111 = arith.constant 7 : index
    %c0_112 = arith.constant 0 : index
    %c0_113 = arith.constant 0 : index
    %139 = vector.load %arg8[%c7_111, %c0_112, %c0_113] : memref<49x128x128xf32, #tpu.memory_space<vmem>>, vector<1x128x128xf32>
    %140 = vector.shape_cast %139 : vector<1x128x128xf32> to vector<128x128xf32>
    %cst_114 = arith.constant dense<0.000000e+00> : vector<4x128xf32>
    %141 = tpu.matmul %138, %140, %cst_114 {dimension_numbers = #tpu.dot_dimension_numbers<[1], [0], [0], [1], [0, 0, 1, 1], [], []>} : vector<4x128xf32>, vector<128x128xf32>, vector<4x128xf32> -> vector<4x128xf32>
    %142 = arith.addf %135, %141 : vector<4x128xf32>
    %c8 = arith.constant 8 : index
    %c0_115 = arith.constant 0 : index
    %c0_116 = arith.constant 0 : index
    %143 = vector.load %arg7[%c8, %c0_115, %c0_116] : memref<49x4x196xf32, #tpu.memory_space<vmem>>, vector<1x4x196xf32>
    %144 = vector.shape_cast %143 : vector<1x4x196xf32> to vector<4x196xf32>
    %cst_117 = arith.constant dense<0.000000e+00> : vector<4x128xf32>
    %145 = tpu.matmul %144, %85, %cst_117 {dimension_numbers = #tpu.dot_dimension_numbers<[1], [0], [0], [1], [0, 0, 1, 1], [], []>} : vector<4x196xf32>, vector<196x128xf32>, vector<4x128xf32> -> vector<4x128xf32>
    %c8_118 = arith.constant 8 : index
    %c0_119 = arith.constant 0 : index
    %c0_120 = arith.constant 0 : index
    %146 = vector.load %arg8[%c8_118, %c0_119, %c0_120] : memref<49x128x128xf32, #tpu.memory_space<vmem>>, vector<1x128x128xf32>
    %147 = vector.shape_cast %146 : vector<1x128x128xf32> to vector<128x128xf32>
    %cst_121 = arith.constant dense<0.000000e+00> : vector<4x128xf32>
    %148 = tpu.matmul %145, %147, %cst_121 {dimension_numbers = #tpu.dot_dimension_numbers<[1], [0], [0], [1], [0, 0, 1, 1], [], []>} : vector<4x128xf32>, vector<128x128xf32>, vector<4x128xf32> -> vector<4x128xf32>
    %149 = arith.addf %142, %148 : vector<4x128xf32>
    %c9 = arith.constant 9 : index
    %c0_122 = arith.constant 0 : index
    %c0_123 = arith.constant 0 : index
    %150 = vector.load %arg7[%c9, %c0_122, %c0_123] : memref<49x4x196xf32, #tpu.memory_space<vmem>>, vector<1x4x196xf32>
    %151 = vector.shape_cast %150 : vector<1x4x196xf32> to vector<4x196xf32>
    %cst_124 = arith.constant dense<0.000000e+00> : vector<4x128xf32>
    %152 = tpu.matmul %151, %85, %cst_124 {dimension_numbers = #tpu.dot_dimension_numbers<[1], [0], [0], [1], [0, 0, 1, 1], [], []>} : vector<4x196xf32>, vector<196x128xf32>, vector<4x128xf32> -> vector<4x128xf32>
    %c9_125 = arith.constant 9 : index
    %c0_126 = arith.constant 0 : index
    %c0_127 = arith.constant 0 : index
    %153 = vector.load %arg8[%c9_125, %c0_126, %c0_127] : memref<49x128x128xf32, #tpu.memory_space<vmem>>, vector<1x128x128xf32>
    %154 = vector.shape_cast %153 : vector<1x128x128xf32> to vector<128x128xf32>
    %cst_128 = arith.constant dense<0.000000e+00> : vector<4x128xf32>
    %155 = tpu.matmul %152, %154, %cst_128 {dimension_numbers = #tpu.dot_dimension_numbers<[1], [0], [0], [1], [0, 0, 1, 1], [], []>} : vector<4x128xf32>, vector<128x128xf32>, vector<4x128xf32> -> vector<4x128xf32>
    %156 = arith.addf %149, %155 : vector<4x128xf32>
    %c10 = arith.constant 10 : index
    %c0_129 = arith.constant 0 : index
    %c0_130 = arith.constant 0 : index
    %157 = vector.load %arg7[%c10, %c0_129, %c0_130] : memref<49x4x196xf32, #tpu.memory_space<vmem>>, vector<1x4x196xf32>
    %158 = vector.shape_cast %157 : vector<1x4x196xf32> to vector<4x196xf32>
    %cst_131 = arith.constant dense<0.000000e+00> : vector<4x128xf32>
    %159 = tpu.matmul %158, %85, %cst_131 {dimension_numbers = #tpu.dot_dimension_numbers<[1], [0], [0], [1], [0, 0, 1, 1], [], []>} : vector<4x196xf32>, vector<196x128xf32>, vector<4x128xf32> -> vector<4x128xf32>
    %c10_132 = arith.constant 10 : index
    %c0_133 = arith.constant 0 : index
    %c0_134 = arith.constant 0 : index
    %160 = vector.load %arg8[%c10_132, %c0_133, %c0_134] : memref<49x128x128xf32, #tpu.memory_space<vmem>>, vector<1x128x128xf32>
    %161 = vector.shape_cast %160 : vector<1x128x128xf32> to vector<128x128xf32>
    %cst_135 = arith.constant dense<0.000000e+00> : vector<4x128xf32>
    %162 = tpu.matmul %159, %161, %cst_135 {dimension_numbers = #tpu.dot_dimension_numbers<[1], [0], [0], [1], [0, 0, 1, 1], [], []>} : vector<4x128xf32>, vector<128x128xf32>, vector<4x128xf32> -> vector<4x128xf32>
    %163 = arith.addf %156, %162 : vector<4x128xf32>
    %c11 = arith.constant 11 : index
    %c0_136 = arith.constant 0 : index
    %c0_137 = arith.constant 0 : index
    %164 = vector.load %arg7[%c11, %c0_136, %c0_137] : memref<49x4x196xf32, #tpu.memory_space<vmem>>, vector<1x4x196xf32>
    %165 = vector.shape_cast %164 : vector<1x4x196xf32> to vector<4x196xf32>
    %cst_138 = arith.constant dense<0.000000e+00> : vector<4x128xf32>
    %166 = tpu.matmul %165, %85, %cst_138 {dimension_numbers = #tpu.dot_dimension_numbers<[1], [0], [0], [1], [0, 0, 1, 1], [], []>} : vector<4x196xf32>, vector<196x128xf32>, vector<4x128xf32> -> vector<4x128xf32>
    %c11_139 = arith.constant 11 : index
    %c0_140 = arith.constant 0 : index
    %c0_141 = arith.constant 0 : index
    %167 = vector.load %arg8[%c11_139, %c0_140, %c0_141] : memref<49x128x128xf32, #tpu.memory_space<vmem>>, vector<1x128x128xf32>
    %168 = vector.shape_cast %167 : vector<1x128x128xf32> to vector<128x128xf32>
    %cst_142 = arith.constant dense<0.000000e+00> : vector<4x128xf32>
    %169 = tpu.matmul %166, %168, %cst_142 {dimension_numbers = #tpu.dot_dimension_numbers<[1], [0], [0], [1], [0, 0, 1, 1], [], []>} : vector<4x128xf32>, vector<128x128xf32>, vector<4x128xf32> -> vector<4x128xf32>
    %170 = arith.addf %163, %169 : vector<4x128xf32>
    %c12 = arith.constant 12 : index
    %c0_143 = arith.constant 0 : index
    %c0_144 = arith.constant 0 : index
    %171 = vector.load %arg7[%c12, %c0_143, %c0_144] : memref<49x4x196xf32, #tpu.memory_space<vmem>>, vector<1x4x196xf32>
    %172 = vector.shape_cast %171 : vector<1x4x196xf32> to vector<4x196xf32>
    %cst_145 = arith.constant dense<0.000000e+00> : vector<4x128xf32>
    %173 = tpu.matmul %172, %85, %cst_145 {dimension_numbers = #tpu.dot_dimension_numbers<[1], [0], [0], [1], [0, 0, 1, 1], [], []>} : vector<4x196xf32>, vector<196x128xf32>, vector<4x128xf32> -> vector<4x128xf32>
    %c12_146 = arith.constant 12 : index
    %c0_147 = arith.constant 0 : index
    %c0_148 = arith.constant 0 : index
    %174 = vector.load %arg8[%c12_146, %c0_147, %c0_148] : memref<49x128x128xf32, #tpu.memory_space<vmem>>, vector<1x128x128xf32>
    %175 = vector.shape_cast %174 : vector<1x128x128xf32> to vector<128x128xf32>
    %cst_149 = arith.constant dense<0.000000e+00> : vector<4x128xf32>
    %176 = tpu.matmul %173, %175, %cst_149 {dimension_numbers = #tpu.dot_dimension_numbers<[1], [0], [0], [1], [0, 0, 1, 1], [], []>} : vector<4x128xf32>, vector<128x128xf32>, vector<4x128xf32> -> vector<4x128xf32>
    %177 = arith.addf %170, %176 : vector<4x128xf32>
    %c13 = arith.constant 13 : index
    %c0_150 = arith.constant 0 : index
    %c0_151 = arith.constant 0 : index
    %178 = vector.load %arg7[%c13, %c0_150, %c0_151] : memref<49x4x196xf32, #tpu.memory_space<vmem>>, vector<1x4x196xf32>
    %179 = vector.shape_cast %178 : vector<1x4x196xf32> to vector<4x196xf32>
    %cst_152 = arith.constant dense<0.000000e+00> : vector<4x128xf32>
    %180 = tpu.matmul %179, %85, %cst_152 {dimension_numbers = #tpu.dot_dimension_numbers<[1], [0], [0], [1], [0, 0, 1, 1], [], []>} : vector<4x196xf32>, vector<196x128xf32>, vector<4x128xf32> -> vector<4x128xf32>
    %c13_153 = arith.constant 13 : index
    %c0_154 = arith.constant 0 : index
    %c0_155 = arith.constant 0 : index
    %181 = vector.load %arg8[%c13_153, %c0_154, %c0_155] : memref<49x128x128xf32, #tpu.memory_space<vmem>>, vector<1x128x128xf32>
    %182 = vector.shape_cast %181 : vector<1x128x128xf32> to vector<128x128xf32>
    %cst_156 = arith.constant dense<0.000000e+00> : vector<4x128xf32>
    %183 = tpu.matmul %180, %182, %cst_156 {dimension_numbers = #tpu.dot_dimension_numbers<[1], [0], [0], [1], [0, 0, 1, 1], [], []>} : vector<4x128xf32>, vector<128x128xf32>, vector<4x128xf32> -> vector<4x128xf32>
    %184 = arith.addf %177, %183 : vector<4x128xf32>
    %c14 = arith.constant 14 : index
    %c0_157 = arith.constant 0 : index
    %c0_158 = arith.constant 0 : index
    %185 = vector.load %arg7[%c14, %c0_157, %c0_158] : memref<49x4x196xf32, #tpu.memory_space<vmem>>, vector<1x4x196xf32>
    %186 = vector.shape_cast %185 : vector<1x4x196xf32> to vector<4x196xf32>
    %cst_159 = arith.constant dense<0.000000e+00> : vector<4x128xf32>
    %187 = tpu.matmul %186, %85, %cst_159 {dimension_numbers = #tpu.dot_dimension_numbers<[1], [0], [0], [1], [0, 0, 1, 1], [], []>} : vector<4x196xf32>, vector<196x128xf32>, vector<4x128xf32> -> vector<4x128xf32>
    %c14_160 = arith.constant 14 : index
    %c0_161 = arith.constant 0 : index
    %c0_162 = arith.constant 0 : index
    %188 = vector.load %arg8[%c14_160, %c0_161, %c0_162] : memref<49x128x128xf32, #tpu.memory_space<vmem>>, vector<1x128x128xf32>
    %189 = vector.shape_cast %188 : vector<1x128x128xf32> to vector<128x128xf32>
    %cst_163 = arith.constant dense<0.000000e+00> : vector<4x128xf32>
    %190 = tpu.matmul %187, %189, %cst_163 {dimension_numbers = #tpu.dot_dimension_numbers<[1], [0], [0], [1], [0, 0, 1, 1], [], []>} : vector<4x128xf32>, vector<128x128xf32>, vector<4x128xf32> -> vector<4x128xf32>
    %191 = arith.addf %184, %190 : vector<4x128xf32>
    %c15 = arith.constant 15 : index
    %c0_164 = arith.constant 0 : index
    %c0_165 = arith.constant 0 : index
    %192 = vector.load %arg7[%c15, %c0_164, %c0_165] : memref<49x4x196xf32, #tpu.memory_space<vmem>>, vector<1x4x196xf32>
    %193 = vector.shape_cast %192 : vector<1x4x196xf32> to vector<4x196xf32>
    %cst_166 = arith.constant dense<0.000000e+00> : vector<4x128xf32>
    %194 = tpu.matmul %193, %85, %cst_166 {dimension_numbers = #tpu.dot_dimension_numbers<[1], [0], [0], [1], [0, 0, 1, 1], [], []>} : vector<4x196xf32>, vector<196x128xf32>, vector<4x128xf32> -> vector<4x128xf32>
    %c15_167 = arith.constant 15 : index
    %c0_168 = arith.constant 0 : index
    %c0_169 = arith.constant 0 : index
    %195 = vector.load %arg8[%c15_167, %c0_168, %c0_169] : memref<49x128x128xf32, #tpu.memory_space<vmem>>, vector<1x128x128xf32>
    %196 = vector.shape_cast %195 : vector<1x128x128xf32> to vector<128x128xf32>
    %cst_170 = arith.constant dense<0.000000e+00> : vector<4x128xf32>
    %197 = tpu.matmul %194, %196, %cst_170 {dimension_numbers = #tpu.dot_dimension_numbers<[1], [0], [0], [1], [0, 0, 1, 1], [], []>} : vector<4x128xf32>, vector<128x128xf32>, vector<4x128xf32> -> vector<4x128xf32>
    %198 = arith.addf %191, %197 : vector<4x128xf32>
    %c16 = arith.constant 16 : index
    %c0_171 = arith.constant 0 : index
    %c0_172 = arith.constant 0 : index
    %199 = vector.load %arg7[%c16, %c0_171, %c0_172] : memref<49x4x196xf32, #tpu.memory_space<vmem>>, vector<1x4x196xf32>
    %200 = vector.shape_cast %199 : vector<1x4x196xf32> to vector<4x196xf32>
    %cst_173 = arith.constant dense<0.000000e+00> : vector<4x128xf32>
    %201 = tpu.matmul %200, %85, %cst_173 {dimension_numbers = #tpu.dot_dimension_numbers<[1], [0], [0], [1], [0, 0, 1, 1], [], []>} : vector<4x196xf32>, vector<196x128xf32>, vector<4x128xf32> -> vector<4x128xf32>
    %c16_174 = arith.constant 16 : index
    %c0_175 = arith.constant 0 : index
    %c0_176 = arith.constant 0 : index
    %202 = vector.load %arg8[%c16_174, %c0_175, %c0_176] : memref<49x128x128xf32, #tpu.memory_space<vmem>>, vector<1x128x128xf32>
    %203 = vector.shape_cast %202 : vector<1x128x128xf32> to vector<128x128xf32>
    %cst_177 = arith.constant dense<0.000000e+00> : vector<4x128xf32>
    %204 = tpu.matmul %201, %203, %cst_177 {dimension_numbers = #tpu.dot_dimension_numbers<[1], [0], [0], [1], [0, 0, 1, 1], [], []>} : vector<4x128xf32>, vector<128x128xf32>, vector<4x128xf32> -> vector<4x128xf32>
    %205 = arith.addf %198, %204 : vector<4x128xf32>
    %c17 = arith.constant 17 : index
    %c0_178 = arith.constant 0 : index
    %c0_179 = arith.constant 0 : index
    %206 = vector.load %arg7[%c17, %c0_178, %c0_179] : memref<49x4x196xf32, #tpu.memory_space<vmem>>, vector<1x4x196xf32>
    %207 = vector.shape_cast %206 : vector<1x4x196xf32> to vector<4x196xf32>
    %cst_180 = arith.constant dense<0.000000e+00> : vector<4x128xf32>
    %208 = tpu.matmul %207, %85, %cst_180 {dimension_numbers = #tpu.dot_dimension_numbers<[1], [0], [0], [1], [0, 0, 1, 1], [], []>} : vector<4x196xf32>, vector<196x128xf32>, vector<4x128xf32> -> vector<4x128xf32>
    %c17_181 = arith.constant 17 : index
    %c0_182 = arith.constant 0 : index
    %c0_183 = arith.constant 0 : index
    %209 = vector.load %arg8[%c17_181, %c0_182, %c0_183] : memref<49x128x128xf32, #tpu.memory_space<vmem>>, vector<1x128x128xf32>
    %210 = vector.shape_cast %209 : vector<1x128x128xf32> to vector<128x128xf32>
    %cst_184 = arith.constant dense<0.000000e+00> : vector<4x128xf32>
    %211 = tpu.matmul %208, %210, %cst_184 {dimension_numbers = #tpu.dot_dimension_numbers<[1], [0], [0], [1], [0, 0, 1, 1], [], []>} : vector<4x128xf32>, vector<128x128xf32>, vector<4x128xf32> -> vector<4x128xf32>
    %212 = arith.addf %205, %211 : vector<4x128xf32>
    %c18 = arith.constant 18 : index
    %c0_185 = arith.constant 0 : index
    %c0_186 = arith.constant 0 : index
    %213 = vector.load %arg7[%c18, %c0_185, %c0_186] : memref<49x4x196xf32, #tpu.memory_space<vmem>>, vector<1x4x196xf32>
    %214 = vector.shape_cast %213 : vector<1x4x196xf32> to vector<4x196xf32>
    %cst_187 = arith.constant dense<0.000000e+00> : vector<4x128xf32>
    %215 = tpu.matmul %214, %85, %cst_187 {dimension_numbers = #tpu.dot_dimension_numbers<[1], [0], [0], [1], [0, 0, 1, 1], [], []>} : vector<4x196xf32>, vector<196x128xf32>, vector<4x128xf32> -> vector<4x128xf32>
    %c18_188 = arith.constant 18 : index
    %c0_189 = arith.constant 0 : index
    %c0_190 = arith.constant 0 : index
    %216 = vector.load %arg8[%c18_188, %c0_189, %c0_190] : memref<49x128x128xf32, #tpu.memory_space<vmem>>, vector<1x128x128xf32>
    %217 = vector.shape_cast %216 : vector<1x128x128xf32> to vector<128x128xf32>
    %cst_191 = arith.constant dense<0.000000e+00> : vector<4x128xf32>
    %218 = tpu.matmul %215, %217, %cst_191 {dimension_numbers = #tpu.dot_dimension_numbers<[1], [0], [0], [1], [0, 0, 1, 1], [], []>} : vector<4x128xf32>, vector<128x128xf32>, vector<4x128xf32> -> vector<4x128xf32>
    %219 = arith.addf %212, %218 : vector<4x128xf32>
    %c19 = arith.constant 19 : index
    %c0_192 = arith.constant 0 : index
    %c0_193 = arith.constant 0 : index
    %220 = vector.load %arg7[%c19, %c0_192, %c0_193] : memref<49x4x196xf32, #tpu.memory_space<vmem>>, vector<1x4x196xf32>
    %221 = vector.shape_cast %220 : vector<1x4x196xf32> to vector<4x196xf32>
    %cst_194 = arith.constant dense<0.000000e+00> : vector<4x128xf32>
    %222 = tpu.matmul %221, %85, %cst_194 {dimension_numbers = #tpu.dot_dimension_numbers<[1], [0], [0], [1], [0, 0, 1, 1], [], []>} : vector<4x196xf32>, vector<196x128xf32>, vector<4x128xf32> -> vector<4x128xf32>
    %c19_195 = arith.constant 19 : index
    %c0_196 = arith.constant 0 : index
    %c0_197 = arith.constant 0 : index
    %223 = vector.load %arg8[%c19_195, %c0_196, %c0_197] : memref<49x128x128xf32, #tpu.memory_space<vmem>>, vector<1x128x128xf32>
    %224 = vector.shape_cast %223 : vector<1x128x128xf32> to vector<128x128xf32>
    %cst_198 = arith.constant dense<0.000000e+00> : vector<4x128xf32>
    %225 = tpu.matmul %222, %224, %cst_198 {dimension_numbers = #tpu.dot_dimension_numbers<[1], [0], [0], [1], [0, 0, 1, 1], [], []>} : vector<4x128xf32>, vector<128x128xf32>, vector<4x128xf32> -> vector<4x128xf32>
    %226 = arith.addf %219, %225 : vector<4x128xf32>
    %c20 = arith.constant 20 : index
    %c0_199 = arith.constant 0 : index
    %c0_200 = arith.constant 0 : index
    %227 = vector.load %arg7[%c20, %c0_199, %c0_200] : memref<49x4x196xf32, #tpu.memory_space<vmem>>, vector<1x4x196xf32>
    %228 = vector.shape_cast %227 : vector<1x4x196xf32> to vector<4x196xf32>
    %cst_201 = arith.constant dense<0.000000e+00> : vector<4x128xf32>
    %229 = tpu.matmul %228, %85, %cst_201 {dimension_numbers = #tpu.dot_dimension_numbers<[1], [0], [0], [1], [0, 0, 1, 1], [], []>} : vector<4x196xf32>, vector<196x128xf32>, vector<4x128xf32> -> vector<4x128xf32>
    %c20_202 = arith.constant 20 : index
    %c0_203 = arith.constant 0 : index
    %c0_204 = arith.constant 0 : index
    %230 = vector.load %arg8[%c20_202, %c0_203, %c0_204] : memref<49x128x128xf32, #tpu.memory_space<vmem>>, vector<1x128x128xf32>
    %231 = vector.shape_cast %230 : vector<1x128x128xf32> to vector<128x128xf32>
    %cst_205 = arith.constant dense<0.000000e+00> : vector<4x128xf32>
    %232 = tpu.matmul %229, %231, %cst_205 {dimension_numbers = #tpu.dot_dimension_numbers<[1], [0], [0], [1], [0, 0, 1, 1], [], []>} : vector<4x128xf32>, vector<128x128xf32>, vector<4x128xf32> -> vector<4x128xf32>
    %233 = arith.addf %226, %232 : vector<4x128xf32>
    %c21 = arith.constant 21 : index
    %c0_206 = arith.constant 0 : index
    %c0_207 = arith.constant 0 : index
    %234 = vector.load %arg7[%c21, %c0_206, %c0_207] : memref<49x4x196xf32, #tpu.memory_space<vmem>>, vector<1x4x196xf32>
    %235 = vector.shape_cast %234 : vector<1x4x196xf32> to vector<4x196xf32>
    %cst_208 = arith.constant dense<0.000000e+00> : vector<4x128xf32>
    %236 = tpu.matmul %235, %85, %cst_208 {dimension_numbers = #tpu.dot_dimension_numbers<[1], [0], [0], [1], [0, 0, 1, 1], [], []>} : vector<4x196xf32>, vector<196x128xf32>, vector<4x128xf32> -> vector<4x128xf32>
    %c21_209 = arith.constant 21 : index
    %c0_210 = arith.constant 0 : index
    %c0_211 = arith.constant 0 : index
    %237 = vector.load %arg8[%c21_209, %c0_210, %c0_211] : memref<49x128x128xf32, #tpu.memory_space<vmem>>, vector<1x128x128xf32>
    %238 = vector.shape_cast %237 : vector<1x128x128xf32> to vector<128x128xf32>
    %cst_212 = arith.constant dense<0.000000e+00> : vector<4x128xf32>
    %239 = tpu.matmul %236, %238, %cst_212 {dimension_numbers = #tpu.dot_dimension_numbers<[1], [0], [0], [1], [0, 0, 1, 1], [], []>} : vector<4x128xf32>, vector<128x128xf32>, vector<4x128xf32> -> vector<4x128xf32>
    %240 = arith.addf %233, %239 : vector<4x128xf32>
    %c22 = arith.constant 22 : index
    %c0_213 = arith.constant 0 : index
    %c0_214 = arith.constant 0 : index
    %241 = vector.load %arg7[%c22, %c0_213, %c0_214] : memref<49x4x196xf32, #tpu.memory_space<vmem>>, vector<1x4x196xf32>
    %242 = vector.shape_cast %241 : vector<1x4x196xf32> to vector<4x196xf32>
    %cst_215 = arith.constant dense<0.000000e+00> : vector<4x128xf32>
    %243 = tpu.matmul %242, %85, %cst_215 {dimension_numbers = #tpu.dot_dimension_numbers<[1], [0], [0], [1], [0, 0, 1, 1], [], []>} : vector<4x196xf32>, vector<196x128xf32>, vector<4x128xf32> -> vector<4x128xf32>
    %c22_216 = arith.constant 22 : index
    %c0_217 = arith.constant 0 : index
    %c0_218 = arith.constant 0 : index
    %244 = vector.load %arg8[%c22_216, %c0_217, %c0_218] : memref<49x128x128xf32, #tpu.memory_space<vmem>>, vector<1x128x128xf32>
    %245 = vector.shape_cast %244 : vector<1x128x128xf32> to vector<128x128xf32>
    %cst_219 = arith.constant dense<0.000000e+00> : vector<4x128xf32>
    %246 = tpu.matmul %243, %245, %cst_219 {dimension_numbers = #tpu.dot_dimension_numbers<[1], [0], [0], [1], [0, 0, 1, 1], [], []>} : vector<4x128xf32>, vector<128x128xf32>, vector<4x128xf32> -> vector<4x128xf32>
    %247 = arith.addf %240, %246 : vector<4x128xf32>
    %c23 = arith.constant 23 : index
    %c0_220 = arith.constant 0 : index
    %c0_221 = arith.constant 0 : index
    %248 = vector.load %arg7[%c23, %c0_220, %c0_221] : memref<49x4x196xf32, #tpu.memory_space<vmem>>, vector<1x4x196xf32>
    %249 = vector.shape_cast %248 : vector<1x4x196xf32> to vector<4x196xf32>
    %cst_222 = arith.constant dense<0.000000e+00> : vector<4x128xf32>
    %250 = tpu.matmul %249, %85, %cst_222 {dimension_numbers = #tpu.dot_dimension_numbers<[1], [0], [0], [1], [0, 0, 1, 1], [], []>} : vector<4x196xf32>, vector<196x128xf32>, vector<4x128xf32> -> vector<4x128xf32>
    %c23_223 = arith.constant 23 : index
    %c0_224 = arith.constant 0 : index
    %c0_225 = arith.constant 0 : index
    %251 = vector.load %arg8[%c23_223, %c0_224, %c0_225] : memref<49x128x128xf32, #tpu.memory_space<vmem>>, vector<1x128x128xf32>
    %252 = vector.shape_cast %251 : vector<1x128x128xf32> to vector<128x128xf32>
    %cst_226 = arith.constant dense<0.000000e+00> : vector<4x128xf32>
    %253 = tpu.matmul %250, %252, %cst_226 {dimension_numbers = #tpu.dot_dimension_numbers<[1], [0], [0], [1], [0, 0, 1, 1], [], []>} : vector<4x128xf32>, vector<128x128xf32>, vector<4x128xf32> -> vector<4x128xf32>
    %254 = arith.addf %247, %253 : vector<4x128xf32>
    %c24 = arith.constant 24 : index
    %c0_227 = arith.constant 0 : index
    %c0_228 = arith.constant 0 : index
    %255 = vector.load %arg7[%c24, %c0_227, %c0_228] : memref<49x4x196xf32, #tpu.memory_space<vmem>>, vector<1x4x196xf32>
    %256 = vector.shape_cast %255 : vector<1x4x196xf32> to vector<4x196xf32>
    %cst_229 = arith.constant dense<0.000000e+00> : vector<4x128xf32>
    %257 = tpu.matmul %256, %85, %cst_229 {dimension_numbers = #tpu.dot_dimension_numbers<[1], [0], [0], [1], [0, 0, 1, 1], [], []>} : vector<4x196xf32>, vector<196x128xf32>, vector<4x128xf32> -> vector<4x128xf32>
    %c24_230 = arith.constant 24 : index
    %c0_231 = arith.constant 0 : index
    %c0_232 = arith.constant 0 : index
    %258 = vector.load %arg8[%c24_230, %c0_231, %c0_232] : memref<49x128x128xf32, #tpu.memory_space<vmem>>, vector<1x128x128xf32>
    %259 = vector.shape_cast %258 : vector<1x128x128xf32> to vector<128x128xf32>
    %cst_233 = arith.constant dense<0.000000e+00> : vector<4x128xf32>
    %260 = tpu.matmul %257, %259, %cst_233 {dimension_numbers = #tpu.dot_dimension_numbers<[1], [0], [0], [1], [0, 0, 1, 1], [], []>} : vector<4x128xf32>, vector<128x128xf32>, vector<4x128xf32> -> vector<4x128xf32>
    %261 = arith.addf %254, %260 : vector<4x128xf32>
    %c25 = arith.constant 25 : index
    %c0_234 = arith.constant 0 : index
    %c0_235 = arith.constant 0 : index
    %262 = vector.load %arg7[%c25, %c0_234, %c0_235] : memref<49x4x196xf32, #tpu.memory_space<vmem>>, vector<1x4x196xf32>
    %263 = vector.shape_cast %262 : vector<1x4x196xf32> to vector<4x196xf32>
    %cst_236 = arith.constant dense<0.000000e+00> : vector<4x128xf32>
    %264 = tpu.matmul %263, %85, %cst_236 {dimension_numbers = #tpu.dot_dimension_numbers<[1], [0], [0], [1], [0, 0, 1, 1], [], []>} : vector<4x196xf32>, vector<196x128xf32>, vector<4x128xf32> -> vector<4x128xf32>
    %c25_237 = arith.constant 25 : index
    %c0_238 = arith.constant 0 : index
    %c0_239 = arith.constant 0 : index
    %265 = vector.load %arg8[%c25_237, %c0_238, %c0_239] : memref<49x128x128xf32, #tpu.memory_space<vmem>>, vector<1x128x128xf32>
    %266 = vector.shape_cast %265 : vector<1x128x128xf32> to vector<128x128xf32>
    %cst_240 = arith.constant dense<0.000000e+00> : vector<4x128xf32>
    %267 = tpu.matmul %264, %266, %cst_240 {dimension_numbers = #tpu.dot_dimension_numbers<[1], [0], [0], [1], [0, 0, 1, 1], [], []>} : vector<4x128xf32>, vector<128x128xf32>, vector<4x128xf32> -> vector<4x128xf32>
    %268 = arith.addf %261, %267 : vector<4x128xf32>
    %c26 = arith.constant 26 : index
    %c0_241 = arith.constant 0 : index
    %c0_242 = arith.constant 0 : index
    %269 = vector.load %arg7[%c26, %c0_241, %c0_242] : memref<49x4x196xf32, #tpu.memory_space<vmem>>, vector<1x4x196xf32>
    %270 = vector.shape_cast %269 : vector<1x4x196xf32> to vector<4x196xf32>
    %cst_243 = arith.constant dense<0.000000e+00> : vector<4x128xf32>
    %271 = tpu.matmul %270, %85, %cst_243 {dimension_numbers = #tpu.dot_dimension_numbers<[1], [0], [0], [1], [0, 0, 1, 1], [], []>} : vector<4x196xf32>, vector<196x128xf32>, vector<4x128xf32> -> vector<4x128xf32>
    %c26_244 = arith.constant 26 : index
    %c0_245 = arith.constant 0 : index
    %c0_246 = arith.constant 0 : index
    %272 = vector.load %arg8[%c26_244, %c0_245, %c0_246] : memref<49x128x128xf32, #tpu.memory_space<vmem>>, vector<1x128x128xf32>
    %273 = vector.shape_cast %272 : vector<1x128x128xf32> to vector<128x128xf32>
    %cst_247 = arith.constant dense<0.000000e+00> : vector<4x128xf32>
    %274 = tpu.matmul %271, %273, %cst_247 {dimension_numbers = #tpu.dot_dimension_numbers<[1], [0], [0], [1], [0, 0, 1, 1], [], []>} : vector<4x128xf32>, vector<128x128xf32>, vector<4x128xf32> -> vector<4x128xf32>
    %275 = arith.addf %268, %274 : vector<4x128xf32>
    %c27 = arith.constant 27 : index
    %c0_248 = arith.constant 0 : index
    %c0_249 = arith.constant 0 : index
    %276 = vector.load %arg7[%c27, %c0_248, %c0_249] : memref<49x4x196xf32, #tpu.memory_space<vmem>>, vector<1x4x196xf32>
    %277 = vector.shape_cast %276 : vector<1x4x196xf32> to vector<4x196xf32>
    %cst_250 = arith.constant dense<0.000000e+00> : vector<4x128xf32>
    %278 = tpu.matmul %277, %85, %cst_250 {dimension_numbers = #tpu.dot_dimension_numbers<[1], [0], [0], [1], [0, 0, 1, 1], [], []>} : vector<4x196xf32>, vector<196x128xf32>, vector<4x128xf32> -> vector<4x128xf32>
    %c27_251 = arith.constant 27 : index
    %c0_252 = arith.constant 0 : index
    %c0_253 = arith.constant 0 : index
    %279 = vector.load %arg8[%c27_251, %c0_252, %c0_253] : memref<49x128x128xf32, #tpu.memory_space<vmem>>, vector<1x128x128xf32>
    %280 = vector.shape_cast %279 : vector<1x128x128xf32> to vector<128x128xf32>
    %cst_254 = arith.constant dense<0.000000e+00> : vector<4x128xf32>
    %281 = tpu.matmul %278, %280, %cst_254 {dimension_numbers = #tpu.dot_dimension_numbers<[1], [0], [0], [1], [0, 0, 1, 1], [], []>} : vector<4x128xf32>, vector<128x128xf32>, vector<4x128xf32> -> vector<4x128xf32>
    %282 = arith.addf %275, %281 : vector<4x128xf32>
    %c28 = arith.constant 28 : index
    %c0_255 = arith.constant 0 : index
    %c0_256 = arith.constant 0 : index
    %283 = vector.load %arg7[%c28, %c0_255, %c0_256] : memref<49x4x196xf32, #tpu.memory_space<vmem>>, vector<1x4x196xf32>
    %284 = vector.shape_cast %283 : vector<1x4x196xf32> to vector<4x196xf32>
    %cst_257 = arith.constant dense<0.000000e+00> : vector<4x128xf32>
    %285 = tpu.matmul %284, %85, %cst_257 {dimension_numbers = #tpu.dot_dimension_numbers<[1], [0], [0], [1], [0, 0, 1, 1], [], []>} : vector<4x196xf32>, vector<196x128xf32>, vector<4x128xf32> -> vector<4x128xf32>
    %c28_258 = arith.constant 28 : index
    %c0_259 = arith.constant 0 : index
    %c0_260 = arith.constant 0 : index
    %286 = vector.load %arg8[%c28_258, %c0_259, %c0_260] : memref<49x128x128xf32, #tpu.memory_space<vmem>>, vector<1x128x128xf32>
    %287 = vector.shape_cast %286 : vector<1x128x128xf32> to vector<128x128xf32>
    %cst_261 = arith.constant dense<0.000000e+00> : vector<4x128xf32>
    %288 = tpu.matmul %285, %287, %cst_261 {dimension_numbers = #tpu.dot_dimension_numbers<[1], [0], [0], [1], [0, 0, 1, 1], [], []>} : vector<4x128xf32>, vector<128x128xf32>, vector<4x128xf32> -> vector<4x128xf32>
    %289 = arith.addf %282, %288 : vector<4x128xf32>
    %c29 = arith.constant 29 : index
    %c0_262 = arith.constant 0 : index
    %c0_263 = arith.constant 0 : index
    %290 = vector.load %arg7[%c29, %c0_262, %c0_263] : memref<49x4x196xf32, #tpu.memory_space<vmem>>, vector<1x4x196xf32>
    %291 = vector.shape_cast %290 : vector<1x4x196xf32> to vector<4x196xf32>
    %cst_264 = arith.constant dense<0.000000e+00> : vector<4x128xf32>
    %292 = tpu.matmul %291, %85, %cst_264 {dimension_numbers = #tpu.dot_dimension_numbers<[1], [0], [0], [1], [0, 0, 1, 1], [], []>} : vector<4x196xf32>, vector<196x128xf32>, vector<4x128xf32> -> vector<4x128xf32>
    %c29_265 = arith.constant 29 : index
    %c0_266 = arith.constant 0 : index
    %c0_267 = arith.constant 0 : index
    %293 = vector.load %arg8[%c29_265, %c0_266, %c0_267] : memref<49x128x128xf32, #tpu.memory_space<vmem>>, vector<1x128x128xf32>
    %294 = vector.shape_cast %293 : vector<1x128x128xf32> to vector<128x128xf32>
    %cst_268 = arith.constant dense<0.000000e+00> : vector<4x128xf32>
    %295 = tpu.matmul %292, %294, %cst_268 {dimension_numbers = #tpu.dot_dimension_numbers<[1], [0], [0], [1], [0, 0, 1, 1], [], []>} : vector<4x128xf32>, vector<128x128xf32>, vector<4x128xf32> -> vector<4x128xf32>
    %296 = arith.addf %289, %295 : vector<4x128xf32>
    %c30 = arith.constant 30 : index
    %c0_269 = arith.constant 0 : index
    %c0_270 = arith.constant 0 : index
    %297 = vector.load %arg7[%c30, %c0_269, %c0_270] : memref<49x4x196xf32, #tpu.memory_space<vmem>>, vector<1x4x196xf32>
    %298 = vector.shape_cast %297 : vector<1x4x196xf32> to vector<4x196xf32>
    %cst_271 = arith.constant dense<0.000000e+00> : vector<4x128xf32>
    %299 = tpu.matmul %298, %85, %cst_271 {dimension_numbers = #tpu.dot_dimension_numbers<[1], [0], [0], [1], [0, 0, 1, 1], [], []>} : vector<4x196xf32>, vector<196x128xf32>, vector<4x128xf32> -> vector<4x128xf32>
    %c30_272 = arith.constant 30 : index
    %c0_273 = arith.constant 0 : index
    %c0_274 = arith.constant 0 : index
    %300 = vector.load %arg8[%c30_272, %c0_273, %c0_274] : memref<49x128x128xf32, #tpu.memory_space<vmem>>, vector<1x128x128xf32>
    %301 = vector.shape_cast %300 : vector<1x128x128xf32> to vector<128x128xf32>
    %cst_275 = arith.constant dense<0.000000e+00> : vector<4x128xf32>
    %302 = tpu.matmul %299, %301, %cst_275 {dimension_numbers = #tpu.dot_dimension_numbers<[1], [0], [0], [1], [0, 0, 1, 1], [], []>} : vector<4x128xf32>, vector<128x128xf32>, vector<4x128xf32> -> vector<4x128xf32>
    %303 = arith.addf %296, %302 : vector<4x128xf32>
    %c31 = arith.constant 31 : index
    %c0_276 = arith.constant 0 : index
    %c0_277 = arith.constant 0 : index
    %304 = vector.load %arg7[%c31, %c0_276, %c0_277] : memref<49x4x196xf32, #tpu.memory_space<vmem>>, vector<1x4x196xf32>
    %305 = vector.shape_cast %304 : vector<1x4x196xf32> to vector<4x196xf32>
    %cst_278 = arith.constant dense<0.000000e+00> : vector<4x128xf32>
    %306 = tpu.matmul %305, %85, %cst_278 {dimension_numbers = #tpu.dot_dimension_numbers<[1], [0], [0], [1], [0, 0, 1, 1], [], []>} : vector<4x196xf32>, vector<196x128xf32>, vector<4x128xf32> -> vector<4x128xf32>
    %c31_279 = arith.constant 31 : index
    %c0_280 = arith.constant 0 : index
    %c0_281 = arith.constant 0 : index
    %307 = vector.load %arg8[%c31_279, %c0_280, %c0_281] : memref<49x128x128xf32, #tpu.memory_space<vmem>>, vector<1x128x128xf32>
    %308 = vector.shape_cast %307 : vector<1x128x128xf32> to vector<128x128xf32>
    %cst_282 = arith.constant dense<0.000000e+00> : vector<4x128xf32>
    %309 = tpu.matmul %306, %308, %cst_282 {dimension_numbers = #tpu.dot_dimension_numbers<[1], [0], [0], [1], [0, 0, 1, 1], [], []>} : vector<4x128xf32>, vector<128x128xf32>, vector<4x128xf32> -> vector<4x128xf32>
    %310 = arith.addf %303, %309 : vector<4x128xf32>
    %c32 = arith.constant 32 : index
    %c0_283 = arith.constant 0 : index
    %c0_284 = arith.constant 0 : index
    %311 = vector.load %arg7[%c32, %c0_283, %c0_284] : memref<49x4x196xf32, #tpu.memory_space<vmem>>, vector<1x4x196xf32>
    %312 = vector.shape_cast %311 : vector<1x4x196xf32> to vector<4x196xf32>
    %cst_285 = arith.constant dense<0.000000e+00> : vector<4x128xf32>
    %313 = tpu.matmul %312, %85, %cst_285 {dimension_numbers = #tpu.dot_dimension_numbers<[1], [0], [0], [1], [0, 0, 1, 1], [], []>} : vector<4x196xf32>, vector<196x128xf32>, vector<4x128xf32> -> vector<4x128xf32>
    %c32_286 = arith.constant 32 : index
    %c0_287 = arith.constant 0 : index
    %c0_288 = arith.constant 0 : index
    %314 = vector.load %arg8[%c32_286, %c0_287, %c0_288] : memref<49x128x128xf32, #tpu.memory_space<vmem>>, vector<1x128x128xf32>
    %315 = vector.shape_cast %314 : vector<1x128x128xf32> to vector<128x128xf32>
    %cst_289 = arith.constant dense<0.000000e+00> : vector<4x128xf32>
    %316 = tpu.matmul %313, %315, %cst_289 {dimension_numbers = #tpu.dot_dimension_numbers<[1], [0], [0], [1], [0, 0, 1, 1], [], []>} : vector<4x128xf32>, vector<128x128xf32>, vector<4x128xf32> -> vector<4x128xf32>
    %317 = arith.addf %310, %316 : vector<4x128xf32>
    %c33 = arith.constant 33 : index
    %c0_290 = arith.constant 0 : index
    %c0_291 = arith.constant 0 : index
    %318 = vector.load %arg7[%c33, %c0_290, %c0_291] : memref<49x4x196xf32, #tpu.memory_space<vmem>>, vector<1x4x196xf32>
    %319 = vector.shape_cast %318 : vector<1x4x196xf32> to vector<4x196xf32>
    %cst_292 = arith.constant dense<0.000000e+00> : vector<4x128xf32>
    %320 = tpu.matmul %319, %85, %cst_292 {dimension_numbers = #tpu.dot_dimension_numbers<[1], [0], [0], [1], [0, 0, 1, 1], [], []>} : vector<4x196xf32>, vector<196x128xf32>, vector<4x128xf32> -> vector<4x128xf32>
    %c33_293 = arith.constant 33 : index
    %c0_294 = arith.constant 0 : index
    %c0_295 = arith.constant 0 : index
    %321 = vector.load %arg8[%c33_293, %c0_294, %c0_295] : memref<49x128x128xf32, #tpu.memory_space<vmem>>, vector<1x128x128xf32>
    %322 = vector.shape_cast %321 : vector<1x128x128xf32> to vector<128x128xf32>
    %cst_296 = arith.constant dense<0.000000e+00> : vector<4x128xf32>
    %323 = tpu.matmul %320, %322, %cst_296 {dimension_numbers = #tpu.dot_dimension_numbers<[1], [0], [0], [1], [0, 0, 1, 1], [], []>} : vector<4x128xf32>, vector<128x128xf32>, vector<4x128xf32> -> vector<4x128xf32>
    %324 = arith.addf %317, %323 : vector<4x128xf32>
    %c34 = arith.constant 34 : index
    %c0_297 = arith.constant 0 : index
    %c0_298 = arith.constant 0 : index
    %325 = vector.load %arg7[%c34, %c0_297, %c0_298] : memref<49x4x196xf32, #tpu.memory_space<vmem>>, vector<1x4x196xf32>
    %326 = vector.shape_cast %325 : vector<1x4x196xf32> to vector<4x196xf32>
    %cst_299 = arith.constant dense<0.000000e+00> : vector<4x128xf32>
    %327 = tpu.matmul %326, %85, %cst_299 {dimension_numbers = #tpu.dot_dimension_numbers<[1], [0], [0], [1], [0, 0, 1, 1], [], []>} : vector<4x196xf32>, vector<196x128xf32>, vector<4x128xf32> -> vector<4x128xf32>
    %c34_300 = arith.constant 34 : index
    %c0_301 = arith.constant 0 : index
    %c0_302 = arith.constant 0 : index
    %328 = vector.load %arg8[%c34_300, %c0_301, %c0_302] : memref<49x128x128xf32, #tpu.memory_space<vmem>>, vector<1x128x128xf32>
    %329 = vector.shape_cast %328 : vector<1x128x128xf32> to vector<128x128xf32>
    %cst_303 = arith.constant dense<0.000000e+00> : vector<4x128xf32>
    %330 = tpu.matmul %327, %329, %cst_303 {dimension_numbers = #tpu.dot_dimension_numbers<[1], [0], [0], [1], [0, 0, 1, 1], [], []>} : vector<4x128xf32>, vector<128x128xf32>, vector<4x128xf32> -> vector<4x128xf32>
    %331 = arith.addf %324, %330 : vector<4x128xf32>
    %c35 = arith.constant 35 : index
    %c0_304 = arith.constant 0 : index
    %c0_305 = arith.constant 0 : index
    %332 = vector.load %arg7[%c35, %c0_304, %c0_305] : memref<49x4x196xf32, #tpu.memory_space<vmem>>, vector<1x4x196xf32>
    %333 = vector.shape_cast %332 : vector<1x4x196xf32> to vector<4x196xf32>
    %cst_306 = arith.constant dense<0.000000e+00> : vector<4x128xf32>
    %334 = tpu.matmul %333, %85, %cst_306 {dimension_numbers = #tpu.dot_dimension_numbers<[1], [0], [0], [1], [0, 0, 1, 1], [], []>} : vector<4x196xf32>, vector<196x128xf32>, vector<4x128xf32> -> vector<4x128xf32>
    %c35_307 = arith.constant 35 : index
    %c0_308 = arith.constant 0 : index
    %c0_309 = arith.constant 0 : index
    %335 = vector.load %arg8[%c35_307, %c0_308, %c0_309] : memref<49x128x128xf32, #tpu.memory_space<vmem>>, vector<1x128x128xf32>
    %336 = vector.shape_cast %335 : vector<1x128x128xf32> to vector<128x128xf32>
    %cst_310 = arith.constant dense<0.000000e+00> : vector<4x128xf32>
    %337 = tpu.matmul %334, %336, %cst_310 {dimension_numbers = #tpu.dot_dimension_numbers<[1], [0], [0], [1], [0, 0, 1, 1], [], []>} : vector<4x128xf32>, vector<128x128xf32>, vector<4x128xf32> -> vector<4x128xf32>
    %338 = arith.addf %331, %337 : vector<4x128xf32>
    %c36 = arith.constant 36 : index
    %c0_311 = arith.constant 0 : index
    %c0_312 = arith.constant 0 : index
    %339 = vector.load %arg7[%c36, %c0_311, %c0_312] : memref<49x4x196xf32, #tpu.memory_space<vmem>>, vector<1x4x196xf32>
    %340 = vector.shape_cast %339 : vector<1x4x196xf32> to vector<4x196xf32>
    %cst_313 = arith.constant dense<0.000000e+00> : vector<4x128xf32>
    %341 = tpu.matmul %340, %85, %cst_313 {dimension_numbers = #tpu.dot_dimension_numbers<[1], [0], [0], [1], [0, 0, 1, 1], [], []>} : vector<4x196xf32>, vector<196x128xf32>, vector<4x128xf32> -> vector<4x128xf32>
    %c36_314 = arith.constant 36 : index
    %c0_315 = arith.constant 0 : index
    %c0_316 = arith.constant 0 : index
    %342 = vector.load %arg8[%c36_314, %c0_315, %c0_316] : memref<49x128x128xf32, #tpu.memory_space<vmem>>, vector<1x128x128xf32>
    %343 = vector.shape_cast %342 : vector<1x128x128xf32> to vector<128x128xf32>
    %cst_317 = arith.constant dense<0.000000e+00> : vector<4x128xf32>
    %344 = tpu.matmul %341, %343, %cst_317 {dimension_numbers = #tpu.dot_dimension_numbers<[1], [0], [0], [1], [0, 0, 1, 1], [], []>} : vector<4x128xf32>, vector<128x128xf32>, vector<4x128xf32> -> vector<4x128xf32>
    %345 = arith.addf %338, %344 : vector<4x128xf32>
    %c37 = arith.constant 37 : index
    %c0_318 = arith.constant 0 : index
    %c0_319 = arith.constant 0 : index
    %346 = vector.load %arg7[%c37, %c0_318, %c0_319] : memref<49x4x196xf32, #tpu.memory_space<vmem>>, vector<1x4x196xf32>
    %347 = vector.shape_cast %346 : vector<1x4x196xf32> to vector<4x196xf32>
    %cst_320 = arith.constant dense<0.000000e+00> : vector<4x128xf32>
    %348 = tpu.matmul %347, %85, %cst_320 {dimension_numbers = #tpu.dot_dimension_numbers<[1], [0], [0], [1], [0, 0, 1, 1], [], []>} : vector<4x196xf32>, vector<196x128xf32>, vector<4x128xf32> -> vector<4x128xf32>
    %c37_321 = arith.constant 37 : index
    %c0_322 = arith.constant 0 : index
    %c0_323 = arith.constant 0 : index
    %349 = vector.load %arg8[%c37_321, %c0_322, %c0_323] : memref<49x128x128xf32, #tpu.memory_space<vmem>>, vector<1x128x128xf32>
    %350 = vector.shape_cast %349 : vector<1x128x128xf32> to vector<128x128xf32>
    %cst_324 = arith.constant dense<0.000000e+00> : vector<4x128xf32>
    %351 = tpu.matmul %348, %350, %cst_324 {dimension_numbers = #tpu.dot_dimension_numbers<[1], [0], [0], [1], [0, 0, 1, 1], [], []>} : vector<4x128xf32>, vector<128x128xf32>, vector<4x128xf32> -> vector<4x128xf32>
    %352 = arith.addf %345, %351 : vector<4x128xf32>
    %c38 = arith.constant 38 : index
    %c0_325 = arith.constant 0 : index
    %c0_326 = arith.constant 0 : index
    %353 = vector.load %arg7[%c38, %c0_325, %c0_326] : memref<49x4x196xf32, #tpu.memory_space<vmem>>, vector<1x4x196xf32>
    %354 = vector.shape_cast %353 : vector<1x4x196xf32> to vector<4x196xf32>
    %cst_327 = arith.constant dense<0.000000e+00> : vector<4x128xf32>
    %355 = tpu.matmul %354, %85, %cst_327 {dimension_numbers = #tpu.dot_dimension_numbers<[1], [0], [0], [1], [0, 0, 1, 1], [], []>} : vector<4x196xf32>, vector<196x128xf32>, vector<4x128xf32> -> vector<4x128xf32>
    %c38_328 = arith.constant 38 : index
    %c0_329 = arith.constant 0 : index
    %c0_330 = arith.constant 0 : index
    %356 = vector.load %arg8[%c38_328, %c0_329, %c0_330] : memref<49x128x128xf32, #tpu.memory_space<vmem>>, vector<1x128x128xf32>
    %357 = vector.shape_cast %356 : vector<1x128x128xf32> to vector<128x128xf32>
    %cst_331 = arith.constant dense<0.000000e+00> : vector<4x128xf32>
    %358 = tpu.matmul %355, %357, %cst_331 {dimension_numbers = #tpu.dot_dimension_numbers<[1], [0], [0], [1], [0, 0, 1, 1], [], []>} : vector<4x128xf32>, vector<128x128xf32>, vector<4x128xf32> -> vector<4x128xf32>
    %359 = arith.addf %352, %358 : vector<4x128xf32>
    %c39 = arith.constant 39 : index
    %c0_332 = arith.constant 0 : index
    %c0_333 = arith.constant 0 : index
    %360 = vector.load %arg7[%c39, %c0_332, %c0_333] : memref<49x4x196xf32, #tpu.memory_space<vmem>>, vector<1x4x196xf32>
    %361 = vector.shape_cast %360 : vector<1x4x196xf32> to vector<4x196xf32>
    %cst_334 = arith.constant dense<0.000000e+00> : vector<4x128xf32>
    %362 = tpu.matmul %361, %85, %cst_334 {dimension_numbers = #tpu.dot_dimension_numbers<[1], [0], [0], [1], [0, 0, 1, 1], [], []>} : vector<4x196xf32>, vector<196x128xf32>, vector<4x128xf32> -> vector<4x128xf32>
    %c39_335 = arith.constant 39 : index
    %c0_336 = arith.constant 0 : index
    %c0_337 = arith.constant 0 : index
    %363 = vector.load %arg8[%c39_335, %c0_336, %c0_337] : memref<49x128x128xf32, #tpu.memory_space<vmem>>, vector<1x128x128xf32>
    %364 = vector.shape_cast %363 : vector<1x128x128xf32> to vector<128x128xf32>
    %cst_338 = arith.constant dense<0.000000e+00> : vector<4x128xf32>
    %365 = tpu.matmul %362, %364, %cst_338 {dimension_numbers = #tpu.dot_dimension_numbers<[1], [0], [0], [1], [0, 0, 1, 1], [], []>} : vector<4x128xf32>, vector<128x128xf32>, vector<4x128xf32> -> vector<4x128xf32>
    %366 = arith.addf %359, %365 : vector<4x128xf32>
    %c40 = arith.constant 40 : index
    %c0_339 = arith.constant 0 : index
    %c0_340 = arith.constant 0 : index
    %367 = vector.load %arg7[%c40, %c0_339, %c0_340] : memref<49x4x196xf32, #tpu.memory_space<vmem>>, vector<1x4x196xf32>
    %368 = vector.shape_cast %367 : vector<1x4x196xf32> to vector<4x196xf32>
    %cst_341 = arith.constant dense<0.000000e+00> : vector<4x128xf32>
    %369 = tpu.matmul %368, %85, %cst_341 {dimension_numbers = #tpu.dot_dimension_numbers<[1], [0], [0], [1], [0, 0, 1, 1], [], []>} : vector<4x196xf32>, vector<196x128xf32>, vector<4x128xf32> -> vector<4x128xf32>
    %c40_342 = arith.constant 40 : index
    %c0_343 = arith.constant 0 : index
    %c0_344 = arith.constant 0 : index
    %370 = vector.load %arg8[%c40_342, %c0_343, %c0_344] : memref<49x128x128xf32, #tpu.memory_space<vmem>>, vector<1x128x128xf32>
    %371 = vector.shape_cast %370 : vector<1x128x128xf32> to vector<128x128xf32>
    %cst_345 = arith.constant dense<0.000000e+00> : vector<4x128xf32>
    %372 = tpu.matmul %369, %371, %cst_345 {dimension_numbers = #tpu.dot_dimension_numbers<[1], [0], [0], [1], [0, 0, 1, 1], [], []>} : vector<4x128xf32>, vector<128x128xf32>, vector<4x128xf32> -> vector<4x128xf32>
    %373 = arith.addf %366, %372 : vector<4x128xf32>
    %c41 = arith.constant 41 : index
    %c0_346 = arith.constant 0 : index
    %c0_347 = arith.constant 0 : index
    %374 = vector.load %arg7[%c41, %c0_346, %c0_347] : memref<49x4x196xf32, #tpu.memory_space<vmem>>, vector<1x4x196xf32>
    %375 = vector.shape_cast %374 : vector<1x4x196xf32> to vector<4x196xf32>
    %cst_348 = arith.constant dense<0.000000e+00> : vector<4x128xf32>
    %376 = tpu.matmul %375, %85, %cst_348 {dimension_numbers = #tpu.dot_dimension_numbers<[1], [0], [0], [1], [0, 0, 1, 1], [], []>} : vector<4x196xf32>, vector<196x128xf32>, vector<4x128xf32> -> vector<4x128xf32>
    %c41_349 = arith.constant 41 : index
    %c0_350 = arith.constant 0 : index
    %c0_351 = arith.constant 0 : index
    %377 = vector.load %arg8[%c41_349, %c0_350, %c0_351] : memref<49x128x128xf32, #tpu.memory_space<vmem>>, vector<1x128x128xf32>
    %378 = vector.shape_cast %377 : vector<1x128x128xf32> to vector<128x128xf32>
    %cst_352 = arith.constant dense<0.000000e+00> : vector<4x128xf32>
    %379 = tpu.matmul %376, %378, %cst_352 {dimension_numbers = #tpu.dot_dimension_numbers<[1], [0], [0], [1], [0, 0, 1, 1], [], []>} : vector<4x128xf32>, vector<128x128xf32>, vector<4x128xf32> -> vector<4x128xf32>
    %380 = arith.addf %373, %379 : vector<4x128xf32>
    %c42 = arith.constant 42 : index
    %c0_353 = arith.constant 0 : index
    %c0_354 = arith.constant 0 : index
    %381 = vector.load %arg7[%c42, %c0_353, %c0_354] : memref<49x4x196xf32, #tpu.memory_space<vmem>>, vector<1x4x196xf32>
    %382 = vector.shape_cast %381 : vector<1x4x196xf32> to vector<4x196xf32>
    %cst_355 = arith.constant dense<0.000000e+00> : vector<4x128xf32>
    %383 = tpu.matmul %382, %85, %cst_355 {dimension_numbers = #tpu.dot_dimension_numbers<[1], [0], [0], [1], [0, 0, 1, 1], [], []>} : vector<4x196xf32>, vector<196x128xf32>, vector<4x128xf32> -> vector<4x128xf32>
    %c42_356 = arith.constant 42 : index
    %c0_357 = arith.constant 0 : index
    %c0_358 = arith.constant 0 : index
    %384 = vector.load %arg8[%c42_356, %c0_357, %c0_358] : memref<49x128x128xf32, #tpu.memory_space<vmem>>, vector<1x128x128xf32>
    %385 = vector.shape_cast %384 : vector<1x128x128xf32> to vector<128x128xf32>
    %cst_359 = arith.constant dense<0.000000e+00> : vector<4x128xf32>
    %386 = tpu.matmul %383, %385, %cst_359 {dimension_numbers = #tpu.dot_dimension_numbers<[1], [0], [0], [1], [0, 0, 1, 1], [], []>} : vector<4x128xf32>, vector<128x128xf32>, vector<4x128xf32> -> vector<4x128xf32>
    %387 = arith.addf %380, %386 : vector<4x128xf32>
    %c43 = arith.constant 43 : index
    %c0_360 = arith.constant 0 : index
    %c0_361 = arith.constant 0 : index
    %388 = vector.load %arg7[%c43, %c0_360, %c0_361] : memref<49x4x196xf32, #tpu.memory_space<vmem>>, vector<1x4x196xf32>
    %389 = vector.shape_cast %388 : vector<1x4x196xf32> to vector<4x196xf32>
    %cst_362 = arith.constant dense<0.000000e+00> : vector<4x128xf32>
    %390 = tpu.matmul %389, %85, %cst_362 {dimension_numbers = #tpu.dot_dimension_numbers<[1], [0], [0], [1], [0, 0, 1, 1], [], []>} : vector<4x196xf32>, vector<196x128xf32>, vector<4x128xf32> -> vector<4x128xf32>
    %c43_363 = arith.constant 43 : index
    %c0_364 = arith.constant 0 : index
    %c0_365 = arith.constant 0 : index
    %391 = vector.load %arg8[%c43_363, %c0_364, %c0_365] : memref<49x128x128xf32, #tpu.memory_space<vmem>>, vector<1x128x128xf32>
    %392 = vector.shape_cast %391 : vector<1x128x128xf32> to vector<128x128xf32>
    %cst_366 = arith.constant dense<0.000000e+00> : vector<4x128xf32>
    %393 = tpu.matmul %390, %392, %cst_366 {dimension_numbers = #tpu.dot_dimension_numbers<[1], [0], [0], [1], [0, 0, 1, 1], [], []>} : vector<4x128xf32>, vector<128x128xf32>, vector<4x128xf32> -> vector<4x128xf32>
    %394 = arith.addf %387, %393 : vector<4x128xf32>
    %c44 = arith.constant 44 : index
    %c0_367 = arith.constant 0 : index
    %c0_368 = arith.constant 0 : index
    %395 = vector.load %arg7[%c44, %c0_367, %c0_368] : memref<49x4x196xf32, #tpu.memory_space<vmem>>, vector<1x4x196xf32>
    %396 = vector.shape_cast %395 : vector<1x4x196xf32> to vector<4x196xf32>
    %cst_369 = arith.constant dense<0.000000e+00> : vector<4x128xf32>
    %397 = tpu.matmul %396, %85, %cst_369 {dimension_numbers = #tpu.dot_dimension_numbers<[1], [0], [0], [1], [0, 0, 1, 1], [], []>} : vector<4x196xf32>, vector<196x128xf32>, vector<4x128xf32> -> vector<4x128xf32>
    %c44_370 = arith.constant 44 : index
    %c0_371 = arith.constant 0 : index
    %c0_372 = arith.constant 0 : index
    %398 = vector.load %arg8[%c44_370, %c0_371, %c0_372] : memref<49x128x128xf32, #tpu.memory_space<vmem>>, vector<1x128x128xf32>
    %399 = vector.shape_cast %398 : vector<1x128x128xf32> to vector<128x128xf32>
    %cst_373 = arith.constant dense<0.000000e+00> : vector<4x128xf32>
    %400 = tpu.matmul %397, %399, %cst_373 {dimension_numbers = #tpu.dot_dimension_numbers<[1], [0], [0], [1], [0, 0, 1, 1], [], []>} : vector<4x128xf32>, vector<128x128xf32>, vector<4x128xf32> -> vector<4x128xf32>
    %401 = arith.addf %394, %400 : vector<4x128xf32>
    %c45 = arith.constant 45 : index
    %c0_374 = arith.constant 0 : index
    %c0_375 = arith.constant 0 : index
    %402 = vector.load %arg7[%c45, %c0_374, %c0_375] : memref<49x4x196xf32, #tpu.memory_space<vmem>>, vector<1x4x196xf32>
    %403 = vector.shape_cast %402 : vector<1x4x196xf32> to vector<4x196xf32>
    %cst_376 = arith.constant dense<0.000000e+00> : vector<4x128xf32>
    %404 = tpu.matmul %403, %85, %cst_376 {dimension_numbers = #tpu.dot_dimension_numbers<[1], [0], [0], [1], [0, 0, 1, 1], [], []>} : vector<4x196xf32>, vector<196x128xf32>, vector<4x128xf32> -> vector<4x128xf32>
    %c45_377 = arith.constant 45 : index
    %c0_378 = arith.constant 0 : index
    %c0_379 = arith.constant 0 : index
    %405 = vector.load %arg8[%c45_377, %c0_378, %c0_379] : memref<49x128x128xf32, #tpu.memory_space<vmem>>, vector<1x128x128xf32>
    %406 = vector.shape_cast %405 : vector<1x128x128xf32> to vector<128x128xf32>
    %cst_380 = arith.constant dense<0.000000e+00> : vector<4x128xf32>
    %407 = tpu.matmul %404, %406, %cst_380 {dimension_numbers = #tpu.dot_dimension_numbers<[1], [0], [0], [1], [0, 0, 1, 1], [], []>} : vector<4x128xf32>, vector<128x128xf32>, vector<4x128xf32> -> vector<4x128xf32>
    %408 = arith.addf %401, %407 : vector<4x128xf32>
    %c46 = arith.constant 46 : index
    %c0_381 = arith.constant 0 : index
    %c0_382 = arith.constant 0 : index
    %409 = vector.load %arg7[%c46, %c0_381, %c0_382] : memref<49x4x196xf32, #tpu.memory_space<vmem>>, vector<1x4x196xf32>
    %410 = vector.shape_cast %409 : vector<1x4x196xf32> to vector<4x196xf32>
    %cst_383 = arith.constant dense<0.000000e+00> : vector<4x128xf32>
    %411 = tpu.matmul %410, %85, %cst_383 {dimension_numbers = #tpu.dot_dimension_numbers<[1], [0], [0], [1], [0, 0, 1, 1], [], []>} : vector<4x196xf32>, vector<196x128xf32>, vector<4x128xf32> -> vector<4x128xf32>
    %c46_384 = arith.constant 46 : index
    %c0_385 = arith.constant 0 : index
    %c0_386 = arith.constant 0 : index
    %412 = vector.load %arg8[%c46_384, %c0_385, %c0_386] : memref<49x128x128xf32, #tpu.memory_space<vmem>>, vector<1x128x128xf32>
    %413 = vector.shape_cast %412 : vector<1x128x128xf32> to vector<128x128xf32>
    %cst_387 = arith.constant dense<0.000000e+00> : vector<4x128xf32>
    %414 = tpu.matmul %411, %413, %cst_387 {dimension_numbers = #tpu.dot_dimension_numbers<[1], [0], [0], [1], [0, 0, 1, 1], [], []>} : vector<4x128xf32>, vector<128x128xf32>, vector<4x128xf32> -> vector<4x128xf32>
    %415 = arith.addf %408, %414 : vector<4x128xf32>
    %c47 = arith.constant 47 : index
    %c0_388 = arith.constant 0 : index
    %c0_389 = arith.constant 0 : index
    %416 = vector.load %arg7[%c47, %c0_388, %c0_389] : memref<49x4x196xf32, #tpu.memory_space<vmem>>, vector<1x4x196xf32>
    %417 = vector.shape_cast %416 : vector<1x4x196xf32> to vector<4x196xf32>
    %cst_390 = arith.constant dense<0.000000e+00> : vector<4x128xf32>
    %418 = tpu.matmul %417, %85, %cst_390 {dimension_numbers = #tpu.dot_dimension_numbers<[1], [0], [0], [1], [0, 0, 1, 1], [], []>} : vector<4x196xf32>, vector<196x128xf32>, vector<4x128xf32> -> vector<4x128xf32>
    %c47_391 = arith.constant 47 : index
    %c0_392 = arith.constant 0 : index
    %c0_393 = arith.constant 0 : index
    %419 = vector.load %arg8[%c47_391, %c0_392, %c0_393] : memref<49x128x128xf32, #tpu.memory_space<vmem>>, vector<1x128x128xf32>
    %420 = vector.shape_cast %419 : vector<1x128x128xf32> to vector<128x128xf32>
    %cst_394 = arith.constant dense<0.000000e+00> : vector<4x128xf32>
    %421 = tpu.matmul %418, %420, %cst_394 {dimension_numbers = #tpu.dot_dimension_numbers<[1], [0], [0], [1], [0, 0, 1, 1], [], []>} : vector<4x128xf32>, vector<128x128xf32>, vector<4x128xf32> -> vector<4x128xf32>
    %422 = arith.addf %415, %421 : vector<4x128xf32>
    %c48 = arith.constant 48 : index
    %c0_395 = arith.constant 0 : index
    %c0_396 = arith.constant 0 : index
    %423 = vector.load %arg7[%c48, %c0_395, %c0_396] : memref<49x4x196xf32, #tpu.memory_space<vmem>>, vector<1x4x196xf32>
    %424 = vector.shape_cast %423 : vector<1x4x196xf32> to vector<4x196xf32>
    %cst_397 = arith.constant dense<0.000000e+00> : vector<4x128xf32>
    %425 = tpu.matmul %424, %85, %cst_397 {dimension_numbers = #tpu.dot_dimension_numbers<[1], [0], [0], [1], [0, 0, 1, 1], [], []>} : vector<4x196xf32>, vector<196x128xf32>, vector<4x128xf32> -> vector<4x128xf32>
    %c48_398 = arith.constant 48 : index
    %c0_399 = arith.constant 0 : index
    %c0_400 = arith.constant 0 : index
    %426 = vector.load %arg8[%c48_398, %c0_399, %c0_400] : memref<49x128x128xf32, #tpu.memory_space<vmem>>, vector<1x128x128xf32>
    %427 = vector.shape_cast %426 : vector<1x128x128xf32> to vector<128x128xf32>
    %cst_401 = arith.constant dense<0.000000e+00> : vector<4x128xf32>
    %428 = tpu.matmul %425, %427, %cst_401 {dimension_numbers = #tpu.dot_dimension_numbers<[1], [0], [0], [1], [0, 0, 1, 1], [], []>} : vector<4x128xf32>, vector<128x128xf32>, vector<4x128xf32> -> vector<4x128xf32>
    %429 = arith.addf %422, %428 : vector<4x128xf32>
    %c0_402 = arith.constant 0 : index
    %c0_403 = arith.constant 0 : index
    %430 = vector.load %arg9[%c0_402, %c0_403] : memref<1x128xf32, #tpu.memory_space<vmem>>, vector<1x128xf32>
    %431 = vector.broadcast %430 : vector<1x128xf32> to vector<4x128xf32>
    %432 = arith.addf %429, %431 : vector<4x128xf32>
    %cst_404 = arith.constant 0.000000e+00 : f32
    %433 = vector.broadcast %cst_404 : f32 to vector<4x128xf32>
    %434 = arith.maximumf %432, %433 : vector<4x128xf32>
    %c0_405 = arith.constant 0 : index
    %c0_406 = arith.constant 0 : index
    %435 = vector.load %arg12[%c0_405, %c0_406] : memref<1x128xf32, #tpu.memory_space<vmem>>, vector<1x128xf32>
    %c0_407 = arith.constant 0 : index
    %c0_408 = arith.constant 0 : index
    %436 = vector.load %arg13[%c0_407, %c0_408] : memref<1x128xf32, #tpu.memory_space<vmem>>, vector<1x128xf32>
    %cst_409 = arith.constant dense<0.000000e+00> : vector<128xf32>
    %437 = vector.multi_reduction <add>, %434, %cst_409 [0] : vector<4x128xf32> to vector<128xf32>
    %438 = vector.shape_cast %437 : vector<128xf32> to vector<1x128xf32>
    %cst_410 = arith.constant 2.500000e-01 : f32
    %439 = vector.broadcast %cst_410 : f32 to vector<1x128xf32>
    %440 = arith.mulf %438, %439 : vector<1x128xf32>
    %441 = arith.mulf %434, %434 : vector<4x128xf32>
    %cst_411 = arith.constant dense<0.000000e+00> : vector<128xf32>
    %442 = vector.multi_reduction <add>, %441, %cst_411 [0] : vector<4x128xf32> to vector<128xf32>
    %443 = vector.shape_cast %442 : vector<128xf32> to vector<1x128xf32>
    %cst_412 = arith.constant 2.500000e-01 : f32
    %444 = vector.broadcast %cst_412 : f32 to vector<1x128xf32>
    %445 = arith.mulf %443, %444 : vector<1x128xf32>
    %446 = arith.mulf %440, %440 : vector<1x128xf32>
    %447 = arith.subf %445, %446 : vector<1x128xf32>
    %cst_413 = arith.constant 0.000000e+00 : f32
    %448 = vector.broadcast %cst_413 : f32 to vector<1x128xf32>
    %449 = arith.maximumf %447, %448 : vector<1x128xf32>
    %450 = vector.broadcast %440 : vector<1x128xf32> to vector<4x128xf32>
    %451 = arith.subf %434, %450 : vector<4x128xf32>
    %cst_414 = arith.constant 9.99999974E-6 : f32
    %452 = vector.broadcast %cst_414 : f32 to vector<1x128xf32>
    %453 = arith.addf %449, %452 : vector<1x128xf32>
    %454 = math.rsqrt %453 : vector<1x128xf32>
    %455 = arith.mulf %435, %454 : vector<1x128xf32>
    %456 = vector.broadcast %455 : vector<1x128xf32> to vector<4x128xf32>
    %457 = arith.mulf %451, %456 : vector<4x128xf32>
    %458 = vector.broadcast %436 : vector<1x128xf32> to vector<4x128xf32>
    %459 = arith.addf %457, %458 : vector<4x128xf32>
    %c0_415 = arith.constant 0 : index
    %c0_416 = arith.constant 0 : index
    %460 = vector.load %arg14[%c0_415, %c0_416] : memref<128x128xf32, #tpu.memory_space<vmem>>, vector<128x128xf32>
    %cst_417 = arith.constant dense<0.000000e+00> : vector<4x128xf32>
    %461 = tpu.matmul %459, %460, %cst_417 {dimension_numbers = #tpu.dot_dimension_numbers<[1], [0], [0], [1], [0, 0, 1, 1], [], []>} : vector<4x128xf32>, vector<128x128xf32>, vector<4x128xf32> -> vector<4x128xf32>
    %c0_418 = arith.constant 0 : index
    %c0_419 = arith.constant 0 : index
    %462 = vector.load %arg15[%c0_418, %c0_419] : memref<1x128xf32, #tpu.memory_space<vmem>>, vector<1x128xf32>
    %463 = vector.broadcast %462 : vector<1x128xf32> to vector<4x128xf32>
    %464 = arith.addf %461, %463 : vector<4x128xf32>
    %c0_420 = arith.constant 0 : index
    %c0_421 = arith.constant 0 : index
    %465 = vector.load %arg16[%c0_420, %c0_421] : memref<128x128xf32, #tpu.memory_space<vmem>>, vector<128x128xf32>
    %cst_422 = arith.constant dense<0.000000e+00> : vector<4x128xf32>
    %466 = tpu.matmul %464, %465, %cst_422 {dimension_numbers = #tpu.dot_dimension_numbers<[1], [0], [0], [1], [0, 0, 1, 1], [], []>} : vector<4x128xf32>, vector<128x128xf32>, vector<4x128xf32> -> vector<4x128xf32>
    %c0_423 = arith.constant 0 : index
    %c0_424 = arith.constant 0 : index
    %467 = vector.load %arg18[%c0_423, %c0_424] : memref<1x128xf32, #tpu.memory_space<vmem>>, vector<1x128xf32>
    %468 = vector.broadcast %467 : vector<1x128xf32> to vector<4x128xf32>
    %469 = arith.addf %466, %468 : vector<4x128xf32>
    %c0_425 = arith.constant 0 : index
    %c0_426 = arith.constant 0 : index
    %470 = vector.load %arg19[%c0_425, %c0_426] : memref<1x128xf32, #tpu.memory_space<vmem>>, vector<1x128xf32>
    %471 = vector.broadcast %470 : vector<1x128xf32> to vector<4x128xf32>
    %472 = arith.addf %469, %471 : vector<4x128xf32>
    %c0_427 = arith.constant 0 : index
    %c0_428 = arith.constant 0 : index
    %473 = vector.load %arg17[%c0_427, %c0_428] : memref<128x128xf32, #tpu.memory_space<vmem>>, vector<128x128xf32>
    %c0_429 = arith.constant 0 : index
    %c0_430 = arith.constant 0 : index
    %474 = vector.load %arg20[%c0_429, %c0_430] : memref<1x128xf32, #tpu.memory_space<vmem>>, vector<1x128xf32>
    %475 = vector.extract_strided_slice %472 {offsets = [0, 0], sizes = [1, 128], strides = [1, 1]} : vector<4x128xf32> to vector<1x128xf32>
    %cst_431 = arith.constant dense<0.000000e+00> : vector<1x128xf32>
    %476 = tpu.matmul %474, %473, %cst_431 {dimension_numbers = #tpu.dot_dimension_numbers<[1], [0], [0], [1], [0, 0, 1, 1], [], []>} : vector<1x128xf32>, vector<128x128xf32>, vector<1x128xf32> -> vector<1x128xf32>
    %477 = arith.addf %475, %476 : vector<1x128xf32>
    %478 = math.tanh %477 : vector<1x128xf32>
    %479 = vector.extract_strided_slice %472 {offsets = [1, 0], sizes = [1, 128], strides = [1, 1]} : vector<4x128xf32> to vector<1x128xf32>
    %cst_432 = arith.constant dense<0.000000e+00> : vector<1x128xf32>
    %480 = tpu.matmul %478, %473, %cst_432 {dimension_numbers = #tpu.dot_dimension_numbers<[1], [0], [0], [1], [0, 0, 1, 1], [], []>} : vector<1x128xf32>, vector<128x128xf32>, vector<1x128xf32> -> vector<1x128xf32>
    %481 = arith.addf %479, %480 : vector<1x128xf32>
    %482 = math.tanh %481 : vector<1x128xf32>
    %483 = vector.extract_strided_slice %472 {offsets = [2, 0], sizes = [1, 128], strides = [1, 1]} : vector<4x128xf32> to vector<1x128xf32>
    %cst_433 = arith.constant dense<0.000000e+00> : vector<1x128xf32>
    %484 = tpu.matmul %482, %473, %cst_433 {dimension_numbers = #tpu.dot_dimension_numbers<[1], [0], [0], [1], [0, 0, 1, 1], [], []>} : vector<1x128xf32>, vector<128x128xf32>, vector<1x128xf32> -> vector<1x128xf32>
    %485 = arith.addf %483, %484 : vector<1x128xf32>
    %486 = math.tanh %485 : vector<1x128xf32>
    %487 = vector.extract_strided_slice %472 {offsets = [3, 0], sizes = [1, 128], strides = [1, 1]} : vector<4x128xf32> to vector<1x128xf32>
    %cst_434 = arith.constant dense<0.000000e+00> : vector<1x128xf32>
    %488 = tpu.matmul %486, %473, %cst_434 {dimension_numbers = #tpu.dot_dimension_numbers<[1], [0], [0], [1], [0, 0, 1, 1], [], []>} : vector<1x128xf32>, vector<128x128xf32>, vector<1x128xf32> -> vector<1x128xf32>
    %489 = arith.addf %487, %488 : vector<1x128xf32>
    %490 = math.tanh %489 : vector<1x128xf32>
    %c0_435 = arith.constant 0 : index
    %c0_436 = arith.constant 0 : index
    %491 = vector.load %arg23[%c0_435, %c0_436] : memref<128x128xf32, #tpu.memory_space<vmem>>, vector<128x128xf32>
    %cst_437 = arith.constant dense<0.000000e+00> : vector<1x128xf32>
    %492 = tpu.matmul %490, %491, %cst_437 {dimension_numbers = #tpu.dot_dimension_numbers<[1], [0], [0], [1], [0, 0, 1, 1], [], []>} : vector<1x128xf32>, vector<128x128xf32>, vector<1x128xf32> -> vector<1x128xf32>
    %c0_438 = arith.constant 0 : index
    %c0_439 = arith.constant 0 : index
    %493 = vector.load %arg24[%c0_438, %c0_439] : memref<1x128xf32, #tpu.memory_space<vmem>>, vector<1x128xf32>
    %494 = arith.addf %492, %493 : vector<1x128xf32>
    %c0_440 = arith.constant 0 : index
    %c0_441 = arith.constant 0 : index
    %c0_442 = arith.constant 0 : index
    %495 = vector.load %arg25[%c0_440, %c0_441, %c0_442] : memref<1x1x128xf32, #tpu.memory_space<vmem>>, vector<1x1x128xf32>
    %496 = vector.shape_cast %495 : vector<1x1x128xf32> to vector<1x128xf32>
    %497 = vector.shape_cast %494 : vector<1x128xf32> to vector<1x1x128xf32>
    tpu.vector_store %arg25[%c0_440, %c0_441, %c0_442], %497 {strides = array<i32>} : memref<1x1x128xf32, #tpu.memory_space<vmem>>, vector<1x1x128xf32>,
    %c0_443 = arith.constant 0 : index
    %c0_444 = arith.constant 0 : index
    %c0_445 = arith.constant 0 : index
    %498 = vector.load %arg26[%c0_443, %c0_444, %c0_445] : memref<1x1x128xf32, #tpu.memory_space<vmem>>, vector<1x1x128xf32>
    %499 = vector.shape_cast %498 : vector<1x1x128xf32> to vector<1x128xf32>
    %500 = vector.shape_cast %490 : vector<1x128xf32> to vector<1x1x128xf32>
    tpu.vector_store %arg26[%c0_443, %c0_444, %c0_445], %500 {strides = array<i32>} : memref<1x1x128xf32, #tpu.memory_space<vmem>>, vector<1x1x128xf32>,
    return
  }
  func.func @transform_0(%arg0: i32) -> (i32, i32, i32) {
    %c0_i32 = arith.constant 0 : i32
    %c0_i32_0 = arith.constant 0 : i32
    %c0_i32_1 = arith.constant 0 : i32
    return %arg0, %c0_i32, %c0_i32_0 : i32, i32, i32
  }
  func.func @transform_1(%arg0: i32) -> (i32, i32, i32) {
    %c0_i32 = arith.constant 0 : i32
    %c0_i32_0 = arith.constant 0 : i32
    %c0_i32_1 = arith.constant 0 : i32
    %c0_i32_2 = arith.constant 0 : i32
    return %c0_i32, %c0_i32_0, %c0_i32_1 : i32, i32, i32
  }
  func.func @transform_2(%arg0: i32) -> (i32, i32, i32) {
    %c0_i32 = arith.constant 0 : i32
    %c0_i32_0 = arith.constant 0 : i32
    %c0_i32_1 = arith.constant 0 : i32
    %c0_i32_2 = arith.constant 0 : i32
    return %c0_i32, %c0_i32_0, %c0_i32_1 : i32, i32, i32
  }
  func.func @transform_3(%arg0: i32) -> (i32, i32) {
    %c0_i32 = arith.constant 0 : i32
    %c0_i32_0 = arith.constant 0 : i32
    %c0_i32_1 = arith.constant 0 : i32
    return %c0_i32, %c0_i32_0 : i32, i32
  }
  func.func @transform_4(%arg0: i32) -> (i32, i32) {
    %c0_i32 = arith.constant 0 : i32
    %c0_i32_0 = arith.constant 0 : i32
    %c0_i32_1 = arith.constant 0 : i32
    return %c0_i32, %c0_i32_0 : i32, i32
  }
  func.func @transform_5(%arg0: i32) -> (i32, i32) {
    %c0_i32 = arith.constant 0 : i32
    %c0_i32_0 = arith.constant 0 : i32
    %c0_i32_1 = arith.constant 0 : i32
    return %c0_i32, %c0_i32_0 : i32, i32
  }
  func.func @transform_6(%arg0: i32) -> (i32, i32, i32) {
    %c0_i32 = arith.constant 0 : i32
    %c0_i32_0 = arith.constant 0 : i32
    %c0_i32_1 = arith.constant 0 : i32
    %c0_i32_2 = arith.constant 0 : i32
    return %c0_i32, %c0_i32_0, %c0_i32_1 : i32, i32, i32
  }
  func.func @transform_7(%arg0: i32) -> (i32, i32, i32) {
    %c0_i32 = arith.constant 0 : i32
    %c0_i32_0 = arith.constant 0 : i32
    %c0_i32_1 = arith.constant 0 : i32
    %c0_i32_2 = arith.constant 0 : i32
    return %c0_i32, %c0_i32_0, %c0_i32_1 : i32, i32, i32
  }
  func.func @transform_8(%arg0: i32) -> (i32, i32) {
    %c0_i32 = arith.constant 0 : i32
    %c0_i32_0 = arith.constant 0 : i32
    %c0_i32_1 = arith.constant 0 : i32
    return %c0_i32, %c0_i32_0 : i32, i32
  }
  func.func @transform_9(%arg0: i32) -> (i32, i32) {
    %c0_i32 = arith.constant 0 : i32
    %c0_i32_0 = arith.constant 0 : i32
    %c0_i32_1 = arith.constant 0 : i32
    return %c0_i32, %c0_i32_0 : i32, i32
  }
  func.func @transform_10(%arg0: i32) -> (i32, i32) {
    %c0_i32 = arith.constant 0 : i32
    %c0_i32_0 = arith.constant 0 : i32
    %c0_i32_1 = arith.constant 0 : i32
    return %c0_i32, %c0_i32_0 : i32, i32
  }
  func.func @transform_11(%arg0: i32) -> (i32, i32) {
    %c0_i32 = arith.constant 0 : i32
    %c0_i32_0 = arith.constant 0 : i32
    %c0_i32_1 = arith.constant 0 : i32
    return %c0_i32, %c0_i32_0 : i32, i32
  }
  func.func @transform_12(%arg0: i32) -> (i32, i32) {
    %c0_i32 = arith.constant 0 : i32
    %c0_i32_0 = arith.constant 0 : i32
    %c0_i32_1 = arith.constant 0 : i32
    return %c0_i32, %c0_i32_0 : i32, i32
  }
  func.func @transform_13(%arg0: i32) -> (i32, i32) {
    %c0_i32 = arith.constant 0 : i32
    %c0_i32_0 = arith.constant 0 : i32
    %c0_i32_1 = arith.constant 0 : i32
    return %c0_i32, %c0_i32_0 : i32, i32
  }
  func.func @transform_14(%arg0: i32) -> (i32, i32) {
    %c0_i32 = arith.constant 0 : i32
    %c0_i32_0 = arith.constant 0 : i32
    %c0_i32_1 = arith.constant 0 : i32
    return %c0_i32, %c0_i32_0 : i32, i32
  }
  func.func @transform_15(%arg0: i32) -> (i32, i32) {
    %c0_i32 = arith.constant 0 : i32
    %c0_i32_0 = arith.constant 0 : i32
    %c0_i32_1 = arith.constant 0 : i32
    return %c0_i32, %c0_i32_0 : i32, i32
  }
  func.func @transform_16(%arg0: i32) -> (i32, i32) {
    %c0_i32 = arith.constant 0 : i32
    %c0_i32_0 = arith.constant 0 : i32
    %c0_i32_1 = arith.constant 0 : i32
    return %c0_i32, %c0_i32_0 : i32, i32
  }
  func.func @transform_17(%arg0: i32) -> (i32, i32) {
    %c0_i32 = arith.constant 0 : i32
    %c0_i32_0 = arith.constant 0 : i32
    %c0_i32_1 = arith.constant 0 : i32
    return %c0_i32, %c0_i32_0 : i32, i32
  }
  func.func @transform_18(%arg0: i32) -> (i32, i32) {
    %c0_i32 = arith.constant 0 : i32
    %c0_i32_0 = arith.constant 0 : i32
    %c0_i32_1 = arith.constant 0 : i32
    return %c0_i32, %c0_i32_0 : i32, i32
  }
  func.func @transform_19(%arg0: i32) -> (i32, i32) {
    %c0_i32 = arith.constant 0 : i32
    %c0_i32_0 = arith.constant 0 : i32
    %c0_i32_1 = arith.constant 0 : i32
    return %c0_i32, %c0_i32_0 : i32, i32
  }
  func.func @transform_20(%arg0: i32) -> (i32, i32) {
    %c0_i32 = arith.constant 0 : i32
    %c0_i32_0 = arith.constant 0 : i32
    %c0_i32_1 = arith.constant 0 : i32
    return %c0_i32, %c0_i32_0 : i32, i32
  }
  func.func @transform_21(%arg0: i32) -> (i32, i32) {
    %c0_i32 = arith.constant 0 : i32
    %c0_i32_0 = arith.constant 0 : i32
    %c0_i32_1 = arith.constant 0 : i32
    return %c0_i32, %c0_i32_0 : i32, i32
  }
  func.func @transform_22(%arg0: i32) -> (i32, i32) {
    %c0_i32 = arith.constant 0 : i32
    %c0_i32_0 = arith.constant 0 : i32
    %c0_i32_1 = arith.constant 0 : i32
    return %c0_i32, %c0_i32_0 : i32, i32
  }
  func.func @transform_23(%arg0: i32) -> (i32, i32) {
    %c0_i32 = arith.constant 0 : i32
    %c0_i32_0 = arith.constant 0 : i32
    %c0_i32_1 = arith.constant 0 : i32
    return %c0_i32, %c0_i32_0 : i32, i32
  }
  func.func @transform_24(%arg0: i32) -> (i32, i32, i32) {
    %c0_i32 = arith.constant 0 : i32
    %c0_i32_0 = arith.constant 0 : i32
    %c0_i32_1 = arith.constant 0 : i32
    return %arg0, %c0_i32, %c0_i32_0 : i32, i32, i32
  }
  func.func @transform_25(%arg0: i32) -> (i32, i32, i32) {
    %c0_i32 = arith.constant 0 : i32
    %c0_i32_0 = arith.constant 0 : i32
    %c0_i32_1 = arith.constant 0 : i32
    return %arg0, %c0_i32, %c0_i32_0 : i32, i32, i32
  }
}

</mosaic_0001>

<llo_original>
// kernel: tpu_custom_call.1
$region0: #{tpu_custom_call.1}
  #allocation0 [shape = 'u32[]', space=smem, size = 0x4, offset = 0x4, fixed_abs, tag = 'smem constant byte address 0x4 - core index']
  #allocation1 [shape = 'u32[72,128]{1,0:T(1,128)}', space=vmem, size = 0x9000, scoped, tag = 'internal scratch']
  %s0 = inlined_call_operand.hbm [shape: f32[1,256,128], index: 0, kind: input, shape index: {}]
  %s1 = inlined_call_operand.vmem [shape: f32[4,196,256], index: 1, kind: input, shape index: {}]
  %s2 = inlined_call_operand.hbm [shape: f32[4,128,128], index: 2, kind: input, shape index: {}]
  %s3 = inlined_call_operand.hbm [shape: f32[1,128], index: 3, kind: input, shape index: {}]
  %s4 = inlined_call_operand.hbm [shape: f32[1,128], index: 4, kind: input, shape index: {}]
  %s5 = inlined_call_operand.hbm [shape: f32[1,128], index: 5, kind: input, shape index: {}]
  %s6 = inlined_call_operand.hbm [shape: f32[49,4,196], index: 6, kind: input, shape index: {}]
  %s7 = inlined_call_operand.hbm [shape: f32[49,128,128], index: 7, kind: input, shape index: {}]
  %s8 = inlined_call_operand.hbm [shape: f32[1,128], index: 8, kind: input, shape index: {}]
  %s9 = inlined_call_operand.hbm [shape: f32[1,128], index: 9, kind: input, shape index: {}]
  %s10 = inlined_call_operand.hbm [shape: f32[1,128], index: 10, kind: input, shape index: {}]
  %s11 = inlined_call_operand.hbm [shape: f32[1,128], index: 11, kind: input, shape index: {}]
  %s12 = inlined_call_operand.hbm [shape: f32[1,128], index: 12, kind: input, shape index: {}]
  %s13 = inlined_call_operand.hbm [shape: f32[128,128], index: 13, kind: input, shape index: {}]
  %s14 = inlined_call_operand.hbm [shape: f32[1,128], index: 14, kind: input, shape index: {}]
  %s15 = inlined_call_operand.hbm [shape: f32[128,128], index: 15, kind: input, shape index: {}]
  %s16 = inlined_call_operand.hbm [shape: f32[128,128], index: 16, kind: input, shape index: {}]
  %s17 = inlined_call_operand.hbm [shape: f32[1,128], index: 17, kind: input, shape index: {}]
  %s18 = inlined_call_operand.hbm [shape: f32[1,128], index: 18, kind: input, shape index: {}]
  %s19 = inlined_call_operand.hbm [shape: f32[1,128], index: 19, kind: input, shape index: {}]
  %s20 = inlined_call_operand.hbm [shape: f32[1,128], index: 20, kind: input, shape index: {}]
  %s21 = inlined_call_operand.hbm [shape: f32[1,128], index: 21, kind: input, shape index: {}]
  %s22 = inlined_call_operand.hbm [shape: f32[128,128], index: 22, kind: input, shape index: {}]
  %s23 = inlined_call_operand.hbm [shape: f32[1,128], index: 23, kind: input, shape index: {}]
  %s24 = inlined_call_operand.hbm [shape: f32[1,1,128], index: 24, kind: output, shape index: {0}]
  %s25 = inlined_call_operand.hbm [shape: f32[1,1,128], index: 25, kind: output, shape index: {1}]
  %26 = xla_tuple %s24, %s25
  %s27 = sld [smem:[#allocation0]]
  $region206: #{tpu_custom_call.1} parent=0
    _
  %s29 = ssub.s32 1, %s27
  %s30 = scalar_select 0, %s29, %s27
  $region1: #{tpu_custom_call.1} parent=0
    #allocation2 [shape = 'u8[131072]{0}', space=vmem, size = 0x20000, scoped, tag = 'input window, operand 0, single buffered']
    #allocation3 [shape = 's32[1]{0}', space=sflag, size = 0x4, scoped, tag = 'scoped memory for tpu_custom_call.1']
    #allocation4 [shape = 's32[1]{0}', space=sflag, size = 0x4, scoped, tag = 'scoped memory for tpu_custom_call.1']
    #allocation5 [shape = 'u8[262144]{0}', space=vmem, size = 0x40000, scoped, tag = 'input window, operand 2, single buffered']
    #allocation6 [shape = 's32[1]{0}', space=sflag, size = 0x4, scoped, tag = 'scoped memory for tpu_custom_call.1']
    #allocation7 [shape = 'u8[512]{0}', space=vmem, size = 0x400, scoped, tag = 'input window, operand 3, single buffered']
    #allocation8 [shape = 'u8[512]{0}', space=vmem, size = 0x400, scoped, tag = 'input window, operand 4, single buffered']
    #allocation9 [shape = 's32[1]{0}', space=sflag, size = 0x4, scoped, tag = 'scoped memory for tpu_custom_call.1']
    #allocation10 [shape = 'u8[512]{0}', space=vmem, size = 0x400, scoped, tag = 'input window, operand 5, single buffered']
    #allocation11 [shape = 'u8[200704]{0}', space=vmem, size = 0x31000, scoped, tag = 'input window, operand 6, single buffered']
    #allocation12 [shape = 's32[1]{0}', space=sflag, size = 0x4, scoped, tag = 'scoped memory for tpu_custom_call.1']
    #allocation13 [shape = 'u8[3211264]{0}', space=vmem, size = 0x310000, scoped, tag = 'input window, operand 7, single buffered']
    #allocation14 [shape = 'u8[512]{0}', space=vmem, size = 0x400, scoped, tag = 'input window, operand 8, single buffered']
    #allocation15 [shape = 's32[1]{0}', space=sflag, size = 0x4, scoped, tag = 'scoped memory for tpu_custom_call.1']
    #allocation16 [shape = 'u8[512]{0}', space=vmem, size = 0x400, scoped, tag = 'input window, operand 9, single buffered']
    #allocation17 [shape = 'u8[512]{0}', space=vmem, size = 0x400, scoped, tag = 'input window, operand 10, single buffered']
    #allocation18 [shape = 's32[1]{0}', space=sflag, size = 0x4, scoped, tag = 'scoped memory for tpu_custom_call.1']
    #allocation19 [shape = 'u8[512]{0}', space=vmem, size = 0x400, scoped, tag = 'input window, operand 11, single buffered']
    #allocation20 [shape = 'u8[512]{0}', space=vmem, size = 0x400, scoped, tag = 'input window, operand 12, single buffered']
    #allocation21 [shape = 's32[1]{0}', space=sflag, size = 0x4, scoped, tag = 'scoped memory for tpu_custom_call.1']
    #allocation22 [shape = 'u8[65536]{0}', space=vmem, size = 0x10000, scoped, tag = 'input window, operand 13, single buffered']
    #allocation23 [shape = 'u8[512]{0}', space=vmem, size = 0x400, scoped, tag = 'input window, operand 14, single buffered']
    #allocation24 [shape = 's32[1]{0}', space=sflag, size = 0x4, scoped, tag = 'scoped memory for tpu_custom_call.1']
    #allocation25 [shape = 'u8[65536]{0}', space=vmem, size = 0x10000, scoped, tag = 'input window, operand 15, single buffered']
    #allocation26 [shape = 'u8[65536]{0}', space=vmem, size = 0x10000, scoped, tag = 'input window, operand 16, single buffered']
    #allocation27 [shape = 's32[1]{0}', space=sflag, size = 0x4, scoped, tag = 'scoped memory for tpu_custom_call.1']
    #allocation28 [shape = 'u8[512]{0}', space=vmem, size = 0x400, scoped, tag = 'input window, operand 17, single buffered']
    #allocation29 [shape = 'u8[512]{0}', space=vmem, size = 0x400, scoped, tag = 'input window, operand 18, single buffered']
    #allocation30 [shape = 's32[1]{0}', space=sflag, size = 0x4, scoped, tag = 'scoped memory for tpu_custom_call.1']
    #allocation31 [shape = 'u8[512]{0}', space=vmem, size = 0x400, scoped, tag = 'input window, operand 19, single buffered']
    #allocation32 [shape = 'u8[512]{0}', space=vmem, size = 0x400, scoped, tag = 'input window, operand 20, single buffered']
    #allocation33 [shape = 's32[1]{0}', space=sflag, size = 0x4, scoped, tag = 'scoped memory for tpu_custom_call.1']
    #allocation34 [shape = 'u8[512]{0}', space=vmem, size = 0x400, scoped, tag = 'input window, operand 21, single buffered']
    #allocation35 [shape = 'u8[65536]{0}', space=vmem, size = 0x10000, scoped, tag = 'input window, operand 22, single buffered']
    #allocation36 [shape = 's32[1]{0}', space=sflag, size = 0x4, scoped, tag = 'scoped memory for tpu_custom_call.1']
    #allocation37 [shape = 'u8[512]{0}', space=vmem, size = 0x400, scoped, tag = 'input window, operand 23, single buffered']
    #allocation38 [shape = 'u8[512]{0}', space=vmem, size = 0x400, scoped, tag = 'output window, operand 0, single buffered']
    #allocation39 [shape = 'u8[512]{0}', space=vmem, size = 0x400, scoped, tag = 'output window, operand 1, single buffered']
    #allocation40 [shape = 's32[1]{0}', space=sflag, size = 0x4, scoped, tag = 'scoped memory for tpu_custom_call.1']
    %31 = vsyncpa [#allocation3], 0
    %32 = vsyncpa [#allocation6], 0
    %33 = vsyncpa [#allocation9], 0
    %34 = vsyncpa [#allocation12], 0
    %35 = vsyncpa [#allocation15], 0
    %36 = vsyncpa [#allocation18], 0
    %37 = vsyncpa [#allocation21], 0
    %38 = vsyncpa [#allocation24], 0
    %39 = vsyncpa [#allocation27], 0
    %40 = vsyncpa [#allocation30], 0
    %41 = vsyncpa [#allocation33], 0
    %42 = vsyncpa [#allocation36], 0
    %43 = vsyncpa [#allocation4], 0
    %44 = vsyncpa [#allocation40], 0
    // Predicated region
    $region2: #{tpu_custom_call.1} parent=1 // pred_check
      _
    $region3: #{tpu_custom_call.1} parent=1 // pred_check_branch
      %46 = sbr.rel (0) target = $region5
    $region4: #{tpu_custom_call.1} parent=1 // pred_region
      %48 = vsyncadd [#allocation3], 0
      %s49 = sshll.u32 %s0, 4
      %s50 = int_to_ptr.hbm [resolvable:$true] %s49
      %s51 = sshll.u32 [#allocation2], 4
      %s52 = int_to_ptr.vmem [resolvable:$true] %s51
      %57 = dma.hbm_to_vmem [thread:$0]  %s50, 4096, %s52, [#allocation3], 128, 128, 8
    $region5: #{tpu_custom_call.1} parent=1 // pred_fallthru
      _
    // Predicated region
    $region6: #{tpu_custom_call.1} parent=1 // pred_check
      _
    $region7: #{tpu_custom_call.1} parent=1 // pred_check_branch
      %59 = sbr.rel (0) target = $region9
    $region8: #{tpu_custom_call.1} parent=1 // pred_region
      _
    $region9: #{tpu_custom_call.1} parent=1 // pred_fallthru
      _
    // Predicated region
    $region10: #{tpu_custom_call.1} parent=1 // pred_check
      _
    $region11: #{tpu_custom_call.1} parent=1 // pred_check_branch
      %61 = sbr.rel (0) target = $region13
    $region12: #{tpu_custom_call.1} parent=1 // pred_region
      %63 = vsyncadd [#allocation6], 0
      %s64 = sshll.u32 %s2, 4
      %s65 = int_to_ptr.hbm [resolvable:$true] %s64
      %s66 = sshll.u32 [#allocation5], 4
      %s67 = int_to_ptr.vmem [resolvable:$true] %s66
      %72 = dma.hbm_to_vmem [thread:$0]  %s65, 8192, %s67, [#allocation6], 128, 128, 8
    $region13: #{tpu_custom_call.1} parent=1 // pred_fallthru
      _
    // Predicated region
    $region14: #{tpu_custom_call.1} parent=1 // pred_check
      _
    $region15: #{tpu_custom_call.1} parent=1 // pred_check_branch
      %74 = sbr.rel (0) target = $region17
    $region16: #{tpu_custom_call.1} parent=1 // pred_region
      %76 = vsyncadd [#allocation6], 0
      %s78 = sshll.u32 %s3, 4
      %s79 = int_to_ptr.hbm [resolvable:$true] %s78
      %s80 = sshll.u32 [#allocation7], 4
      %s81 = int_to_ptr.vmem [resolvable:$true] %s80
      %83 = dma.hbm_to_vmem [thread:$0]  %s79, 16, %s81, [#allocation6]
    $region17: #{tpu_custom_call.1} parent=1 // pred_fallthru
      _
    // Predicated region
    $region18: #{tpu_custom_call.1} parent=1 // pred_check
      _
    $region19: #{tpu_custom_call.1} parent=1 // pred_check_branch
      %85 = sbr.rel (0) target = $region21
    $region20: #{tpu_custom_call.1} parent=1 // pred_region
      %87 = vsyncadd [#allocation9], 0
      %s89 = sshll.u32 %s4, 4
      %s90 = int_to_ptr.hbm [resolvable:$true] %s89
      %s91 = sshll.u32 [#allocation8], 4
      %s92 = int_to_ptr.vmem [resolvable:$true] %s91
      %94 = dma.hbm_to_vmem [thread:$0]  %s90, 16, %s92, [#allocation9]
    $region21: #{tpu_custom_call.1} parent=1 // pred_fallthru
      _
    // Predicated region
    $region22: #{tpu_custom_call.1} parent=1 // pred_check
      _
    $region23: #{tpu_custom_call.1} parent=1 // pred_check_branch
      %96 = sbr.rel (0) target = $region25
    $region24: #{tpu_custom_call.1} parent=1 // pred_region
      %98 = vsyncadd [#allocation9], 0
      %s100 = sshll.u32 %s5, 4
      %s101 = int_to_ptr.hbm [resolvable:$true] %s100
      %s102 = sshll.u32 [#allocation10], 4
      %s103 = int_to_ptr.vmem [resolvable:$true] %s102
      %105 = dma.hbm_to_vmem [thread:$0]  %s101, 16, %s103, [#allocation9]
    $region25: #{tpu_custom_call.1} parent=1 // pred_fallthru
      _
    // Predicated region
    $region26: #{tpu_custom_call.1} parent=1 // pred_check
      _
    $region27: #{tpu_custom_call.1} parent=1 // pred_check_branch
      %107 = sbr.rel (0) target = $region29
    $region28: #{tpu_custom_call.1} parent=1 // pred_region
      %109 = vsyncadd [#allocation12], 0
      %s110 = sshll.u32 %s6, 4
      %s111 = int_to_ptr.hbm [resolvable:$true] %s110
      %s112 = sshll.u32 [#allocation11], 4
      %s113 = int_to_ptr.vmem [resolvable:$true] %s112
      %118 = dma.hbm_to_vmem [thread:$0]  %s111, 6272, %s113, [#allocation12], 128, 128, 8
    $region29: #{tpu_custom_call.1} parent=1 // pred_fallthru
      _
    // Predicated region
    $region30: #{tpu_custom_call.1} parent=1 // pred_check
      _
    $region31: #{tpu_custom_call.1} parent=1 // pred_check_branch
      %120 = sbr.rel (0) target = $region33
    $region32: #{tpu_custom_call.1} parent=1 // pred_region
      %122 = vsyncadd [#allocation12], 0
      %s123 = sshll.u32 %s7, 4
      %s124 = int_to_ptr.hbm [resolvable:$true] %s123
      %s125 = sshll.u32 [#allocation13], 4
      %s126 = int_to_ptr.vmem [resolvable:$true] %s125
      %131 = dma.hbm_to_vmem [thread:$0]  %s124, 100352, %s126, [#allocation12], 128, 128, 8
    $region33: #{tpu_custom_call.1} parent=1 // pred_fallthru
      _
    // Predicated region
    $region34: #{tpu_custom_call.1} parent=1 // pred_check
      _
    $region35: #{tpu_custom_call.1} parent=1 // pred_check_branch
      %133 = sbr.rel (0) target = $region37
    $region36: #{tpu_custom_call.1} parent=1 // pred_region
      %135 = vsyncadd [#allocation15], 0
      %s137 = sshll.u32 %s8, 4
      %s138 = int_to_ptr.hbm [resolvable:$true] %s137
      %s139 = sshll.u32 [#allocation14], 4
      %s140 = int_to_ptr.vmem [resolvable:$true] %s139
      %142 = dma.hbm_to_vmem [thread:$0]  %s138, 16, %s140, [#allocation15]
    $region37: #{tpu_custom_call.1} parent=1 // pred_fallthru
      _
    // Predicated region
    $region38: #{tpu_custom_call.1} parent=1 // pred_check
      _
    $region39: #{tpu_custom_call.1} parent=1 // pred_check_branch
      %144 = sbr.rel (0) target = $region41
    $region40: #{tpu_custom_call.1} parent=1 // pred_region
      %146 = vsyncadd [#allocation15], 0
      %s148 = sshll.u32 %s9, 4
      %s149 = int_to_ptr.hbm [resolvable:$true] %s148
      %s150 = sshll.u32 [#allocation16], 4
      %s151 = int_to_ptr.vmem [resolvable:$true] %s150
      %153 = dma.hbm_to_vmem [thread:$0]  %s149, 16, %s151, [#allocation15]
    $region41: #{tpu_custom_call.1} parent=1 // pred_fallthru
      _
    // Predicated region
    $region42: #{tpu_custom_call.1} parent=1 // pred_check
      _
    $region43: #{tpu_custom_call.1} parent=1 // pred_check_branch
      %155 = sbr.rel (0) target = $region45
    $region44: #{tpu_custom_call.1} parent=1 // pred_region
      %157 = vsyncadd [#allocation18], 0
      %s159 = sshll.u32 %s10, 4
      %s160 = int_to_ptr.hbm [resolvable:$true] %s159
      %s161 = sshll.u32 [#allocation17], 4
      %s162 = int_to_ptr.vmem [resolvable:$true] %s161
      %164 = dma.hbm_to_vmem [thread:$0]  %s160, 16, %s162, [#allocation18]
    $region45: #{tpu_custom_call.1} parent=1 // pred_fallthru
      _
    // Predicated region
    $region46: #{tpu_custom_call.1} parent=1 // pred_check
      _
    $region47: #{tpu_custom_call.1} parent=1 // pred_check_branch
      %166 = sbr.rel (0) target = $region49
    $region48: #{tpu_custom_call.1} parent=1 // pred_region
      %168 = vsyncadd [#allocation18], 0
      %s170 = sshll.u32 %s11, 4
      %s171 = int_to_ptr.hbm [resolvable:$true] %s170
      %s172 = sshll.u32 [#allocation19], 4
      %s173 = int_to_ptr.vmem [resolvable:$true] %s172
      %175 = dma.hbm_to_vmem [thread:$0]  %s171, 16, %s173, [#allocation18]
    $region49: #{tpu_custom_call.1} parent=1 // pred_fallthru
      _
    // Predicated region
    $region50: #{tpu_custom_call.1} parent=1 // pred_check
      _
    $region51: #{tpu_custom_call.1} parent=1 // pred_check_branch
      %177 = sbr.rel (0) target = $region53
    $region52: #{tpu_custom_call.1} parent=1 // pred_region
      %179 = vsyncadd [#allocation21], 0
      %s181 = sshll.u32 %s12, 4
      %s182 = int_to_ptr.hbm [resolvable:$true] %s181
      %s183 = sshll.u32 [#allocation20], 4
      %s184 = int_to_ptr.vmem [resolvable:$true] %s183
      %186 = dma.hbm_to_vmem [thread:$0]  %s182, 16, %s184, [#allocation21]
    $region53: #{tpu_custom_call.1} parent=1 // pred_fallthru
      _
    // Predicated region
    $region54: #{tpu_custom_call.1} parent=1 // pred_check
      _
    $region55: #{tpu_custom_call.1} parent=1 // pred_check_branch
      %188 = sbr.rel (0) target = $region57
    $region56: #{tpu_custom_call.1} parent=1 // pred_region
      %190 = vsyncadd [#allocation21], 0
      %s191 = sshll.u32 %s13, 4
      %s192 = int_to_ptr.hbm [resolvable:$true] %s191
      %s193 = sshll.u32 [#allocation22], 4
      %s194 = int_to_ptr.vmem [resolvable:$true] %s193
      %199 = dma.hbm_to_vmem [thread:$0]  %s192, 2048, %s194, [#allocation21], 128, 128, 8
    $region57: #{tpu_custom_call.1} parent=1 // pred_fallthru
      _
    // Predicated region
    $region58: #{tpu_custom_call.1} parent=1 // pred_check
      _
    $region59: #{tpu_custom_call.1} parent=1 // pred_check_branch
      %201 = sbr.rel (0) target = $region61
    $region60: #{tpu_custom_call.1} parent=1 // pred_region
      %203 = vsyncadd [#allocation24], 0
      %s205 = sshll.u32 %s14, 4
      %s206 = int_to_ptr.hbm [resolvable:$true] %s205
      %s207 = sshll.u32 [#allocation23], 4
      %s208 = int_to_ptr.vmem [resolvable:$true] %s207
      %210 = dma.hbm_to_vmem [thread:$0]  %s206, 16, %s208, [#allocation24]
    $region61: #{tpu_custom_call.1} parent=1 // pred_fallthru
      _
    // Predicated region
    $region62: #{tpu_custom_call.1} parent=1 // pred_check
      _
    $region63: #{tpu_custom_call.1} parent=1 // pred_check_branch
      %212 = sbr.rel (0) target = $region65
    $region64: #{tpu_custom_call.1} parent=1 // pred_region
      %214 = vsyncadd [#allocation24], 0
      %s215 = sshll.u32 %s15, 4
      %s216 = int_to_ptr.hbm [resolvable:$true] %s215
      %s217 = sshll.u32 [#allocation25], 4
      %s218 = int_to_ptr.vmem [resolvable:$true] %s217
      %223 = dma.hbm_to_vmem [thread:$0]  %s216, 2048, %s218, [#allocation24], 128, 128, 8
    $region65: #{tpu_custom_call.1} parent=1 // pred_fallthru
      _
    // Predicated region
    $region66: #{tpu_custom_call.1} parent=1 // pred_check
      _
    $region67: #{tpu_custom_call.1} parent=1 // pred_check_branch
      %225 = sbr.rel (0) target = $region69
    $region68: #{tpu_custom_call.1} parent=1 // pred_region
      %227 = vsyncadd [#allocation27], 0
      %s228 = sshll.u32 %s16, 4
      %s229 = int_to_ptr.hbm [resolvable:$true] %s228
      %s230 = sshll.u32 [#allocation26], 4
      %s231 = int_to_ptr.vmem [resolvable:$true] %s230
      %236 = dma.hbm_to_vmem [thread:$0]  %s229, 2048, %s231, [#allocation27], 128, 128, 8
    $region69: #{tpu_custom_call.1} parent=1 // pred_fallthru
      _
    // Predicated region
    $region70: #{tpu_custom_call.1} parent=1 // pred_check
      _
    $region71: #{tpu_custom_call.1} parent=1 // pred_check_branch
      %238 = sbr.rel (0) target = $region73
    $region72: #{tpu_custom_call.1} parent=1 // pred_region
      %240 = vsyncadd [#allocation27], 0
      %s242 = sshll.u32 %s17, 4
      %s243 = int_to_ptr.hbm [resolvable:$true] %s242
      %s244 = sshll.u32 [#allocation28], 4
      %s245 = int_to_ptr.vmem [resolvable:$true] %s244
      %247 = dma.hbm_to_vmem [thread:$0]  %s243, 16, %s245, [#allocation27]
    $region73: #{tpu_custom_call.1} parent=1 // pred_fallthru
      _
    // Predicated region
    $region74: #{tpu_custom_call.1} parent=1 // pred_check
      _
    $region75: #{tpu_custom_call.1} parent=1 // pred_check_branch
      %249 = sbr.rel (0) target = $region77
    $region76: #{tpu_custom_call.1} parent=1 // pred_region
      %251 = vsyncadd [#allocation30], 0
      %s253 = sshll.u32 %s18, 4
      %s254 = int_to_ptr.hbm [resolvable:$true] %s253
      %s255 = sshll.u32 [#allocation29], 4
      %s256 = int_to_ptr.vmem [resolvable:$true] %s255
      %258 = dma.hbm_to_vmem [thread:$0]  %s254, 16, %s256, [#allocation30]
    $region77: #{tpu_custom_call.1} parent=1 // pred_fallthru
      _
    // Predicated region
    $region78: #{tpu_custom_call.1} parent=1 // pred_check
      _
    $region79: #{tpu_custom_call.1} parent=1 // pred_check_branch
      %260 = sbr.rel (0) target = $region81
    $region80: #{tpu_custom_call.1} parent=1 // pred_region
      %262 = vsyncadd [#allocation30], 0
      %s264 = sshll.u32 %s19, 4
      %s265 = int_to_ptr.hbm [resolvable:$true] %s264
      %s266 = sshll.u32 [#allocation31], 4
      %s267 = int_to_ptr.vmem [resolvable:$true] %s266
      %269 = dma.hbm_to_vmem [thread:$0]  %s265, 16, %s267, [#allocation30]
    $region81: #{tpu_custom_call.1} parent=1 // pred_fallthru
      _
    // Predicated region
    $region82: #{tpu_custom_call.1} parent=1 // pred_check
      _
    $region83: #{tpu_custom_call.1} parent=1 // pred_check_branch
      %271 = sbr.rel (0) target = $region85
    $region84: #{tpu_custom_call.1} parent=1 // pred_region
      %273 = vsyncadd [#allocation33], 0
      %s275 = sshll.u32 %s20, 4
      %s276 = int_to_ptr.hbm [resolvable:$true] %s275
      %s277 = sshll.u32 [#allocation32], 4
      %s278 = int_to_ptr.vmem [resolvable:$true] %s277
      %280 = dma.hbm_to_vmem [thread:$0]  %s276, 16, %s278, [#allocation33]
    $region85: #{tpu_custom_call.1} parent=1 // pred_fallthru
      _
    // Predicated region
    $region86: #{tpu_custom_call.1} parent=1 // pred_check
      _
    $region87: #{tpu_custom_call.1} parent=1 // pred_check_branch
      %282 = sbr.rel (0) target = $region89
    $region88: #{tpu_custom_call.1} parent=1 // pred_region
      %284 = vsyncadd [#allocation33], 0
      %s286 = sshll.u32 %s21, 4
      %s287 = int_to_ptr.hbm [resolvable:$true] %s286
      %s288 = sshll.u32 [#allocation34], 4
      %s289 = int_to_ptr.vmem [resolvable:$true] %s288
      %291 = dma.hbm_to_vmem [thread:$0]  %s287, 16, %s289, [#allocation33]
    $region89: #{tpu_custom_call.1} parent=1 // pred_fallthru
      _
    // Predicated region
    $region90: #{tpu_custom_call.1} parent=1 // pred_check
      _
    $region91: #{tpu_custom_call.1} parent=1 // pred_check_branch
      %293 = sbr.rel (0) target = $region93
    $region92: #{tpu_custom_call.1} parent=1 // pred_region
      %295 = vsyncadd [#allocation36], 0
      %s296 = sshll.u32 %s22, 4
      %s297 = int_to_ptr.hbm [resolvable:$true] %s296
      %s298 = sshll.u32 [#allocation35], 4
      %s299 = int_to_ptr.vmem [resolvable:$true] %s298
      %304 = dma.hbm_to_vmem [thread:$0]  %s297, 2048, %s299, [#allocation36], 128, 128, 8
    $region93: #{tpu_custom_call.1} parent=1 // pred_fallthru
      _
    // Predicated region
    $region94: #{tpu_custom_call.1} parent=1 // pred_check
      _
    $region95: #{tpu_custom_call.1} parent=1 // pred_check_branch
      %306 = sbr.rel (0) target = $region97
    $region96: #{tpu_custom_call.1} parent=1 // pred_region
      %308 = vsyncadd [#allocation36], 0
      %s310 = sshll.u32 %s23, 4
      %s311 = int_to_ptr.hbm [resolvable:$true] %s310
      %s312 = sshll.u32 [#allocation37], 4
      %s313 = int_to_ptr.vmem [resolvable:$true] %s312
      %315 = dma.hbm_to_vmem [thread:$0]  %s311, 16, %s313, [#allocation36]
    $region97: #{tpu_custom_call.1} parent=1 // pred_fallthru
      _
    // Predicated region
    $region98: #{tpu_custom_call.1} parent=1 // pred_check
      _
    $region99: #{tpu_custom_call.1} parent=1 // pred_check_branch
      %317 = sbr.rel (0) target = $region101
    $region100: #{tpu_custom_call.1} parent=1 // pred_region
      %319 = dma.done [#allocation3], 4096
    $region101: #{tpu_custom_call.1} parent=1 // pred_fallthru
      _
    // Predicated region
    $region102: #{tpu_custom_call.1} parent=1 // pred_check
      _
    $region103: #{tpu_custom_call.1} parent=1 // pred_check_branch
      %321 = sbr.rel (0) target = $region105
    $region104: #{tpu_custom_call.1} parent=1 // pred_region
      %323 = dma.done [#allocation6], 8192
    $region105: #{tpu_custom_call.1} parent=1 // pred_fallthru
      _
    // Predicated region
    $region106: #{tpu_custom_call.1} parent=1 // pred_check
      _
    $region107: #{tpu_custom_call.1} parent=1 // pred_check_branch
      %325 = sbr.rel (0) target = $region109
    $region108: #{tpu_custom_call.1} parent=1 // pred_region
      %327 = dma.done [#allocation6], 16
    $region109: #{tpu_custom_call.1} parent=1 // pred_fallthru
      _
    // Predicated region
    $region110: #{tpu_custom_call.1} parent=1 // pred_check
      _
    $region111: #{tpu_custom_call.1} parent=1 // pred_check_branch
      %329 = sbr.rel (0) target = $region113
    $region112: #{tpu_custom_call.1} parent=1 // pred_region
      %331 = dma.done [#allocation9], 16
    $region113: #{tpu_custom_call.1} parent=1 // pred_fallthru
      _
    // Predicated region
    $region114: #{tpu_custom_call.1} parent=1 // pred_check
      _
    $region115: #{tpu_custom_call.1} parent=1 // pred_check_branch
      %333 = sbr.rel (0) target = $region117
    $region116: #{tpu_custom_call.1} parent=1 // pred_region
      %335 = dma.done [#allocation9], 16
    $region117: #{tpu_custom_call.1} parent=1 // pred_fallthru
      _
    // Predicated region
    $region118: #{tpu_custom_call.1} parent=1 // pred_check
      _
    $region119: #{tpu_custom_call.1} parent=1 // pred_check_branch
      %337 = sbr.rel (0) target = $region121
    $region120: #{tpu_custom_call.1} parent=1 // pred_region
      %339 = dma.done [#allocation12], 6272
    $region121: #{tpu_custom_call.1} parent=1 // pred_fallthru
      _
    // Predicated region
    $region122: #{tpu_custom_call.1} parent=1 // pred_check
      _
    $region123: #{tpu_custom_call.1} parent=1 // pred_check_branch
      %341 = sbr.rel (0) target = $region125
    $region124: #{tpu_custom_call.1} parent=1 // pred_region
      %343 = dma.done [#allocation12], 100352
    $region125: #{tpu_custom_call.1} parent=1 // pred_fallthru
      _
    // Predicated region
    $region126: #{tpu_custom_call.1} parent=1 // pred_check
      _
    $region127: #{tpu_custom_call.1} parent=1 // pred_check_branch
      %345 = sbr.rel (0) target = $region129
    $region128: #{tpu_custom_call.1} parent=1 // pred_region
      %347 = dma.done [#allocation15], 16
    $region129: #{tpu_custom_call.1} parent=1 // pred_fallthru
      _
    // Predicated region
    $region130: #{tpu_custom_call.1} parent=1 // pred_check
      _
    $region131: #{tpu_custom_call.1} parent=1 // pred_check_branch
      %349 = sbr.rel (0) target = $region133
    $region132: #{tpu_custom_call.1} parent=1 // pred_region
      %351 = dma.done [#allocation15], 16
    $region133: #{tpu_custom_call.1} parent=1 // pred_fallthru
      _
    // Predicated region
    $region134: #{tpu_custom_call.1} parent=1 // pred_check
      _
    $region135: #{tpu_custom_call.1} parent=1 // pred_check_branch
      %353 = sbr.rel (0) target = $region137
    $region136: #{tpu_custom_call.1} parent=1 // pred_region
      %355 = dma.done [#allocation18], 16
    $region137: #{tpu_custom_call.1} parent=1 // pred_fallthru
      _
    // Predicated region
    $region138: #{tpu_custom_call.1} parent=1 // pred_check
      _
    $region139: #{tpu_custom_call.1} parent=1 // pred_check_branch
      %357 = sbr.rel (0) target = $region141
    $region140: #{tpu_custom_call.1} parent=1 // pred_region
      %359 = dma.done [#allocation18], 16
    $region141: #{tpu_custom_call.1} parent=1 // pred_fallthru
      _
    // Predicated region
    $region142: #{tpu_custom_call.1} parent=1 // pred_check
      _
    $region143: #{tpu_custom_call.1} parent=1 // pred_check_branch
      %361 = sbr.rel (0) target = $region145
    $region144: #{tpu_custom_call.1} parent=1 // pred_region
      %363 = dma.done [#allocation21], 16
    $region145: #{tpu_custom_call.1} parent=1 // pred_fallthru
      _
    // Predicated region
    $region146: #{tpu_custom_call.1} parent=1 // pred_check
      _
    $region147: #{tpu_custom_call.1} parent=1 // pred_check_branch
      %365 = sbr.rel (0) target = $region149
    $region148: #{tpu_custom_call.1} parent=1 // pred_region
      %367 = dma.done [#allocation21], 2048
    $region149: #{tpu_custom_call.1} parent=1 // pred_fallthru
      _
    // Predicated region
    $region150: #{tpu_custom_call.1} parent=1 // pred_check
      _
    $region151: #{tpu_custom_call.1} parent=1 // pred_check_branch
      %369 = sbr.rel (0) target = $region153
    $region152: #{tpu_custom_call.1} parent=1 // pred_region
      %371 = dma.done [#allocation24], 16
    $region153: #{tpu_custom_call.1} parent=1 // pred_fallthru
      _
    // Predicated region
    $region154: #{tpu_custom_call.1} parent=1 // pred_check
      _
    $region155: #{tpu_custom_call.1} parent=1 // pred_check_branch
      %373 = sbr.rel (0) target = $region157
    $region156: #{tpu_custom_call.1} parent=1 // pred_region
      %375 = dma.done [#allocation24], 2048
    $region157: #{tpu_custom_call.1} parent=1 // pred_fallthru
      _
    // Predicated region
    $region158: #{tpu_custom_call.1} parent=1 // pred_check
      _
    $region159: #{tpu_custom_call.1} parent=1 // pred_check_branch
      %377 = sbr.rel (0) target = $region161
    $region160: #{tpu_custom_call.1} parent=1 // pred_region
      %379 = dma.done [#allocation27], 2048
    $region161: #{tpu_custom_call.1} parent=1 // pred_fallthru
      _
    // Predicated region
    $region162: #{tpu_custom_call.1} parent=1 // pred_check
      _
    $region163: #{tpu_custom_call.1} parent=1 // pred_check_branch
      %381 = sbr.rel (0) target = $region165
    $region164: #{tpu_custom_call.1} parent=1 // pred_region
      %383 = dma.done [#allocation27], 16
    $region165: #{tpu_custom_call.1} parent=1 // pred_fallthru
      _
    // Predicated region
    $region166: #{tpu_custom_call.1} parent=1 // pred_check
      _
    $region167: #{tpu_custom_call.1} parent=1 // pred_check_branch
      %385 = sbr.rel (0) target = $region169
    $region168: #{tpu_custom_call.1} parent=1 // pred_region
      %387 = dma.done [#allocation30], 16
    $region169: #{tpu_custom_call.1} parent=1 // pred_fallthru
      _
    // Predicated region
    $region170: #{tpu_custom_call.1} parent=1 // pred_check
      _
    $region171: #{tpu_custom_call.1} parent=1 // pred_check_branch
      %389 = sbr.rel (0) target = $region173
    $region172: #{tpu_custom_call.1} parent=1 // pred_region
      %391 = dma.done [#allocation30], 16
    $region173: #{tpu_custom_call.1} parent=1 // pred_fallthru
      _
    // Predicated region
    $region174: #{tpu_custom_call.1} parent=1 // pred_check
      _
    $region175: #{tpu_custom_call.1} parent=1 // pred_check_branch
      %393 = sbr.rel (0) target = $region177
    $region176: #{tpu_custom_call.1} parent=1 // pred_region
      %395 = dma.done [#allocation33], 16
    $region177: #{tpu_custom_call.1} parent=1 // pred_fallthru
      _
    // Predicated region
    $region178: #{tpu_custom_call.1} parent=1 // pred_check
      _
    $region179: #{tpu_custom_call.1} parent=1 // pred_check_branch
      %397 = sbr.rel (0) target = $region181
    $region180: #{tpu_custom_call.1} parent=1 // pred_region
      %399 = dma.done [#allocation33], 16
    $region181: #{tpu_custom_call.1} parent=1 // pred_fallthru
      _
    // Predicated region
    $region182: #{tpu_custom_call.1} parent=1 // pred_check
      _
    $region183: #{tpu_custom_call.1} parent=1 // pred_check_branch
      %401 = sbr.rel (0) target = $region185
    $region184: #{tpu_custom_call.1} parent=1 // pred_region
      %403 = dma.done [#allocation36], 2048
    $region185: #{tpu_custom_call.1} parent=1 // pred_fallthru
      _
    // Predicated region
    $region186: #{tpu_custom_call.1} parent=1 // pred_check
      _
    $region187: #{tpu_custom_call.1} parent=1 // pred_check_branch
      %405 = sbr.rel (0) target = $region189
    $region188: #{tpu_custom_call.1} parent=1 // pred_region
      %407 = dma.done [#allocation36], 16
    $region189: #{tpu_custom_call.1} parent=1 // pred_fallthru
      _
    %v408 = vld [vmem:[#allocation2] sm:$0xff]
    %v409 = vld [vmem:[#allocation2 + $0x8] sm:$0xff]
    %v410 = vld [vmem:[#allocation2 + $0x10] sm:$0xff]
    %v411 = vld [vmem:[#allocation2 + $0x18] sm:$0xff]
    %v412 = vld [vmem:[#allocation2 + $0x20] sm:$0xff]
    %v413 = vld [vmem:[#allocation2 + $0x28] sm:$0xff]
    %v414 = vld [vmem:[#allocation2 + $0x30] sm:$0xff]
    %v415 = vld [vmem:[#allocation2 + $0x38] sm:$0xff]
    %v416 = vld [vmem:[#allocation2 + $0x40] sm:$0xff]
    %v417 = vld [vmem:[#allocation2 + $0x48] sm:$0xff]
    %v418 = vld [vmem:[#allocation2 + $0x50] sm:$0xff]
    %v419 = vld [vmem:[#allocation2 + $0x58] sm:$0xff]
    %v420 = vld [vmem:[#allocation2 + $0x60] sm:$0xff]
    %v421 = vld [vmem:[#allocation2 + $0x68] sm:$0xff]
    %v422 = vld [vmem:[#allocation2 + $0x70] sm:$0xff]
    %v423 = vld [vmem:[#allocation2 + $0x78] sm:$0xff]
    %v424 = vld [vmem:[#allocation2 + $0x80] sm:$0xff]
    %v425 = vld [vmem:[#allocation2 + $0x88] sm:$0xff]
    %v426 = vld [vmem:[#allocation2 + $0x90] sm:$0xff]
    %v427 = vld [vmem:[#allocation2 + $0x98] sm:$0xff]
    %v428 = vld [vmem:[#allocation2 + $0xa0] sm:$0xff]
    %v429 = vld [vmem:[#allocation2 + $0xa8] sm:$0xff]
    %v430 = vld [vmem:[#allocation2 + $0xb0] sm:$0xff]
    %v431 = vld [vmem:[#allocation2 + $0xb8] sm:$0xff]
    %v432 = vld [vmem:[#allocation2 + $0xc0] sm:$0xff]
    %v433 = vld [vmem:[#allocation2 + $0xc8] sm:$0xff]
    %v434 = vld [vmem:[#allocation2 + $0xd0] sm:$0xff]
    %v435 = vld [vmem:[#allocation2 + $0xd8] sm:$0xff]
    %v436 = vld [vmem:[#allocation2 + $0xe0] sm:$0xff]
    %v437 = vld [vmem:[#allocation2 + $0xe8] sm:$0xff]
    %v438 = vld [vmem:[#allocation2 + $0xf0] sm:$0xff]
    %v439 = vld [vmem:[#allocation2 + $0xf8] sm:$0xff]
    %v440 = vld [vmem:[#allocation8] sm:$0x1]
    %v441 = vld [vmem:[#allocation10] sm:$0x1]
    %v442 = vadd.f32 %v408, %v409
    %v443 = vadd.f32 %v442, %v410
    %v444 = vadd.f32 %v443, %v411
    %v445 = vadd.f32 %v444, %v412
    %v446 = vadd.f32 %v445, %v413
    %v447 = vadd.f32 %v446, %v414
    %v448 = vadd.f32 %v447, %v415
    %v449 = vadd.f32 %v448, %v416
    %v450 = vadd.f32 %v449, %v417
    %v451 = vadd.f32 %v450, %v418
    %v452 = vadd.f32 %v451, %v419
    %v453 = vadd.f32 %v452, %v420
    %v454 = vadd.f32 %v453, %v421
    %v455 = vadd.f32 %v454, %v422
    %v456 = vadd.f32 %v455, %v423
    %v457 = vadd.f32 %v456, %v424
    %v458 = vadd.f32 %v457, %v425
    %v459 = vadd.f32 %v458, %v426
    %v460 = vadd.f32 %v459, %v427
    %v461 = vadd.f32 %v460, %v428
    %v462 = vadd.f32 %v461, %v429
    %v463 = vadd.f32 %v462, %v430
    %v464 = vadd.f32 %v463, %v431
    %v465 = vadd.f32 %v464, %v432
    %v466 = vadd.f32 %v465, %v433
    %v467 = vadd.f32 %v466, %v434
    %v468 = vadd.f32 %v467, %v435
    %v469 = vadd.f32 %v468, %v436
    %v470 = vadd.f32 %v469, %v437
    %v471 = vadd.f32 %v470, %v438
    %v472 = vadd.f32 %v471, %v439
    %v473 = vrot.slane %v472, 4
    %v474 = vadd.f32 %v472, %v473
    %v475 = vrot.slane %v474, 2
    %v476 = vadd.f32 %v474, %v475
    %v477 = vrot.slane %v476, 1
    %v478 = vadd.f32 %v476, %v477
    %v479 = vmul.f32 %v478, 0.00390625
    %v480 = vmul.f32 %v408, %v408
    %v481 = vmul.f32 %v409, %v409
    %v482 = vmul.f32 %v410, %v410
    %v483 = vmul.f32 %v411, %v411
    %v484 = vmul.f32 %v412, %v412
    %v485 = vmul.f32 %v413, %v413
    %v486 = vmul.f32 %v414, %v414
    %v487 = vmul.f32 %v415, %v415
    %v488 = vmul.f32 %v416, %v416
    %v489 = vmul.f32 %v417, %v417
    %v490 = vmul.f32 %v418, %v418
    %v491 = vmul.f32 %v419, %v419
    %v492 = vmul.f32 %v420, %v420
    %v493 = vmul.f32 %v421, %v421
    %v494 = vmul.f32 %v422, %v422
    %v495 = vmul.f32 %v423, %v423
    %v496 = vmul.f32 %v424, %v424
    %v497 = vmul.f32 %v425, %v425
    %v498 = vmul.f32 %v426, %v426
    %v499 = vmul.f32 %v427, %v427
    %v500 = vmul.f32 %v428, %v428
    %v501 = vmul.f32 %v429, %v429
    %v502 = vmul.f32 %v430, %v430
    %v503 = vmul.f32 %v431, %v431
    %v504 = vmul.f32 %v432, %v432
    %v505 = vmul.f32 %v433, %v433
    %v506 = vmul.f32 %v434, %v434
    %v507 = vmul.f32 %v435, %v435
    %v508 = vmul.f32 %v436, %v436
    %v509 = vmul.f32 %v437, %v437
    %v510 = vmul.f32 %v438, %v438
    %v511 = vmul.f32 %v439, %v439
    %v512 = vadd.f32 %v480, %v481
    %v513 = vadd.f32 %v512, %v482
    %v514 = vadd.f32 %v513, %v483
    %v515 = vadd.f32 %v514, %v484
    %v516 = vadd.f32 %v515, %v485
    %v517 = vadd.f32 %v516, %v486
    %v518 = vadd.f32 %v517, %v487
    %v519 = vadd.f32 %v518, %v488
    %v520 = vadd.f32 %v519, %v489
    %v521 = vadd.f32 %v520, %v490
    %v522 = vadd.f32 %v521, %v491
    %v523 = vadd.f32 %v522, %v492
    %v524 = vadd.f32 %v523, %v493
    %v525 = vadd.f32 %v524, %v494
    %v526 = vadd.f32 %v525, %v495
    %v527 = vadd.f32 %v526, %v496
    %v528 = vadd.f32 %v527, %v497
    %v529 = vadd.f32 %v528, %v498
    %v530 = vadd.f32 %v529, %v499
    %v531 = vadd.f32 %v530, %v500
    %v532 = vadd.f32 %v531, %v501
    %v533 = vadd.f32 %v532, %v502
    %v534 = vadd.f32 %v533, %v503
    %v535 = vadd.f32 %v534, %v504
    %v536 = vadd.f32 %v535, %v505
    %v537 = vadd.f32 %v536, %v506
    %v538 = vadd.f32 %v537, %v507
    %v539 = vadd.f32 %v538, %v508
    %v540 = vadd.f32 %v539, %v509
    %v541 = vadd.f32 %v540, %v510
    %v542 = vadd.f32 %v541, %v511
    %v543 = vrot.slane %v542, 4
    %v544 = vadd.f32 %v542, %v543
    %v545 = vrot.slane %v544, 2
    %v546 = vadd.f32 %v544, %v545
    %v547 = vrot.slane %v546, 1
    %v548 = vadd.f32 %v546, %v547
    %v549 = vmul.f32 %v548, 0.00390625
    %v550 = vmul.f32 %v479, %v479
    %v551 = vsub.f32 %v549, %v550
    %v552 = vmax.f32 %v551, 0.0
    %v553 = vsub.f32 %v408, %v479
    %v554 = vsub.f32 %v409, %v479
    %v555 = vsub.f32 %v410, %v479
    %v556 = vsub.f32 %v411, %v479
    %v557 = vsub.f32 %v412, %v479
    %v558 = vsub.f32 %v413, %v479
    %v559 = vsub.f32 %v414, %v479
    %v560 = vsub.f32 %v415, %v479
    %v561 = vsub.f32 %v416, %v479
    %v562 = vsub.f32 %v417, %v479
    %v563 = vsub.f32 %v418, %v479
    %v564 = vsub.f32 %v419, %v479
    %v565 = vsub.f32 %v420, %v479
    %v566 = vsub.f32 %v421, %v479
    %v567 = vsub.f32 %v422, %v479
    %v568 = vsub.f32 %v423, %v479
    %v569 = vsub.f32 %v424, %v479
    %v570 = vsub.f32 %v425, %v479
    %v571 = vsub.f32 %v426, %v479
    %v572 = vsub.f32 %v427, %v479
    %v573 = vsub.f32 %v428, %v479
    %v574 = vsub.f32 %v429, %v479
    %v575 = vsub.f32 %v430, %v479
    %v576 = vsub.f32 %v431, %v479
    %v577 = vsub.f32 %v432, %v479
    %v578 = vsub.f32 %v433, %v479
    %v579 = vsub.f32 %v434, %v479
    %v580 = vsub.f32 %v435, %v479
    %v581 = vsub.f32 %v436, %v479
    %v582 = vsub.f32 %v437, %v479
    %v583 = vsub.f32 %v438, %v479
    %v584 = vsub.f32 %v439, %v479
    %v585 = vadd.f32 %v552, 1e-05
    %v586 = vrsqrt.pop %v585
    %v587 = vmul.f32 %v586, %v585
    %v588 = vmul.f32 %v587, %v586
    %v589 = vmul.f32 0.5, %v588
    %v590 = vsub.f32 1.5, %v589
    %v591 = vmul.f32 %v586, %v590
    %vm592 = vweird.f32 %v585
    %vm593 = vweird.f32 %v586
    %vm594 = vmor %vm592, %vm593
    %v595 = vsel %vm594, %v586, %v591
    %v596 = vmul.f32 %v440, %v595
    %v598 = vperm.slane %v596, 0
    %v600 = vmul.f32 %v553, %v598
    %v601 = vmul.f32 %v554, %v598
    %v602 = vmul.f32 %v555, %v598
    %v603 = vmul.f32 %v556, %v598
    %v604 = vmul.f32 %v557, %v598
    %v605 = vmul.f32 %v558, %v598
    %v606 = vmul.f32 %v559, %v598
    %v607 = vmul.f32 %v560, %v598
    %v608 = vmul.f32 %v561, %v598
    %v609 = vmul.f32 %v562, %v598
    %v610 = vmul.f32 %v563, %v598
    %v611 = vmul.f32 %v564, %v598
    %v612 = vmul.f32 %v565, %v598
    %v613 = vmul.f32 %v566, %v598
    %v614 = vmul.f32 %v567, %v598
    %v615 = vmul.f32 %v568, %v598
    %v616 = vmul.f32 %v569, %v598
    %v617 = vmul.f32 %v570, %v598
    %v618 = vmul.f32 %v571, %v598
    %v619 = vmul.f32 %v572, %v598
    %v620 = vmul.f32 %v573, %v598
    %v621 = vmul.f32 %v574, %v598
    %v622 = vmul.f32 %v575, %v598
    %v623 = vmul.f32 %v576, %v598
    %v624 = vmul.f32 %v577, %v598
    %v625 = vmul.f32 %v578, %v598
    %v626 = vmul.f32 %v579, %v598
    %v627 = vmul.f32 %v580, %v598
    %v628 = vmul.f32 %v581, %v598
    %v629 = vmul.f32 %v582, %v598
    %v630 = vmul.f32 %v583, %v598
    %v631 = vmul.f32 %v584, %v598
    %v633 = vperm.slane %v441, 0
    %v635 = vadd.f32 %v600, %v633
    %v636 = vadd.f32 %v601, %v633
    %v637 = vadd.f32 %v602, %v633
    %v638 = vadd.f32 %v603, %v633
    %v639 = vadd.f32 %v604, %v633
    %v640 = vadd.f32 %v605, %v633
    %v641 = vadd.f32 %v606, %v633
    %v642 = vadd.f32 %v607, %v633
    %v643 = vadd.f32 %v608, %v633
    %v644 = vadd.f32 %v609, %v633
    %v645 = vadd.f32 %v610, %v633
    %v646 = vadd.f32 %v611, %v633
    %v647 = vadd.f32 %v612, %v633
    %v648 = vadd.f32 %v613, %v633
    %v649 = vadd.f32 %v614, %v633
    %v650 = vadd.f32 %v615, %v633
    %v651 = vadd.f32 %v616, %v633
    %v652 = vadd.f32 %v617, %v633
    %v653 = vadd.f32 %v618, %v633
    %v654 = vadd.f32 %v619, %v633
    %v655 = vadd.f32 %v620, %v633
    %v656 = vadd.f32 %v621, %v633
    %v657 = vadd.f32 %v622, %v633
    %v658 = vadd.f32 %v623, %v633
    %v659 = vadd.f32 %v624, %v633
    %v660 = vadd.f32 %v625, %v633
    %v661 = vadd.f32 %v626, %v633
    %v662 = vadd.f32 %v627, %v633
    %v663 = vadd.f32 %v628, %v633
    %v664 = vadd.f32 %v629, %v633
    %v665 = vadd.f32 %v630, %v633
    %v666 = vadd.f32 %v631, %v633
    %v667 = vld [vmem:[%s1] sm:$0xff]
    %v668 = vld [vmem:[%s1 + $0x8] sm:$0xff]
    %v669 = vld [vmem:[%s1 + $0x10] sm:$0xff]
    %v670 = vld [vmem:[%s1 + $0x18] sm:$0xff]
    %v671 = vld [vmem:[%s1 + $0x20] sm:$0xff]
    %v672 = vld [vmem:[%s1 + $0x28] sm:$0xff]
    %v673 = vld [vmem:[%s1 + $0x30] sm:$0xff]
    %v674 = vld [vmem:[%s1 + $0x38] sm:$0xff]
    %v675 = vld [vmem:[%s1 + $0x40] sm:$0xff]
    %v676 = vld [vmem:[%s1 + $0x48] sm:$0xff]
    %v677 = vld [vmem:[%s1 + $0x50] sm:$0xff]
    %v678 = vld [vmem:[%s1 + $0x58] sm:$0xff]
    %v679 = vld [vmem:[%s1 + $0x60] sm:$0xff]
    %v680 = vld [vmem:[%s1 + $0x68] sm:$0xff]
    %v681 = vld [vmem:[%s1 + $0x70] sm:$0xff]
    %v682 = vld [vmem:[%s1 + $0x78] sm:$0xff]
    %v683 = vld [vmem:[%s1 + $0x80] sm:$0xff]
    %v684 = vld [vmem:[%s1 + $0x88] sm:$0xff]
    %v685 = vld [vmem:[%s1 + $0x90] sm:$0xff]
    %v686 = vld [vmem:[%s1 + $0x98] sm:$0xff]
    %v687 = vld [vmem:[%s1 + $0xa0] sm:$0xff]
    %v688 = vld [vmem:[%s1 + $0xa8] sm:$0xff]
    %v689 = vld [vmem:[%s1 + $0xb0] sm:$0xff]
    %v690 = vld [vmem:[%s1 + $0xb8] sm:$0xff]
    %v691 = vld [vmem:[%s1 + $0xc0] sm:$0xff]
    %v692 = vld [vmem:[%s1 + $0xc8] sm:$0xff]
    %v693 = vld [vmem:[%s1 + $0xd0] sm:$0xff]
    %v694 = vld [vmem:[%s1 + $0xd8] sm:$0xff]
    %v695 = vld [vmem:[%s1 + $0xe0] sm:$0xff]
    %v696 = vld [vmem:[%s1 + $0xe8] sm:$0xff]
    %v697 = vld [vmem:[%s1 + $0xf0] sm:$0xff]
    %v698 = vld [vmem:[%s1 + $0xf8] sm:$0xff]
    %v699 = vld [vmem:[%s1 + $0x100] sm:$0xff]
    %v700 = vld [vmem:[%s1 + $0x108] sm:$0xff]
    %v701 = vld [vmem:[%s1 + $0x110] sm:$0xff]
    %v702 = vld [vmem:[%s1 + $0x118] sm:$0xff]
    %v703 = vld [vmem:[%s1 + $0x120] sm:$0xff]
    %v704 = vld [vmem:[%s1 + $0x128] sm:$0xff]
    %v705 = vld [vmem:[%s1 + $0x130] sm:$0xff]
    %v706 = vld [vmem:[%s1 + $0x138] sm:$0xff]
    %v707 = vld [vmem:[%s1 + $0x140] sm:$0xff]
    %v708 = vld [vmem:[%s1 + $0x148] sm:$0xff]
    %v709 = vld [vmem:[%s1 + $0x150] sm:$0xff]
    %v710 = vld [vmem:[%s1 + $0x158] sm:$0xff]
    %v711 = vld [vmem:[%s1 + $0x160] sm:$0xff]
    %v712 = vld [vmem:[%s1 + $0x168] sm:$0xff]
    %v713 = vld [vmem:[%s1 + $0x170] sm:$0xff]
    %v714 = vld [vmem:[%s1 + $0x178] sm:$0xff]
    %v715 = vld [vmem:[%s1 + $0x180] sm:$0xf]
    %v716 = vld [vmem:[%s1 + $0x188] sm:$0xf]
    %717 = vmatpush.msra.mxu0 %v650
    %718 = vmatpush.msra.mxu0 %v649
    %719 = vmatpush.msra.mxu0 %v648
    %720 = vmatpush.msra.mxu0 %v647
    %721 = vmatpush.msra.mxu0 %v646
    %722 = vmatpush.msra.mxu0 %v645
    %723 = vmatpush.msra.mxu0 %v644
    %724 = vmatpush.msra.mxu0 %v643
    %725 = vmatpush.msra.mxu0 %v642
    %726 = vmatpush.msra.mxu0 %v641
    %727 = vmatpush.msra.mxu0 %v640
    %728 = vmatpush.msra.mxu0 %v639
    %729 = vmatpush.msra.mxu0 %v638
    %730 = vmatpush.msra.mxu0 %v637
    %731 = vmatpush.msra.mxu0 %v636
    %732 = vmatpush.msra.mxu0 %v635
    %733 = vmatmul.f32.gmra.mxu0 %v667
    %v734 = vpop.f32.mrf.mxu0
    %v735 = vadd.f32 0.0, %v734
    %736 = vmatmul.f32.gmra.mxu0 %v669
    %v737 = vpop.f32.mrf.mxu0
    %v738 = vadd.f32 0.0, %v737
    %739 = vmatmul.f32.gmra.mxu0 %v671
    %v740 = vpop.f32.mrf.mxu0
    %v741 = vadd.f32 0.0, %v740
    %742 = vmatmul.f32.gmra.mxu0 %v673
    %v743 = vpop.f32.mrf.mxu0
    %v744 = vadd.f32 0.0, %v743
    %745 = vmatmul.f32.gmra.mxu0 %v675
    %v746 = vpop.f32.mrf.mxu0
    %v747 = vadd.f32 0.0, %v746
    %748 = vmatmul.f32.gmra.mxu0 %v677
    %v749 = vpop.f32.mrf.mxu0
    %v750 = vadd.f32 0.0, %v749
    %751 = vmatmul.f32.gmra.mxu0 %v679
    %v752 = vpop.f32.mrf.mxu0
    %v753 = vadd.f32 0.0, %v752
    %754 = vmatmul.f32.gmra.mxu0 %v681
    %v755 = vpop.f32.mrf.mxu0
    %v756 = vadd.f32 0.0, %v755
    %757 = vmatmul.f32.gmra.mxu0 %v683
    %v758 = vpop.f32.mrf.mxu0
    %v759 = vadd.f32 0.0, %v758
    %760 = vmatmul.f32.gmra.mxu0 %v685
    %v761 = vpop.f32.mrf.mxu0
    %v762 = vadd.f32 0.0, %v761
    %763 = vmatmul.f32.gmra.mxu0 %v687
    %v764 = vpop.f32.mrf.mxu0
    %v765 = vadd.f32 0.0, %v764
    %766 = vmatmul.f32.gmra.mxu0 %v689
    %v767 = vpop.f32.mrf.mxu0
    %v768 = vadd.f32 0.0, %v767
    %769 = vmatmul.f32.gmra.mxu0 %v691
    %v770 = vpop.f32.mrf.mxu0
    %v771 = vadd.f32 0.0, %v770
    %772 = vmatmul.f32.gmra.mxu0 %v693
    %v773 = vpop.f32.mrf.mxu0
    %v774 = vadd.f32 0.0, %v773
    %775 = vmatmul.f32.gmra.mxu0 %v695
    %v776 = vpop.f32.mrf.mxu0
    %v777 = vadd.f32 0.0, %v776
    %778 = vmatmul.f32.gmra.mxu0 %v697
    %v779 = vpop.f32.mrf.mxu0
    %v780 = vadd.f32 0.0, %v779
    %781 = vmatmul.f32.gmra.mxu0 %v699
    %v782 = vpop.f32.mrf.mxu0
    %v783 = vadd.f32 0.0, %v782
    %784 = vmatmul.f32.gmra.mxu0 %v701
    %v785 = vpop.f32.mrf.mxu0
    %v786 = vadd.f32 0.0, %v785
    %787 = vmatmul.f32.gmra.mxu0 %v703
    %v788 = vpop.f32.mrf.mxu0
    %v789 = vadd.f32 0.0, %v788
    %790 = vmatmul.f32.gmra.mxu0 %v705
    %v791 = vpop.f32.mrf.mxu0
    %v792 = vadd.f32 0.0, %v791
    %793 = vmatmul.f32.gmra.mxu0 %v707
    %v794 = vpop.f32.mrf.mxu0
    %v795 = vadd.f32 0.0, %v794
    %796 = vmatmul.f32.gmra.mxu0 %v709
    %v797 = vpop.f32.mrf.mxu0
    %v798 = vadd.f32 0.0, %v797
    %799 = vmatmul.f32.gmra.mxu0 %v711
    %v800 = vpop.f32.mrf.mxu0
    %v801 = vadd.f32 0.0, %v800
    %802 = vmatmul.f32.gmra.mxu0 %v713
    %v803 = vpop.f32.mrf.mxu0
    %v804 = vadd.f32 0.0, %v803
    %805 = vmatmul.f32.gmra.mxu0 %v715
    %v806 = vpop.f32.mrf.mxu0
    %v807 = vadd.f32 0.0, %v806
    %808 = vdwg.mxu0
    %809 = vmatpush.msra.mxu0 %v666
    %810 = vmatpush.msra.mxu0 %v665
    %811 = vmatpush.msra.mxu0 %v664
    %812 = vmatpush.msra.mxu0 %v663
    %813 = vmatpush.msra.mxu0 %v662
    %814 = vmatpush.msra.mxu0 %v661
    %815 = vmatpush.msra.mxu0 %v660
    %816 = vmatpush.msra.mxu0 %v659
    %817 = vmatpush.msra.mxu0 %v658
    %818 = vmatpush.msra.mxu0 %v657
    %819 = vmatpush.msra.mxu0 %v656
    %820 = vmatpush.msra.mxu0 %v655
    %821 = vmatpush.msra.mxu0 %v654
    %822 = vmatpush.msra.mxu0 %v653
    %823 = vmatpush.msra.mxu0 %v652
    %824 = vmatpush.msra.mxu0 %v651
    %825 = vmatmul.f32.gmra.mxu0 %v668
    %v826 = vpop.f32.mrf.mxu0
    %v827 = vadd.f32 %v735, %v826
    %828 = vmatmul.f32.gmra.mxu0 %v670
    %v829 = vpop.f32.mrf.mxu0
    %v830 = vadd.f32 %v738, %v829
    %831 = vmatmul.f32.gmra.mxu0 %v672
    %v832 = vpop.f32.mrf.mxu0
    %v833 = vadd.f32 %v741, %v832
    %834 = vmatmul.f32.gmra.mxu0 %v674
    %v835 = vpop.f32.mrf.mxu0
    %v836 = vadd.f32 %v744, %v835
    %837 = vmatmul.f32.gmra.mxu0 %v676
    %v838 = vpop.f32.mrf.mxu0
    %v839 = vadd.f32 %v747, %v838
    %840 = vmatmul.f32.gmra.mxu0 %v678
    %v841 = vpop.f32.mrf.mxu0
    %v842 = vadd.f32 %v750, %v841
    %843 = vmatmul.f32.gmra.mxu0 %v680
    %v844 = vpop.f32.mrf.mxu0
    %v845 = vadd.f32 %v753, %v844
    %846 = vmatmul.f32.gmra.mxu0 %v682
    %v847 = vpop.f32.mrf.mxu0
    %v848 = vadd.f32 %v756, %v847
    %849 = vmatmul.f32.gmra.mxu0 %v684
    %v850 = vpop.f32.mrf.mxu0
    %v851 = vadd.f32 %v759, %v850
    %852 = vmatmul.f32.gmra.mxu0 %v686
    %v853 = vpop.f32.mrf.mxu0
    %v854 = vadd.f32 %v762, %v853
    %855 = vmatmul.f32.gmra.mxu0 %v688
    %v856 = vpop.f32.mrf.mxu0
    %v857 = vadd.f32 %v765, %v856
    %858 = vmatmul.f32.gmra.mxu0 %v690
    %v859 = vpop.f32.mrf.mxu0
    %v860 = vadd.f32 %v768, %v859
    %861 = vmatmul.f32.gmra.mxu0 %v692
    %v862 = vpop.f32.mrf.mxu0
    %v863 = vadd.f32 %v771, %v862
    %864 = vmatmul.f32.gmra.mxu0 %v694
    %v865 = vpop.f32.mrf.mxu0
    %v866 = vadd.f32 %v774, %v865
    %867 = vmatmul.f32.gmra.mxu0 %v696
    %v868 = vpop.f32.mrf.mxu0
    %v869 = vadd.f32 %v777, %v868
    %870 = vmatmul.f32.gmra.mxu0 %v698
    %v871 = vpop.f32.mrf.mxu0
    %v872 = vadd.f32 %v780, %v871
    %873 = vmatmul.f32.gmra.mxu0 %v700
    %v874 = vpop.f32.mrf.mxu0
    %v875 = vadd.f32 %v783, %v874
    %876 = vmatmul.f32.gmra.mxu0 %v702
    %v877 = vpop.f32.mrf.mxu0
    %v878 = vadd.f32 %v786, %v877
    %879 = vmatmul.f32.gmra.mxu0 %v704
    %v880 = vpop.f32.mrf.mxu0
    %v881 = vadd.f32 %v789, %v880
    %882 = vmatmul.f32.gmra.mxu0 %v706
    %v883 = vpop.f32.mrf.mxu0
    %v884 = vadd.f32 %v792, %v883
    %885 = vmatmul.f32.gmra.mxu0 %v708
    %v886 = vpop.f32.mrf.mxu0
    %v887 = vadd.f32 %v795, %v886
    %888 = vmatmul.f32.gmra.mxu0 %v710
    %v889 = vpop.f32.mrf.mxu0
    %v890 = vadd.f32 %v798, %v889
    %891 = vmatmul.f32.gmra.mxu0 %v712
    %v892 = vpop.f32.mrf.mxu0
    %v893 = vadd.f32 %v801, %v892
    %894 = vmatmul.f32.gmra.mxu0 %v714
    %v895 = vpop.f32.mrf.mxu0
    %v896 = vadd.f32 %v804, %v895
    %897 = vmatmul.f32.gmra.mxu0 %v716
    %v898 = vpop.f32.mrf.mxu0
    %v899 = vadd.f32 %v807, %v898
    %900 = vdwg.mxu0
    %v901 = vld [vmem:[#allocation5] sm:$0xff]
    %v902 = vld [vmem:[#allocation5 + $0x8] sm:$0xff]
    %v903 = vld [vmem:[#allocation5 + $0x10] sm:$0xff]
    %v904 = vld [vmem:[#allocation5 + $0x18] sm:$0xff]
    %v905 = vld [vmem:[#allocation5 + $0x20] sm:$0xff]
    %v906 = vld [vmem:[#allocation5 + $0x28] sm:$0xff]
    %v907 = vld [vmem:[#allocation5 + $0x30] sm:$0xff]
    %v908 = vld [vmem:[#allocation5 + $0x38] sm:$0xff]
    %v909 = vld [vmem:[#allocation5 + $0x40] sm:$0xff]
    %v910 = vld [vmem:[#allocation5 + $0x48] sm:$0xff]
    %v911 = vld [vmem:[#allocation5 + $0x50] sm:$0xff]
    %v912 = vld [vmem:[#allocation5 + $0x58] sm:$0xff]
    %v913 = vld [vmem:[#allocation5 + $0x60] sm:$0xff]
    %v914 = vld [vmem:[#allocation5 + $0x68] sm:$0xff]
    %v915 = vld [vmem:[#allocation5 + $0x70] sm:$0xff]
    %v916 = vld [vmem:[#allocation5 + $0x78] sm:$0xff]
    %s917 = scalar_lea.vmem %s1, 400
    %v918 = vld [vmem:[%s917] sm:$0xff]
    %v919 = vld [vmem:[%s917 + $0x8] sm:$0xff]
    %v920 = vld [vmem:[%s917 + $0x10] sm:$0xff]
    %v921 = vld [vmem:[%s917 + $0x18] sm:$0xff]
    %v922 = vld [vmem:[%s917 + $0x20] sm:$0xff]
    %v923 = vld [vmem:[%s917 + $0x28] sm:$0xff]
    %v924 = vld [vmem:[%s917 + $0x30] sm:$0xff]
    %v925 = vld [vmem:[%s917 + $0x38] sm:$0xff]
    %v926 = vld [vmem:[%s917 + $0x40] sm:$0xff]
    %v927 = vld [vmem:[%s917 + $0x48] sm:$0xff]
    %v928 = vld [vmem:[%s917 + $0x50] sm:$0xff]
    %v929 = vld [vmem:[%s917 + $0x58] sm:$0xff]
    %v930 = vld [vmem:[%s917 + $0x60] sm:$0xff]
    %v931 = vld [vmem:[%s917 + $0x68] sm:$0xff]
    %v932 = vld [vmem:[%s917 + $0x70] sm:$0xff]
    %v933 = vld [vmem:[%s917 + $0x78] sm:$0xff]
    %v934 = vld [vmem:[%s917 + $0x80] sm:$0xff]
    %v935 = vld [vmem:[%s917 + $0x88] sm:$0xff]
    %v936 = vld [vmem:[%s917 + $0x90] sm:$0xff]
    %v937 = vld [vmem:[%s917 + $0x98] sm:$0xff]
    %v938 = vld [vmem:[%s917 + $0xa0] sm:$0xff]
    %v939 = vld [vmem:[%s917 + $0xa8] sm:$0xff]
    %v940 = vld [vmem:[%s917 + $0xb0] sm:$0xff]
    %v941 = vld [vmem:[%s917 + $0xb8] sm:$0xff]
    %v942 = vld [vmem:[%s917 + $0xc0] sm:$0xff]
    %v943 = vld [vmem:[%s917 + $0xc8] sm:$0xff]
    %v944 = vld [vmem:[%s917 + $0xd0] sm:$0xff]
    %v945 = vld [vmem:[%s917 + $0xd8] sm:$0xff]
    %v946 = vld [vmem:[%s917 + $0xe0] sm:$0xff]
    %v947 = vld [vmem:[%s917 + $0xe8] sm:$0xff]
    %v948 = vld [vmem:[%s917 + $0xf0] sm:$0xff]
    %v949 = vld [vmem:[%s917 + $0xf8] sm:$0xff]
    %v950 = vld [vmem:[%s917 + $0x100] sm:$0xff]
    %v951 = vld [vmem:[%s917 + $0x108] sm:$0xff]
    %v952 = vld [vmem:[%s917 + $0x110] sm:$0xff]
    %v953 = vld [vmem:[%s917 + $0x118] sm:$0xff]
    %v954 = vld [vmem:[%s917 + $0x120] sm:$0xff]
    %v955 = vld [vmem:[%s917 + $0x128] sm:$0xff]
    %v956 = vld [vmem:[%s917 + $0x130] sm:$0xff]
    %v957 = vld [vmem:[%s917 + $0x138] sm:$0xff]
    %v958 = vld [vmem:[%s917 + $0x140] sm:$0xff]
    %v959 = vld [vmem:[%s917 + $0x148] sm:$0xff]
    %v960 = vld [vmem:[%s917 + $0x150] sm:$0xff]
    %v961 = vld [vmem:[%s917 + $0x158] sm:$0xff]
    %v962 = vld [vmem:[%s917 + $0x160] sm:$0xff]
    %v963 = vld [vmem:[%s917 + $0x168] sm:$0xff]
    %v964 = vld [vmem:[%s917 + $0x170] sm:$0xff]
    %v965 = vld [vmem:[%s917 + $0x178] sm:$0xff]
    %v966 = vld [vmem:[%s917 + $0x180] sm:$0xf]
    %v967 = vld [vmem:[%s917 + $0x188] sm:$0xf]
    %968 = vmatpush.msra.mxu0 %v650
    %969 = vmatpush.msra.mxu0 %v649
    %970 = vmatpush.msra.mxu0 %v648
    %971 = vmatpush.msra.mxu0 %v647
    %972 = vmatpush.msra.mxu0 %v646
    %973 = vmatpush.msra.mxu0 %v645
    %974 = vmatpush.msra.mxu0 %v644
    %975 = vmatpush.msra.mxu0 %v643
    %976 = vmatpush.msra.mxu0 %v642
    %977 = vmatpush.msra.mxu0 %v641
    %978 = vmatpush.msra.mxu0 %v640
    %979 = vmatpush.msra.mxu0 %v639
    %980 = vmatpush.msra.mxu0 %v638
    %981 = vmatpush.msra.mxu0 %v637
    %982 = vmatpush.msra.mxu0 %v636
    %983 = vmatpush.msra.mxu0 %v635
    %984 = vmatmul.f32.gmra.mxu0 %v918
    %v985 = vpop.f32.mrf.mxu0
    %v986 = vadd.f32 0.0, %v985
    %987 = vmatmul.f32.gmra.mxu0 %v920
    %v988 = vpop.f32.mrf.mxu0
    %v989 = vadd.f32 0.0, %v988
    %990 = vmatmul.f32.gmra.mxu0 %v922
    %v991 = vpop.f32.mrf.mxu0
    %v992 = vadd.f32 0.0, %v991
    %993 = vmatmul.f32.gmra.mxu0 %v924
    %v994 = vpop.f32.mrf.mxu0
    %v995 = vadd.f32 0.0, %v994
    %996 = vmatmul.f32.gmra.mxu0 %v926
    %v997 = vpop.f32.mrf.mxu0
    %v998 = vadd.f32 0.0, %v997
    %999 = vmatmul.f32.gmra.mxu0 %v928
    %v1000 = vpop.f32.mrf.mxu0
    %v1001 = vadd.f32 0.0, %v1000
    %1002 = vmatmul.f32.gmra.mxu0 %v930
    %v1003 = vpop.f32.mrf.mxu0
    %v1004 = vadd.f32 0.0, %v1003
    %1005 = vmatmul.f32.gmra.mxu0 %v932
    %v1006 = vpop.f32.mrf.mxu0
    %v1007 = vadd.f32 0.0, %v1006
    %1008 = vmatmul.f32.gmra.mxu0 %v934
    %v1009 = vpop.f32.mrf.mxu0
    %v1010 = vadd.f32 0.0, %v1009
    %1011 = vmatmul.f32.gmra.mxu0 %v936
    %v1012 = vpop.f32.mrf.mxu0
    %v1013 = vadd.f32 0.0, %v1012
    %1014 = vmatmul.f32.gmra.mxu0 %v938
    %v1015 = vpop.f32.mrf.mxu0
    %v1016 = vadd.f32 0.0, %v1015
    %1017 = vmatmul.f32.gmra.mxu0 %v940
    %v1018 = vpop.f32.mrf.mxu0
    %v1019 = vadd.f32 0.0, %v1018
    %1020 = vmatmul.f32.gmra.mxu0 %v942
    %v1021 = vpop.f32.mrf.mxu0
    %v1022 = vadd.f32 0.0, %v1021
    %1023 = vmatmul.f32.gmra.mxu0 %v944
    %v1024 = vpop.f32.mrf.mxu0
    %v1025 = vadd.f32 0.0, %v1024
    %1026 = vmatmul.f32.gmra.mxu0 %v946
    %v1027 = vpop.f32.mrf.mxu0
    %v1028 = vadd.f32 0.0, %v1027
    %1029 = vmatmul.f32.gmra.mxu0 %v948
    %v1030 = vpop.f32.mrf.mxu0
    %v1031 = vadd.f32 0.0, %v1030
    %1032 = vmatmul.f32.gmra.mxu0 %v950
    %v1033 = vpop.f32.mrf.mxu0
    %v1034 = vadd.f32 0.0, %v1033
    %1035 = vmatmul.f32.gmra.mxu0 %v952
    %v1036 = vpop.f32.mrf.mxu0
    %v1037 = vadd.f32 0.0, %v1036
    %1038 = vmatmul.f32.gmra.mxu0 %v954
    %v1039 = vpop.f32.mrf.mxu0
    %v1040 = vadd.f32 0.0, %v1039
    %1041 = vmatmul.f32.gmra.mxu0 %v956
    %v1042 = vpop.f32.mrf.mxu0
    %v1043 = vadd.f32 0.0, %v1042
    %1044 = vmatmul.f32.gmra.mxu0 %v958
    %v1045 = vpop.f32.mrf.mxu0
    %v1046 = vadd.f32 0.0, %v1045
    %1047 = vmatmul.f32.gmra.mxu0 %v960
    %v1048 = vpop.f32.mrf.mxu0
    %v1049 = vadd.f32 0.0, %v1048
    %1050 = vmatmul.f32.gmra.mxu0 %v962
    %v1051 = vpop.f32.mrf.mxu0
    %v1052 = vadd.f32 0.0, %v1051
    %1053 = vmatmul.f32.gmra.mxu0 %v964
    %v1054 = vpop.f32.mrf.mxu0
    %v1055 = vadd.f32 0.0, %v1054
    %1056 = vmatmul.f32.gmra.mxu0 %v966
    %v1057 = vpop.f32.mrf.mxu0
    %v1058 = vadd.f32 0.0, %v1057
    %1059 = vdwg.mxu0
    %1060 = vmatpush.msra.mxu0 %v666
    %1061 = vmatpush.msra.mxu0 %v665
    %1062 = vmatpush.msra.mxu0 %v664
    %1063 = vmatpush.msra.mxu0 %v663
    %1064 = vmatpush.msra.mxu0 %v662
    %1065 = vmatpush.msra.mxu0 %v661
    %1066 = vmatpush.msra.mxu0 %v660
    %1067 = vmatpush.msra.mxu0 %v659
    %1068 = vmatpush.msra.mxu0 %v658
    %1069 = vmatpush.msra.mxu0 %v657
    %1070 = vmatpush.msra.mxu0 %v656
    %1071 = vmatpush.msra.mxu0 %v655
    %1072 = vmatpush.msra.mxu0 %v654
    %1073 = vmatpush.msra.mxu0 %v653
    %1074 = vmatpush.msra.mxu0 %v652
    %1075 = vmatpush.msra.mxu0 %v651
    %1076 = vmatmul.f32.gmra.mxu0 %v919
    %v1077 = vpop.f32.mrf.mxu0
    %v1078 = vadd.f32 %v986, %v1077
    %1079 = vmatmul.f32.gmra.mxu0 %v921
    %v1080 = vpop.f32.mrf.mxu0
    %v1081 = vadd.f32 %v989, %v1080
    %1082 = vmatmul.f32.gmra.mxu0 %v923
    %v1083 = vpop.f32.mrf.mxu0
    %v1084 = vadd.f32 %v992, %v1083
    %1085 = vmatmul.f32.gmra.mxu0 %v925
    %v1086 = vpop.f32.mrf.mxu0
    %v1087 = vadd.f32 %v995, %v1086
    %1088 = vmatmul.f32.gmra.mxu0 %v927
    %v1089 = vpop.f32.mrf.mxu0
    %v1090 = vadd.f32 %v998, %v1089
    %1091 = vmatmul.f32.gmra.mxu0 %v929
    %v1092 = vpop.f32.mrf.mxu0
    %v1093 = vadd.f32 %v1001, %v1092
    %1094 = vmatmul.f32.gmra.mxu0 %v931
    %v1095 = vpop.f32.mrf.mxu0
    %v1096 = vadd.f32 %v1004, %v1095
    %1097 = vmatmul.f32.gmra.mxu0 %v933
    %v1098 = vpop.f32.mrf.mxu0
    %v1099 = vadd.f32 %v1007, %v1098
    %1100 = vmatmul.f32.gmra.mxu0 %v935
    %v1101 = vpop.f32.mrf.mxu0
    %v1102 = vadd.f32 %v1010, %v1101
    %1103 = vmatmul.f32.gmra.mxu0 %v937
    %v1104 = vpop.f32.mrf.mxu0
    %v1105 = vadd.f32 %v1013, %v1104
    %1106 = vmatmul.f32.gmra.mxu0 %v939
    %v1107 = vpop.f32.mrf.mxu0
    %v1108 = vadd.f32 %v1016, %v1107
    %1109 = vmatmul.f32.gmra.mxu0 %v941
    %v1110 = vpop.f32.mrf.mxu0
    %v1111 = vadd.f32 %v1019, %v1110
    %1112 = vmatmul.f32.gmra.mxu0 %v943
    %v1113 = vpop.f32.mrf.mxu0
    %v1114 = vadd.f32 %v1022, %v1113
    %1115 = vmatmul.f32.gmra.mxu0 %v945
    %v1116 = vpop.f32.mrf.mxu0
    %v1117 = vadd.f32 %v1025, %v1116
    %1118 = vmatmul.f32.gmra.mxu0 %v947
    %v1119 = vpop.f32.mrf.mxu0
    %v1120 = vadd.f32 %v1028, %v1119
    %1121 = vmatmul.f32.gmra.mxu0 %v949
    %v1122 = vpop.f32.mrf.mxu0
    %v1123 = vadd.f32 %v1031, %v1122
    %1124 = vmatmul.f32.gmra.mxu0 %v951
    %v1125 = vpop.f32.mrf.mxu0
    %v1126 = vadd.f32 %v1034, %v1125
    %1127 = vmatmul.f32.gmra.mxu0 %v953
    %v1128 = vpop.f32.mrf.mxu0
    %v1129 = vadd.f32 %v1037, %v1128
    %1130 = vmatmul.f32.gmra.mxu0 %v955
    %v1131 = vpop.f32.mrf.mxu0
    %v1132 = vadd.f32 %v1040, %v1131
    %1133 = vmatmul.f32.gmra.mxu0 %v957
    %v1134 = vpop.f32.mrf.mxu0
    %v1135 = vadd.f32 %v1043, %v1134
    %1136 = vmatmul.f32.gmra.mxu0 %v959
    %v1137 = vpop.f32.mrf.mxu0
    %v1138 = vadd.f32 %v1046, %v1137
    %1139 = vmatmul.f32.gmra.mxu0 %v961
    %v1140 = vpop.f32.mrf.mxu0
    %v1141 = vadd.f32 %v1049, %v1140
    %1142 = vmatmul.f32.gmra.mxu0 %v963
    %v1143 = vpop.f32.mrf.mxu0
    %v1144 = vadd.f32 %v1052, %v1143
    %1145 = vmatmul.f32.gmra.mxu0 %v965
    %v1146 = vpop.f32.mrf.mxu0
    %v1147 = vadd.f32 %v1055, %v1146
    %1148 = vmatmul.f32.gmra.mxu0 %v967
    %v1149 = vpop.f32.mrf.mxu0
    %v1150 = vadd.f32 %v1058, %v1149
    %1151 = vdwg.mxu0
    %s1152 = scalar_lea.vmem [#allocation5], 128
    %v1153 = vld [vmem:[%s1152] sm:$0xff]
    %v1154 = vld [vmem:[%s1152 + $0x8] sm:$0xff]
    %v1155 = vld [vmem:[%s1152 + $0x10] sm:$0xff]
    %v1156 = vld [vmem:[%s1152 + $0x18] sm:$0xff]
    %v1157 = vld [vmem:[%s1152 + $0x20] sm:$0xff]
    %v1158 = vld [vmem:[%s1152 + $0x28] sm:$0xff]
    %v1159 = vld [vmem:[%s1152 + $0x30] sm:$0xff]
    %v1160 = vld [vmem:[%s1152 + $0x38] sm:$0xff]
    %v1161 = vld [vmem:[%s1152 + $0x40] sm:$0xff]
    %v1162 = vld [vmem:[%s1152 + $0x48] sm:$0xff]
    %v1163 = vld [vmem:[%s1152 + $0x50] sm:$0xff]
    %v1164 = vld [vmem:[%s1152 + $0x58] sm:$0xff]
    %v1165 = vld [vmem:[%s1152 + $0x60] sm:$0xff]
    %v1166 = vld [vmem:[%s1152 + $0x68] sm:$0xff]
    %v1167 = vld [vmem:[%s1152 + $0x70] sm:$0xff]
    %v1168 = vld [vmem:[%s1152 + $0x78] sm:$0xff]
    %1169 = vmatpush.msra.mxu0 %v1168
    %1170 = vmatpush.msra.mxu0 %v1167
    %1171 = vmatpush.msra.mxu0 %v1166
    %1172 = vmatpush.msra.mxu0 %v1165
    %1173 = vmatpush.msra.mxu0 %v1164
    %1174 = vmatpush.msra.mxu0 %v1163
    %1175 = vmatpush.msra.mxu0 %v1162
    %1176 = vmatpush.msra.mxu0 %v1161
    %1177 = vmatpush.msra.mxu0 %v1160
    %1178 = vmatpush.msra.mxu0 %v1159
    %1179 = vmatpush.msra.mxu0 %v1158
    %1180 = vmatpush.msra.mxu0 %v1157
    %1181 = vmatpush.msra.mxu0 %v1156
    %1182 = vmatpush.msra.mxu0 %v1155
    %1183 = vmatpush.msra.mxu0 %v1154
    %1184 = vmatpush.msra.mxu0 %v1153
    %1185 = vmatmul.f32.gmra.mxu0 %v1078
    %v1186 = vpop.f32.mrf.mxu0
    %v1187 = vadd.f32 0.0, %v1186
    %1188 = vmatmul.f32.gmra.mxu0 %v1081
    %v1189 = vpop.f32.mrf.mxu0
    %v1190 = vadd.f32 0.0, %v1189
    %1191 = vmatmul.f32.gmra.mxu0 %v1084
    %v1192 = vpop.f32.mrf.mxu0
    %v1193 = vadd.f32 0.0, %v1192
    %1194 = vmatmul.f32.gmra.mxu0 %v1087
    %v1195 = vpop.f32.mrf.mxu0
    %v1196 = vadd.f32 0.0, %v1195
    %1197 = vmatmul.f32.gmra.mxu0 %v1090
    %v1198 = vpop.f32.mrf.mxu0
    %v1199 = vadd.f32 0.0, %v1198
    %1200 = vmatmul.f32.gmra.mxu0 %v1093
    %v1201 = vpop.f32.mrf.mxu0
    %v1202 = vadd.f32 0.0, %v1201
    %1203 = vmatmul.f32.gmra.mxu0 %v1096
    %v1204 = vpop.f32.mrf.mxu0
    %v1205 = vadd.f32 0.0, %v1204
    %1206 = vmatmul.f32.gmra.mxu0 %v1099
    %v1207 = vpop.f32.mrf.mxu0
    %v1208 = vadd.f32 0.0, %v1207
    %1209 = vmatmul.f32.gmra.mxu0 %v1102
    %v1210 = vpop.f32.mrf.mxu0
    %v1211 = vadd.f32 0.0, %v1210
    %1212 = vmatmul.f32.gmra.mxu0 %v1105
    %v1213 = vpop.f32.mrf.mxu0
    %v1214 = vadd.f32 0.0, %v1213
    %1215 = vmatmul.f32.gmra.mxu0 %v1108
    %v1216 = vpop.f32.mrf.mxu0
    %v1217 = vadd.f32 0.0, %v1216
    %1218 = vmatmul.f32.gmra.mxu0 %v1111
    %v1219 = vpop.f32.mrf.mxu0
    %v1220 = vadd.f32 0.0, %v1219
    %1221 = vmatmul.f32.gmra.mxu0 %v1114
    %v1222 = vpop.f32.mrf.mxu0
    %v1223 = vadd.f32 0.0, %v1222
    %1224 = vmatmul.f32.gmra.mxu0 %v1117
    %v1225 = vpop.f32.mrf.mxu0
    %v1226 = vadd.f32 0.0, %v1225
    %1227 = vmatmul.f32.gmra.mxu0 %v1120
    %v1228 = vpop.f32.mrf.mxu0
    %v1229 = vadd.f32 0.0, %v1228
    %1230 = vmatmul.f32.gmra.mxu0 %v1123
    %v1231 = vpop.f32.mrf.mxu0
    %v1232 = vadd.f32 0.0, %v1231
    %1233 = vmatmul.f32.gmra.mxu0 %v1126
    %v1234 = vpop.f32.mrf.mxu0
    %v1235 = vadd.f32 0.0, %v1234
    %1236 = vmatmul.f32.gmra.mxu0 %v1129
    %v1237 = vpop.f32.mrf.mxu0
    %v1238 = vadd.f32 0.0, %v1237
    %1239 = vmatmul.f32.gmra.mxu0 %v1132
    %v1240 = vpop.f32.mrf.mxu0
    %v1241 = vadd.f32 0.0, %v1240
    %1242 = vmatmul.f32.gmra.mxu0 %v1135
    %v1243 = vpop.f32.mrf.mxu0
    %v1244 = vadd.f32 0.0, %v1243
    %1245 = vmatmul.f32.gmra.mxu0 %v1138
    %v1246 = vpop.f32.mrf.mxu0
    %v1247 = vadd.f32 0.0, %v1246
    %1248 = vmatmul.f32.gmra.mxu0 %v1141
    %v1249 = vpop.f32.mrf.mxu0
    %v1250 = vadd.f32 0.0, %v1249
    %1251 = vmatmul.f32.gmra.mxu0 %v1144
    %v1252 = vpop.f32.mrf.mxu0
    %v1253 = vadd.f32 0.0, %v1252
    %1254 = vmatmul.f32.gmra.mxu0 %v1147
    %v1255 = vpop.f32.mrf.mxu0
    %v1256 = vadd.f32 0.0, %v1255
    %1257 = vmatmul.f32.gmra.mxu0 %v1150
    %v1258 = vpop.f32.mrf.mxu0
    %v1259 = vadd.f32 0.0, %v1258
    %1260 = vdwg.mxu0
    %1261 = vmatpush.msra.mxu0 %v916
    %1262 = vmatpush.msra.mxu0 %v915
    %1263 = vmatpush.msra.mxu0 %v914
    %1264 = vmatpush.msra.mxu0 %v913
    %1265 = vmatpush.msra.mxu0 %v912
    %1266 = vmatpush.msra.mxu0 %v911
    %1267 = vmatpush.msra.mxu0 %v910
    %1268 = vmatpush.msra.mxu0 %v909
    %1269 = vmatpush.msra.mxu0 %v908
    %1270 = vmatpush.msra.mxu0 %v907
    %1271 = vmatpush.msra.mxu0 %v906
    %1272 = vmatpush.msra.mxu0 %v905
    %1273 = vmatpush.msra.mxu0 %v904
    %1274 = vmatpush.msra.mxu0 %v903
    %1275 = vmatpush.msra.mxu0 %v902
    %1276 = vmatpush.msra.mxu0 %v901
    %1277 = vmatmul.f32.gmra.mxu0 %v827
    %v1278 = vpop.f32.mrf.mxu0
    %v1279 = vadd.f32 %v1187, %v1278
    %1280 = vmatmul.f32.gmra.mxu0 %v830
    %v1281 = vpop.f32.mrf.mxu0
    %v1282 = vadd.f32 %v1190, %v1281
    %1283 = vmatmul.f32.gmra.mxu0 %v833
    %v1284 = vpop.f32.mrf.mxu0
    %v1285 = vadd.f32 %v1193, %v1284
    %1286 = vmatmul.f32.gmra.mxu0 %v836
    %v1287 = vpop.f32.mrf.mxu0
    %v1288 = vadd.f32 %v1196, %v1287
    %1289 = vmatmul.f32.gmra.mxu0 %v839
    %v1290 = vpop.f32.mrf.mxu0
    %v1291 = vadd.f32 %v1199, %v1290
    %1292 = vmatmul.f32.gmra.mxu0 %v842
    %v1293 = vpop.f32.mrf.mxu0
    %v1294 = vadd.f32 %v1202, %v1293
    %1295 = vmatmul.f32.gmra.mxu0 %v845
    %v1296 = vpop.f32.mrf.mxu0
    %v1297 = vadd.f32 %v1205, %v1296
    %1298 = vmatmul.f32.gmra.mxu0 %v848
    %v1299 = vpop.f32.mrf.mxu0
    %v1300 = vadd.f32 %v1208, %v1299
    %1301 = vmatmul.f32.gmra.mxu0 %v851
    %v1302 = vpop.f32.mrf.mxu0
    %v1303 = vadd.f32 %v1211, %v1302
    %1304 = vmatmul.f32.gmra.mxu0 %v854
    %v1305 = vpop.f32.mrf.mxu0
    %v1306 = vadd.f32 %v1214, %v1305
    %1307 = vmatmul.f32.gmra.mxu0 %v857
    %v1308 = vpop.f32.mrf.mxu0
    %v1309 = vadd.f32 %v1217, %v1308
    %1310 = vmatmul.f32.gmra.mxu0 %v860
    %v1311 = vpop.f32.mrf.mxu0
    %v1312 = vadd.f32 %v1220, %v1311
    %1313 = vmatmul.f32.gmra.mxu0 %v863
    %v1314 = vpop.f32.mrf.mxu0
    %v1315 = vadd.f32 %v1223, %v1314
    %1316 = vmatmul.f32.gmra.mxu0 %v866
    %v1317 = vpop.f32.mrf.mxu0
    %v1318 = vadd.f32 %v1226, %v1317
    %1319 = vmatmul.f32.gmra.mxu0 %v869
    %v1320 = vpop.f32.mrf.mxu0
    %v1321 = vadd.f32 %v1229, %v1320
    %1322 = vmatmul.f32.gmra.mxu0 %v872
    %v1323 = vpop.f32.mrf.mxu0
    %v1324 = vadd.f32 %v1232, %v1323
    %1325 = vmatmul.f32.gmra.mxu0 %v875
    %v1326 = vpop.f32.mrf.mxu0
    %v1327 = vadd.f32 %v1235, %v1326
    %1328 = vmatmul.f32.gmra.mxu0 %v878
    %v1329 = vpop.f32.mrf.mxu0
    %v1330 = vadd.f32 %v1238, %v1329
    %1331 = vmatmul.f32.gmra.mxu0 %v881
    %v1332 = vpop.f32.mrf.mxu0
    %v1333 = vadd.f32 %v1241, %v1332
    %1334 = vmatmul.f32.gmra.mxu0 %v884
    %v1335 = vpop.f32.mrf.mxu0
    %v1336 = vadd.f32 %v1244, %v1335
    %1337 = vmatmul.f32.gmra.mxu0 %v887
    %v1338 = vpop.f32.mrf.mxu0
    %v1339 = vadd.f32 %v1247, %v1338
    %1340 = vmatmul.f32.gmra.mxu0 %v890
    %v1341 = vpop.f32.mrf.mxu0
    %v1342 = vadd.f32 %v1250, %v1341
    %1343 = vmatmul.f32.gmra.mxu0 %v893
    %v1344 = vpop.f32.mrf.mxu0
    %v1345 = vadd.f32 %v1253, %v1344
    %1346 = vmatmul.f32.gmra.mxu0 %v896
    %v1347 = vpop.f32.mrf.mxu0
    %v1348 = vadd.f32 %v1256, %v1347
    %1349 = vmatmul.f32.gmra.mxu0 %v899
    %v1350 = vpop.f32.mrf.mxu0
    %v1351 = vadd.f32 %v1259, %v1350
    %1352 = vdwg.mxu0
    %s1353 = scalar_lea.vmem %s1, 800
    %v1354 = vld [vmem:[%s1353] sm:$0xff]
    %v1355 = vld [vmem:[%s1353 + $0x8] sm:$0xff]
    %v1356 = vld [vmem:[%s1353 + $0x10] sm:$0xff]
    %v1357 = vld [vmem:[%s1353 + $0x18] sm:$0xff]
    %v1358 = vld [vmem:[%s1353 + $0x20] sm:$0xff]
    %v1359 = vld [vmem:[%s1353 + $0x28] sm:$0xff]
    %v1360 = vld [vmem:[%s1353 + $0x30] sm:$0xff]
    %v1361 = vld [vmem:[%s1353 + $0x38] sm:$0xff]
    %v1362 = vld [vmem:[%s1353 + $0x40] sm:$0xff]
    %v1363 = vld [vmem:[%s1353 + $0x48] sm:$0xff]
    %v1364 = vld [vmem:[%s1353 + $0x50] sm:$0xff]
    %v1365 = vld [vmem:[%s1353 + $0x58] sm:$0xff]
    %v1366 = vld [vmem:[%s1353 + $0x60] sm:$0xff]
    %v1367 = vld [vmem:[%s1353 + $0x68] sm:$0xff]
    %v1368 = vld [vmem:[%s1353 + $0x70] sm:$0xff]
    %v1369 = vld [vmem:[%s1353 + $0x78] sm:$0xff]
    %v1370 = vld [vmem:[%s1353 + $0x80] sm:$0xff]
    %v1371 = vld [vmem:[%s1353 + $0x88] sm:$0xff]
    %v1372 = vld [vmem:[%s1353 + $0x90] sm:$0xff]
    %v1373 = vld [vmem:[%s1353 + $0x98] sm:$0xff]
    %v1374 = vld [vmem:[%s1353 + $0xa0] sm:$0xff]
    %v1375 = vld [vmem:[%s1353 + $0xa8] sm:$0xff]
    %v1376 = vld [vmem:[%s1353 + $0xb0] sm:$0xff]
    %v1377 = vld [vmem:[%s1353 + $0xb8] sm:$0xff]
    %v1378 = vld [vmem:[%s1353 + $0xc0] sm:$0xff]
    %v1379 = vld [vmem:[%s1353 + $0xc8] sm:$0xff]
    %v1380 = vld [vmem:[%s1353 + $0xd0] sm:$0xff]
    %v1381 = vld [vmem:[%s1353 + $0xd8] sm:$0xff]
    %v1382 = vld [vmem:[%s1353 + $0xe0] sm:$0xff]
    %v1383 = vld [vmem:[%s1353 + $0xe8] sm:$0xff]
    %v1384 = vld [vmem:[%s1353 + $0xf0] sm:$0xff]
    %v1385 = vld [vmem:[%s1353 + $0xf8] sm:$0xff]
    %v1386 = vld [vmem:[%s1353 + $0x100] sm:$0xff]
    %v1387 = vld [vmem:[%s1353 + $0x108] sm:$0xff]
    %v1388 = vld [vmem:[%s1353 + $0x110] sm:$0xff]
    %v1389 = vld [vmem:[%s1353 + $0x118] sm:$0xff]
    %v1390 = vld [vmem:[%s1353 + $0x120] sm:$0xff]
    %v1391 = vld [vmem:[%s1353 + $0x128] sm:$0xff]
    %v1392 = vld [vmem:[%s1353 + $0x130] sm:$0xff]
    %v1393 = vld [vmem:[%s1353 + $0x138] sm:$0xff]
    %v1394 = vld [vmem:[%s1353 + $0x140] sm:$0xff]
    %v1395 = vld [vmem:[%s1353 + $0x148] sm:$0xff]
    %v1396 = vld [vmem:[%s1353 + $0x150] sm:$0xff]
    %v1397 = vld [vmem:[%s1353 + $0x158] sm:$0xff]
    %v1398 = vld [vmem:[%s1353 + $0x160] sm:$0xff]
    %v1399 = vld [vmem:[%s1353 + $0x168] sm:$0xff]
    %v1400 = vld [vmem:[%s1353 + $0x170] sm:$0xff]
    %v1401 = vld [vmem:[%s1353 + $0x178] sm:$0xff]
    %v1402 = vld [vmem:[%s1353 + $0x180] sm:$0xf]
    %v1403 = vld [vmem:[%s1353 + $0x188] sm:$0xf]
    %1404 = vmatpush.msra.mxu0 %v650
    %1405 = vmatpush.msra.mxu0 %v649
    %1406 = vmatpush.msra.mxu0 %v648
    %1407 = vmatpush.msra.mxu0 %v647
    %1408 = vmatpush.msra.mxu0 %v646
    %1409 = vmatpush.msra.mxu0 %v645
    %1410 = vmatpush.msra.mxu0 %v644
    %1411 = vmatpush.msra.mxu0 %v643
    %1412 = vmatpush.msra.mxu0 %v642
    %1413 = vmatpush.msra.mxu0 %v641
    %1414 = vmatpush.msra.mxu0 %v640
    %1415 = vmatpush.msra.mxu0 %v639
    %1416 = vmatpush.msra.mxu0 %v638
    %1417 = vmatpush.msra.mxu0 %v637
    %1418 = vmatpush.msra.mxu0 %v636
    %1419 = vmatpush.msra.mxu0 %v635
    %1420 = vmatmul.f32.gmra.mxu0 %v1354
    %v1421 = vpop.f32.mrf.mxu0
    %v1422 = vadd.f32 0.0, %v1421
    %1423 = vmatmul.f32.gmra.mxu0 %v1356
    %v1424 = vpop.f32.mrf.mxu0
    %v1425 = vadd.f32 0.0, %v1424
    %1426 = vmatmul.f32.gmra.mxu0 %v1358
    %v1427 = vpop.f32.mrf.mxu0
    %v1428 = vadd.f32 0.0, %v1427
    %1429 = vmatmul.f32.gmra.mxu0 %v1360
    %v1430 = vpop.f32.mrf.mxu0
    %v1431 = vadd.f32 0.0, %v1430
    %1432 = vmatmul.f32.gmra.mxu0 %v1362
    %v1433 = vpop.f32.mrf.mxu0
    %v1434 = vadd.f32 0.0, %v1433
    %1435 = vmatmul.f32.gmra.mxu0 %v1364
    %v1436 = vpop.f32.mrf.mxu0
    %v1437 = vadd.f32 0.0, %v1436
    %1438 = vmatmul.f32.gmra.mxu0 %v1366
    %v1439 = vpop.f32.mrf.mxu0
    %v1440 = vadd.f32 0.0, %v1439
    %1441 = vmatmul.f32.gmra.mxu0 %v1368
    %v1442 = vpop.f32.mrf.mxu0
    %v1443 = vadd.f32 0.0, %v1442
    %1444 = vmatmul.f32.gmra.mxu0 %v1370
    %v1445 = vpop.f32.mrf.mxu0
    %v1446 = vadd.f32 0.0, %v1445
    %1447 = vmatmul.f32.gmra.mxu0 %v1372
    %v1448 = vpop.f32.mrf.mxu0
    %v1449 = vadd.f32 0.0, %v1448
    %1450 = vmatmul.f32.gmra.mxu0 %v1374
    %v1451 = vpop.f32.mrf.mxu0
    %v1452 = vadd.f32 0.0, %v1451
    %1453 = vmatmul.f32.gmra.mxu0 %v1376
    %v1454 = vpop.f32.mrf.mxu0
    %v1455 = vadd.f32 0.0, %v1454
    %1456 = vmatmul.f32.gmra.mxu0 %v1378
    %v1457 = vpop.f32.mrf.mxu0
    %v1458 = vadd.f32 0.0, %v1457
    %1459 = vmatmul.f32.gmra.mxu0 %v1380
    %v1460 = vpop.f32.mrf.mxu0
    %v1461 = vadd.f32 0.0, %v1460
    %1462 = vmatmul.f32.gmra.mxu0 %v1382
    %v1463 = vpop.f32.mrf.mxu0
    %v1464 = vadd.f32 0.0, %v1463
    %1465 = vmatmul.f32.gmra.mxu0 %v1384
    %v1466 = vpop.f32.mrf.mxu0
    %v1467 = vadd.f32 0.0, %v1466
    %1468 = vmatmul.f32.gmra.mxu0 %v1386
    %v1469 = vpop.f32.mrf.mxu0
    %v1470 = vadd.f32 0.0, %v1469
    %1471 = vmatmul.f32.gmra.mxu0 %v1388
    %v1472 = vpop.f32.mrf.mxu0
    %v1473 = vadd.f32 0.0, %v1472
    %1474 = vmatmul.f32.gmra.mxu0 %v1390
    %v1475 = vpop.f32.mrf.mxu0
    %v1476 = vadd.f32 0.0, %v1475
    %1477 = vmatmul.f32.gmra.mxu0 %v1392
    %v1478 = vpop.f32.mrf.mxu0
    %v1479 = vadd.f32 0.0, %v1478
    %1480 = vmatmul.f32.gmra.mxu0 %v1394
    %v1481 = vpop.f32.mrf.mxu0
    %v1482 = vadd.f32 0.0, %v1481
    %1483 = vmatmul.f32.gmra.mxu0 %v1396
    %v1484 = vpop.f32.mrf.mxu0
    %v1485 = vadd.f32 0.0, %v1484
    %1486 = vmatmul.f32.gmra.mxu0 %v1398
    %v1487 = vpop.f32.mrf.mxu0
    %v1488 = vadd.f32 0.0, %v1487
    %1489 = vmatmul.f32.gmra.mxu0 %v1400
    %v1490 = vpop.f32.mrf.mxu0
    %v1491 = vadd.f32 0.0, %v1490
    %1492 = vmatmul.f32.gmra.mxu0 %v1402
    %v1493 = vpop.f32.mrf.mxu0
    %v1494 = vadd.f32 0.0, %v1493
    %1495 = vdwg.mxu0
    %1496 = vmatpush.msra.mxu0 %v666
    %1497 = vmatpush.msra.mxu0 %v665
    %1498 = vmatpush.msra.mxu0 %v664
    %1499 = vmatpush.msra.mxu0 %v663
    %1500 = vmatpush.msra.mxu0 %v662
    %1501 = vmatpush.msra.mxu0 %v661
    %1502 = vmatpush.msra.mxu0 %v660
    %1503 = vmatpush.msra.mxu0 %v659
    %1504 = vmatpush.msra.mxu0 %v658
    %1505 = vmatpush.msra.mxu0 %v657
    %1506 = vmatpush.msra.mxu0 %v656
    %1507 = vmatpush.msra.mxu0 %v655
    %1508 = vmatpush.msra.mxu0 %v654
    %1509 = vmatpush.msra.mxu0 %v653
    %1510 = vmatpush.msra.mxu0 %v652
    %1511 = vmatpush.msra.mxu0 %v651
    %1512 = vmatmul.f32.gmra.mxu0 %v1355
    %v1513 = vpop.f32.mrf.mxu0
    %v1514 = vadd.f32 %v1422, %v1513
    %1515 = vmatmul.f32.gmra.mxu0 %v1357
    %v1516 = vpop.f32.mrf.mxu0
    %v1517 = vadd.f32 %v1425, %v1516
    %1518 = vmatmul.f32.gmra.mxu0 %v1359
    %v1519 = vpop.f32.mrf.mxu0
    %v1520 = vadd.f32 %v1428, %v1519
    %1521 = vmatmul.f32.gmra.mxu0 %v1361
    %v1522 = vpop.f32.mrf.mxu0
    %v1523 = vadd.f32 %v1431, %v1522
    %1524 = vmatmul.f32.gmra.mxu0 %v1363
    %v1525 = vpop.f32.mrf.mxu0
    %v1526 = vadd.f32 %v1434, %v1525
    %1527 = vmatmul.f32.gmra.mxu0 %v1365
    %v1528 = vpop.f32.mrf.mxu0
    %v1529 = vadd.f32 %v1437, %v1528
    %1530 = vmatmul.f32.gmra.mxu0 %v1367
    %v1531 = vpop.f32.mrf.mxu0
    %v1532 = vadd.f32 %v1440, %v1531
    %1533 = vmatmul.f32.gmra.mxu0 %v1369
    %v1534 = vpop.f32.mrf.mxu0
    %v1535 = vadd.f32 %v1443, %v1534
    %1536 = vmatmul.f32.gmra.mxu0 %v1371
    %v1537 = vpop.f32.mrf.mxu0
    %v1538 = vadd.f32 %v1446, %v1537
    %1539 = vmatmul.f32.gmra.mxu0 %v1373
    %v1540 = vpop.f32.mrf.mxu0
    %v1541 = vadd.f32 %v1449, %v1540
    %1542 = vmatmul.f32.gmra.mxu0 %v1375
    %v1543 = vpop.f32.mrf.mxu0
    %v1544 = vadd.f32 %v1452, %v1543
    %1545 = vmatmul.f32.gmra.mxu0 %v1377
    %v1546 = vpop.f32.mrf.mxu0
    %v1547 = vadd.f32 %v1455, %v1546
    %1548 = vmatmul.f32.gmra.mxu0 %v1379
    %v1549 = vpop.f32.mrf.mxu0
    %v1550 = vadd.f32 %v1458, %v1549
    %1551 = vmatmul.f32.gmra.mxu0 %v1381
    %v1552 = vpop.f32.mrf.mxu0
    %v1553 = vadd.f32 %v1461, %v1552
    %1554 = vmatmul.f32.gmra.mxu0 %v1383
    %v1555 = vpop.f32.mrf.mxu0
    %v1556 = vadd.f32 %v1464, %v1555
    %1557 = vmatmul.f32.gmra.mxu0 %v1385
    %v1558 = vpop.f32.mrf.mxu0
    %v1559 = vadd.f32 %v1467, %v1558
    %1560 = vmatmul.f32.gmra.mxu0 %v1387
    %v1561 = vpop.f32.mrf.mxu0
    %v1562 = vadd.f32 %v1470, %v1561
    %1563 = vmatmul.f32.gmra.mxu0 %v1389
    %v1564 = vpop.f32.mrf.mxu0
    %v1565 = vadd.f32 %v1473, %v1564
    %1566 = vmatmul.f32.gmra.mxu0 %v1391
    %v1567 = vpop.f32.mrf.mxu0
    %v1568 = vadd.f32 %v1476, %v1567
    %1569 = vmatmul.f32.gmra.mxu0 %v1393
    %v1570 = vpop.f32.mrf.mxu0
    %v1571 = vadd.f32 %v1479, %v1570
    %1572 = vmatmul.f32.gmra.mxu0 %v1395
    %v1573 = vpop.f32.mrf.mxu0
    %v1574 = vadd.f32 %v1482, %v1573
    %1575 = vmatmul.f32.gmra.mxu0 %v1397
    %v1576 = vpop.f32.mrf.mxu0
    %v1577 = vadd.f32 %v1485, %v1576
    %1578 = vmatmul.f32.gmra.mxu0 %v1399
    %v1579 = vpop.f32.mrf.mxu0
    %v1580 = vadd.f32 %v1488, %v1579
    %1581 = vmatmul.f32.gmra.mxu0 %v1401
    %v1582 = vpop.f32.mrf.mxu0
    %v1583 = vadd.f32 %v1491, %v1582
    %1584 = vmatmul.f32.gmra.mxu0 %v1403
    %v1585 = vpop.f32.mrf.mxu0
    %v1586 = vadd.f32 %v1494, %v1585
    %1587 = vdwg.mxu0
    %s1588 = scalar_lea.vmem [#allocation5], 256
    %v1589 = vld [vmem:[%s1588] sm:$0xff]
    %v1590 = vld [vmem:[%s1588 + $0x8] sm:$0xff]
    %v1591 = vld [vmem:[%s1588 + $0x10] sm:$0xff]
    %v1592 = vld [vmem:[%s1588 + $0x18] sm:$0xff]
    %v1593 = vld [vmem:[%s1588 + $0x20] sm:$0xff]
    %v1594 = vld [vmem:[%s1588 + $0x28] sm:$0xff]
    %v1595 = vld [vmem:[%s1588 + $0x30] sm:$0xff]
    %v1596 = vld [vmem:[%s1588 + $0x38] sm:$0xff]
    %v1597 = vld [vmem:[%s1588 + $0x40] sm:$0xff]
    %v1598 = vld [vmem:[%s1588 + $0x48] sm:$0xff]
    %v1599 = vld [vmem:[%s1588 + $0x50] sm:$0xff]
    %v1600 = vld [vmem:[%s1588 + $0x58] sm:$0xff]
    %v1601 = vld [vmem:[%s1588 + $0x60] sm:$0xff]
    %v1602 = vld [vmem:[%s1588 + $0x68] sm:$0xff]
    %v1603 = vld [vmem:[%s1588 + $0x70] sm:$0xff]
    %v1604 = vld [vmem:[%s1588 + $0x78] sm:$0xff]
    %1605 = vmatpush.msra.mxu0 %v1604
    %1606 = vmatpush.msra.mxu0 %v1603
    %1607 = vmatpush.msra.mxu0 %v1602
    %1608 = vmatpush.msra.mxu0 %v1601
    %1609 = vmatpush.msra.mxu0 %v1600
    %1610 = vmatpush.msra.mxu0 %v1599
    %1611 = vmatpush.msra.mxu0 %v1598
    %1612 = vmatpush.msra.mxu0 %v1597
    %1613 = vmatpush.msra.mxu0 %v1596
    %1614 = vmatpush.msra.mxu0 %v1595
    %1615 = vmatpush.msra.mxu0 %v1594
    %1616 = vmatpush.msra.mxu0 %v1593
    %1617 = vmatpush.msra.mxu0 %v1592
    %1618 = vmatpush.msra.mxu0 %v1591
    %1619 = vmatpush.msra.mxu0 %v1590
    %1620 = vmatpush.msra.mxu0 %v1589
    %1621 = vmatmul.f32.gmra.mxu0 %v1514
    %v1622 = vpop.f32.mrf.mxu0
    %v1623 = vadd.f32 0.0, %v1622
    %1624 = vmatmul.f32.gmra.mxu0 %v1517
    %v1625 = vpop.f32.mrf.mxu0
    %v1626 = vadd.f32 0.0, %v1625
    %1627 = vmatmul.f32.gmra.mxu0 %v1520
    %v1628 = vpop.f32.mrf.mxu0
    %v1629 = vadd.f32 0.0, %v1628
    %1630 = vmatmul.f32.gmra.mxu0 %v1523
    %v1631 = vpop.f32.mrf.mxu0
    %v1632 = vadd.f32 0.0, %v1631
    %1633 = vmatmul.f32.gmra.mxu0 %v1526
    %v1634 = vpop.f32.mrf.mxu0
    %v1635 = vadd.f32 0.0, %v1634
    %1636 = vmatmul.f32.gmra.mxu0 %v1529
    %v1637 = vpop.f32.mrf.mxu0
    %v1638 = vadd.f32 0.0, %v1637
    %1639 = vmatmul.f32.gmra.mxu0 %v1532
    %v1640 = vpop.f32.mrf.mxu0
    %v1641 = vadd.f32 0.0, %v1640
    %1642 = vmatmul.f32.gmra.mxu0 %v1535
    %v1643 = vpop.f32.mrf.mxu0
    %v1644 = vadd.f32 0.0, %v1643
    %1645 = vmatmul.f32.gmra.mxu0 %v1538
    %v1646 = vpop.f32.mrf.mxu0
    %v1647 = vadd.f32 0.0, %v1646
    %1648 = vmatmul.f32.gmra.mxu0 %v1541
    %v1649 = vpop.f32.mrf.mxu0
    %v1650 = vadd.f32 0.0, %v1649
    %1651 = vmatmul.f32.gmra.mxu0 %v1544
    %v1652 = vpop.f32.mrf.mxu0
    %v1653 = vadd.f32 0.0, %v1652
    %1654 = vmatmul.f32.gmra.mxu0 %v1547
    %v1655 = vpop.f32.mrf.mxu0
    %v1656 = vadd.f32 0.0, %v1655
    %1657 = vmatmul.f32.gmra.mxu0 %v1550
    %v1658 = vpop.f32.mrf.mxu0
    %v1659 = vadd.f32 0.0, %v1658
    %1660 = vmatmul.f32.gmra.mxu0 %v1553
    %v1661 = vpop.f32.mrf.mxu0
    %v1662 = vadd.f32 0.0, %v1661
    %1663 = vmatmul.f32.gmra.mxu0 %v1556
    %v1664 = vpop.f32.mrf.mxu0
    %v1665 = vadd.f32 0.0, %v1664
    %1666 = vmatmul.f32.gmra.mxu0 %v1559
    %v1667 = vpop.f32.mrf.mxu0
    %v1668 = vadd.f32 0.0, %v1667
    %1669 = vmatmul.f32.gmra.mxu0 %v1562
    %v1670 = vpop.f32.mrf.mxu0
    %v1671 = vadd.f32 0.0, %v1670
    %1672 = vmatmul.f32.gmra.mxu0 %v1565
    %v1673 = vpop.f32.mrf.mxu0
    %v1674 = vadd.f32 0.0, %v1673
    %1675 = vmatmul.f32.gmra.mxu0 %v1568
    %v1676 = vpop.f32.mrf.mxu0
    %v1677 = vadd.f32 0.0, %v1676
    %1678 = vmatmul.f32.gmra.mxu0 %v1571
    %v1679 = vpop.f32.mrf.mxu0
    %v1680 = vadd.f32 0.0, %v1679
    %1681 = vmatmul.f32.gmra.mxu0 %v1574
    %v1682 = vpop.f32.mrf.mxu0
    %v1683 = vadd.f32 0.0, %v1682
    %1684 = vmatmul.f32.gmra.mxu0 %v1577
    %v1685 = vpop.f32.mrf.mxu0
    %v1686 = vadd.f32 0.0, %v1685
    %1687 = vmatmul.f32.gmra.mxu0 %v1580
    %v1688 = vpop.f32.mrf.mxu0
    %v1689 = vadd.f32 0.0, %v1688
    %1690 = vmatmul.f32.gmra.mxu0 %v1583
    %v1691 = vpop.f32.mrf.mxu0
    %v1692 = vadd.f32 0.0, %v1691
    %1693 = vmatmul.f32.gmra.mxu0 %v1586
    %v1694 = vpop.f32.mrf.mxu0
    %v1695 = vadd.f32 0.0, %v1694
    %1696 = vdwg.mxu0
    %v1697 = vadd.f32 %v1279, %v1623
    %v1698 = vadd.f32 %v1282, %v1626
    %v1699 = vadd.f32 %v1285, %v1629
    %v1700 = vadd.f32 %v1288, %v1632
    %v1701 = vadd.f32 %v1291, %v1635
    %v1702 = vadd.f32 %v1294, %v1638
    %v1703 = vadd.f32 %v1297, %v1641
    %v1704 = vadd.f32 %v1300, %v1644
    %v1705 = vadd.f32 %v1303, %v1647
    %v1706 = vadd.f32 %v1306, %v1650
    %v1707 = vadd.f32 %v1309, %v1653
    %v1708 = vadd.f32 %v1312, %v1656
    %v1709 = vadd.f32 %v1315, %v1659
    %v1710 = vadd.f32 %v1318, %v1662
    %v1711 = vadd.f32 %v1321, %v1665
    %v1712 = vadd.f32 %v1324, %v1668
    %v1713 = vadd.f32 %v1327, %v1671
    %v1714 = vadd.f32 %v1330, %v1674
    %v1715 = vadd.f32 %v1333, %v1677
    %v1716 = vadd.f32 %v1336, %v1680
    %v1717 = vadd.f32 %v1339, %v1683
    %v1718 = vadd.f32 %v1342, %v1686
    %v1719 = vadd.f32 %v1345, %v1689
    %v1720 = vadd.f32 %v1348, %v1692
    %v1721 = vadd.f32 %v1351, %v1695
    %s1722 = scalar_lea.vmem %s1, 1200
    %v1723 = vld [vmem:[%s1722] sm:$0xff]
    %v1724 = vld [vmem:[%s1722 + $0x8] sm:$0xff]
    %v1725 = vld [vmem:[%s1722 + $0x10] sm:$0xff]
    %v1726 = vld [vmem:[%s1722 + $0x18] sm:$0xff]
    %v1727 = vld [vmem:[%s1722 + $0x20] sm:$0xff]
    %v1728 = vld [vmem:[%s1722 + $0x28] sm:$0xff]
    %v1729 = vld [vmem:[%s1722 + $0x30] sm:$0xff]
    %v1730 = vld [vmem:[%s1722 + $0x38] sm:$0xff]
    %v1731 = vld [vmem:[%s1722 + $0x40] sm:$0xff]
    %v1732 = vld [vmem:[%s1722 + $0x48] sm:$0xff]
    %v1733 = vld [vmem:[%s1722 + $0x50] sm:$0xff]
    %v1734 = vld [vmem:[%s1722 + $0x58] sm:$0xff]
    %v1735 = vld [vmem:[%s1722 + $0x60] sm:$0xff]
    %v1736 = vld [vmem:[%s1722 + $0x68] sm:$0xff]
    %v1737 = vld [vmem:[%s1722 + $0x70] sm:$0xff]
    %v1738 = vld [vmem:[%s1722 + $0x78] sm:$0xff]
    %v1739 = vld [vmem:[%s1722 + $0x80] sm:$0xff]
    %v1740 = vld [vmem:[%s1722 + $0x88] sm:$0xff]
    %v1741 = vld [vmem:[%s1722 + $0x90] sm:$0xff]
    %v1742 = vld [vmem:[%s1722 + $0x98] sm:$0xff]
    %v1743 = vld [vmem:[%s1722 + $0xa0] sm:$0xff]
    %v1744 = vld [vmem:[%s1722 + $0xa8] sm:$0xff]
    %v1745 = vld [vmem:[%s1722 + $0xb0] sm:$0xff]
    %v1746 = vld [vmem:[%s1722 + $0xb8] sm:$0xff]
    %v1747 = vld [vmem:[%s1722 + $0xc0] sm:$0xff]
    %v1748 = vld [vmem:[%s1722 + $0xc8] sm:$0xff]
    %v1749 = vld [vmem:[%s1722 + $0xd0] sm:$0xff]
    %v1750 = vld [vmem:[%s1722 + $0xd8] sm:$0xff]
    %v1751 = vld [vmem:[%s1722 + $0xe0] sm:$0xff]
    %v1752 = vld [vmem:[%s1722 + $0xe8] sm:$0xff]
    %v1753 = vld [vmem:[%s1722 + $0xf0] sm:$0xff]
    %v1754 = vld [vmem:[%s1722 + $0xf8] sm:$0xff]
    %v1755 = vld [vmem:[%s1722 + $0x100] sm:$0xff]
    %v1756 = vld [vmem:[%s1722 + $0x108] sm:$0xff]
    %v1757 = vld [vmem:[%s1722 + $0x110] sm:$0xff]
    %v1758 = vld [vmem:[%s1722 + $0x118] sm:$0xff]
    %v1759 = vld [vmem:[%s1722 + $0x120] sm:$0xff]
    %v1760 = vld [vmem:[%s1722 + $0x128] sm:$0xff]
    %v1761 = vld [vmem:[%s1722 + $0x130] sm:$0xff]
    %v1762 = vld [vmem:[%s1722 + $0x138] sm:$0xff]
    %v1763 = vld [vmem:[%s1722 + $0x140] sm:$0xff]
    %v1764 = vld [vmem:[%s1722 + $0x148] sm:$0xff]
    %v1765 = vld [vmem:[%s1722 + $0x150] sm:$0xff]
    %v1766 = vld [vmem:[%s1722 + $0x158] sm:$0xff]
    %v1767 = vld [vmem:[%s1722 + $0x160] sm:$0xff]
    %v1768 = vld [vmem:[%s1722 + $0x168] sm:$0xff]
    %v1769 = vld [vmem:[%s1722 + $0x170] sm:$0xff]
    %v1770 = vld [vmem:[%s1722 + $0x178] sm:$0xff]
    %v1771 = vld [vmem:[%s1722 + $0x180] sm:$0xf]
    %v1772 = vld [vmem:[%s1722 + $0x188] sm:$0xf]
    %1773 = vmatpush.msra.mxu0 %v650
    %1774 = vmatpush.msra.mxu0 %v649
    %1775 = vmatpush.msra.mxu0 %v648
    %1776 = vmatpush.msra.mxu0 %v647
    %1777 = vmatpush.msra.mxu0 %v646
    %1778 = vmatpush.msra.mxu0 %v645
    %1779 = vmatpush.msra.mxu0 %v644
    %1780 = vmatpush.msra.mxu0 %v643
    %1781 = vmatpush.msra.mxu0 %v642
    %1782 = vmatpush.msra.mxu0 %v641
    %1783 = vmatpush.msra.mxu0 %v640
    %1784 = vmatpush.msra.mxu0 %v639
    %1785 = vmatpush.msra.mxu0 %v638
    %1786 = vmatpush.msra.mxu0 %v637
    %1787 = vmatpush.msra.mxu0 %v636
    %1788 = vmatpush.msra.mxu0 %v635
    %1789 = vmatmul.f32.gmra.mxu0 %v1723
    %v1790 = vpop.f32.mrf.mxu0
    %v1791 = vadd.f32 0.0, %v1790
    %1792 = vmatmul.f32.gmra.mxu0 %v1725
    %v1793 = vpop.f32.mrf.mxu0
    %v1794 = vadd.f32 0.0, %v1793
    %1795 = vmatmul.f32.gmra.mxu0 %v1727
    %v1796 = vpop.f32.mrf.mxu0
    %v1797 = vadd.f32 0.0, %v1796
    %1798 = vmatmul.f32.gmra.mxu0 %v1729
    %v1799 = vpop.f32.mrf.mxu0
    %v1800 = vadd.f32 0.0, %v1799
    %1801 = vmatmul.f32.gmra.mxu0 %v1731
    %v1802 = vpop.f32.mrf.mxu0
    %v1803 = vadd.f32 0.0, %v1802
    %1804 = vmatmul.f32.gmra.mxu0 %v1733
    %v1805 = vpop.f32.mrf.mxu0
    %v1806 = vadd.f32 0.0, %v1805
    %1807 = vmatmul.f32.gmra.mxu0 %v1735
    %v1808 = vpop.f32.mrf.mxu0
    %v1809 = vadd.f32 0.0, %v1808
    %1810 = vmatmul.f32.gmra.mxu0 %v1737
    %v1811 = vpop.f32.mrf.mxu0
    %v1812 = vadd.f32 0.0, %v1811
    %1813 = vmatmul.f32.gmra.mxu0 %v1739
    %v1814 = vpop.f32.mrf.mxu0
    %v1815 = vadd.f32 0.0, %v1814
    %1816 = vmatmul.f32.gmra.mxu0 %v1741
    %v1817 = vpop.f32.mrf.mxu0
    %v1818 = vadd.f32 0.0, %v1817
    %1819 = vmatmul.f32.gmra.mxu0 %v1743
    %v1820 = vpop.f32.mrf.mxu0
    %v1821 = vadd.f32 0.0, %v1820
    %1822 = vmatmul.f32.gmra.mxu0 %v1745
    %v1823 = vpop.f32.mrf.mxu0
    %v1824 = vadd.f32 0.0, %v1823
    %1825 = vmatmul.f32.gmra.mxu0 %v1747
    %v1826 = vpop.f32.mrf.mxu0
    %v1827 = vadd.f32 0.0, %v1826
    %1828 = vmatmul.f32.gmra.mxu0 %v1749
    %v1829 = vpop.f32.mrf.mxu0
    %v1830 = vadd.f32 0.0, %v1829
    %1831 = vmatmul.f32.gmra.mxu0 %v1751
    %v1832 = vpop.f32.mrf.mxu0
    %v1833 = vadd.f32 0.0, %v1832
    %1834 = vmatmul.f32.gmra.mxu0 %v1753
    %v1835 = vpop.f32.mrf.mxu0
    %v1836 = vadd.f32 0.0, %v1835
    %1837 = vmatmul.f32.gmra.mxu0 %v1755
    %v1838 = vpop.f32.mrf.mxu0
    %v1839 = vadd.f32 0.0, %v1838
    %1840 = vmatmul.f32.gmra.mxu0 %v1757
    %v1841 = vpop.f32.mrf.mxu0
    %v1842 = vadd.f32 0.0, %v1841
    %1843 = vmatmul.f32.gmra.mxu0 %v1759
    %v1844 = vpop.f32.mrf.mxu0
    %v1845 = vadd.f32 0.0, %v1844
    %1846 = vmatmul.f32.gmra.mxu0 %v1761
    %v1847 = vpop.f32.mrf.mxu0
    %v1848 = vadd.f32 0.0, %v1847
    %1849 = vmatmul.f32.gmra.mxu0 %v1763
    %v1850 = vpop.f32.mrf.mxu0
    %v1851 = vadd.f32 0.0, %v1850
    %1852 = vmatmul.f32.gmra.mxu0 %v1765
    %v1853 = vpop.f32.mrf.mxu0
    %v1854 = vadd.f32 0.0, %v1853
    %1855 = vmatmul.f32.gmra.mxu0 %v1767
    %v1856 = vpop.f32.mrf.mxu0
    %v1857 = vadd.f32 0.0, %v1856
    %1858 = vmatmul.f32.gmra.mxu0 %v1769
    %v1859 = vpop.f32.mrf.mxu0
    %v1860 = vadd.f32 0.0, %v1859
    %1861 = vmatmul.f32.gmra.mxu0 %v1771
    %v1862 = vpop.f32.mrf.mxu0
    %v1863 = vadd.f32 0.0, %v1862
    %1864 = vdwg.mxu0
    %1865 = vmatpush.msra.mxu0 %v666
    %1866 = vmatpush.msra.mxu0 %v665
    %1867 = vmatpush.msra.mxu0 %v664
    %1868 = vmatpush.msra.mxu0 %v663
    %1869 = vmatpush.msra.mxu0 %v662
    %1870 = vmatpush.msra.mxu0 %v661
    %1871 = vmatpush.msra.mxu0 %v660
    %1872 = vmatpush.msra.mxu0 %v659
    %1873 = vmatpush.msra.mxu0 %v658
    %1874 = vmatpush.msra.mxu0 %v657
    %1875 = vmatpush.msra.mxu0 %v656
    %1876 = vmatpush.msra.mxu0 %v655
    %1877 = vmatpush.msra.mxu0 %v654
    %1878 = vmatpush.msra.mxu0 %v653
    %1879 = vmatpush.msra.mxu0 %v652
    %1880 = vmatpush.msra.mxu0 %v651
    %1881 = vmatmul.f32.gmra.mxu0 %v1724
    %v1882 = vpop.f32.mrf.mxu0
    %v1883 = vadd.f32 %v1791, %v1882
    %1884 = vmatmul.f32.gmra.mxu0 %v1726
    %v1885 = vpop.f32.mrf.mxu0
    %v1886 = vadd.f32 %v1794, %v1885
    %1887 = vmatmul.f32.gmra.mxu0 %v1728
    %v1888 = vpop.f32.mrf.mxu0
    %v1889 = vadd.f32 %v1797, %v1888
    %1890 = vmatmul.f32.gmra.mxu0 %v1730
    %v1891 = vpop.f32.mrf.mxu0
    %v1892 = vadd.f32 %v1800, %v1891
    %1893 = vmatmul.f32.gmra.mxu0 %v1732
    %v1894 = vpop.f32.mrf.mxu0
    %v1895 = vadd.f32 %v1803, %v1894
    %1896 = vmatmul.f32.gmra.mxu0 %v1734
    %v1897 = vpop.f32.mrf.mxu0
    %v1898 = vadd.f32 %v1806, %v1897
    %1899 = vmatmul.f32.gmra.mxu0 %v1736
    %v1900 = vpop.f32.mrf.mxu0
    %v1901 = vadd.f32 %v1809, %v1900
    %1902 = vmatmul.f32.gmra.mxu0 %v1738
    %v1903 = vpop.f32.mrf.mxu0
    %v1904 = vadd.f32 %v1812, %v1903
    %1905 = vmatmul.f32.gmra.mxu0 %v1740
    %v1906 = vpop.f32.mrf.mxu0
    %v1907 = vadd.f32 %v1815, %v1906
    %1908 = vmatmul.f32.gmra.mxu0 %v1742
    %v1909 = vpop.f32.mrf.mxu0
    %v1910 = vadd.f32 %v1818, %v1909
    %1911 = vmatmul.f32.gmra.mxu0 %v1744
    %v1912 = vpop.f32.mrf.mxu0
    %v1913 = vadd.f32 %v1821, %v1912
    %1914 = vmatmul.f32.gmra.mxu0 %v1746
    %v1915 = vpop.f32.mrf.mxu0
    %v1916 = vadd.f32 %v1824, %v1915
    %1917 = vmatmul.f32.gmra.mxu0 %v1748
    %v1918 = vpop.f32.mrf.mxu0
    %v1919 = vadd.f32 %v1827, %v1918
    %1920 = vmatmul.f32.gmra.mxu0 %v1750
    %v1921 = vpop.f32.mrf.mxu0
    %v1922 = vadd.f32 %v1830, %v1921
    %1923 = vmatmul.f32.gmra.mxu0 %v1752
    %v1924 = vpop.f32.mrf.mxu0
    %v1925 = vadd.f32 %v1833, %v1924
    %1926 = vmatmul.f32.gmra.mxu0 %v1754
    %v1927 = vpop.f32.mrf.mxu0
    %v1928 = vadd.f32 %v1836, %v1927
    %1929 = vmatmul.f32.gmra.mxu0 %v1756
    %v1930 = vpop.f32.mrf.mxu0
    %v1931 = vadd.f32 %v1839, %v1930
    %1932 = vmatmul.f32.gmra.mxu0 %v1758
    %v1933 = vpop.f32.mrf.mxu0
    %v1934 = vadd.f32 %v1842, %v1933
    %1935 = vmatmul.f32.gmra.mxu0 %v1760
    %v1936 = vpop.f32.mrf.mxu0
    %v1937 = vadd.f32 %v1845, %v1936
    %1938 = vmatmul.f32.gmra.mxu0 %v1762
    %v1939 = vpop.f32.mrf.mxu0
    %v1940 = vadd.f32 %v1848, %v1939
    %1941 = vmatmul.f32.gmra.mxu0 %v1764
    %v1942 = vpop.f32.mrf.mxu0
    %v1943 = vadd.f32 %v1851, %v1942
    %1944 = vmatmul.f32.gmra.mxu0 %v1766
    %v1945 = vpop.f32.mrf.mxu0
    %v1946 = vadd.f32 %v1854, %v1945
    %1947 = vmatmul.f32.gmra.mxu0 %v1768
    %v1948 = vpop.f32.mrf.mxu0
    %v1949 = vadd.f32 %v1857, %v1948
    %1950 = vmatmul.f32.gmra.mxu0 %v1770
    %v1951 = vpop.f32.mrf.mxu0
    %v1952 = vadd.f32 %v1860, %v1951
    %1953 = vmatmul.f32.gmra.mxu0 %v1772
    %v1954 = vpop.f32.mrf.mxu0
    %v1955 = vadd.f32 %v1863, %v1954
    %1956 = vdwg.mxu0
    %s1957 = scalar_lea.vmem [#allocation5], 384
    %v1958 = vld [vmem:[%s1957] sm:$0xff]
    %v1959 = vld [vmem:[%s1957 + $0x8] sm:$0xff]
    %v1960 = vld [vmem:[%s1957 + $0x10] sm:$0xff]
    %v1961 = vld [vmem:[%s1957 + $0x18] sm:$0xff]
    %v1962 = vld [vmem:[%s1957 + $0x20] sm:$0xff]
    %v1963 = vld [vmem:[%s1957 + $0x28] sm:$0xff]
    %v1964 = vld [vmem:[%s1957 + $0x30] sm:$0xff]
    %v1965 = vld [vmem:[%s1957 + $0x38] sm:$0xff]
    %v1966 = vld [vmem:[%s1957 + $0x40] sm:$0xff]
    %v1967 = vld [vmem:[%s1957 + $0x48] sm:$0xff]
    %v1968 = vld [vmem:[%s1957 + $0x50] sm:$0xff]
    %v1969 = vld [vmem:[%s1957 + $0x58] sm:$0xff]
    %v1970 = vld [vmem:[%s1957 + $0x60] sm:$0xff]
    %v1971 = vld [vmem:[%s1957 + $0x68] sm:$0xff]
    %v1972 = vld [vmem:[%s1957 + $0x70] sm:$0xff]
    %v1973 = vld [vmem:[%s1957 + $0x78] sm:$0xff]
    %1974 = vmatpush.msra.mxu0 %v1973
    %1975 = vmatpush.msra.mxu0 %v1972
    %1976 = vmatpush.msra.mxu0 %v1971
    %1977 = vmatpush.msra.mxu0 %v1970
    %1978 = vmatpush.msra.mxu0 %v1969
    %1979 = vmatpush.msra.mxu0 %v1968
    %1980 = vmatpush.msra.mxu0 %v1967
    %1981 = vmatpush.msra.mxu0 %v1966
    %1982 = vmatpush.msra.mxu0 %v1965
    %1983 = vmatpush.msra.mxu0 %v1964
    %1984 = vmatpush.msra.mxu0 %v1963
    %1985 = vmatpush.msra.mxu0 %v1962
    %1986 = vmatpush.msra.mxu0 %v1961
    %1987 = vmatpush.msra.mxu0 %v1960
    %1988 = vmatpush.msra.mxu0 %v1959
    %1989 = vmatpush.msra.mxu0 %v1958
    %1990 = vmatmul.f32.gmra.mxu0 %v1883
    %v1991 = vpop.f32.mrf.mxu0
    %v1992 = vadd.f32 0.0, %v1991
    %1993 = vmatmul.f32.gmra.mxu0 %v1886
    %v1994 = vpop.f32.mrf.mxu0
    %v1995 = vadd.f32 0.0, %v1994
    %1996 = vmatmul.f32.gmra.mxu0 %v1889
    %v1997 = vpop.f32.mrf.mxu0
    %v1998 = vadd.f32 0.0, %v1997
    %1999 = vmatmul.f32.gmra.mxu0 %v1892
    %v2000 = vpop.f32.mrf.mxu0
    %v2001 = vadd.f32 0.0, %v2000
    %2002 = vmatmul.f32.gmra.mxu0 %v1895
    %v2003 = vpop.f32.mrf.mxu0
    %v2004 = vadd.f32 0.0, %v2003
    %2005 = vmatmul.f32.gmra.mxu0 %v1898
    %v2006 = vpop.f32.mrf.mxu0
    %v2007 = vadd.f32 0.0, %v2006
    %2008 = vmatmul.f32.gmra.mxu0 %v1901
    %v2009 = vpop.f32.mrf.mxu0
    %v2010 = vadd.f32 0.0, %v2009
    %2011 = vmatmul.f32.gmra.mxu0 %v1904
    %v2012 = vpop.f32.mrf.mxu0
    %v2013 = vadd.f32 0.0, %v2012
    %2014 = vmatmul.f32.gmra.mxu0 %v1907
    %v2015 = vpop.f32.mrf.mxu0
    %v2016 = vadd.f32 0.0, %v2015
    %2017 = vmatmul.f32.gmra.mxu0 %v1910
    %v2018 = vpop.f32.mrf.mxu0
    %v2019 = vadd.f32 0.0, %v2018
    %2020 = vmatmul.f32.gmra.mxu0 %v1913
    %v2021 = vpop.f32.mrf.mxu0
    %v2022 = vadd.f32 0.0, %v2021
    %2023 = vmatmul.f32.gmra.mxu0 %v1916
    %v2024 = vpop.f32.mrf.mxu0
    %v2025 = vadd.f32 0.0, %v2024
    %2026 = vmatmul.f32.gmra.mxu0 %v1919
    %v2027 = vpop.f32.mrf.mxu0
    %v2028 = vadd.f32 0.0, %v2027
    %2029 = vmatmul.f32.gmra.mxu0 %v1922
    %v2030 = vpop.f32.mrf.mxu0
    %v2031 = vadd.f32 0.0, %v2030
    %2032 = vmatmul.f32.gmra.mxu0 %v1925
    %v2033 = vpop.f32.mrf.mxu0
    %v2034 = vadd.f32 0.0, %v2033
    %2035 = vmatmul.f32.gmra.mxu0 %v1928
    %v2036 = vpop.f32.mrf.mxu0
    %v2037 = vadd.f32 0.0, %v2036
    %2038 = vmatmul.f32.gmra.mxu0 %v1931
    %v2039 = vpop.f32.mrf.mxu0
    %v2040 = vadd.f32 0.0, %v2039
    %2041 = vmatmul.f32.gmra.mxu0 %v1934
    %v2042 = vpop.f32.mrf.mxu0
    %v2043 = vadd.f32 0.0, %v2042
    %2044 = vmatmul.f32.gmra.mxu0 %v1937
    %v2045 = vpop.f32.mrf.mxu0
    %v2046 = vadd.f32 0.0, %v2045
    %2047 = vmatmul.f32.gmra.mxu0 %v1940
    %v2048 = vpop.f32.mrf.mxu0
    %v2049 = vadd.f32 0.0, %v2048
    %2050 = vmatmul.f32.gmra.mxu0 %v1943
    %v2051 = vpop.f32.mrf.mxu0
    %v2052 = vadd.f32 0.0, %v2051
    %2053 = vmatmul.f32.gmra.mxu0 %v1946
    %v2054 = vpop.f32.mrf.mxu0
    %v2055 = vadd.f32 0.0, %v2054
    %2056 = vmatmul.f32.gmra.mxu0 %v1949
    %v2057 = vpop.f32.mrf.mxu0
    %v2058 = vadd.f32 0.0, %v2057
    %2059 = vmatmul.f32.gmra.mxu0 %v1952
    %v2060 = vpop.f32.mrf.mxu0
    %v2061 = vadd.f32 0.0, %v2060
    %2062 = vmatmul.f32.gmra.mxu0 %v1955
    %v2063 = vpop.f32.mrf.mxu0
    %v2064 = vadd.f32 0.0, %v2063
    %2065 = vdwg.mxu0
    %v2066 = vadd.f32 %v1697, %v1992
    %v2067 = vadd.f32 %v1698, %v1995
    %v2068 = vadd.f32 %v1699, %v1998
    %v2069 = vadd.f32 %v1700, %v2001
    %v2070 = vadd.f32 %v1701, %v2004
    %v2071 = vadd.f32 %v1702, %v2007
    %v2072 = vadd.f32 %v1703, %v2010
    %v2073 = vadd.f32 %v1704, %v2013
    %v2074 = vadd.f32 %v1705, %v2016
    %v2075 = vadd.f32 %v1706, %v2019
    %v2076 = vadd.f32 %v1707, %v2022
    %v2077 = vadd.f32 %v1708, %v2025
    %v2078 = vadd.f32 %v1709, %v2028
    %v2079 = vadd.f32 %v1710, %v2031
    %v2080 = vadd.f32 %v1711, %v2034
    %v2081 = vadd.f32 %v1712, %v2037
    %v2082 = vadd.f32 %v1713, %v2040
    %v2083 = vadd.f32 %v1714, %v2043
    %v2084 = vadd.f32 %v1715, %v2046
    %v2085 = vadd.f32 %v1716, %v2049
    %v2086 = vadd.f32 %v1717, %v2052
    %v2087 = vadd.f32 %v1718, %v2055
    %v2088 = vadd.f32 %v1719, %v2058
    %v2089 = vadd.f32 %v1720, %v2061
    %v2090 = vadd.f32 %v1721, %v2064
    %v2091 = vld [vmem:[#allocation7] sm:$0x1]
    %v2093 = vperm.slane %v2091, 0
    %v2095 = vadd.f32 %v2066, %v2093
    %v2096 = vadd.f32 %v2067, %v2093
    %v2097 = vadd.f32 %v2068, %v2093
    %v2098 = vadd.f32 %v2069, %v2093
    %v2099 = vadd.f32 %v2070, %v2093
    %v2100 = vadd.f32 %v2071, %v2093
    %v2101 = vadd.f32 %v2072, %v2093
    %v2102 = vadd.f32 %v2073, %v2093
    %v2103 = vadd.f32 %v2074, %v2093
    %v2104 = vadd.f32 %v2075, %v2093
    %v2105 = vadd.f32 %v2076, %v2093
    %v2106 = vadd.f32 %v2077, %v2093
    %v2107 = vadd.f32 %v2078, %v2093
    %v2108 = vadd.f32 %v2079, %v2093
    %v2109 = vadd.f32 %v2080, %v2093
    %v2110 = vadd.f32 %v2081, %v2093
    %v2111 = vadd.f32 %v2082, %v2093
    %v2112 = vadd.f32 %v2083, %v2093
    %v2113 = vadd.f32 %v2084, %v2093
    %v2114 = vadd.f32 %v2085, %v2093
    %v2115 = vadd.f32 %v2086, %v2093
    %v2116 = vadd.f32 %v2087, %v2093
    %v2117 = vadd.f32 %v2088, %v2093
    %v2118 = vadd.f32 %v2089, %v2093
    %v2119 = vadd.f32 %v2090, %v2093
    %v2120 = vmax.f32 %v2095, 0.0
    %v2121 = vmax.f32 %v2096, 0.0
    %v2122 = vmax.f32 %v2097, 0.0
    %v2123 = vmax.f32 %v2098, 0.0
    %v2124 = vmax.f32 %v2099, 0.0
    %v2125 = vmax.f32 %v2100, 0.0
    %v2126 = vmax.f32 %v2101, 0.0
    %v2127 = vmax.f32 %v2102, 0.0
    %v2128 = vmax.f32 %v2103, 0.0
    %v2129 = vmax.f32 %v2104, 0.0
    %v2130 = vmax.f32 %v2105, 0.0
    %v2131 = vmax.f32 %v2106, 0.0
    %v2132 = vmax.f32 %v2107, 0.0
    %v2133 = vmax.f32 %v2108, 0.0
    %v2134 = vmax.f32 %v2109, 0.0
    %v2135 = vmax.f32 %v2110, 0.0
    %v2136 = vmax.f32 %v2111, 0.0
    %v2137 = vmax.f32 %v2112, 0.0
    %v2138 = vmax.f32 %v2113, 0.0
    %v2139 = vmax.f32 %v2114, 0.0
    %v2140 = vmax.f32 %v2115, 0.0
    %v2141 = vmax.f32 %v2116, 0.0
    %v2142 = vmax.f32 %v2117, 0.0
    %v2143 = vmax.f32 %v2118, 0.0
    %v2144 = vmax.f32 %v2119, 0.0
    %v2145 = vld [vmem:[#allocation16] sm:$0x1]
    %v2146 = vld [vmem:[#allocation17] sm:$0x1]
    %v2147 = vadd.f32 %v2120, %v2121
    %v2148 = vadd.f32 %v2147, %v2122
    %v2149 = vadd.f32 %v2148, %v2123
    %v2150 = vadd.f32 %v2149, %v2124
    %v2151 = vadd.f32 %v2150, %v2125
    %v2152 = vadd.f32 %v2151, %v2126
    %v2153 = vadd.f32 %v2152, %v2127
    %v2154 = vadd.f32 %v2153, %v2128
    %v2155 = vadd.f32 %v2154, %v2129
    %v2156 = vadd.f32 %v2155, %v2130
    %v2157 = vadd.f32 %v2156, %v2131
    %v2158 = vadd.f32 %v2157, %v2132
    %v2159 = vadd.f32 %v2158, %v2133
    %v2160 = vadd.f32 %v2159, %v2134
    %v2161 = vadd.f32 %v2160, %v2135
    %v2162 = vadd.f32 %v2161, %v2136
    %v2163 = vadd.f32 %v2162, %v2137
    %v2164 = vadd.f32 %v2163, %v2138
    %v2165 = vadd.f32 %v2164, %v2139
    %v2166 = vadd.f32 %v2165, %v2140
    %v2167 = vadd.f32 %v2166, %v2141
    %v2168 = vadd.f32 %v2167, %v2142
    %v2169 = vadd.f32 %v2168, %v2143
    %vm2170 = vcmask 1043456
    %v2171 = vsel %vm2170, %v2144, 0.0
    %v2172 = vadd.f32 %v2169, %v2171
    %v2173 = vrot.slane %v2172, 4
    %v2174 = vadd.f32 %v2172, %v2173
    %v2175 = vrot.slane %v2174, 2
    %v2176 = vadd.f32 %v2174, %v2175
    %v2177 = vrot.slane %v2176, 1
    %v2178 = vadd.f32 %v2176, %v2177
    %v2179 = vmul.f32 %v2178, 0.0051020407
    %v2180 = vmul.f32 %v2120, %v2120
    %v2181 = vmul.f32 %v2121, %v2121
    %v2182 = vmul.f32 %v2122, %v2122
    %v2183 = vmul.f32 %v2123, %v2123
    %v2184 = vmul.f32 %v2124, %v2124
    %v2185 = vmul.f32 %v2125, %v2125
    %v2186 = vmul.f32 %v2126, %v2126
    %v2187 = vmul.f32 %v2127, %v2127
    %v2188 = vmul.f32 %v2128, %v2128
    %v2189 = vmul.f32 %v2129, %v2129
    %v2190 = vmul.f32 %v2130, %v2130
    %v2191 = vmul.f32 %v2131, %v2131
    %v2192 = vmul.f32 %v2132, %v2132
    %v2193 = vmul.f32 %v2133, %v2133
    %v2194 = vmul.f32 %v2134, %v2134
    %v2195 = vmul.f32 %v2135, %v2135
    %v2196 = vmul.f32 %v2136, %v2136
    %v2197 = vmul.f32 %v2137, %v2137
    %v2198 = vmul.f32 %v2138, %v2138
    %v2199 = vmul.f32 %v2139, %v2139
    %v2200 = vmul.f32 %v2140, %v2140
    %v2201 = vmul.f32 %v2141, %v2141
    %v2202 = vmul.f32 %v2142, %v2142
    %v2203 = vmul.f32 %v2143, %v2143
    %v2204 = vmul.f32 %v2144, %v2144
    %v2205 = vadd.f32 %v2180, %v2181
    %v2206 = vadd.f32 %v2205, %v2182
    %v2207 = vadd.f32 %v2206, %v2183
    %v2208 = vadd.f32 %v2207, %v2184
    %v2209 = vadd.f32 %v2208, %v2185
    %v2210 = vadd.f32 %v2209, %v2186
    %v2211 = vadd.f32 %v2210, %v2187
    %v2212 = vadd.f32 %v2211, %v2188
    %v2213 = vadd.f32 %v2212, %v2189
    %v2214 = vadd.f32 %v2213, %v2190
    %v2215 = vadd.f32 %v2214, %v2191
    %v2216 = vadd.f32 %v2215, %v2192
    %v2217 = vadd.f32 %v2216, %v2193
    %v2218 = vadd.f32 %v2217, %v2194
    %v2219 = vadd.f32 %v2218, %v2195
    %v2220 = vadd.f32 %v2219, %v2196
    %v2221 = vadd.f32 %v2220, %v2197
    %v2222 = vadd.f32 %v2221, %v2198
    %v2223 = vadd.f32 %v2222, %v2199
    %v2224 = vadd.f32 %v2223, %v2200
    %v2225 = vadd.f32 %v2224, %v2201
    %v2226 = vadd.f32 %v2225, %v2202
    %v2227 = vadd.f32 %v2226, %v2203
    %v2228 = vsel %vm2170, %v2204, 0.0
    %v2229 = vadd.f32 %v2227, %v2228
    %v2230 = vrot.slane %v2229, 4
    %v2231 = vadd.f32 %v2229, %v2230
    %v2232 = vrot.slane %v2231, 2
    %v2233 = vadd.f32 %v2231, %v2232
    %v2234 = vrot.slane %v2233, 1
    %v2235 = vadd.f32 %v2233, %v2234
    %v2236 = vmul.f32 %v2235, 0.0051020407
    %v2237 = vmul.f32 %v2179, %v2179
    %v2238 = vsub.f32 %v2236, %v2237
    %v2239 = vmax.f32 %v2238, 0.0
    %v2240 = vsub.f32 %v2120, %v2179
    %v2241 = vsub.f32 %v2121, %v2179
    %v2242 = vsub.f32 %v2122, %v2179
    %v2243 = vsub.f32 %v2123, %v2179
    %v2244 = vsub.f32 %v2124, %v2179
    %v2245 = vsub.f32 %v2125, %v2179
    %v2246 = vsub.f32 %v2126, %v2179
    %v2247 = vsub.f32 %v2127, %v2179
    %v2248 = vsub.f32 %v2128, %v2179
    %v2249 = vsub.f32 %v2129, %v2179
    %v2250 = vsub.f32 %v2130, %v2179
    %v2251 = vsub.f32 %v2131, %v2179
    %v2252 = vsub.f32 %v2132, %v2179
    %v2253 = vsub.f32 %v2133, %v2179
    %v2254 = vsub.f32 %v2134, %v2179
    %v2255 = vsub.f32 %v2135, %v2179
    %v2256 = vsub.f32 %v2136, %v2179
    %v2257 = vsub.f32 %v2137, %v2179
    %v2258 = vsub.f32 %v2138, %v2179
    %v2259 = vsub.f32 %v2139, %v2179
    %v2260 = vsub.f32 %v2140, %v2179
    %v2261 = vsub.f32 %v2141, %v2179
    %v2262 = vsub.f32 %v2142, %v2179
    %v2263 = vsub.f32 %v2143, %v2179
    %v2264 = vsub.f32 %v2144, %v2179
    %v2265 = vadd.f32 %v2239, 1e-05
    %v2266 = vrsqrt.pop %v2265
    %v2267 = vmul.f32 %v2266, %v2265
    %v2268 = vmul.f32 %v2267, %v2266
    %v2269 = vmul.f32 0.5, %v2268
    %v2270 = vsub.f32 1.5, %v2269
    %v2271 = vmul.f32 %v2266, %v2270
    %vm2272 = vweird.f32 %v2265
    %vm2273 = vweird.f32 %v2266
    %vm2274 = vmor %vm2272, %vm2273
    %v2275 = vsel %vm2274, %v2266, %v2271
    %v2276 = vmul.f32 %v2145, %v2275
    %v2278 = vperm.slane %v2276, 0
    %v2280 = vmul.f32 %v2240, %v2278
    %v2281 = vmul.f32 %v2241, %v2278
    %v2282 = vmul.f32 %v2242, %v2278
    %v2283 = vmul.f32 %v2243, %v2278
    %v2284 = vmul.f32 %v2244, %v2278
    %v2285 = vmul.f32 %v2245, %v2278
    %v2286 = vmul.f32 %v2246, %v2278
    %v2287 = vmul.f32 %v2247, %v2278
    %v2288 = vmul.f32 %v2248, %v2278
    %v2289 = vmul.f32 %v2249, %v2278
    %v2290 = vmul.f32 %v2250, %v2278
    %v2291 = vmul.f32 %v2251, %v2278
    %v2292 = vmul.f32 %v2252, %v2278
    %v2293 = vmul.f32 %v2253, %v2278
    %v2294 = vmul.f32 %v2254, %v2278
    %v2295 = vmul.f32 %v2255, %v2278
    %v2296 = vmul.f32 %v2256, %v2278
    %v2297 = vmul.f32 %v2257, %v2278
    %v2298 = vmul.f32 %v2258, %v2278
    %v2299 = vmul.f32 %v2259, %v2278
    %v2300 = vmul.f32 %v2260, %v2278
    %v2301 = vmul.f32 %v2261, %v2278
    %v2302 = vmul.f32 %v2262, %v2278
    %v2303 = vmul.f32 %v2263, %v2278
    %v2304 = vmul.f32 %v2264, %v2278
    %v2306 = vperm.slane %v2146, 0
    %v2308 = vadd.f32 %v2280, %v2306
    %v2309 = vadd.f32 %v2281, %v2306
    %v2310 = vadd.f32 %v2282, %v2306
    %v2311 = vadd.f32 %v2283, %v2306
    %v2312 = vadd.f32 %v2284, %v2306
    %v2313 = vadd.f32 %v2285, %v2306
    %v2314 = vadd.f32 %v2286, %v2306
    %v2315 = vadd.f32 %v2287, %v2306
    %v2316 = vadd.f32 %v2288, %v2306
    %v2317 = vadd.f32 %v2289, %v2306
    %v2318 = vadd.f32 %v2290, %v2306
    %v2319 = vadd.f32 %v2291, %v2306
    %v2320 = vadd.f32 %v2292, %v2306
    %v2321 = vadd.f32 %v2293, %v2306
    %v2322 = vadd.f32 %v2294, %v2306
    %v2323 = vadd.f32 %v2295, %v2306
    %v2324 = vadd.f32 %v2296, %v2306
    %v2325 = vadd.f32 %v2297, %v2306
    %v2326 = vadd.f32 %v2298, %v2306
    %v2327 = vadd.f32 %v2299, %v2306
    %v2328 = vadd.f32 %v2300, %v2306
    %v2329 = vadd.f32 %v2301, %v2306
    %v2330 = vadd.f32 %v2302, %v2306
    %v2331 = vadd.f32 %v2303, %v2306
    %v2332 = vadd.f32 %v2304, %v2306
    %v2333 = vld [vmem:[#allocation11] sm:$0xff]
    %2335 = vst [vmem:[#allocation1] ss:$2 sm:$0xff] %v2333
    %v2336 = vld.sshfl [vmem:[#allocation1] sm:$0xff pattern:$0x75316420]
    %v2337 = vld.sshfl [vmem:[#allocation1 + $0x8] sm:$0xff pattern:$0x75316420]
    %vm2339 = vcmask 556032
    %v2340 = vsel %vm2339, %v2337, 0
    %v2343 = vsel %vm2170, %v2332, 0
    %2345 = vmatpush.msra.mxu0 %v2323
    %2346 = vmatpush.msra.mxu0 %v2322
    %2347 = vmatpush.msra.mxu0 %v2321
    %2348 = vmatpush.msra.mxu0 %v2320
    %2349 = vmatpush.msra.mxu0 %v2319
    %2350 = vmatpush.msra.mxu0 %v2318
    %2351 = vmatpush.msra.mxu0 %v2317
    %2352 = vmatpush.msra.mxu0 %v2316
    %2353 = vmatpush.msra.mxu0 %v2315
    %2354 = vmatpush.msra.mxu0 %v2314
    %2355 = vmatpush.msra.mxu0 %v2313
    %2356 = vmatpush.msra.mxu0 %v2312
    %2357 = vmatpush.msra.mxu0 %v2311
    %2358 = vmatpush.msra.mxu0 %v2310
    %2359 = vmatpush.msra.mxu0 %v2309
    %2360 = vmatpush.msra.mxu0 %v2308
    %2361 = vmatmul.f32.gmra.mxu0 %v2336
    %v2362 = vpop.f32.mrf.mxu0
    %v2363 = vadd.f32 0.0, %v2362
    %2364 = vdwg.mxu0
    %2365 = vmatpush.msra.mxu0 0.0
    %2366 = vmatpush.msra.mxu0 0.0
    %2367 = vmatpush.msra.mxu0 0.0
    %2368 = vmatpush.msra.mxu0 0.0
    %2369 = vmatpush.msra.mxu0 0.0
    %2370 = vmatpush.msra.mxu0 0.0
    %2371 = vmatpush.msra.mxu0 0.0
    %2372 = vmatpush.msra.mxu0 %v2343
    %2373 = vmatpush.msra.mxu0 %v2331
    %2374 = vmatpush.msra.mxu0 %v2330
    %2375 = vmatpush.msra.mxu0 %v2329
    %2376 = vmatpush.msra.mxu0 %v2328
    %2377 = vmatpush.msra.mxu0 %v2327
    %2378 = vmatpush.msra.mxu0 %v2326
    %2379 = vmatpush.msra.mxu0 %v2325
    %2380 = vmatpush.msra.mxu0 %v2324
    %2381 = vmatmul.f32.gmra.mxu0 %v2340
    %v2382 = vpop.f32.mrf.mxu0
    %v2383 = vadd.f32 %v2363, %v2382
    %2384 = vdwg.mxu0
    %v2385 = vld [vmem:[#allocation13] sm:$0xff]
    %v2386 = vld [vmem:[#allocation13 + $0x8] sm:$0xff]
    %v2387 = vld [vmem:[#allocation13 + $0x10] sm:$0xff]
    %v2388 = vld [vmem:[#allocation13 + $0x18] sm:$0xff]
    %v2389 = vld [vmem:[#allocation13 + $0x20] sm:$0xff]
    %v2390 = vld [vmem:[#allocation13 + $0x28] sm:$0xff]
    %v2391 = vld [vmem:[#allocation13 + $0x30] sm:$0xff]
    %v2392 = vld [vmem:[#allocation13 + $0x38] sm:$0xff]
    %v2393 = vld [vmem:[#allocation13 + $0x40] sm:$0xff]
    %v2394 = vld [vmem:[#allocation13 + $0x48] sm:$0xff]
    %v2395 = vld [vmem:[#allocation13 + $0x50] sm:$0xff]
    %v2396 = vld [vmem:[#allocation13 + $0x58] sm:$0xff]
    %v2397 = vld [vmem:[#allocation13 + $0x60] sm:$0xff]
    %v2398 = vld [vmem:[#allocation13 + $0x68] sm:$0xff]
    %v2399 = vld [vmem:[#allocation13 + $0x70] sm:$0xff]
    %v2400 = vld [vmem:[#allocation13 + $0x78] sm:$0xff]
    %s2401 = scalar_lea.vmem [#allocation11], 8
    %v2402 = vld [vmem:[%s2401] sm:$0xff]
    %2404 = vst [vmem:[#allocation1] ss:$2 sm:$0xff] %v2402
    %v2405 = vld.sshfl [vmem:[#allocation1] sm:$0xff pattern:$0x75316420]
    %v2406 = vld.sshfl [vmem:[#allocation1 + $0x8] sm:$0xff pattern:$0x75316420]
    %v2408 = vsel %vm2339, %v2406, 0
    %2410 = vmatpush.msra.mxu0 %v2323
    %2411 = vmatpush.msra.mxu0 %v2322
    %2412 = vmatpush.msra.mxu0 %v2321
    %2413 = vmatpush.msra.mxu0 %v2320
    %2414 = vmatpush.msra.mxu0 %v2319
    %2415 = vmatpush.msra.mxu0 %v2318
    %2416 = vmatpush.msra.mxu0 %v2317
    %2417 = vmatpush.msra.mxu0 %v2316
    %2418 = vmatpush.msra.mxu0 %v2315
    %2419 = vmatpush.msra.mxu0 %v2314
    %2420 = vmatpush.msra.mxu0 %v2313
    %2421 = vmatpush.msra.mxu0 %v2312
    %2422 = vmatpush.msra.mxu0 %v2311
    %2423 = vmatpush.msra.mxu0 %v2310
    %2424 = vmatpush.msra.mxu0 %v2309
    %2425 = vmatpush.msra.mxu0 %v2308
    %2426 = vmatmul.f32.gmra.mxu0 %v2405
    %v2427 = vpop.f32.mrf.mxu0
    %v2428 = vadd.f32 0.0, %v2427
    %2429 = vdwg.mxu0
    %2430 = vmatpush.msra.mxu0 0.0
    %2431 = vmatpush.msra.mxu0 0.0
    %2432 = vmatpush.msra.mxu0 0.0
    %2433 = vmatpush.msra.mxu0 0.0
    %2434 = vmatpush.msra.mxu0 0.0
    %2435 = vmatpush.msra.mxu0 0.0
    %2436 = vmatpush.msra.mxu0 0.0
    %2437 = vmatpush.msra.mxu0 %v2343
    %2438 = vmatpush.msra.mxu0 %v2331
    %2439 = vmatpush.msra.mxu0 %v2330
    %2440 = vmatpush.msra.mxu0 %v2329
    %2441 = vmatpush.msra.mxu0 %v2328
    %2442 = vmatpush.msra.mxu0 %v2327
    %2443 = vmatpush.msra.mxu0 %v2326
    %2444 = vmatpush.msra.mxu0 %v2325
    %2445 = vmatpush.msra.mxu0 %v2324
    %2446 = vmatmul.f32.gmra.mxu0 %v2408
    %v2447 = vpop.f32.mrf.mxu0
    %v2448 = vadd.f32 %v2428, %v2447
    %2449 = vdwg.mxu0
    %s2450 = scalar_lea.vmem [#allocation13], 128
    %v2451 = vld [vmem:[%s2450] sm:$0xff]
    %v2452 = vld [vmem:[%s2450 + $0x8] sm:$0xff]
    %v2453 = vld [vmem:[%s2450 + $0x10] sm:$0xff]
    %v2454 = vld [vmem:[%s2450 + $0x18] sm:$0xff]
    %v2455 = vld [vmem:[%s2450 + $0x20] sm:$0xff]
    %v2456 = vld [vmem:[%s2450 + $0x28] sm:$0xff]
    %v2457 = vld [vmem:[%s2450 + $0x30] sm:$0xff]
    %v2458 = vld [vmem:[%s2450 + $0x38] sm:$0xff]
    %v2459 = vld [vmem:[%s2450 + $0x40] sm:$0xff]
    %v2460 = vld [vmem:[%s2450 + $0x48] sm:$0xff]
    %v2461 = vld [vmem:[%s2450 + $0x50] sm:$0xff]
    %v2462 = vld [vmem:[%s2450 + $0x58] sm:$0xff]
    %v2463 = vld [vmem:[%s2450 + $0x60] sm:$0xff]
    %v2464 = vld [vmem:[%s2450 + $0x68] sm:$0xff]
    %v2465 = vld [vmem:[%s2450 + $0x70] sm:$0xff]
    %v2466 = vld [vmem:[%s2450 + $0x78] sm:$0xff]
    %2467 = vmatpush.msra.mxu0 %v2466
    %2468 = vmatpush.msra.mxu0 %v2465
    %2469 = vmatpush.msra.mxu0 %v2464
    %2470 = vmatpush.msra.mxu0 %v2463
    %2471 = vmatpush.msra.mxu0 %v2462
    %2472 = vmatpush.msra.mxu0 %v2461
    %2473 = vmatpush.msra.mxu0 %v2460
    %2474 = vmatpush.msra.mxu0 %v2459
    %2475 = vmatpush.msra.mxu0 %v2458
    %2476 = vmatpush.msra.mxu0 %v2457
    %2477 = vmatpush.msra.mxu0 %v2456
    %2478 = vmatpush.msra.mxu0 %v2455
    %2479 = vmatpush.msra.mxu0 %v2454
    %2480 = vmatpush.msra.mxu0 %v2453
    %2481 = vmatpush.msra.mxu0 %v2452
    %2482 = vmatpush.msra.mxu0 %v2451
    %2483 = vmatmul.f32.gmra.mxu0 %v2448
    %v2484 = vpop.f32.mrf.mxu0
    %v2485 = vadd.f32 0.0, %v2484
    %2486 = vdwg.mxu0
    %2487 = vmatpush.msra.mxu0 %v2400
    %2488 = vmatpush.msra.mxu0 %v2399
    %2489 = vmatpush.msra.mxu0 %v2398
    %2490 = vmatpush.msra.mxu0 %v2397
    %2491 = vmatpush.msra.mxu0 %v2396
    %2492 = vmatpush.msra.mxu0 %v2395
    %2493 = vmatpush.msra.mxu0 %v2394
    %2494 = vmatpush.msra.mxu0 %v2393
    %2495 = vmatpush.msra.mxu0 %v2392
    %2496 = vmatpush.msra.mxu0 %v2391
    %2497 = vmatpush.msra.mxu0 %v2390
    %2498 = vmatpush.msra.mxu0 %v2389
    %2499 = vmatpush.msra.mxu0 %v2388
    %2500 = vmatpush.msra.mxu0 %v2387
    %2501 = vmatpush.msra.mxu0 %v2386
    %2502 = vmatpush.msra.mxu0 %v2385
    %2503 = vmatmul.f32.gmra.mxu0 %v2383
    %v2504 = vpop.f32.mrf.mxu0
    %v2505 = vadd.f32 %v2485, %v2504
    %2506 = vdwg.mxu0
    %s2507 = scalar_lea.vmem [#allocation11], 16
    %v2508 = vld [vmem:[%s2507] sm:$0xff]
    %2510 = vst [vmem:[#allocation1] ss:$2 sm:$0xff] %v2508
    %v2511 = vld.sshfl [vmem:[#allocation1] sm:$0xff pattern:$0x75316420]
    %v2512 = vld.sshfl [vmem:[#allocation1 + $0x8] sm:$0xff pattern:$0x75316420]
    %v2514 = vsel %vm2339, %v2512, 0
    %2516 = vmatpush.msra.mxu0 %v2323
    %2517 = vmatpush.msra.mxu0 %v2322
    %2518 = vmatpush.msra.mxu0 %v2321
    %2519 = vmatpush.msra.mxu0 %v2320
    %2520 = vmatpush.msra.mxu0 %v2319
    %2521 = vmatpush.msra.mxu0 %v2318
    %2522 = vmatpush.msra.mxu0 %v2317
    %2523 = vmatpush.msra.mxu0 %v2316
    %2524 = vmatpush.msra.mxu0 %v2315
    %2525 = vmatpush.msra.mxu0 %v2314
    %2526 = vmatpush.msra.mxu0 %v2313
    %2527 = vmatpush.msra.mxu0 %v2312
    %2528 = vmatpush.msra.mxu0 %v2311
    %2529 = vmatpush.msra.mxu0 %v2310
    %2530 = vmatpush.msra.mxu0 %v2309
    %2531 = vmatpush.msra.mxu0 %v2308
    %2532 = vmatmul.f32.gmra.mxu0 %v2511
    %v2533 = vpop.f32.mrf.mxu0
    %v2534 = vadd.f32 0.0, %v2533
    %2535 = vdwg.mxu0
    %2536 = vmatpush.msra.mxu0 0.0
    %2537 = vmatpush.msra.mxu0 0.0
    %2538 = vmatpush.msra.mxu0 0.0
    %2539 = vmatpush.msra.mxu0 0.0
    %2540 = vmatpush.msra.mxu0 0.0
    %2541 = vmatpush.msra.mxu0 0.0
    %2542 = vmatpush.msra.mxu0 0.0
    %2543 = vmatpush.msra.mxu0 %v2343
    %2544 = vmatpush.msra.mxu0 %v2331
    %2545 = vmatpush.msra.mxu0 %v2330
    %2546 = vmatpush.msra.mxu0 %v2329
    %2547 = vmatpush.msra.mxu0 %v2328
    %2548 = vmatpush.msra.mxu0 %v2327
    %2549 = vmatpush.msra.mxu0 %v2326
    %2550 = vmatpush.msra.mxu0 %v2325
    %2551 = vmatpush.msra.mxu0 %v2324
    %2552 = vmatmul.f32.gmra.mxu0 %v2514
    %v2553 = vpop.f32.mrf.mxu0
    %v2554 = vadd.f32 %v2534, %v2553
    %2555 = vdwg.mxu0
    %s2556 = scalar_lea.vmem [#allocation13], 256
    %v2557 = vld [vmem:[%s2556] sm:$0xff]
    %v2558 = vld [vmem:[%s2556 + $0x8] sm:$0xff]
    %v2559 = vld [vmem:[%s2556 + $0x10] sm:$0xff]
    %v2560 = vld [vmem:[%s2556 + $0x18] sm:$0xff]
    %v2561 = vld [vmem:[%s2556 + $0x20] sm:$0xff]
    %v2562 = vld [vmem:[%s2556 + $0x28] sm:$0xff]
    %v2563 = vld [vmem:[%s2556 + $0x30] sm:$0xff]
    %v2564 = vld [vmem:[%s2556 + $0x38] sm:$0xff]
    %v2565 = vld [vmem:[%s2556 + $0x40] sm:$0xff]
    %v2566 = vld [vmem:[%s2556 + $0x48] sm:$0xff]
    %v2567 = vld [vmem:[%s2556 + $0x50] sm:$0xff]
    %v2568 = vld [vmem:[%s2556 + $0x58] sm:$0xff]
    %v2569 = vld [vmem:[%s2556 + $0x60] sm:$0xff]
    %v2570 = vld [vmem:[%s2556 + $0x68] sm:$0xff]
    %v2571 = vld [vmem:[%s2556 + $0x70] sm:$0xff]
    %v2572 = vld [vmem:[%s2556 + $0x78] sm:$0xff]
    %2573 = vmatpush.msra.mxu0 %v2572
    %2574 = vmatpush.msra.mxu0 %v2571
    %2575 = vmatpush.msra.mxu0 %v2570
    %2576 = vmatpush.msra.mxu0 %v2569
    %2577 = vmatpush.msra.mxu0 %v2568
    %2578 = vmatpush.msra.mxu0 %v2567
    %2579 = vmatpush.msra.mxu0 %v2566
    %2580 = vmatpush.msra.mxu0 %v2565
    %2581 = vmatpush.msra.mxu0 %v2564
    %2582 = vmatpush.msra.mxu0 %v2563
    %2583 = vmatpush.msra.mxu0 %v2562
    %2584 = vmatpush.msra.mxu0 %v2561
    %2585 = vmatpush.msra.mxu0 %v2560
    %2586 = vmatpush.msra.mxu0 %v2559
    %2587 = vmatpush.msra.mxu0 %v2558
    %2588 = vmatpush.msra.mxu0 %v2557
    %2589 = vmatmul.f32.gmra.mxu0 %v2554
    %v2590 = vpop.f32.mrf.mxu0
    %v2591 = vadd.f32 0.0, %v2590
    %2592 = vdwg.mxu0
    %v2593 = vadd.f32 %v2505, %v2591
    %s2594 = scalar_lea.vmem [#allocation11], 24
    %v2595 = vld [vmem:[%s2594] sm:$0xff]
    %2597 = vst [vmem:[#allocation1] ss:$2 sm:$0xff] %v2595
    %v2598 = vld.sshfl [vmem:[#allocation1] sm:$0xff pattern:$0x75316420]
    %v2599 = vld.sshfl [vmem:[#allocation1 + $0x8] sm:$0xff pattern:$0x75316420]
    %v2601 = vsel %vm2339, %v2599, 0
    %2603 = vmatpush.msra.mxu0 %v2323
    %2604 = vmatpush.msra.mxu0 %v2322
    %2605 = vmatpush.msra.mxu0 %v2321
    %2606 = vmatpush.msra.mxu0 %v2320
    %2607 = vmatpush.msra.mxu0 %v2319
    %2608 = vmatpush.msra.mxu0 %v2318
    %2609 = vmatpush.msra.mxu0 %v2317
    %2610 = vmatpush.msra.mxu0 %v2316
    %2611 = vmatpush.msra.mxu0 %v2315
    %2612 = vmatpush.msra.mxu0 %v2314
    %2613 = vmatpush.msra.mxu0 %v2313
    %2614 = vmatpush.msra.mxu0 %v2312
    %2615 = vmatpush.msra.mxu0 %v2311
    %2616 = vmatpush.msra.mxu0 %v2310
    %2617 = vmatpush.msra.mxu0 %v2309
    %2618 = vmatpush.msra.mxu0 %v2308
    %2619 = vmatmul.f32.gmra.mxu0 %v2598
    %v2620 = vpop.f32.mrf.mxu0
    %v2621 = vadd.f32 0.0, %v2620
    %2622 = vdwg.mxu0
    %2623 = vmatpush.msra.mxu0 0.0
    %2624 = vmatpush.msra.mxu0 0.0
    %2625 = vmatpush.msra.mxu0 0.0
    %2626 = vmatpush.msra.mxu0 0.0
    %2627 = vmatpush.msra.mxu0 0.0
    %2628 = vmatpush.msra.mxu0 0.0
    %2629 = vmatpush.msra.mxu0 0.0
    %2630 = vmatpush.msra.mxu0 %v2343
    %2631 = vmatpush.msra.mxu0 %v2331
    %2632 = vmatpush.msra.mxu0 %v2330
    %2633 = vmatpush.msra.mxu0 %v2329
    %2634 = vmatpush.msra.mxu0 %v2328
    %2635 = vmatpush.msra.mxu0 %v2327
    %2636 = vmatpush.msra.mxu0 %v2326
    %2637 = vmatpush.msra.mxu0 %v2325
    %2638 = vmatpush.msra.mxu0 %v2324
    %2639 = vmatmul.f32.gmra.mxu0 %v2601
    %v2640 = vpop.f32.mrf.mxu0
    %v2641 = vadd.f32 %v2621, %v2640
    %2642 = vdwg.mxu0
    %s2643 = scalar_lea.vmem [#allocation13], 384
    %v2644 = vld [vmem:[%s2643] sm:$0xff]
    %v2645 = vld [vmem:[%s2643 + $0x8] sm:$0xff]
    %v2646 = vld [vmem:[%s2643 + $0x10] sm:$0xff]
    %v2647 = vld [vmem:[%s2643 + $0x18] sm:$0xff]
    %v2648 = vld [vmem:[%s2643 + $0x20] sm:$0xff]
    %v2649 = vld [vmem:[%s2643 + $0x28] sm:$0xff]
    %v2650 = vld [vmem:[%s2643 + $0x30] sm:$0xff]
    %v2651 = vld [vmem:[%s2643 + $0x38] sm:$0xff]
    %v2652 = vld [vmem:[%s2643 + $0x40] sm:$0xff]
    %v2653 = vld [vmem:[%s2643 + $0x48] sm:$0xff]
    %v2654 = vld [vmem:[%s2643 + $0x50] sm:$0xff]
    %v2655 = vld [vmem:[%s2643 + $0x58] sm:$0xff]
    %v2656 = vld [vmem:[%s2643 + $0x60] sm:$0xff]
    %v2657 = vld [vmem:[%s2643 + $0x68] sm:$0xff]
    %v2658 = vld [vmem:[%s2643 + $0x70] sm:$0xff]
    %v2659 = vld [vmem:[%s2643 + $0x78] sm:$0xff]
    %2660 = vmatpush.msra.mxu0 %v2659
    %2661 = vmatpush.msra.mxu0 %v2658
    %2662 = vmatpush.msra.mxu0 %v2657
    %2663 = vmatpush.msra.mxu0 %v2656
    %2664 = vmatpush.msra.mxu0 %v2655
    %2665 = vmatpush.msra.mxu0 %v2654
    %2666 = vmatpush.msra.mxu0 %v2653
    %2667 = vmatpush.msra.mxu0 %v2652
    %2668 = vmatpush.msra.mxu0 %v2651
    %2669 = vmatpush.msra.mxu0 %v2650
    %2670 = vmatpush.msra.mxu0 %v2649
    %2671 = vmatpush.msra.mxu0 %v2648
    %2672 = vmatpush.msra.mxu0 %v2647
    %2673 = vmatpush.msra.mxu0 %v2646
    %2674 = vmatpush.msra.mxu0 %v2645
    %2675 = vmatpush.msra.mxu0 %v2644
    %2676 = vmatmul.f32.gmra.mxu0 %v2641
    %v2677 = vpop.f32.mrf.mxu0
    %v2678 = vadd.f32 0.0, %v2677
    %2679 = vdwg.mxu0
    %v2680 = vadd.f32 %v2593, %v2678
    %s2681 = scalar_lea.vmem [#allocation11], 32
    %v2682 = vld [vmem:[%s2681] sm:$0xff]
    %2684 = vst [vmem:[#allocation1] ss:$2 sm:$0xff] %v2682
    %v2685 = vld.sshfl [vmem:[#allocation1] sm:$0xff pattern:$0x75316420]
    %v2686 = vld.sshfl [vmem:[#allocation1 + $0x8] sm:$0xff pattern:$0x75316420]
    %v2688 = vsel %vm2339, %v2686, 0
    %2690 = vmatpush.msra.mxu0 %v2323
    %2691 = vmatpush.msra.mxu0 %v2322
    %2692 = vmatpush.msra.mxu0 %v2321
    %2693 = vmatpush.msra.mxu0 %v2320
    %2694 = vmatpush.msra.mxu0 %v2319
    %2695 = vmatpush.msra.mxu0 %v2318
    %2696 = vmatpush.msra.mxu0 %v2317
    %2697 = vmatpush.msra.mxu0 %v2316
    %2698 = vmatpush.msra.mxu0 %v2315
    %2699 = vmatpush.msra.mxu0 %v2314
    %2700 = vmatpush.msra.mxu0 %v2313
    %2701 = vmatpush.msra.mxu0 %v2312
    %2702 = vmatpush.msra.mxu0 %v2311
    %2703 = vmatpush.msra.mxu0 %v2310
    %2704 = vmatpush.msra.mxu0 %v2309
    %2705 = vmatpush.msra.mxu0 %v2308
    %2706 = vmatmul.f32.gmra.mxu0 %v2685
    %v2707 = vpop.f32.mrf.mxu0
    %v2708 = vadd.f32 0.0, %v2707
    %2709 = vdwg.mxu0
    %2710 = vmatpush.msra.mxu0 0.0
    %2711 = vmatpush.msra.mxu0 0.0
    %2712 = vmatpush.msra.mxu0 0.0
    %2713 = vmatpush.msra.mxu0 0.0
    %2714 = vmatpush.msra.mxu0 0.0
    %2715 = vmatpush.msra.mxu0 0.0
    %2716 = vmatpush.msra.mxu0 0.0
    %2717 = vmatpush.msra.mxu0 %v2343
    %2718 = vmatpush.msra.mxu0 %v2331
    %2719 = vmatpush.msra.mxu0 %v2330
    %2720 = vmatpush.msra.mxu0 %v2329
    %2721 = vmatpush.msra.mxu0 %v2328
    %2722 = vmatpush.msra.mxu0 %v2327
    %2723 = vmatpush.msra.mxu0 %v2326
    %2724 = vmatpush.msra.mxu0 %v2325
    %2725 = vmatpush.msra.mxu0 %v2324
    %2726 = vmatmul.f32.gmra.mxu0 %v2688
    %v2727 = vpop.f32.mrf.mxu0
    %v2728 = vadd.f32 %v2708, %v2727
    %2729 = vdwg.mxu0
    %s2730 = scalar_lea.vmem [#allocation13], 512
    %v2731 = vld [vmem:[%s2730] sm:$0xff]
    %v2732 = vld [vmem:[%s2730 + $0x8] sm:$0xff]
    %v2733 = vld [vmem:[%s2730 + $0x10] sm:$0xff]
    %v2734 = vld [vmem:[%s2730 + $0x18] sm:$0xff]
    %v2735 = vld [vmem:[%s2730 + $0x20] sm:$0xff]
    %v2736 = vld [vmem:[%s2730 + $0x28] sm:$0xff]
    %v2737 = vld [vmem:[%s2730 + $0x30] sm:$0xff]
    %v2738 = vld [vmem:[%s2730 + $0x38] sm:$0xff]
    %v2739 = vld [vmem:[%s2730 + $0x40] sm:$0xff]
    %v2740 = vld [vmem:[%s2730 + $0x48] sm:$0xff]
    %v2741 = vld [vmem:[%s2730 + $0x50] sm:$0xff]
    %v2742 = vld [vmem:[%s2730 + $0x58] sm:$0xff]
    %v2743 = vld [vmem:[%s2730 + $0x60] sm:$0xff]
    %v2744 = vld [vmem:[%s2730 + $0x68] sm:$0xff]
    %v2745 = vld [vmem:[%s2730 + $0x70] sm:$0xff]
    %v2746 = vld [vmem:[%s2730 + $0x78] sm:$0xff]
    %2747 = vmatpush.msra.mxu0 %v2746
    %2748 = vmatpush.msra.mxu0 %v2745
    %2749 = vmatpush.msra.mxu0 %v2744
    %2750 = vmatpush.msra.mxu0 %v2743
    %2751 = vmatpush.msra.mxu0 %v2742
    %2752 = vmatpush.msra.mxu0 %v2741
    %2753 = vmatpush.msra.mxu0 %v2740
    %2754 = vmatpush.msra.mxu0 %v2739
    %2755 = vmatpush.msra.mxu0 %v2738
    %2756 = vmatpush.msra.mxu0 %v2737
    %2757 = vmatpush.msra.mxu0 %v2736
    %2758 = vmatpush.msra.mxu0 %v2735
    %2759 = vmatpush.msra.mxu0 %v2734
    %2760 = vmatpush.msra.mxu0 %v2733
    %2761 = vmatpush.msra.mxu0 %v2732
    %2762 = vmatpush.msra.mxu0 %v2731
    %2763 = vmatmul.f32.gmra.mxu0 %v2728
    %v2764 = vpop.f32.mrf.mxu0
    %v2765 = vadd.f32 0.0, %v2764
    %2766 = vdwg.mxu0
    %v2767 = vadd.f32 %v2680, %v2765
    %s2768 = scalar_lea.vmem [#allocation11], 40
    %v2769 = vld [vmem:[%s2768] sm:$0xff]
    %2771 = vst [vmem:[#allocation1] ss:$2 sm:$0xff] %v2769
    %v2772 = vld.sshfl [vmem:[#allocation1] sm:$0xff pattern:$0x75316420]
    %v2773 = vld.sshfl [vmem:[#allocation1 + $0x8] sm:$0xff pattern:$0x75316420]
    %v2775 = vsel %vm2339, %v2773, 0
    %2777 = vmatpush.msra.mxu0 %v2323
    %2778 = vmatpush.msra.mxu0 %v2322
    %2779 = vmatpush.msra.mxu0 %v2321
    %2780 = vmatpush.msra.mxu0 %v2320
    %2781 = vmatpush.msra.mxu0 %v2319
    %2782 = vmatpush.msra.mxu0 %v2318
    %2783 = vmatpush.msra.mxu0 %v2317
    %2784 = vmatpush.msra.mxu0 %v2316
    %2785 = vmatpush.msra.mxu0 %v2315
    %2786 = vmatpush.msra.mxu0 %v2314
    %2787 = vmatpush.msra.mxu0 %v2313
    %2788 = vmatpush.msra.mxu0 %v2312
    %2789 = vmatpush.msra.mxu0 %v2311
    %2790 = vmatpush.msra.mxu0 %v2310
    %2791 = vmatpush.msra.mxu0 %v2309
    %2792 = vmatpush.msra.mxu0 %v2308
    %2793 = vmatmul.f32.gmra.mxu0 %v2772
    %v2794 = vpop.f32.mrf.mxu0
    %v2795 = vadd.f32 0.0, %v2794
    %2796 = vdwg.mxu0
    %2797 = vmatpush.msra.mxu0 0.0
    %2798 = vmatpush.msra.mxu0 0.0
    %2799 = vmatpush.msra.mxu0 0.0
    %2800 = vmatpush.msra.mxu0 0.0
    %2801 = vmatpush.msra.mxu0 0.0
    %2802 = vmatpush.msra.mxu0 0.0
    %2803 = vmatpush.msra.mxu0 0.0
    %2804 = vmatpush.msra.mxu0 %v2343
    %2805 = vmatpush.msra.mxu0 %v2331
    %2806 = vmatpush.msra.mxu0 %v2330
    %2807 = vmatpush.msra.mxu0 %v2329
    %2808 = vmatpush.msra.mxu0 %v2328
    %2809 = vmatpush.msra.mxu0 %v2327
    %2810 = vmatpush.msra.mxu0 %v2326
    %2811 = vmatpush.msra.mxu0 %v2325
    %2812 = vmatpush.msra.mxu0 %v2324
    %2813 = vmatmul.f32.gmra.mxu0 %v2775
    %v2814 = vpop.f32.mrf.mxu0
    %v2815 = vadd.f32 %v2795, %v2814
    %2816 = vdwg.mxu0
    %s2817 = scalar_lea.vmem [#allocation13], 640
    %v2818 = vld [vmem:[%s2817] sm:$0xff]
    %v2819 = vld [vmem:[%s2817 + $0x8] sm:$0xff]
    %v2820 = vld [vmem:[%s2817 + $0x10] sm:$0xff]
    %v2821 = vld [vmem:[%s2817 + $0x18] sm:$0xff]
    %v2822 = vld [vmem:[%s2817 + $0x20] sm:$0xff]
    %v2823 = vld [vmem:[%s2817 + $0x28] sm:$0xff]
    %v2824 = vld [vmem:[%s2817 + $0x30] sm:$0xff]
    %v2825 = vld [vmem:[%s2817 + $0x38] sm:$0xff]
    %v2826 = vld [vmem:[%s2817 + $0x40] sm:$0xff]
    %v2827 = vld [vmem:[%s2817 + $0x48] sm:$0xff]
    %v2828 = vld [vmem:[%s2817 + $0x50] sm:$0xff]
    %v2829 = vld [vmem:[%s2817 + $0x58] sm:$0xff]
    %v2830 = vld [vmem:[%s2817 + $0x60] sm:$0xff]
    %v2831 = vld [vmem:[%s2817 + $0x68] sm:$0xff]
    %v2832 = vld [vmem:[%s2817 + $0x70] sm:$0xff]
    %v2833 = vld [vmem:[%s2817 + $0x78] sm:$0xff]
    %2834 = vmatpush.msra.mxu0 %v2833
    %2835 = vmatpush.msra.mxu0 %v2832
    %2836 = vmatpush.msra.mxu0 %v2831
    %2837 = vmatpush.msra.mxu0 %v2830
    %2838 = vmatpush.msra.mxu0 %v2829
    %2839 = vmatpush.msra.mxu0 %v2828
    %2840 = vmatpush.msra.mxu0 %v2827
    %2841 = vmatpush.msra.mxu0 %v2826
    %2842 = vmatpush.msra.mxu0 %v2825
    %2843 = vmatpush.msra.mxu0 %v2824
    %2844 = vmatpush.msra.mxu0 %v2823
    %2845 = vmatpush.msra.mxu0 %v2822
    %2846 = vmatpush.msra.mxu0 %v2821
    %2847 = vmatpush.msra.mxu0 %v2820
    %2848 = vmatpush.msra.mxu0 %v2819
    %2849 = vmatpush.msra.mxu0 %v2818
    %2850 = vmatmul.f32.gmra.mxu0 %v2815
    %v2851 = vpop.f32.mrf.mxu0
    %v2852 = vadd.f32 0.0, %v2851
    %2853 = vdwg.mxu0
    %v2854 = vadd.f32 %v2767, %v2852
    %s2855 = scalar_lea.vmem [#allocation11], 48
    %v2856 = vld [vmem:[%s2855] sm:$0xff]
    %2858 = vst [vmem:[#allocation1] ss:$2 sm:$0xff] %v2856
    %v2859 = vld.sshfl [vmem:[#allocation1] sm:$0xff pattern:$0x75316420]
    %v2860 = vld.sshfl [vmem:[#allocation1 + $0x8] sm:$0xff pattern:$0x75316420]
    %v2862 = vsel %vm2339, %v2860, 0
    %2864 = vmatpush.msra.mxu0 %v2323
    %2865 = vmatpush.msra.mxu0 %v2322
    %2866 = vmatpush.msra.mxu0 %v2321
    %2867 = vmatpush.msra.mxu0 %v2320
    %2868 = vmatpush.msra.mxu0 %v2319
    %2869 = vmatpush.msra.mxu0 %v2318
    %2870 = vmatpush.msra.mxu0 %v2317
    %2871 = vmatpush.msra.mxu0 %v2316
    %2872 = vmatpush.msra.mxu0 %v2315
    %2873 = vmatpush.msra.mxu0 %v2314
    %2874 = vmatpush.msra.mxu0 %v2313
    %2875 = vmatpush.msra.mxu0 %v2312
    %2876 = vmatpush.msra.mxu0 %v2311
    %2877 = vmatpush.msra.mxu0 %v2310
    %2878 = vmatpush.msra.mxu0 %v2309
    %2879 = vmatpush.msra.mxu0 %v2308
    %2880 = vmatmul.f32.gmra.mxu0 %v2859
    %v2881 = vpop.f32.mrf.mxu0
    %v2882 = vadd.f32 0.0, %v2881
    %2883 = vdwg.mxu0
    %2884 = vmatpush.msra.mxu0 0.0
    %2885 = vmatpush.msra.mxu0 0.0
    %2886 = vmatpush.msra.mxu0 0.0
    %2887 = vmatpush.msra.mxu0 0.0
    %2888 = vmatpush.msra.mxu0 0.0
    %2889 = vmatpush.msra.mxu0 0.0
    %2890 = vmatpush.msra.mxu0 0.0
    %2891 = vmatpush.msra.mxu0 %v2343
    %2892 = vmatpush.msra.mxu0 %v2331
    %2893 = vmatpush.msra.mxu0 %v2330
    %2894 = vmatpush.msra.mxu0 %v2329
    %2895 = vmatpush.msra.mxu0 %v2328
    %2896 = vmatpush.msra.mxu0 %v2327
    %2897 = vmatpush.msra.mxu0 %v2326
    %2898 = vmatpush.msra.mxu0 %v2325
    %2899 = vmatpush.msra.mxu0 %v2324
    %2900 = vmatmul.f32.gmra.mxu0 %v2862
    %v2901 = vpop.f32.mrf.mxu0
    %v2902 = vadd.f32 %v2882, %v2901
    %2903 = vdwg.mxu0
    %s2904 = scalar_lea.vmem [#allocation13], 768
    %v2905 = vld [vmem:[%s2904] sm:$0xff]
    %v2906 = vld [vmem:[%s2904 + $0x8] sm:$0xff]
    %v2907 = vld [vmem:[%s2904 + $0x10] sm:$0xff]
    %v2908 = vld [vmem:[%s2904 + $0x18] sm:$0xff]
    %v2909 = vld [vmem:[%s2904 + $0x20] sm:$0xff]
    %v2910 = vld [vmem:[%s2904 + $0x28] sm:$0xff]
    %v2911 = vld [vmem:[%s2904 + $0x30] sm:$0xff]
    %v2912 = vld [vmem:[%s2904 + $0x38] sm:$0xff]
    %v2913 = vld [vmem:[%s2904 + $0x40] sm:$0xff]
    %v2914 = vld [vmem:[%s2904 + $0x48] sm:$0xff]
    %v2915 = vld [vmem:[%s2904 + $0x50] sm:$0xff]
    %v2916 = vld [vmem:[%s2904 + $0x58] sm:$0xff]
    %v2917 = vld [vmem:[%s2904 + $0x60] sm:$0xff]
    %v2918 = vld [vmem:[%s2904 + $0x68] sm:$0xff]
    %v2919 = vld [vmem:[%s2904 + $0x70] sm:$0xff]
    %v2920 = vld [vmem:[%s2904 + $0x78] sm:$0xff]
    %2921 = vmatpush.msra.mxu0 %v2920
    %2922 = vmatpush.msra.mxu0 %v2919
    %2923 = vmatpush.msra.mxu0 %v2918
    %2924 = vmatpush.msra.mxu0 %v2917
    %2925 = vmatpush.msra.mxu0 %v2916
    %2926 = vmatpush.msra.mxu0 %v2915
    %2927 = vmatpush.msra.mxu0 %v2914
    %2928 = vmatpush.msra.mxu0 %v2913
    %2929 = vmatpush.msra.mxu0 %v2912
    %2930 = vmatpush.msra.mxu0 %v2911
    %2931 = vmatpush.msra.mxu0 %v2910
    %2932 = vmatpush.msra.mxu0 %v2909
    %2933 = vmatpush.msra.mxu0 %v2908
    %2934 = vmatpush.msra.mxu0 %v2907
    %2935 = vmatpush.msra.mxu0 %v2906
    %2936 = vmatpush.msra.mxu0 %v2905
    %2937 = vmatmul.f32.gmra.mxu0 %v2902
    %v2938 = vpop.f32.mrf.mxu0
    %v2939 = vadd.f32 0.0, %v2938
    %2940 = vdwg.mxu0
    %v2941 = vadd.f32 %v2854, %v2939
    %s2942 = scalar_lea.vmem [#allocation11], 56
    %v2943 = vld [vmem:[%s2942] sm:$0xff]
    %2945 = vst [vmem:[#allocation1] ss:$2 sm:$0xff] %v2943
    %v2946 = vld.sshfl [vmem:[#allocation1] sm:$0xff pattern:$0x75316420]
    %v2947 = vld.sshfl [vmem:[#allocation1 + $0x8] sm:$0xff pattern:$0x75316420]
    %v2949 = vsel %vm2339, %v2947, 0
    %2951 = vmatpush.msra.mxu0 %v2323
    %2952 = vmatpush.msra.mxu0 %v2322
    %2953 = vmatpush.msra.mxu0 %v2321
    %2954 = vmatpush.msra.mxu0 %v2320
    %2955 = vmatpush.msra.mxu0 %v2319
    %2956 = vmatpush.msra.mxu0 %v2318
    %2957 = vmatpush.msra.mxu0 %v2317
    %2958 = vmatpush.msra.mxu0 %v2316
    %2959 = vmatpush.msra.mxu0 %v2315
    %2960 = vmatpush.msra.mxu0 %v2314
    %2961 = vmatpush.msra.mxu0 %v2313
    %2962 = vmatpush.msra.mxu0 %v2312
    %2963 = vmatpush.msra.mxu0 %v2311
    %2964 = vmatpush.msra.mxu0 %v2310
    %2965 = vmatpush.msra.mxu0 %v2309
    %2966 = vmatpush.msra.mxu0 %v2308
    %2967 = vmatmul.f32.gmra.mxu0 %v2946
    %v2968 = vpop.f32.mrf.mxu0
    %v2969 = vadd.f32 0.0, %v2968
    %2970 = vdwg.mxu0
    %2971 = vmatpush.msra.mxu0 0.0
    %2972 = vmatpush.msra.mxu0 0.0
    %2973 = vmatpush.msra.mxu0 0.0
    %2974 = vmatpush.msra.mxu0 0.0
    %2975 = vmatpush.msra.mxu0 0.0
    %2976 = vmatpush.msra.mxu0 0.0
    %2977 = vmatpush.msra.mxu0 0.0
    %2978 = vmatpush.msra.mxu0 %v2343
    %2979 = vmatpush.msra.mxu0 %v2331
    %2980 = vmatpush.msra.mxu0 %v2330
    %2981 = vmatpush.msra.mxu0 %v2329
    %2982 = vmatpush.msra.mxu0 %v2328
    %2983 = vmatpush.msra.mxu0 %v2327
    %2984 = vmatpush.msra.mxu0 %v2326
    %2985 = vmatpush.msra.mxu0 %v2325
    %2986 = vmatpush.msra.mxu0 %v2324
    %2987 = vmatmul.f32.gmra.mxu0 %v2949
    %v2988 = vpop.f32.mrf.mxu0
    %v2989 = vadd.f32 %v2969, %v2988
    %2990 = vdwg.mxu0
    %s2991 = scalar_lea.vmem [#allocation13], 896
    %v2992 = vld [vmem:[%s2991] sm:$0xff]
    %v2993 = vld [vmem:[%s2991 + $0x8] sm:$0xff]
    %v2994 = vld [vmem:[%s2991 + $0x10] sm:$0xff]
    %v2995 = vld [vmem:[%s2991 + $0x18] sm:$0xff]
    %v2996 = vld [vmem:[%s2991 + $0x20] sm:$0xff]
    %v2997 = vld [vmem:[%s2991 + $0x28] sm:$0xff]
    %v2998 = vld [vmem:[%s2991 + $0x30] sm:$0xff]
    %v2999 = vld [vmem:[%s2991 + $0x38] sm:$0xff]
    %v3000 = vld [vmem:[%s2991 + $0x40] sm:$0xff]
    %v3001 = vld [vmem:[%s2991 + $0x48] sm:$0xff]
    %v3002 = vld [vmem:[%s2991 + $0x50] sm:$0xff]
    %v3003 = vld [vmem:[%s2991 + $0x58] sm:$0xff]
    %v3004 = vld [vmem:[%s2991 + $0x60] sm:$0xff]
    %v3005 = vld [vmem:[%s2991 + $0x68] sm:$0xff]
    %v3006 = vld [vmem:[%s2991 + $0x70] sm:$0xff]
    %v3007 = vld [vmem:[%s2991 + $0x78] sm:$0xff]
    %3008 = vmatpush.msra.mxu0 %v3007
    %3009 = vmatpush.msra.mxu0 %v3006
    %3010 = vmatpush.msra.mxu0 %v3005
    %3011 = vmatpush.msra.mxu0 %v3004
    %3012 = vmatpush.msra.mxu0 %v3003
    %3013 = vmatpush.msra.mxu0 %v3002
    %3014 = vmatpush.msra.mxu0 %v3001
    %3015 = vmatpush.msra.mxu0 %v3000
    %3016 = vmatpush.msra.mxu0 %v2999
    %3017 = vmatpush.msra.mxu0 %v2998
    %3018 = vmatpush.msra.mxu0 %v2997
    %3019 = vmatpush.msra.mxu0 %v2996
    %3020 = vmatpush.msra.mxu0 %v2995
    %3021 = vmatpush.msra.mxu0 %v2994
    %3022 = vmatpush.msra.mxu0 %v2993
    %3023 = vmatpush.msra.mxu0 %v2992
    %3024 = vmatmul.f32.gmra.mxu0 %v2989
    %v3025 = vpop.f32.mrf.mxu0
    %v3026 = vadd.f32 0.0, %v3025
    %3027 = vdwg.mxu0
    %v3028 = vadd.f32 %v2941, %v3026
    %s3029 = scalar_lea.vmem [#allocation11], 64
    %v3030 = vld [vmem:[%s3029] sm:$0xff]
    %3032 = vst [vmem:[#allocation1] ss:$2 sm:$0xff] %v3030
    %v3033 = vld.sshfl [vmem:[#allocation1] sm:$0xff pattern:$0x75316420]
    %v3034 = vld.sshfl [vmem:[#allocation1 + $0x8] sm:$0xff pattern:$0x75316420]
    %v3036 = vsel %vm2339, %v3034, 0
    %3038 = vmatpush.msra.mxu0 %v2323
    %3039 = vmatpush.msra.mxu0 %v2322
    %3040 = vmatpush.msra.mxu0 %v2321
    %3041 = vmatpush.msra.mxu0 %v2320
    %3042 = vmatpush.msra.mxu0 %v2319
    %3043 = vmatpush.msra.mxu0 %v2318
    %3044 = vmatpush.msra.mxu0 %v2317
    %3045 = vmatpush.msra.mxu0 %v2316
    %3046 = vmatpush.msra.mxu0 %v2315
    %3047 = vmatpush.msra.mxu0 %v2314
    %3048 = vmatpush.msra.mxu0 %v2313
    %3049 = vmatpush.msra.mxu0 %v2312
    %3050 = vmatpush.msra.mxu0 %v2311
    %3051 = vmatpush.msra.mxu0 %v2310
    %3052 = vmatpush.msra.mxu0 %v2309
    %3053 = vmatpush.msra.mxu0 %v2308
    %3054 = vmatmul.f32.gmra.mxu0 %v3033
    %v3055 = vpop.f32.mrf.mxu0
    %v3056 = vadd.f32 0.0, %v3055
    %3057 = vdwg.mxu0
    %3058 = vmatpush.msra.mxu0 0.0
    %3059 = vmatpush.msra.mxu0 0.0
    %3060 = vmatpush.msra.mxu0 0.0
    %3061 = vmatpush.msra.mxu0 0.0
    %3062 = vmatpush.msra.mxu0 0.0
    %3063 = vmatpush.msra.mxu0 0.0
    %3064 = vmatpush.msra.mxu0 0.0
    %3065 = vmatpush.msra.mxu0 %v2343
    %3066 = vmatpush.msra.mxu0 %v2331
    %3067 = vmatpush.msra.mxu0 %v2330
    %3068 = vmatpush.msra.mxu0 %v2329
    %3069 = vmatpush.msra.mxu0 %v2328
    %3070 = vmatpush.msra.mxu0 %v2327
    %3071 = vmatpush.msra.mxu0 %v2326
    %3072 = vmatpush.msra.mxu0 %v2325
    %3073 = vmatpush.msra.mxu0 %v2324
    %3074 = vmatmul.f32.gmra.mxu0 %v3036
    %v3075 = vpop.f32.mrf.mxu0
    %v3076 = vadd.f32 %v3056, %v3075
    %3077 = vdwg.mxu0
    %s3078 = scalar_lea.vmem [#allocation13], 1024
    %v3079 = vld [vmem:[%s3078] sm:$0xff]
    %v3080 = vld [vmem:[%s3078 + $0x8] sm:$0xff]
    %v3081 = vld [vmem:[%s3078 + $0x10] sm:$0xff]
    %v3082 = vld [vmem:[%s3078 + $0x18] sm:$0xff]
    %v3083 = vld [vmem:[%s3078 + $0x20] sm:$0xff]
    %v3084 = vld [vmem:[%s3078 + $0x28] sm:$0xff]
    %v3085 = vld [vmem:[%s3078 + $0x30] sm:$0xff]
    %v3086 = vld [vmem:[%s3078 + $0x38] sm:$0xff]
    %v3087 = vld [vmem:[%s3078 + $0x40] sm:$0xff]
    %v3088 = vld [vmem:[%s3078 + $0x48] sm:$0xff]
    %v3089 = vld [vmem:[%s3078 + $0x50] sm:$0xff]
    %v3090 = vld [vmem:[%s3078 + $0x58] sm:$0xff]
    %v3091 = vld [vmem:[%s3078 + $0x60] sm:$0xff]
    %v3092 = vld [vmem:[%s3078 + $0x68] sm:$0xff]
    %v3093 = vld [vmem:[%s3078 + $0x70] sm:$0xff]
    %v3094 = vld [vmem:[%s3078 + $0x78] sm:$0xff]
    %3095 = vmatpush.msra.mxu0 %v3094
    %3096 = vmatpush.msra.mxu0 %v3093
    %3097 = vmatpush.msra.mxu0 %v3092
    %3098 = vmatpush.msra.mxu0 %v3091
    %3099 = vmatpush.msra.mxu0 %v3090
    %3100 = vmatpush.msra.mxu0 %v3089
    %3101 = vmatpush.msra.mxu0 %v3088
    %3102 = vmatpush.msra.mxu0 %v3087
    %3103 = vmatpush.msra.mxu0 %v3086
    %3104 = vmatpush.msra.mxu0 %v3085
    %3105 = vmatpush.msra.mxu0 %v3084
    %3106 = vmatpush.msra.mxu0 %v3083
    %3107 = vmatpush.msra.mxu0 %v3082
    %3108 = vmatpush.msra.mxu0 %v3081
    %3109 = vmatpush.msra.mxu0 %v3080
    %3110 = vmatpush.msra.mxu0 %v3079
    %3111 = vmatmul.f32.gmra.mxu0 %v3076
    %v3112 = vpop.f32.mrf.mxu0
    %v3113 = vadd.f32 0.0, %v3112
    %3114 = vdwg.mxu0
    %v3115 = vadd.f32 %v3028, %v3113
    %s3116 = scalar_lea.vmem [#allocation11], 72
    %v3117 = vld [vmem:[%s3116] sm:$0xff]
    %3119 = vst [vmem:[#allocation1] ss:$2 sm:$0xff] %v3117
    %v3120 = vld.sshfl [vmem:[#allocation1] sm:$0xff pattern:$0x75316420]
    %v3121 = vld.sshfl [vmem:[#allocation1 + $0x8] sm:$0xff pattern:$0x75316420]
    %v3123 = vsel %vm2339, %v3121, 0
    %3125 = vmatpush.msra.mxu0 %v2323
    %3126 = vmatpush.msra.mxu0 %v2322
    %3127 = vmatpush.msra.mxu0 %v2321
    %3128 = vmatpush.msra.mxu0 %v2320
    %3129 = vmatpush.msra.mxu0 %v2319
    %3130 = vmatpush.msra.mxu0 %v2318
    %3131 = vmatpush.msra.mxu0 %v2317
    %3132 = vmatpush.msra.mxu0 %v2316
    %3133 = vmatpush.msra.mxu0 %v2315
    %3134 = vmatpush.msra.mxu0 %v2314
    %3135 = vmatpush.msra.mxu0 %v2313
    %3136 = vmatpush.msra.mxu0 %v2312
    %3137 = vmatpush.msra.mxu0 %v2311
    %3138 = vmatpush.msra.mxu0 %v2310
    %3139 = vmatpush.msra.mxu0 %v2309
    %3140 = vmatpush.msra.mxu0 %v2308
    %3141 = vmatmul.f32.gmra.mxu0 %v3120
    %v3142 = vpop.f32.mrf.mxu0
    %v3143 = vadd.f32 0.0, %v3142
    %3144 = vdwg.mxu0
    %3145 = vmatpush.msra.mxu0 0.0
    %3146 = vmatpush.msra.mxu0 0.0
    %3147 = vmatpush.msra.mxu0 0.0
    %3148 = vmatpush.msra.mxu0 0.0
    %3149 = vmatpush.msra.mxu0 0.0
    %3150 = vmatpush.msra.mxu0 0.0
    %3151 = vmatpush.msra.mxu0 0.0
    %3152 = vmatpush.msra.mxu0 %v2343
    %3153 = vmatpush.msra.mxu0 %v2331
    %3154 = vmatpush.msra.mxu0 %v2330
    %3155 = vmatpush.msra.mxu0 %v2329
    %3156 = vmatpush.msra.mxu0 %v2328
    %3157 = vmatpush.msra.mxu0 %v2327
    %3158 = vmatpush.msra.mxu0 %v2326
    %3159 = vmatpush.msra.mxu0 %v2325
    %3160 = vmatpush.msra.mxu0 %v2324
    %3161 = vmatmul.f32.gmra.mxu0 %v3123
    %v3162 = vpop.f32.mrf.mxu0
    %v3163 = vadd.f32 %v3143, %v3162
    %3164 = vdwg.mxu0
    %s3165 = scalar_lea.vmem [#allocation13], 1152
    %v3166 = vld [vmem:[%s3165] sm:$0xff]
    %v3167 = vld [vmem:[%s3165 + $0x8] sm:$0xff]
    %v3168 = vld [vmem:[%s3165 + $0x10] sm:$0xff]
    %v3169 = vld [vmem:[%s3165 + $0x18] sm:$0xff]
    %v3170 = vld [vmem:[%s3165 + $0x20] sm:$0xff]
    %v3171 = vld [vmem:[%s3165 + $0x28] sm:$0xff]
    %v3172 = vld [vmem:[%s3165 + $0x30] sm:$0xff]
    %v3173 = vld [vmem:[%s3165 + $0x38] sm:$0xff]
    %v3174 = vld [vmem:[%s3165 + $0x40] sm:$0xff]
    %v3175 = vld [vmem:[%s3165 + $0x48] sm:$0xff]
    %v3176 = vld [vmem:[%s3165 + $0x50] sm:$0xff]
    %v3177 = vld [vmem:[%s3165 + $0x58] sm:$0xff]
    %v3178 = vld [vmem:[%s3165 + $0x60] sm:$0xff]
    %v3179 = vld [vmem:[%s3165 + $0x68] sm:$0xff]
    %v3180 = vld [vmem:[%s3165 + $0x70] sm:$0xff]
    %v3181 = vld [vmem:[%s3165 + $0x78] sm:$0xff]
    %3182 = vmatpush.msra.mxu0 %v3181
    %3183 = vmatpush.msra.mxu0 %v3180
    %3184 = vmatpush.msra.mxu0 %v3179
    %3185 = vmatpush.msra.mxu0 %v3178
    %3186 = vmatpush.msra.mxu0 %v3177
    %3187 = vmatpush.msra.mxu0 %v3176
    %3188 = vmatpush.msra.mxu0 %v3175
    %3189 = vmatpush.msra.mxu0 %v3174
    %3190 = vmatpush.msra.mxu0 %v3173
    %3191 = vmatpush.msra.mxu0 %v3172
    %3192 = vmatpush.msra.mxu0 %v3171
    %3193 = vmatpush.msra.mxu0 %v3170
    %3194 = vmatpush.msra.mxu0 %v3169
    %3195 = vmatpush.msra.mxu0 %v3168
    %3196 = vmatpush.msra.mxu0 %v3167
    %3197 = vmatpush.msra.mxu0 %v3166
    %3198 = vmatmul.f32.gmra.mxu0 %v3163
    %v3199 = vpop.f32.mrf.mxu0
    %v3200 = vadd.f32 0.0, %v3199
    %3201 = vdwg.mxu0
    %v3202 = vadd.f32 %v3115, %v3200
    %s3203 = scalar_lea.vmem [#allocation11], 80
    %v3204 = vld [vmem:[%s3203] sm:$0xff]
    %3206 = vst [vmem:[#allocation1] ss:$2 sm:$0xff] %v3204
    %v3207 = vld.sshfl [vmem:[#allocation1] sm:$0xff pattern:$0x75316420]
    %v3208 = vld.sshfl [vmem:[#allocation1 + $0x8] sm:$0xff pattern:$0x75316420]
    %v3210 = vsel %vm2339, %v3208, 0
    %3212 = vmatpush.msra.mxu0 %v2323
    %3213 = vmatpush.msra.mxu0 %v2322
    %3214 = vmatpush.msra.mxu0 %v2321
    %3215 = vmatpush.msra.mxu0 %v2320
    %3216 = vmatpush.msra.mxu0 %v2319
    %3217 = vmatpush.msra.mxu0 %v2318
    %3218 = vmatpush.msra.mxu0 %v2317
    %3219 = vmatpush.msra.mxu0 %v2316
    %3220 = vmatpush.msra.mxu0 %v2315
    %3221 = vmatpush.msra.mxu0 %v2314
    %3222 = vmatpush.msra.mxu0 %v2313
    %3223 = vmatpush.msra.mxu0 %v2312
    %3224 = vmatpush.msra.mxu0 %v2311
    %3225 = vmatpush.msra.mxu0 %v2310
    %3226 = vmatpush.msra.mxu0 %v2309
    %3227 = vmatpush.msra.mxu0 %v2308
    %3228 = vmatmul.f32.gmra.mxu0 %v3207
    %v3229 = vpop.f32.mrf.mxu0
    %v3230 = vadd.f32 0.0, %v3229
    %3231 = vdwg.mxu0
    %3232 = vmatpush.msra.mxu0 0.0
    %3233 = vmatpush.msra.mxu0 0.0
    %3234 = vmatpush.msra.mxu0 0.0
    %3235 = vmatpush.msra.mxu0 0.0
    %3236 = vmatpush.msra.mxu0 0.0
    %3237 = vmatpush.msra.mxu0 0.0
    %3238 = vmatpush.msra.mxu0 0.0
    %3239 = vmatpush.msra.mxu0 %v2343
    %3240 = vmatpush.msra.mxu0 %v2331
    %3241 = vmatpush.msra.mxu0 %v2330
    %3242 = vmatpush.msra.mxu0 %v2329
    %3243 = vmatpush.msra.mxu0 %v2328
    %3244 = vmatpush.msra.mxu0 %v2327
    %3245 = vmatpush.msra.mxu0 %v2326
    %3246 = vmatpush.msra.mxu0 %v2325
    %3247 = vmatpush.msra.mxu0 %v2324
    %3248 = vmatmul.f32.gmra.mxu0 %v3210
    %v3249 = vpop.f32.mrf.mxu0
    %v3250 = vadd.f32 %v3230, %v3249
    %3251 = vdwg.mxu0
    %s3252 = scalar_lea.vmem [#allocation13], 1280
    %v3253 = vld [vmem:[%s3252] sm:$0xff]
    %v3254 = vld [vmem:[%s3252 + $0x8] sm:$0xff]
    %v3255 = vld [vmem:[%s3252 + $0x10] sm:$0xff]
    %v3256 = vld [vmem:[%s3252 + $0x18] sm:$0xff]
    %v3257 = vld [vmem:[%s3252 + $0x20] sm:$0xff]
    %v3258 = vld [vmem:[%s3252 + $0x28] sm:$0xff]
    %v3259 = vld [vmem:[%s3252 + $0x30] sm:$0xff]
    %v3260 = vld [vmem:[%s3252 + $0x38] sm:$0xff]
    %v3261 = vld [vmem:[%s3252 + $0x40] sm:$0xff]
    %v3262 = vld [vmem:[%s3252 + $0x48] sm:$0xff]
    %v3263 = vld [vmem:[%s3252 + $0x50] sm:$0xff]
    %v3264 = vld [vmem:[%s3252 + $0x58] sm:$0xff]
    %v3265 = vld [vmem:[%s3252 + $0x60] sm:$0xff]
    %v3266 = vld [vmem:[%s3252 + $0x68] sm:$0xff]
    %v3267 = vld [vmem:[%s3252 + $0x70] sm:$0xff]
    %v3268 = vld [vmem:[%s3252 + $0x78] sm:$0xff]
    %3269 = vmatpush.msra.mxu0 %v3268
    %3270 = vmatpush.msra.mxu0 %v3267
    %3271 = vmatpush.msra.mxu0 %v3266
    %3272 = vmatpush.msra.mxu0 %v3265
    %3273 = vmatpush.msra.mxu0 %v3264
    %3274 = vmatpush.msra.mxu0 %v3263
    %3275 = vmatpush.msra.mxu0 %v3262
    %3276 = vmatpush.msra.mxu0 %v3261
    %3277 = vmatpush.msra.mxu0 %v3260
    %3278 = vmatpush.msra.mxu0 %v3259
    %3279 = vmatpush.msra.mxu0 %v3258
    %3280 = vmatpush.msra.mxu0 %v3257
    %3281 = vmatpush.msra.mxu0 %v3256
    %3282 = vmatpush.msra.mxu0 %v3255
    %3283 = vmatpush.msra.mxu0 %v3254
    %3284 = vmatpush.msra.mxu0 %v3253
    %3285 = vmatmul.f32.gmra.mxu0 %v3250
    %v3286 = vpop.f32.mrf.mxu0
    %v3287 = vadd.f32 0.0, %v3286
    %3288 = vdwg.mxu0
    %v3289 = vadd.f32 %v3202, %v3287
    %s3290 = scalar_lea.vmem [#allocation11], 88
    %v3291 = vld [vmem:[%s3290] sm:$0xff]
    %3293 = vst [vmem:[#allocation1] ss:$2 sm:$0xff] %v3291
    %v3294 = vld.sshfl [vmem:[#allocation1] sm:$0xff pattern:$0x75316420]
    %v3295 = vld.sshfl [vmem:[#allocation1 + $0x8] sm:$0xff pattern:$0x75316420]
    %v3297 = vsel %vm2339, %v3295, 0
    %3299 = vmatpush.msra.mxu0 %v2323
    %3300 = vmatpush.msra.mxu0 %v2322
    %3301 = vmatpush.msra.mxu0 %v2321
    %3302 = vmatpush.msra.mxu0 %v2320
    %3303 = vmatpush.msra.mxu0 %v2319
    %3304 = vmatpush.msra.mxu0 %v2318
    %3305 = vmatpush.msra.mxu0 %v2317
    %3306 = vmatpush.msra.mxu0 %v2316
    %3307 = vmatpush.msra.mxu0 %v2315
    %3308 = vmatpush.msra.mxu0 %v2314
    %3309 = vmatpush.msra.mxu0 %v2313
    %3310 = vmatpush.msra.mxu0 %v2312
    %3311 = vmatpush.msra.mxu0 %v2311
    %3312 = vmatpush.msra.mxu0 %v2310
    %3313 = vmatpush.msra.mxu0 %v2309
    %3314 = vmatpush.msra.mxu0 %v2308
    %3315 = vmatmul.f32.gmra.mxu0 %v3294
    %v3316 = vpop.f32.mrf.mxu0
    %v3317 = vadd.f32 0.0, %v3316
    %3318 = vdwg.mxu0
    %3319 = vmatpush.msra.mxu0 0.0
    %3320 = vmatpush.msra.mxu0 0.0
    %3321 = vmatpush.msra.mxu0 0.0
    %3322 = vmatpush.msra.mxu0 0.0
    %3323 = vmatpush.msra.mxu0 0.0
    %3324 = vmatpush.msra.mxu0 0.0
    %3325 = vmatpush.msra.mxu0 0.0
    %3326 = vmatpush.msra.mxu0 %v2343
    %3327 = vmatpush.msra.mxu0 %v2331
    %3328 = vmatpush.msra.mxu0 %v2330
    %3329 = vmatpush.msra.mxu0 %v2329
    %3330 = vmatpush.msra.mxu0 %v2328
    %3331 = vmatpush.msra.mxu0 %v2327
    %3332 = vmatpush.msra.mxu0 %v2326
    %3333 = vmatpush.msra.mxu0 %v2325
    %3334 = vmatpush.msra.mxu0 %v2324
    %3335 = vmatmul.f32.gmra.mxu0 %v3297
    %v3336 = vpop.f32.mrf.mxu0
    %v3337 = vadd.f32 %v3317, %v3336
    %3338 = vdwg.mxu0
    %s3339 = scalar_lea.vmem [#allocation13], 1408
    %v3340 = vld [vmem:[%s3339] sm:$0xff]
    %v3341 = vld [vmem:[%s3339 + $0x8] sm:$0xff]
    %v3342 = vld [vmem:[%s3339 + $0x10] sm:$0xff]
    %v3343 = vld [vmem:[%s3339 + $0x18] sm:$0xff]
    %v3344 = vld [vmem:[%s3339 + $0x20] sm:$0xff]
    %v3345 = vld [vmem:[%s3339 + $0x28] sm:$0xff]
    %v3346 = vld [vmem:[%s3339 + $0x30] sm:$0xff]
    %v3347 = vld [vmem:[%s3339 + $0x38] sm:$0xff]
    %v3348 = vld [vmem:[%s3339 + $0x40] sm:$0xff]
    %v3349 = vld [vmem:[%s3339 + $0x48] sm:$0xff]
    %v3350 = vld [vmem:[%s3339 + $0x50] sm:$0xff]
    %v3351 = vld [vmem:[%s3339 + $0x58] sm:$0xff]
    %v3352 = vld [vmem:[%s3339 + $0x60] sm:$0xff]
    %v3353 = vld [vmem:[%s3339 + $0x68] sm:$0xff]
    %v3354 = vld [vmem:[%s3339 + $0x70] sm:$0xff]
    %v3355 = vld [vmem:[%s3339 + $0x78] sm:$0xff]
    %3356 = vmatpush.msra.mxu0 %v3355
    %3357 = vmatpush.msra.mxu0 %v3354
    %3358 = vmatpush.msra.mxu0 %v3353
    %3359 = vmatpush.msra.mxu0 %v3352
    %3360 = vmatpush.msra.mxu0 %v3351
    %3361 = vmatpush.msra.mxu0 %v3350
    %3362 = vmatpush.msra.mxu0 %v3349
    %3363 = vmatpush.msra.mxu0 %v3348
    %3364 = vmatpush.msra.mxu0 %v3347
    %3365 = vmatpush.msra.mxu0 %v3346
    %3366 = vmatpush.msra.mxu0 %v3345
    %3367 = vmatpush.msra.mxu0 %v3344
    %3368 = vmatpush.msra.mxu0 %v3343
    %3369 = vmatpush.msra.mxu0 %v3342
    %3370 = vmatpush.msra.mxu0 %v3341
    %3371 = vmatpush.msra.mxu0 %v3340
    %3372 = vmatmul.f32.gmra.mxu0 %v3337
    %v3373 = vpop.f32.mrf.mxu0
    %v3374 = vadd.f32 0.0, %v3373
    %3375 = vdwg.mxu0
    %v3376 = vadd.f32 %v3289, %v3374
    %s3377 = scalar_lea.vmem [#allocation11], 96
    %v3378 = vld [vmem:[%s3377] sm:$0xff]
    %3380 = vst [vmem:[#allocation1] ss:$2 sm:$0xff] %v3378
    %v3381 = vld.sshfl [vmem:[#allocation1] sm:$0xff pattern:$0x75316420]
    %v3382 = vld.sshfl [vmem:[#allocation1 + $0x8] sm:$0xff pattern:$0x75316420]
    %v3384 = vsel %vm2339, %v3382, 0
    %3386 = vmatpush.msra.mxu0 %v2323
    %3387 = vmatpush.msra.mxu0 %v2322
    %3388 = vmatpush.msra.mxu0 %v2321
    %3389 = vmatpush.msra.mxu0 %v2320
    %3390 = vmatpush.msra.mxu0 %v2319
    %3391 = vmatpush.msra.mxu0 %v2318
    %3392 = vmatpush.msra.mxu0 %v2317
    %3393 = vmatpush.msra.mxu0 %v2316
    %3394 = vmatpush.msra.mxu0 %v2315
    %3395 = vmatpush.msra.mxu0 %v2314
    %3396 = vmatpush.msra.mxu0 %v2313
    %3397 = vmatpush.msra.mxu0 %v2312
    %3398 = vmatpush.msra.mxu0 %v2311
    %3399 = vmatpush.msra.mxu0 %v2310
    %3400 = vmatpush.msra.mxu0 %v2309
    %3401 = vmatpush.msra.mxu0 %v2308
    %3402 = vmatmul.f32.gmra.mxu0 %v3381
    %v3403 = vpop.f32.mrf.mxu0
    %v3404 = vadd.f32 0.0, %v3403
    %3405 = vdwg.mxu0
    %3406 = vmatpush.msra.mxu0 0.0
    %3407 = vmatpush.msra.mxu0 0.0
    %3408 = vmatpush.msra.mxu0 0.0
    %3409 = vmatpush.msra.mxu0 0.0
    %3410 = vmatpush.msra.mxu0 0.0
    %3411 = vmatpush.msra.mxu0 0.0
    %3412 = vmatpush.msra.mxu0 0.0
    %3413 = vmatpush.msra.mxu0 %v2343
    %3414 = vmatpush.msra.mxu0 %v2331
    %3415 = vmatpush.msra.mxu0 %v2330
    %3416 = vmatpush.msra.mxu0 %v2329
    %3417 = vmatpush.msra.mxu0 %v2328
    %3418 = vmatpush.msra.mxu0 %v2327
    %3419 = vmatpush.msra.mxu0 %v2326
    %3420 = vmatpush.msra.mxu0 %v2325
    %3421 = vmatpush.msra.mxu0 %v2324
    %3422 = vmatmul.f32.gmra.mxu0 %v3384
    %v3423 = vpop.f32.mrf.mxu0
    %v3424 = vadd.f32 %v3404, %v3423
    %3425 = vdwg.mxu0
    %s3426 = scalar_lea.vmem [#allocation13], 1536
    %v3427 = vld [vmem:[%s3426] sm:$0xff]
    %v3428 = vld [vmem:[%s3426 + $0x8] sm:$0xff]
    %v3429 = vld [vmem:[%s3426 + $0x10] sm:$0xff]
    %v3430 = vld [vmem:[%s3426 + $0x18] sm:$0xff]
    %v3431 = vld [vmem:[%s3426 + $0x20] sm:$0xff]
    %v3432 = vld [vmem:[%s3426 + $0x28] sm:$0xff]
    %v3433 = vld [vmem:[%s3426 + $0x30] sm:$0xff]
    %v3434 = vld [vmem:[%s3426 + $0x38] sm:$0xff]
    %v3435 = vld [vmem:[%s3426 + $0x40] sm:$0xff]
    %v3436 = vld [vmem:[%s3426 + $0x48] sm:$0xff]
    %v3437 = vld [vmem:[%s3426 + $0x50] sm:$0xff]
    %v3438 = vld [vmem:[%s3426 + $0x58] sm:$0xff]
    %v3439 = vld [vmem:[%s3426 + $0x60] sm:$0xff]
    %v3440 = vld [vmem:[%s3426 + $0x68] sm:$0xff]
    %v3441 = vld [vmem:[%s3426 + $0x70] sm:$0xff]
    %v3442 = vld [vmem:[%s3426 + $0x78] sm:$0xff]
    %3443 = vmatpush.msra.mxu0 %v3442
    %3444 = vmatpush.msra.mxu0 %v3441
    %3445 = vmatpush.msra.mxu0 %v3440
    %3446 = vmatpush.msra.mxu0 %v3439
    %3447 = vmatpush.msra.mxu0 %v3438
    %3448 = vmatpush.msra.mxu0 %v3437
    %3449 = vmatpush.msra.mxu0 %v3436
    %3450 = vmatpush.msra.mxu0 %v3435
    %3451 = vmatpush.msra.mxu0 %v3434
    %3452 = vmatpush.msra.mxu0 %v3433
    %3453 = vmatpush.msra.mxu0 %v3432
    %3454 = vmatpush.msra.mxu0 %v3431
    %3455 = vmatpush.msra.mxu0 %v3430
    %3456 = vmatpush.msra.mxu0 %v3429
    %3457 = vmatpush.msra.mxu0 %v3428
    %3458 = vmatpush.msra.mxu0 %v3427
    %3459 = vmatmul.f32.gmra.mxu0 %v3424
    %v3460 = vpop.f32.mrf.mxu0
    %v3461 = vadd.f32 0.0, %v3460
    %3462 = vdwg.mxu0
    %v3463 = vadd.f32 %v3376, %v3461
    %s3464 = scalar_lea.vmem [#allocation11], 104
    %v3465 = vld [vmem:[%s3464] sm:$0xff]
    %3467 = vst [vmem:[#allocation1] ss:$2 sm:$0xff] %v3465
    %v3468 = vld.sshfl [vmem:[#allocation1] sm:$0xff pattern:$0x75316420]
    %v3469 = vld.sshfl [vmem:[#allocation1 + $0x8] sm:$0xff pattern:$0x75316420]
    %v3471 = vsel %vm2339, %v3469, 0
    %3473 = vmatpush.msra.mxu0 %v2323
    %3474 = vmatpush.msra.mxu0 %v2322
    %3475 = vmatpush.msra.mxu0 %v2321
    %3476 = vmatpush.msra.mxu0 %v2320
    %3477 = vmatpush.msra.mxu0 %v2319
    %3478 = vmatpush.msra.mxu0 %v2318
    %3479 = vmatpush.msra.mxu0 %v2317
    %3480 = vmatpush.msra.mxu0 %v2316
    %3481 = vmatpush.msra.mxu0 %v2315
    %3482 = vmatpush.msra.mxu0 %v2314
    %3483 = vmatpush.msra.mxu0 %v2313
    %3484 = vmatpush.msra.mxu0 %v2312
    %3485 = vmatpush.msra.mxu0 %v2311
    %3486 = vmatpush.msra.mxu0 %v2310
    %3487 = vmatpush.msra.mxu0 %v2309
    %3488 = vmatpush.msra.mxu0 %v2308
    %3489 = vmatmul.f32.gmra.mxu0 %v3468
    %v3490 = vpop.f32.mrf.mxu0
    %v3491 = vadd.f32 0.0, %v3490
    %3492 = vdwg.mxu0
    %3493 = vmatpush.msra.mxu0 0.0
    %3494 = vmatpush.msra.mxu0 0.0
    %3495 = vmatpush.msra.mxu0 0.0
    %3496 = vmatpush.msra.mxu0 0.0
    %3497 = vmatpush.msra.mxu0 0.0
    %3498 = vmatpush.msra.mxu0 0.0
    %3499 = vmatpush.msra.mxu0 0.0
    %3500 = vmatpush.msra.mxu0 %v2343
    %3501 = vmatpush.msra.mxu0 %v2331
    %3502 = vmatpush.msra.mxu0 %v2330
    %3503 = vmatpush.msra.mxu0 %v2329
    %3504 = vmatpush.msra.mxu0 %v2328
    %3505 = vmatpush.msra.mxu0 %v2327
    %3506 = vmatpush.msra.mxu0 %v2326
    %3507 = vmatpush.msra.mxu0 %v2325
    %3508 = vmatpush.msra.mxu0 %v2324
    %3509 = vmatmul.f32.gmra.mxu0 %v3471
    %v3510 = vpop.f32.mrf.mxu0
    %v3511 = vadd.f32 %v3491, %v3510
    %3512 = vdwg.mxu0
    %s3513 = scalar_lea.vmem [#allocation13], 1664
    %v3514 = vld [vmem:[%s3513] sm:$0xff]
    %v3515 = vld [vmem:[%s3513 + $0x8] sm:$0xff]
    %v3516 = vld [vmem:[%s3513 + $0x10] sm:$0xff]
    %v3517 = vld [vmem:[%s3513 + $0x18] sm:$0xff]
    %v3518 = vld [vmem:[%s3513 + $0x20] sm:$0xff]
    %v3519 = vld [vmem:[%s3513 + $0x28] sm:$0xff]
    %v3520 = vld [vmem:[%s3513 + $0x30] sm:$0xff]
    %v3521 = vld [vmem:[%s3513 + $0x38] sm:$0xff]
    %v3522 = vld [vmem:[%s3513 + $0x40] sm:$0xff]
    %v3523 = vld [vmem:[%s3513 + $0x48] sm:$0xff]
    %v3524 = vld [vmem:[%s3513 + $0x50] sm:$0xff]
    %v3525 = vld [vmem:[%s3513 + $0x58] sm:$0xff]
    %v3526 = vld [vmem:[%s3513 + $0x60] sm:$0xff]
    %v3527 = vld [vmem:[%s3513 + $0x68] sm:$0xff]
    %v3528 = vld [vmem:[%s3513 + $0x70] sm:$0xff]
    %v3529 = vld [vmem:[%s3513 + $0x78] sm:$0xff]
    %3530 = vmatpush.msra.mxu0 %v3529
    %3531 = vmatpush.msra.mxu0 %v3528
    %3532 = vmatpush.msra.mxu0 %v3527
    %3533 = vmatpush.msra.mxu0 %v3526
    %3534 = vmatpush.msra.mxu0 %v3525
    %3535 = vmatpush.msra.mxu0 %v3524
    %3536 = vmatpush.msra.mxu0 %v3523
    %3537 = vmatpush.msra.mxu0 %v3522
    %3538 = vmatpush.msra.mxu0 %v3521
    %3539 = vmatpush.msra.mxu0 %v3520
    %3540 = vmatpush.msra.mxu0 %v3519
    %3541 = vmatpush.msra.mxu0 %v3518
    %3542 = vmatpush.msra.mxu0 %v3517
    %3543 = vmatpush.msra.mxu0 %v3516
    %3544 = vmatpush.msra.mxu0 %v3515
    %3545 = vmatpush.msra.mxu0 %v3514
    %3546 = vmatmul.f32.gmra.mxu0 %v3511
    %v3547 = vpop.f32.mrf.mxu0
    %v3548 = vadd.f32 0.0, %v3547
    %3549 = vdwg.mxu0
    %v3550 = vadd.f32 %v3463, %v3548
    %s3551 = scalar_lea.vmem [#allocation11], 112
    %v3552 = vld [vmem:[%s3551] sm:$0xff]
    %3554 = vst [vmem:[#allocation1] ss:$2 sm:$0xff] %v3552
    %v3555 = vld.sshfl [vmem:[#allocation1] sm:$0xff pattern:$0x75316420]
    %v3556 = vld.sshfl [vmem:[#allocation1 + $0x8] sm:$0xff pattern:$0x75316420]
    %v3558 = vsel %vm2339, %v3556, 0
    %3560 = vmatpush.msra.mxu0 %v2323
    %3561 = vmatpush.msra.mxu0 %v2322
    %3562 = vmatpush.msra.mxu0 %v2321
    %3563 = vmatpush.msra.mxu0 %v2320
    %3564 = vmatpush.msra.mxu0 %v2319
    %3565 = vmatpush.msra.mxu0 %v2318
    %3566 = vmatpush.msra.mxu0 %v2317
    %3567 = vmatpush.msra.mxu0 %v2316
    %3568 = vmatpush.msra.mxu0 %v2315
    %3569 = vmatpush.msra.mxu0 %v2314
    %3570 = vmatpush.msra.mxu0 %v2313
    %3571 = vmatpush.msra.mxu0 %v2312
    %3572 = vmatpush.msra.mxu0 %v2311
    %3573 = vmatpush.msra.mxu0 %v2310
    %3574 = vmatpush.msra.mxu0 %v2309
    %3575 = vmatpush.msra.mxu0 %v2308
    %3576 = vmatmul.f32.gmra.mxu0 %v3555
    %v3577 = vpop.f32.mrf.mxu0
    %v3578 = vadd.f32 0.0, %v3577
    %3579 = vdwg.mxu0
    %3580 = vmatpush.msra.mxu0 0.0
    %3581 = vmatpush.msra.mxu0 0.0
    %3582 = vmatpush.msra.mxu0 0.0
    %3583 = vmatpush.msra.mxu0 0.0
    %3584 = vmatpush.msra.mxu0 0.0
    %3585 = vmatpush.msra.mxu0 0.0
    %3586 = vmatpush.msra.mxu0 0.0
    %3587 = vmatpush.msra.mxu0 %v2343
    %3588 = vmatpush.msra.mxu0 %v2331
    %3589 = vmatpush.msra.mxu0 %v2330
    %3590 = vmatpush.msra.mxu0 %v2329
    %3591 = vmatpush.msra.mxu0 %v2328
    %3592 = vmatpush.msra.mxu0 %v2327
    %3593 = vmatpush.msra.mxu0 %v2326
    %3594 = vmatpush.msra.mxu0 %v2325
    %3595 = vmatpush.msra.mxu0 %v2324
    %3596 = vmatmul.f32.gmra.mxu0 %v3558
    %v3597 = vpop.f32.mrf.mxu0
    %v3598 = vadd.f32 %v3578, %v3597
    %3599 = vdwg.mxu0
    %s3600 = scalar_lea.vmem [#allocation13], 1792
    %v3601 = vld [vmem:[%s3600] sm:$0xff]
    %v3602 = vld [vmem:[%s3600 + $0x8] sm:$0xff]
    %v3603 = vld [vmem:[%s3600 + $0x10] sm:$0xff]
    %v3604 = vld [vmem:[%s3600 + $0x18] sm:$0xff]
    %v3605 = vld [vmem:[%s3600 + $0x20] sm:$0xff]
    %v3606 = vld [vmem:[%s3600 + $0x28] sm:$0xff]
    %v3607 = vld [vmem:[%s3600 + $0x30] sm:$0xff]
    %v3608 = vld [vmem:[%s3600 + $0x38] sm:$0xff]
    %v3609 = vld [vmem:[%s3600 + $0x40] sm:$0xff]
    %v3610 = vld [vmem:[%s3600 + $0x48] sm:$0xff]
    %v3611 = vld [vmem:[%s3600 + $0x50] sm:$0xff]
    %v3612 = vld [vmem:[%s3600 + $0x58] sm:$0xff]
    %v3613 = vld [vmem:[%s3600 + $0x60] sm:$0xff]
    %v3614 = vld [vmem:[%s3600 + $0x68] sm:$0xff]
    %v3615 = vld [vmem:[%s3600 + $0x70] sm:$0xff]
    %v3616 = vld [vmem:[%s3600 + $0x78] sm:$0xff]
    %3617 = vmatpush.msra.mxu0 %v3616
    %3618 = vmatpush.msra.mxu0 %v3615
    %3619 = vmatpush.msra.mxu0 %v3614
    %3620 = vmatpush.msra.mxu0 %v3613
    %3621 = vmatpush.msra.mxu0 %v3612
    %3622 = vmatpush.msra.mxu0 %v3611
    %3623 = vmatpush.msra.mxu0 %v3610
    %3624 = vmatpush.msra.mxu0 %v3609
    %3625 = vmatpush.msra.mxu0 %v3608
    %3626 = vmatpush.msra.mxu0 %v3607
    %3627 = vmatpush.msra.mxu0 %v3606
    %3628 = vmatpush.msra.mxu0 %v3605
    %3629 = vmatpush.msra.mxu0 %v3604
    %3630 = vmatpush.msra.mxu0 %v3603
    %3631 = vmatpush.msra.mxu0 %v3602
    %3632 = vmatpush.msra.mxu0 %v3601
    %3633 = vmatmul.f32.gmra.mxu0 %v3598
    %v3634 = vpop.f32.mrf.mxu0
    %v3635 = vadd.f32 0.0, %v3634
    %3636 = vdwg.mxu0
    %v3637 = vadd.f32 %v3550, %v3635
    %s3638 = scalar_lea.vmem [#allocation11], 120
    %v3639 = vld [vmem:[%s3638] sm:$0xff]
    %3641 = vst [vmem:[#allocation1] ss:$2 sm:$0xff] %v3639
    %v3642 = vld.sshfl [vmem:[#allocation1] sm:$0xff pattern:$0x75316420]
    %v3643 = vld.sshfl [vmem:[#allocation1 + $0x8] sm:$0xff pattern:$0x75316420]
    %v3645 = vsel %vm2339, %v3643, 0
    %3647 = vmatpush.msra.mxu0 %v2323
    %3648 = vmatpush.msra.mxu0 %v2322
    %3649 = vmatpush.msra.mxu0 %v2321
    %3650 = vmatpush.msra.mxu0 %v2320
    %3651 = vmatpush.msra.mxu0 %v2319
    %3652 = vmatpush.msra.mxu0 %v2318
    %3653 = vmatpush.msra.mxu0 %v2317
    %3654 = vmatpush.msra.mxu0 %v2316
    %3655 = vmatpush.msra.mxu0 %v2315
    %3656 = vmatpush.msra.mxu0 %v2314
    %3657 = vmatpush.msra.mxu0 %v2313
    %3658 = vmatpush.msra.mxu0 %v2312
    %3659 = vmatpush.msra.mxu0 %v2311
    %3660 = vmatpush.msra.mxu0 %v2310
    %3661 = vmatpush.msra.mxu0 %v2309
    %3662 = vmatpush.msra.mxu0 %v2308
    %3663 = vmatmul.f32.gmra.mxu0 %v3642
    %v3664 = vpop.f32.mrf.mxu0
    %v3665 = vadd.f32 0.0, %v3664
    %3666 = vdwg.mxu0
    %3667 = vmatpush.msra.mxu0 0.0
    %3668 = vmatpush.msra.mxu0 0.0
    %3669 = vmatpush.msra.mxu0 0.0
    %3670 = vmatpush.msra.mxu0 0.0
    %3671 = vmatpush.msra.mxu0 0.0
    %3672 = vmatpush.msra.mxu0 0.0
    %3673 = vmatpush.msra.mxu0 0.0
    %3674 = vmatpush.msra.mxu0 %v2343
    %3675 = vmatpush.msra.mxu0 %v2331
    %3676 = vmatpush.msra.mxu0 %v2330
    %3677 = vmatpush.msra.mxu0 %v2329
    %3678 = vmatpush.msra.mxu0 %v2328
    %3679 = vmatpush.msra.mxu0 %v2327
    %3680 = vmatpush.msra.mxu0 %v2326
    %3681 = vmatpush.msra.mxu0 %v2325
    %3682 = vmatpush.msra.mxu0 %v2324
    %3683 = vmatmul.f32.gmra.mxu0 %v3645
    %v3684 = vpop.f32.mrf.mxu0
    %v3685 = vadd.f32 %v3665, %v3684
    %3686 = vdwg.mxu0
    %s3687 = scalar_lea.vmem [#allocation13], 1920
    %v3688 = vld [vmem:[%s3687] sm:$0xff]
    %v3689 = vld [vmem:[%s3687 + $0x8] sm:$0xff]
    %v3690 = vld [vmem:[%s3687 + $0x10] sm:$0xff]
    %v3691 = vld [vmem:[%s3687 + $0x18] sm:$0xff]
    %v3692 = vld [vmem:[%s3687 + $0x20] sm:$0xff]
    %v3693 = vld [vmem:[%s3687 + $0x28] sm:$0xff]
    %v3694 = vld [vmem:[%s3687 + $0x30] sm:$0xff]
    %v3695 = vld [vmem:[%s3687 + $0x38] sm:$0xff]
    %v3696 = vld [vmem:[%s3687 + $0x40] sm:$0xff]
    %v3697 = vld [vmem:[%s3687 + $0x48] sm:$0xff]
    %v3698 = vld [vmem:[%s3687 + $0x50] sm:$0xff]
    %v3699 = vld [vmem:[%s3687 + $0x58] sm:$0xff]
    %v3700 = vld [vmem:[%s3687 + $0x60] sm:$0xff]
    %v3701 = vld [vmem:[%s3687 + $0x68] sm:$0xff]
    %v3702 = vld [vmem:[%s3687 + $0x70] sm:$0xff]
    %v3703 = vld [vmem:[%s3687 + $0x78] sm:$0xff]
    %3704 = vmatpush.msra.mxu0 %v3703
    %3705 = vmatpush.msra.mxu0 %v3702
    %3706 = vmatpush.msra.mxu0 %v3701
    %3707 = vmatpush.msra.mxu0 %v3700
    %3708 = vmatpush.msra.mxu0 %v3699
    %3709 = vmatpush.msra.mxu0 %v3698
    %3710 = vmatpush.msra.mxu0 %v3697
    %3711 = vmatpush.msra.mxu0 %v3696
    %3712 = vmatpush.msra.mxu0 %v3695
    %3713 = vmatpush.msra.mxu0 %v3694
    %3714 = vmatpush.msra.mxu0 %v3693
    %3715 = vmatpush.msra.mxu0 %v3692
    %3716 = vmatpush.msra.mxu0 %v3691
    %3717 = vmatpush.msra.mxu0 %v3690
    %3718 = vmatpush.msra.mxu0 %v3689
    %3719 = vmatpush.msra.mxu0 %v3688
    %3720 = vmatmul.f32.gmra.mxu0 %v3685
    %v3721 = vpop.f32.mrf.mxu0
    %v3722 = vadd.f32 0.0, %v3721
    %3723 = vdwg.mxu0
    %v3724 = vadd.f32 %v3637, %v3722
    %s3725 = scalar_lea.vmem [#allocation11], 128
    %v3726 = vld [vmem:[%s3725] sm:$0xff]
    %3728 = vst [vmem:[#allocation1] ss:$2 sm:$0xff] %v3726
    %v3729 = vld.sshfl [vmem:[#allocation1] sm:$0xff pattern:$0x75316420]
    %v3730 = vld.sshfl [vmem:[#allocation1 + $0x8] sm:$0xff pattern:$0x75316420]
    %v3732 = vsel %vm2339, %v3730, 0
    %3734 = vmatpush.msra.mxu0 %v2323
    %3735 = vmatpush.msra.mxu0 %v2322
    %3736 = vmatpush.msra.mxu0 %v2321
    %3737 = vmatpush.msra.mxu0 %v2320
    %3738 = vmatpush.msra.mxu0 %v2319
    %3739 = vmatpush.msra.mxu0 %v2318
    %3740 = vmatpush.msra.mxu0 %v2317
    %3741 = vmatpush.msra.mxu0 %v2316
    %3742 = vmatpush.msra.mxu0 %v2315
    %3743 = vmatpush.msra.mxu0 %v2314
    %3744 = vmatpush.msra.mxu0 %v2313
    %3745 = vmatpush.msra.mxu0 %v2312
    %3746 = vmatpush.msra.mxu0 %v2311
    %3747 = vmatpush.msra.mxu0 %v2310
    %3748 = vmatpush.msra.mxu0 %v2309
    %3749 = vmatpush.msra.mxu0 %v2308
    %3750 = vmatmul.f32.gmra.mxu0 %v3729
    %v3751 = vpop.f32.mrf.mxu0
    %v3752 = vadd.f32 0.0, %v3751
    %3753 = vdwg.mxu0
    %3754 = vmatpush.msra.mxu0 0.0
    %3755 = vmatpush.msra.mxu0 0.0
    %3756 = vmatpush.msra.mxu0 0.0
    %3757 = vmatpush.msra.mxu0 0.0
    %3758 = vmatpush.msra.mxu0 0.0
    %3759 = vmatpush.msra.mxu0 0.0
    %3760 = vmatpush.msra.mxu0 0.0
    %3761 = vmatpush.msra.mxu0 %v2343
    %3762 = vmatpush.msra.mxu0 %v2331
    %3763 = vmatpush.msra.mxu0 %v2330
    %3764 = vmatpush.msra.mxu0 %v2329
    %3765 = vmatpush.msra.mxu0 %v2328
    %3766 = vmatpush.msra.mxu0 %v2327
    %3767 = vmatpush.msra.mxu0 %v2326
    %3768 = vmatpush.msra.mxu0 %v2325
    %3769 = vmatpush.msra.mxu0 %v2324
    %3770 = vmatmul.f32.gmra.mxu0 %v3732
    %v3771 = vpop.f32.mrf.mxu0
    %v3772 = vadd.f32 %v3752, %v3771
    %3773 = vdwg.mxu0
    %s3774 = scalar_lea.vmem [#allocation13], 2048
    %v3775 = vld [vmem:[%s3774] sm:$0xff]
    %v3776 = vld [vmem:[%s3774 + $0x8] sm:$0xff]
    %v3777 = vld [vmem:[%s3774 + $0x10] sm:$0xff]
    %v3778 = vld [vmem:[%s3774 + $0x18] sm:$0xff]
    %v3779 = vld [vmem:[%s3774 + $0x20] sm:$0xff]
    %v3780 = vld [vmem:[%s3774 + $0x28] sm:$0xff]
    %v3781 = vld [vmem:[%s3774 + $0x30] sm:$0xff]
    %v3782 = vld [vmem:[%s3774 + $0x38] sm:$0xff]
    %v3783 = vld [vmem:[%s3774 + $0x40] sm:$0xff]
    %v3784 = vld [vmem:[%s3774 + $0x48] sm:$0xff]
    %v3785 = vld [vmem:[%s3774 + $0x50] sm:$0xff]
    %v3786 = vld [vmem:[%s3774 + $0x58] sm:$0xff]
    %v3787 = vld [vmem:[%s3774 + $0x60] sm:$0xff]
    %v3788 = vld [vmem:[%s3774 + $0x68] sm:$0xff]
    %v3789 = vld [vmem:[%s3774 + $0x70] sm:$0xff]
    %v3790 = vld [vmem:[%s3774 + $0x78] sm:$0xff]
    %3791 = vmatpush.msra.mxu0 %v3790
    %3792 = vmatpush.msra.mxu0 %v3789
    %3793 = vmatpush.msra.mxu0 %v3788
    %3794 = vmatpush.msra.mxu0 %v3787
    %3795 = vmatpush.msra.mxu0 %v3786
    %3796 = vmatpush.msra.mxu0 %v3785
    %3797 = vmatpush.msra.mxu0 %v3784
    %3798 = vmatpush.msra.mxu0 %v3783
    %3799 = vmatpush.msra.mxu0 %v3782
    %3800 = vmatpush.msra.mxu0 %v3781
    %3801 = vmatpush.msra.mxu0 %v3780
    %3802 = vmatpush.msra.mxu0 %v3779
    %3803 = vmatpush.msra.mxu0 %v3778
    %3804 = vmatpush.msra.mxu0 %v3777
    %3805 = vmatpush.msra.mxu0 %v3776
    %3806 = vmatpush.msra.mxu0 %v3775
    %3807 = vmatmul.f32.gmra.mxu0 %v3772
    %v3808 = vpop.f32.mrf.mxu0
    %v3809 = vadd.f32 0.0, %v3808
    %3810 = vdwg.mxu0
    %v3811 = vadd.f32 %v3724, %v3809
    %s3812 = scalar_lea.vmem [#allocation11], 136
    %v3813 = vld [vmem:[%s3812] sm:$0xff]
    %3815 = vst [vmem:[#allocation1] ss:$2 sm:$0xff] %v3813
    %v3816 = vld.sshfl [vmem:[#allocation1] sm:$0xff pattern:$0x75316420]
    %v3817 = vld.sshfl [vmem:[#allocation1 + $0x8] sm:$0xff pattern:$0x75316420]
    %v3819 = vsel %vm2339, %v3817, 0
    %3821 = vmatpush.msra.mxu0 %v2323
    %3822 = vmatpush.msra.mxu0 %v2322
    %3823 = vmatpush.msra.mxu0 %v2321
    %3824 = vmatpush.msra.mxu0 %v2320
    %3825 = vmatpush.msra.mxu0 %v2319
    %3826 = vmatpush.msra.mxu0 %v2318
    %3827 = vmatpush.msra.mxu0 %v2317
    %3828 = vmatpush.msra.mxu0 %v2316
    %3829 = vmatpush.msra.mxu0 %v2315
    %3830 = vmatpush.msra.mxu0 %v2314
    %3831 = vmatpush.msra.mxu0 %v2313
    %3832 = vmatpush.msra.mxu0 %v2312
    %3833 = vmatpush.msra.mxu0 %v2311
    %3834 = vmatpush.msra.mxu0 %v2310
    %3835 = vmatpush.msra.mxu0 %v2309
    %3836 = vmatpush.msra.mxu0 %v2308
    %3837 = vmatmul.f32.gmra.mxu0 %v3816
    %v3838 = vpop.f32.mrf.mxu0
    %v3839 = vadd.f32 0.0, %v3838
    %3840 = vdwg.mxu0
    %3841 = vmatpush.msra.mxu0 0.0
    %3842 = vmatpush.msra.mxu0 0.0
    %3843 = vmatpush.msra.mxu0 0.0
    %3844 = vmatpush.msra.mxu0 0.0
    %3845 = vmatpush.msra.mxu0 0.0
    %3846 = vmatpush.msra.mxu0 0.0
    %3847 = vmatpush.msra.mxu0 0.0
    %3848 = vmatpush.msra.mxu0 %v2343
    %3849 = vmatpush.msra.mxu0 %v2331
    %3850 = vmatpush.msra.mxu0 %v2330
    %3851 = vmatpush.msra.mxu0 %v2329
    %3852 = vmatpush.msra.mxu0 %v2328
    %3853 = vmatpush.msra.mxu0 %v2327
    %3854 = vmatpush.msra.mxu0 %v2326
    %3855 = vmatpush.msra.mxu0 %v2325
    %3856 = vmatpush.msra.mxu0 %v2324
    %3857 = vmatmul.f32.gmra.mxu0 %v3819
    %v3858 = vpop.f32.mrf.mxu0
    %v3859 = vadd.f32 %v3839, %v3858
    %3860 = vdwg.mxu0
    %s3861 = scalar_lea.vmem [#allocation13], 2176
    %v3862 = vld [vmem:[%s3861] sm:$0xff]
    %v3863 = vld [vmem:[%s3861 + $0x8] sm:$0xff]
    %v3864 = vld [vmem:[%s3861 + $0x10] sm:$0xff]
    %v3865 = vld [vmem:[%s3861 + $0x18] sm:$0xff]
    %v3866 = vld [vmem:[%s3861 + $0x20] sm:$0xff]
    %v3867 = vld [vmem:[%s3861 + $0x28] sm:$0xff]
    %v3868 = vld [vmem:[%s3861 + $0x30] sm:$0xff]
    %v3869 = vld [vmem:[%s3861 + $0x38] sm:$0xff]
    %v3870 = vld [vmem:[%s3861 + $0x40] sm:$0xff]
    %v3871 = vld [vmem:[%s3861 + $0x48] sm:$0xff]
    %v3872 = vld [vmem:[%s3861 + $0x50] sm:$0xff]
    %v3873 = vld [vmem:[%s3861 + $0x58] sm:$0xff]
    %v3874 = vld [vmem:[%s3861 + $0x60] sm:$0xff]
    %v3875 = vld [vmem:[%s3861 + $0x68] sm:$0xff]
    %v3876 = vld [vmem:[%s3861 + $0x70] sm:$0xff]
    %v3877 = vld [vmem:[%s3861 + $0x78] sm:$0xff]
    %3878 = vmatpush.msra.mxu0 %v3877
    %3879 = vmatpush.msra.mxu0 %v3876
    %3880 = vmatpush.msra.mxu0 %v3875
    %3881 = vmatpush.msra.mxu0 %v3874
    %3882 = vmatpush.msra.mxu0 %v3873
    %3883 = vmatpush.msra.mxu0 %v3872
    %3884 = vmatpush.msra.mxu0 %v3871
    %3885 = vmatpush.msra.mxu0 %v3870
    %3886 = vmatpush.msra.mxu0 %v3869
    %3887 = vmatpush.msra.mxu0 %v3868
    %3888 = vmatpush.msra.mxu0 %v3867
    %3889 = vmatpush.msra.mxu0 %v3866
    %3890 = vmatpush.msra.mxu0 %v3865
    %3891 = vmatpush.msra.mxu0 %v3864
    %3892 = vmatpush.msra.mxu0 %v3863
    %3893 = vmatpush.msra.mxu0 %v3862
    %3894 = vmatmul.f32.gmra.mxu0 %v3859
    %v3895 = vpop.f32.mrf.mxu0
    %v3896 = vadd.f32 0.0, %v3895
    %3897 = vdwg.mxu0
    %v3898 = vadd.f32 %v3811, %v3896
    %s3899 = scalar_lea.vmem [#allocation11], 144
    %v3900 = vld [vmem:[%s3899] sm:$0xff]
    %3902 = vst [vmem:[#allocation1] ss:$2 sm:$0xff] %v3900
    %v3903 = vld.sshfl [vmem:[#allocation1] sm:$0xff pattern:$0x75316420]
    %v3904 = vld.sshfl [vmem:[#allocation1 + $0x8] sm:$0xff pattern:$0x75316420]
    %v3906 = vsel %vm2339, %v3904, 0
    %3908 = vmatpush.msra.mxu0 %v2323
    %3909 = vmatpush.msra.mxu0 %v2322
    %3910 = vmatpush.msra.mxu0 %v2321
    %3911 = vmatpush.msra.mxu0 %v2320
    %3912 = vmatpush.msra.mxu0 %v2319
    %3913 = vmatpush.msra.mxu0 %v2318
    %3914 = vmatpush.msra.mxu0 %v2317
    %3915 = vmatpush.msra.mxu0 %v2316
    %3916 = vmatpush.msra.mxu0 %v2315
    %3917 = vmatpush.msra.mxu0 %v2314
    %3918 = vmatpush.msra.mxu0 %v2313
    %3919 = vmatpush.msra.mxu0 %v2312
    %3920 = vmatpush.msra.mxu0 %v2311
    %3921 = vmatpush.msra.mxu0 %v2310
    %3922 = vmatpush.msra.mxu0 %v2309
    %3923 = vmatpush.msra.mxu0 %v2308
    %3924 = vmatmul.f32.gmra.mxu0 %v3903
    %v3925 = vpop.f32.mrf.mxu0
    %v3926 = vadd.f32 0.0, %v3925
    %3927 = vdwg.mxu0
    %3928 = vmatpush.msra.mxu0 0.0
    %3929 = vmatpush.msra.mxu0 0.0
    %3930 = vmatpush.msra.mxu0 0.0
    %3931 = vmatpush.msra.mxu0 0.0
    %3932 = vmatpush.msra.mxu0 0.0
    %3933 = vmatpush.msra.mxu0 0.0
    %3934 = vmatpush.msra.mxu0 0.0
    %3935 = vmatpush.msra.mxu0 %v2343
    %3936 = vmatpush.msra.mxu0 %v2331
    %3937 = vmatpush.msra.mxu0 %v2330
    %3938 = vmatpush.msra.mxu0 %v2329
    %3939 = vmatpush.msra.mxu0 %v2328
    %3940 = vmatpush.msra.mxu0 %v2327
    %3941 = vmatpush.msra.mxu0 %v2326
    %3942 = vmatpush.msra.mxu0 %v2325
    %3943 = vmatpush.msra.mxu0 %v2324
    %3944 = vmatmul.f32.gmra.mxu0 %v3906
    %v3945 = vpop.f32.mrf.mxu0
    %v3946 = vadd.f32 %v3926, %v3945
    %3947 = vdwg.mxu0
    %s3948 = scalar_lea.vmem [#allocation13], 2304
    %v3949 = vld [vmem:[%s3948] sm:$0xff]
    %v3950 = vld [vmem:[%s3948 + $0x8] sm:$0xff]
    %v3951 = vld [vmem:[%s3948 + $0x10] sm:$0xff]
    %v3952 = vld [vmem:[%s3948 + $0x18] sm:$0xff]
    %v3953 = vld [vmem:[%s3948 + $0x20] sm:$0xff]
    %v3954 = vld [vmem:[%s3948 + $0x28] sm:$0xff]
    %v3955 = vld [vmem:[%s3948 + $0x30] sm:$0xff]
    %v3956 = vld [vmem:[%s3948 + $0x38] sm:$0xff]
    %v3957 = vld [vmem:[%s3948 + $0x40] sm:$0xff]
    %v3958 = vld [vmem:[%s3948 + $0x48] sm:$0xff]
    %v3959 = vld [vmem:[%s3948 + $0x50] sm:$0xff]
    %v3960 = vld [vmem:[%s3948 + $0x58] sm:$0xff]
    %v3961 = vld [vmem:[%s3948 + $0x60] sm:$0xff]
    %v3962 = vld [vmem:[%s3948 + $0x68] sm:$0xff]
    %v3963 = vld [vmem:[%s3948 + $0x70] sm:$0xff]
    %v3964 = vld [vmem:[%s3948 + $0x78] sm:$0xff]
    %3965 = vmatpush.msra.mxu0 %v3964
    %3966 = vmatpush.msra.mxu0 %v3963
    %3967 = vmatpush.msra.mxu0 %v3962
    %3968 = vmatpush.msra.mxu0 %v3961
    %3969 = vmatpush.msra.mxu0 %v3960
    %3970 = vmatpush.msra.mxu0 %v3959
    %3971 = vmatpush.msra.mxu0 %v3958
    %3972 = vmatpush.msra.mxu0 %v3957
    %3973 = vmatpush.msra.mxu0 %v3956
    %3974 = vmatpush.msra.mxu0 %v3955
    %3975 = vmatpush.msra.mxu0 %v3954
    %3976 = vmatpush.msra.mxu0 %v3953
    %3977 = vmatpush.msra.mxu0 %v3952
    %3978 = vmatpush.msra.mxu0 %v3951
    %3979 = vmatpush.msra.mxu0 %v3950
    %3980 = vmatpush.msra.mxu0 %v3949
    %3981 = vmatmul.f32.gmra.mxu0 %v3946
    %v3982 = vpop.f32.mrf.mxu0
    %v3983 = vadd.f32 0.0, %v3982
    %3984 = vdwg.mxu0
    %v3985 = vadd.f32 %v3898, %v3983
    %s3986 = scalar_lea.vmem [#allocation11], 152
    %v3987 = vld [vmem:[%s3986] sm:$0xff]
    %3989 = vst [vmem:[#allocation1] ss:$2 sm:$0xff] %v3987
    %v3990 = vld.sshfl [vmem:[#allocation1] sm:$0xff pattern:$0x75316420]
    %v3991 = vld.sshfl [vmem:[#allocation1 + $0x8] sm:$0xff pattern:$0x75316420]
    %v3993 = vsel %vm2339, %v3991, 0
    %3995 = vmatpush.msra.mxu0 %v2323
    %3996 = vmatpush.msra.mxu0 %v2322
    %3997 = vmatpush.msra.mxu0 %v2321
    %3998 = vmatpush.msra.mxu0 %v2320
    %3999 = vmatpush.msra.mxu0 %v2319
    %4000 = vmatpush.msra.mxu0 %v2318
    %4001 = vmatpush.msra.mxu0 %v2317
    %4002 = vmatpush.msra.mxu0 %v2316
    %4003 = vmatpush.msra.mxu0 %v2315
    %4004 = vmatpush.msra.mxu0 %v2314
    %4005 = vmatpush.msra.mxu0 %v2313
    %4006 = vmatpush.msra.mxu0 %v2312
    %4007 = vmatpush.msra.mxu0 %v2311
    %4008 = vmatpush.msra.mxu0 %v2310
    %4009 = vmatpush.msra.mxu0 %v2309
    %4010 = vmatpush.msra.mxu0 %v2308
    %4011 = vmatmul.f32.gmra.mxu0 %v3990
    %v4012 = vpop.f32.mrf.mxu0
    %v4013 = vadd.f32 0.0, %v4012
    %4014 = vdwg.mxu0
    %4015 = vmatpush.msra.mxu0 0.0
    %4016 = vmatpush.msra.mxu0 0.0
    %4017 = vmatpush.msra.mxu0 0.0
    %4018 = vmatpush.msra.mxu0 0.0
    %4019 = vmatpush.msra.mxu0 0.0
    %4020 = vmatpush.msra.mxu0 0.0
    %4021 = vmatpush.msra.mxu0 0.0
    %4022 = vmatpush.msra.mxu0 %v2343
    %4023 = vmatpush.msra.mxu0 %v2331
    %4024 = vmatpush.msra.mxu0 %v2330
    %4025 = vmatpush.msra.mxu0 %v2329
    %4026 = vmatpush.msra.mxu0 %v2328
    %4027 = vmatpush.msra.mxu0 %v2327
    %4028 = vmatpush.msra.mxu0 %v2326
    %4029 = vmatpush.msra.mxu0 %v2325
    %4030 = vmatpush.msra.mxu0 %v2324
    %4031 = vmatmul.f32.gmra.mxu0 %v3993
    %v4032 = vpop.f32.mrf.mxu0
    %v4033 = vadd.f32 %v4013, %v4032
    %4034 = vdwg.mxu0
    %s4035 = scalar_lea.vmem [#allocation13], 2432
    %v4036 = vld [vmem:[%s4035] sm:$0xff]
    %v4037 = vld [vmem:[%s4035 + $0x8] sm:$0xff]
    %v4038 = vld [vmem:[%s4035 + $0x10] sm:$0xff]
    %v4039 = vld [vmem:[%s4035 + $0x18] sm:$0xff]
    %v4040 = vld [vmem:[%s4035 + $0x20] sm:$0xff]
    %v4041 = vld [vmem:[%s4035 + $0x28] sm:$0xff]
    %v4042 = vld [vmem:[%s4035 + $0x30] sm:$0xff]
    %v4043 = vld [vmem:[%s4035 + $0x38] sm:$0xff]
    %v4044 = vld [vmem:[%s4035 + $0x40] sm:$0xff]
    %v4045 = vld [vmem:[%s4035 + $0x48] sm:$0xff]
    %v4046 = vld [vmem:[%s4035 + $0x50] sm:$0xff]
    %v4047 = vld [vmem:[%s4035 + $0x58] sm:$0xff]
    %v4048 = vld [vmem:[%s4035 + $0x60] sm:$0xff]
    %v4049 = vld [vmem:[%s4035 + $0x68] sm:$0xff]
    %v4050 = vld [vmem:[%s4035 + $0x70] sm:$0xff]
    %v4051 = vld [vmem:[%s4035 + $0x78] sm:$0xff]
    %4052 = vmatpush.msra.mxu0 %v4051
    %4053 = vmatpush.msra.mxu0 %v4050
    %4054 = vmatpush.msra.mxu0 %v4049
    %4055 = vmatpush.msra.mxu0 %v4048
    %4056 = vmatpush.msra.mxu0 %v4047
    %4057 = vmatpush.msra.mxu0 %v4046
    %4058 = vmatpush.msra.mxu0 %v4045
    %4059 = vmatpush.msra.mxu0 %v4044
    %4060 = vmatpush.msra.mxu0 %v4043
    %4061 = vmatpush.msra.mxu0 %v4042
    %4062 = vmatpush.msra.mxu0 %v4041
    %4063 = vmatpush.msra.mxu0 %v4040
    %4064 = vmatpush.msra.mxu0 %v4039
    %4065 = vmatpush.msra.mxu0 %v4038
    %4066 = vmatpush.msra.mxu0 %v4037
    %4067 = vmatpush.msra.mxu0 %v4036
    %4068 = vmatmul.f32.gmra.mxu0 %v4033
    %v4069 = vpop.f32.mrf.mxu0
    %v4070 = vadd.f32 0.0, %v4069
    %4071 = vdwg.mxu0
    %v4072 = vadd.f32 %v3985, %v4070
    %s4073 = scalar_lea.vmem [#allocation11], 160
    %v4074 = vld [vmem:[%s4073] sm:$0xff]
    %4076 = vst [vmem:[#allocation1] ss:$2 sm:$0xff] %v4074
    %v4077 = vld.sshfl [vmem:[#allocation1] sm:$0xff pattern:$0x75316420]
    %v4078 = vld.sshfl [vmem:[#allocation1 + $0x8] sm:$0xff pattern:$0x75316420]
    %v4080 = vsel %vm2339, %v4078, 0
    %4082 = vmatpush.msra.mxu0 %v2323
    %4083 = vmatpush.msra.mxu0 %v2322
    %4084 = vmatpush.msra.mxu0 %v2321
    %4085 = vmatpush.msra.mxu0 %v2320
    %4086 = vmatpush.msra.mxu0 %v2319
    %4087 = vmatpush.msra.mxu0 %v2318
    %4088 = vmatpush.msra.mxu0 %v2317
    %4089 = vmatpush.msra.mxu0 %v2316
    %4090 = vmatpush.msra.mxu0 %v2315
    %4091 = vmatpush.msra.mxu0 %v2314
    %4092 = vmatpush.msra.mxu0 %v2313
    %4093 = vmatpush.msra.mxu0 %v2312
    %4094 = vmatpush.msra.mxu0 %v2311
    %4095 = vmatpush.msra.mxu0 %v2310
    %4096 = vmatpush.msra.mxu0 %v2309
    %4097 = vmatpush.msra.mxu0 %v2308
    %4098 = vmatmul.f32.gmra.mxu0 %v4077
    %v4099 = vpop.f32.mrf.mxu0
    %v4100 = vadd.f32 0.0, %v4099
    %4101 = vdwg.mxu0
    %4102 = vmatpush.msra.mxu0 0.0
    %4103 = vmatpush.msra.mxu0 0.0
    %4104 = vmatpush.msra.mxu0 0.0
    %4105 = vmatpush.msra.mxu0 0.0
    %4106 = vmatpush.msra.mxu0 0.0
    %4107 = vmatpush.msra.mxu0 0.0
    %4108 = vmatpush.msra.mxu0 0.0
    %4109 = vmatpush.msra.mxu0 %v2343
    %4110 = vmatpush.msra.mxu0 %v2331
    %4111 = vmatpush.msra.mxu0 %v2330
    %4112 = vmatpush.msra.mxu0 %v2329
    %4113 = vmatpush.msra.mxu0 %v2328
    %4114 = vmatpush.msra.mxu0 %v2327
    %4115 = vmatpush.msra.mxu0 %v2326
    %4116 = vmatpush.msra.mxu0 %v2325
    %4117 = vmatpush.msra.mxu0 %v2324
    %4118 = vmatmul.f32.gmra.mxu0 %v4080
    %v4119 = vpop.f32.mrf.mxu0
    %v4120 = vadd.f32 %v4100, %v4119
    %4121 = vdwg.mxu0
    %s4122 = scalar_lea.vmem [#allocation13], 2560
    %v4123 = vld [vmem:[%s4122] sm:$0xff]
    %v4124 = vld [vmem:[%s4122 + $0x8] sm:$0xff]
    %v4125 = vld [vmem:[%s4122 + $0x10] sm:$0xff]
    %v4126 = vld [vmem:[%s4122 + $0x18] sm:$0xff]
    %v4127 = vld [vmem:[%s4122 + $0x20] sm:$0xff]
    %v4128 = vld [vmem:[%s4122 + $0x28] sm:$0xff]
    %v4129 = vld [vmem:[%s4122 + $0x30] sm:$0xff]
    %v4130 = vld [vmem:[%s4122 + $0x38] sm:$0xff]
    %v4131 = vld [vmem:[%s4122 + $0x40] sm:$0xff]
    %v4132 = vld [vmem:[%s4122 + $0x48] sm:$0xff]
    %v4133 = vld [vmem:[%s4122 + $0x50] sm:$0xff]
    %v4134 = vld [vmem:[%s4122 + $0x58] sm:$0xff]
    %v4135 = vld [vmem:[%s4122 + $0x60] sm:$0xff]
    %v4136 = vld [vmem:[%s4122 + $0x68] sm:$0xff]
    %v4137 = vld [vmem:[%s4122 + $0x70] sm:$0xff]
    %v4138 = vld [vmem:[%s4122 + $0x78] sm:$0xff]
    %4139 = vmatpush.msra.mxu0 %v4138
    %4140 = vmatpush.msra.mxu0 %v4137
    %4141 = vmatpush.msra.mxu0 %v4136
    %4142 = vmatpush.msra.mxu0 %v4135
    %4143 = vmatpush.msra.mxu0 %v4134
    %4144 = vmatpush.msra.mxu0 %v4133
    %4145 = vmatpush.msra.mxu0 %v4132
    %4146 = vmatpush.msra.mxu0 %v4131
    %4147 = vmatpush.msra.mxu0 %v4130
    %4148 = vmatpush.msra.mxu0 %v4129
    %4149 = vmatpush.msra.mxu0 %v4128
    %4150 = vmatpush.msra.mxu0 %v4127
    %4151 = vmatpush.msra.mxu0 %v4126
    %4152 = vmatpush.msra.mxu0 %v4125
    %4153 = vmatpush.msra.mxu0 %v4124
    %4154 = vmatpush.msra.mxu0 %v4123
    %4155 = vmatmul.f32.gmra.mxu0 %v4120
    %v4156 = vpop.f32.mrf.mxu0
    %v4157 = vadd.f32 0.0, %v4156
    %4158 = vdwg.mxu0
    %v4159 = vadd.f32 %v4072, %v4157
    %s4160 = scalar_lea.vmem [#allocation11], 168
    %v4161 = vld [vmem:[%s4160] sm:$0xff]
    %4163 = vst [vmem:[#allocation1] ss:$2 sm:$0xff] %v4161
    %v4164 = vld.sshfl [vmem:[#allocation1] sm:$0xff pattern:$0x75316420]
    %v4165 = vld.sshfl [vmem:[#allocation1 + $0x8] sm:$0xff pattern:$0x75316420]
    %v4167 = vsel %vm2339, %v4165, 0
    %4169 = vmatpush.msra.mxu0 %v2323
    %4170 = vmatpush.msra.mxu0 %v2322
    %4171 = vmatpush.msra.mxu0 %v2321
    %4172 = vmatpush.msra.mxu0 %v2320
    %4173 = vmatpush.msra.mxu0 %v2319
    %4174 = vmatpush.msra.mxu0 %v2318
    %4175 = vmatpush.msra.mxu0 %v2317
    %4176 = vmatpush.msra.mxu0 %v2316
    %4177 = vmatpush.msra.mxu0 %v2315
    %4178 = vmatpush.msra.mxu0 %v2314
    %4179 = vmatpush.msra.mxu0 %v2313
    %4180 = vmatpush.msra.mxu0 %v2312
    %4181 = vmatpush.msra.mxu0 %v2311
    %4182 = vmatpush.msra.mxu0 %v2310
    %4183 = vmatpush.msra.mxu0 %v2309
    %4184 = vmatpush.msra.mxu0 %v2308
    %4185 = vmatmul.f32.gmra.mxu0 %v4164
    %v4186 = vpop.f32.mrf.mxu0
    %v4187 = vadd.f32 0.0, %v4186
    %4188 = vdwg.mxu0
    %4189 = vmatpush.msra.mxu0 0.0
    %4190 = vmatpush.msra.mxu0 0.0
    %4191 = vmatpush.msra.mxu0 0.0
    %4192 = vmatpush.msra.mxu0 0.0
    %4193 = vmatpush.msra.mxu0 0.0
    %4194 = vmatpush.msra.mxu0 0.0
    %4195 = vmatpush.msra.mxu0 0.0
    %4196 = vmatpush.msra.mxu0 %v2343
    %4197 = vmatpush.msra.mxu0 %v2331
    %4198 = vmatpush.msra.mxu0 %v2330
    %4199 = vmatpush.msra.mxu0 %v2329
    %4200 = vmatpush.msra.mxu0 %v2328
    %4201 = vmatpush.msra.mxu0 %v2327
    %4202 = vmatpush.msra.mxu0 %v2326
    %4203 = vmatpush.msra.mxu0 %v2325
    %4204 = vmatpush.msra.mxu0 %v2324
    %4205 = vmatmul.f32.gmra.mxu0 %v4167
    %v4206 = vpop.f32.mrf.mxu0
    %v4207 = vadd.f32 %v4187, %v4206
    %4208 = vdwg.mxu0
    %s4209 = scalar_lea.vmem [#allocation13], 2688
    %v4210 = vld [vmem:[%s4209] sm:$0xff]
    %v4211 = vld [vmem:[%s4209 + $0x8] sm:$0xff]
    %v4212 = vld [vmem:[%s4209 + $0x10] sm:$0xff]
    %v4213 = vld [vmem:[%s4209 + $0x18] sm:$0xff]
    %v4214 = vld [vmem:[%s4209 + $0x20] sm:$0xff]
    %v4215 = vld [vmem:[%s4209 + $0x28] sm:$0xff]
    %v4216 = vld [vmem:[%s4209 + $0x30] sm:$0xff]
    %v4217 = vld [vmem:[%s4209 + $0x38] sm:$0xff]
    %v4218 = vld [vmem:[%s4209 + $0x40] sm:$0xff]
    %v4219 = vld [vmem:[%s4209 + $0x48] sm:$0xff]
    %v4220 = vld [vmem:[%s4209 + $0x50] sm:$0xff]
    %v4221 = vld [vmem:[%s4209 + $0x58] sm:$0xff]
    %v4222 = vld [vmem:[%s4209 + $0x60] sm:$0xff]
    %v4223 = vld [vmem:[%s4209 + $0x68] sm:$0xff]
    %v4224 = vld [vmem:[%s4209 + $0x70] sm:$0xff]
    %v4225 = vld [vmem:[%s4209 + $0x78] sm:$0xff]
    %4226 = vmatpush.msra.mxu0 %v4225
    %4227 = vmatpush.msra.mxu0 %v4224
    %4228 = vmatpush.msra.mxu0 %v4223
    %4229 = vmatpush.msra.mxu0 %v4222
    %4230 = vmatpush.msra.mxu0 %v4221
    %4231 = vmatpush.msra.mxu0 %v4220
    %4232 = vmatpush.msra.mxu0 %v4219
    %4233 = vmatpush.msra.mxu0 %v4218
    %4234 = vmatpush.msra.mxu0 %v4217
    %4235 = vmatpush.msra.mxu0 %v4216
    %4236 = vmatpush.msra.mxu0 %v4215
    %4237 = vmatpush.msra.mxu0 %v4214
    %4238 = vmatpush.msra.mxu0 %v4213
    %4239 = vmatpush.msra.mxu0 %v4212
    %4240 = vmatpush.msra.mxu0 %v4211
    %4241 = vmatpush.msra.mxu0 %v4210
    %4242 = vmatmul.f32.gmra.mxu0 %v4207
    %v4243 = vpop.f32.mrf.mxu0
    %v4244 = vadd.f32 0.0, %v4243
    %4245 = vdwg.mxu0
    %v4246 = vadd.f32 %v4159, %v4244
    %s4247 = scalar_lea.vmem [#allocation11], 176
    %v4248 = vld [vmem:[%s4247] sm:$0xff]
    %4250 = vst [vmem:[#allocation1] ss:$2 sm:$0xff] %v4248
    %v4251 = vld.sshfl [vmem:[#allocation1] sm:$0xff pattern:$0x75316420]
    %v4252 = vld.sshfl [vmem:[#allocation1 + $0x8] sm:$0xff pattern:$0x75316420]
    %v4254 = vsel %vm2339, %v4252, 0
    %4256 = vmatpush.msra.mxu0 %v2323
    %4257 = vmatpush.msra.mxu0 %v2322
    %4258 = vmatpush.msra.mxu0 %v2321
    %4259 = vmatpush.msra.mxu0 %v2320
    %4260 = vmatpush.msra.mxu0 %v2319
    %4261 = vmatpush.msra.mxu0 %v2318
    %4262 = vmatpush.msra.mxu0 %v2317
    %4263 = vmatpush.msra.mxu0 %v2316
    %4264 = vmatpush.msra.mxu0 %v2315
    %4265 = vmatpush.msra.mxu0 %v2314
    %4266 = vmatpush.msra.mxu0 %v2313
    %4267 = vmatpush.msra.mxu0 %v2312
    %4268 = vmatpush.msra.mxu0 %v2311
    %4269 = vmatpush.msra.mxu0 %v2310
    %4270 = vmatpush.msra.mxu0 %v2309
    %4271 = vmatpush.msra.mxu0 %v2308
    %4272 = vmatmul.f32.gmra.mxu0 %v4251
    %v4273 = vpop.f32.mrf.mxu0
    %v4274 = vadd.f32 0.0, %v4273
    %4275 = vdwg.mxu0
    %4276 = vmatpush.msra.mxu0 0.0
    %4277 = vmatpush.msra.mxu0 0.0
    %4278 = vmatpush.msra.mxu0 0.0
    %4279 = vmatpush.msra.mxu0 0.0
    %4280 = vmatpush.msra.mxu0 0.0
    %4281 = vmatpush.msra.mxu0 0.0
    %4282 = vmatpush.msra.mxu0 0.0
    %4283 = vmatpush.msra.mxu0 %v2343
    %4284 = vmatpush.msra.mxu0 %v2331
    %4285 = vmatpush.msra.mxu0 %v2330
    %4286 = vmatpush.msra.mxu0 %v2329
    %4287 = vmatpush.msra.mxu0 %v2328
    %4288 = vmatpush.msra.mxu0 %v2327
    %4289 = vmatpush.msra.mxu0 %v2326
    %4290 = vmatpush.msra.mxu0 %v2325
    %4291 = vmatpush.msra.mxu0 %v2324
    %4292 = vmatmul.f32.gmra.mxu0 %v4254
    %v4293 = vpop.f32.mrf.mxu0
    %v4294 = vadd.f32 %v4274, %v4293
    %4295 = vdwg.mxu0
    %s4296 = scalar_lea.vmem [#allocation13], 2816
    %v4297 = vld [vmem:[%s4296] sm:$0xff]
    %v4298 = vld [vmem:[%s4296 + $0x8] sm:$0xff]
    %v4299 = vld [vmem:[%s4296 + $0x10] sm:$0xff]
    %v4300 = vld [vmem:[%s4296 + $0x18] sm:$0xff]
    %v4301 = vld [vmem:[%s4296 + $0x20] sm:$0xff]
    %v4302 = vld [vmem:[%s4296 + $0x28] sm:$0xff]
    %v4303 = vld [vmem:[%s4296 + $0x30] sm:$0xff]
    %v4304 = vld [vmem:[%s4296 + $0x38] sm:$0xff]
    %v4305 = vld [vmem:[%s4296 + $0x40] sm:$0xff]
    %v4306 = vld [vmem:[%s4296 + $0x48] sm:$0xff]
    %v4307 = vld [vmem:[%s4296 + $0x50] sm:$0xff]
    %v4308 = vld [vmem:[%s4296 + $0x58] sm:$0xff]
    %v4309 = vld [vmem:[%s4296 + $0x60] sm:$0xff]
    %v4310 = vld [vmem:[%s4296 + $0x68] sm:$0xff]
    %v4311 = vld [vmem:[%s4296 + $0x70] sm:$0xff]
    %v4312 = vld [vmem:[%s4296 + $0x78] sm:$0xff]
    %4313 = vmatpush.msra.mxu0 %v4312
    %4314 = vmatpush.msra.mxu0 %v4311
    %4315 = vmatpush.msra.mxu0 %v4310
    %4316 = vmatpush.msra.mxu0 %v4309
    %4317 = vmatpush.msra.mxu0 %v4308
    %4318 = vmatpush.msra.mxu0 %v4307
    %4319 = vmatpush.msra.mxu0 %v4306
    %4320 = vmatpush.msra.mxu0 %v4305
    %4321 = vmatpush.msra.mxu0 %v4304
    %4322 = vmatpush.msra.mxu0 %v4303
    %4323 = vmatpush.msra.mxu0 %v4302
    %4324 = vmatpush.msra.mxu0 %v4301
    %4325 = vmatpush.msra.mxu0 %v4300
    %4326 = vmatpush.msra.mxu0 %v4299
    %4327 = vmatpush.msra.mxu0 %v4298
    %4328 = vmatpush.msra.mxu0 %v4297
    %4329 = vmatmul.f32.gmra.mxu0 %v4294
    %v4330 = vpop.f32.mrf.mxu0
    %v4331 = vadd.f32 0.0, %v4330
    %4332 = vdwg.mxu0
    %v4333 = vadd.f32 %v4246, %v4331
    %s4334 = scalar_lea.vmem [#allocation11], 184
    %v4335 = vld [vmem:[%s4334] sm:$0xff]
    %4337 = vst [vmem:[#allocation1] ss:$2 sm:$0xff] %v4335
    %v4338 = vld.sshfl [vmem:[#allocation1] sm:$0xff pattern:$0x75316420]
    %v4339 = vld.sshfl [vmem:[#allocation1 + $0x8] sm:$0xff pattern:$0x75316420]
    %v4341 = vsel %vm2339, %v4339, 0
    %4343 = vmatpush.msra.mxu0 %v2323
    %4344 = vmatpush.msra.mxu0 %v2322
    %4345 = vmatpush.msra.mxu0 %v2321
    %4346 = vmatpush.msra.mxu0 %v2320
    %4347 = vmatpush.msra.mxu0 %v2319
    %4348 = vmatpush.msra.mxu0 %v2318
    %4349 = vmatpush.msra.mxu0 %v2317
    %4350 = vmatpush.msra.mxu0 %v2316
    %4351 = vmatpush.msra.mxu0 %v2315
    %4352 = vmatpush.msra.mxu0 %v2314
    %4353 = vmatpush.msra.mxu0 %v2313
    %4354 = vmatpush.msra.mxu0 %v2312
    %4355 = vmatpush.msra.mxu0 %v2311
    %4356 = vmatpush.msra.mxu0 %v2310
    %4357 = vmatpush.msra.mxu0 %v2309
    %4358 = vmatpush.msra.mxu0 %v2308
    %4359 = vmatmul.f32.gmra.mxu0 %v4338
    %v4360 = vpop.f32.mrf.mxu0
    %v4361 = vadd.f32 0.0, %v4360
    %4362 = vdwg.mxu0
    %4363 = vmatpush.msra.mxu0 0.0
    %4364 = vmatpush.msra.mxu0 0.0
    %4365 = vmatpush.msra.mxu0 0.0
    %4366 = vmatpush.msra.mxu0 0.0
    %4367 = vmatpush.msra.mxu0 0.0
    %4368 = vmatpush.msra.mxu0 0.0
    %4369 = vmatpush.msra.mxu0 0.0
    %4370 = vmatpush.msra.mxu0 %v2343
    %4371 = vmatpush.msra.mxu0 %v2331
    %4372 = vmatpush.msra.mxu0 %v2330
    %4373 = vmatpush.msra.mxu0 %v2329
    %4374 = vmatpush.msra.mxu0 %v2328
    %4375 = vmatpush.msra.mxu0 %v2327
    %4376 = vmatpush.msra.mxu0 %v2326
    %4377 = vmatpush.msra.mxu0 %v2325
    %4378 = vmatpush.msra.mxu0 %v2324
    %4379 = vmatmul.f32.gmra.mxu0 %v4341
    %v4380 = vpop.f32.mrf.mxu0
    %v4381 = vadd.f32 %v4361, %v4380
    %4382 = vdwg.mxu0
    %s4383 = scalar_lea.vmem [#allocation13], 2944
    %v4384 = vld [vmem:[%s4383] sm:$0xff]
    %v4385 = vld [vmem:[%s4383 + $0x8] sm:$0xff]
    %v4386 = vld [vmem:[%s4383 + $0x10] sm:$0xff]
    %v4387 = vld [vmem:[%s4383 + $0x18] sm:$0xff]
    %v4388 = vld [vmem:[%s4383 + $0x20] sm:$0xff]
    %v4389 = vld [vmem:[%s4383 + $0x28] sm:$0xff]
    %v4390 = vld [vmem:[%s4383 + $0x30] sm:$0xff]
    %v4391 = vld [vmem:[%s4383 + $0x38] sm:$0xff]
    %v4392 = vld [vmem:[%s4383 + $0x40] sm:$0xff]
    %v4393 = vld [vmem:[%s4383 + $0x48] sm:$0xff]
    %v4394 = vld [vmem:[%s4383 + $0x50] sm:$0xff]
    %v4395 = vld [vmem:[%s4383 + $0x58] sm:$0xff]
    %v4396 = vld [vmem:[%s4383 + $0x60] sm:$0xff]
    %v4397 = vld [vmem:[%s4383 + $0x68] sm:$0xff]
    %v4398 = vld [vmem:[%s4383 + $0x70] sm:$0xff]
    %v4399 = vld [vmem:[%s4383 + $0x78] sm:$0xff]
    %4400 = vmatpush.msra.mxu0 %v4399
    %4401 = vmatpush.msra.mxu0 %v4398
    %4402 = vmatpush.msra.mxu0 %v4397
    %4403 = vmatpush.msra.mxu0 %v4396
    %4404 = vmatpush.msra.mxu0 %v4395
    %4405 = vmatpush.msra.mxu0 %v4394
    %4406 = vmatpush.msra.mxu0 %v4393
    %4407 = vmatpush.msra.mxu0 %v4392
    %4408 = vmatpush.msra.mxu0 %v4391
    %4409 = vmatpush.msra.mxu0 %v4390
    %4410 = vmatpush.msra.mxu0 %v4389
    %4411 = vmatpush.msra.mxu0 %v4388
    %4412 = vmatpush.msra.mxu0 %v4387
    %4413 = vmatpush.msra.mxu0 %v4386
    %4414 = vmatpush.msra.mxu0 %v4385
    %4415 = vmatpush.msra.mxu0 %v4384
    %4416 = vmatmul.f32.gmra.mxu0 %v4381
    %v4417 = vpop.f32.mrf.mxu0
    %v4418 = vadd.f32 0.0, %v4417
    %4419 = vdwg.mxu0
    %v4420 = vadd.f32 %v4333, %v4418
    %s4421 = scalar_lea.vmem [#allocation11], 192
    %v4422 = vld [vmem:[%s4421] sm:$0xff]
    %4424 = vst [vmem:[#allocation1] ss:$2 sm:$0xff] %v4422
    %v4425 = vld.sshfl [vmem:[#allocation1] sm:$0xff pattern:$0x75316420]
    %v4426 = vld.sshfl [vmem:[#allocation1 + $0x8] sm:$0xff pattern:$0x75316420]
    %v4428 = vsel %vm2339, %v4426, 0
    %4430 = vmatpush.msra.mxu0 %v2323
    %4431 = vmatpush.msra.mxu0 %v2322
    %4432 = vmatpush.msra.mxu0 %v2321
    %4433 = vmatpush.msra.mxu0 %v2320
    %4434 = vmatpush.msra.mxu0 %v2319
    %4435 = vmatpush.msra.mxu0 %v2318
    %4436 = vmatpush.msra.mxu0 %v2317
    %4437 = vmatpush.msra.mxu0 %v2316
    %4438 = vmatpush.msra.mxu0 %v2315
    %4439 = vmatpush.msra.mxu0 %v2314
    %4440 = vmatpush.msra.mxu0 %v2313
    %4441 = vmatpush.msra.mxu0 %v2312
    %4442 = vmatpush.msra.mxu0 %v2311
    %4443 = vmatpush.msra.mxu0 %v2310
    %4444 = vmatpush.msra.mxu0 %v2309
    %4445 = vmatpush.msra.mxu0 %v2308
    %4446 = vmatmul.f32.gmra.mxu0 %v4425
    %v4447 = vpop.f32.mrf.mxu0
    %v4448 = vadd.f32 0.0, %v4447
    %4449 = vdwg.mxu0
    %4450 = vmatpush.msra.mxu0 0.0
    %4451 = vmatpush.msra.mxu0 0.0
    %4452 = vmatpush.msra.mxu0 0.0
    %4453 = vmatpush.msra.mxu0 0.0
    %4454 = vmatpush.msra.mxu0 0.0
    %4455 = vmatpush.msra.mxu0 0.0
    %4456 = vmatpush.msra.mxu0 0.0
    %4457 = vmatpush.msra.mxu0 %v2343
    %4458 = vmatpush.msra.mxu0 %v2331
    %4459 = vmatpush.msra.mxu0 %v2330
    %4460 = vmatpush.msra.mxu0 %v2329
    %4461 = vmatpush.msra.mxu0 %v2328
    %4462 = vmatpush.msra.mxu0 %v2327
    %4463 = vmatpush.msra.mxu0 %v2326
    %4464 = vmatpush.msra.mxu0 %v2325
    %4465 = vmatpush.msra.mxu0 %v2324
    %4466 = vmatmul.f32.gmra.mxu0 %v4428
    %v4467 = vpop.f32.mrf.mxu0
    %v4468 = vadd.f32 %v4448, %v4467
    %4469 = vdwg.mxu0
    %s4470 = scalar_lea.vmem [#allocation13], 3072
    %v4471 = vld [vmem:[%s4470] sm:$0xff]
    %v4472 = vld [vmem:[%s4470 + $0x8] sm:$0xff]
    %v4473 = vld [vmem:[%s4470 + $0x10] sm:$0xff]
    %v4474 = vld [vmem:[%s4470 + $0x18] sm:$0xff]
    %v4475 = vld [vmem:[%s4470 + $0x20] sm:$0xff]
    %v4476 = vld [vmem:[%s4470 + $0x28] sm:$0xff]
    %v4477 = vld [vmem:[%s4470 + $0x30] sm:$0xff]
    %v4478 = vld [vmem:[%s4470 + $0x38] sm:$0xff]
    %v4479 = vld [vmem:[%s4470 + $0x40] sm:$0xff]
    %v4480 = vld [vmem:[%s4470 + $0x48] sm:$0xff]
    %v4481 = vld [vmem:[%s4470 + $0x50] sm:$0xff]
    %v4482 = vld [vmem:[%s4470 + $0x58] sm:$0xff]
    %v4483 = vld [vmem:[%s4470 + $0x60] sm:$0xff]
    %v4484 = vld [vmem:[%s4470 + $0x68] sm:$0xff]
    %v4485 = vld [vmem:[%s4470 + $0x70] sm:$0xff]
    %v4486 = vld [vmem:[%s4470 + $0x78] sm:$0xff]
    %4487 = vmatpush.msra.mxu0 %v4486
    %4488 = vmatpush.msra.mxu0 %v4485
    %4489 = vmatpush.msra.mxu0 %v4484
    %4490 = vmatpush.msra.mxu0 %v4483
    %4491 = vmatpush.msra.mxu0 %v4482
    %4492 = vmatpush.msra.mxu0 %v4481
    %4493 = vmatpush.msra.mxu0 %v4480
    %4494 = vmatpush.msra.mxu0 %v4479
    %4495 = vmatpush.msra.mxu0 %v4478
    %4496 = vmatpush.msra.mxu0 %v4477
    %4497 = vmatpush.msra.mxu0 %v4476
    %4498 = vmatpush.msra.mxu0 %v4475
    %4499 = vmatpush.msra.mxu0 %v4474
    %4500 = vmatpush.msra.mxu0 %v4473
    %4501 = vmatpush.msra.mxu0 %v4472
    %4502 = vmatpush.msra.mxu0 %v4471
    %4503 = vmatmul.f32.gmra.mxu0 %v4468
    %v4504 = vpop.f32.mrf.mxu0
    %v4505 = vadd.f32 0.0, %v4504
    %4506 = vdwg.mxu0
    %v4507 = vadd.f32 %v4420, %v4505
    %s4508 = scalar_lea.vmem [#allocation11], 200
    %v4509 = vld [vmem:[%s4508] sm:$0xff]
    %4511 = vst [vmem:[#allocation1] ss:$2 sm:$0xff] %v4509
    %v4512 = vld.sshfl [vmem:[#allocation1] sm:$0xff pattern:$0x75316420]
    %v4513 = vld.sshfl [vmem:[#allocation1 + $0x8] sm:$0xff pattern:$0x75316420]
    %v4515 = vsel %vm2339, %v4513, 0
    %4517 = vmatpush.msra.mxu0 %v2323
    %4518 = vmatpush.msra.mxu0 %v2322
    %4519 = vmatpush.msra.mxu0 %v2321
    %4520 = vmatpush.msra.mxu0 %v2320
    %4521 = vmatpush.msra.mxu0 %v2319
    %4522 = vmatpush.msra.mxu0 %v2318
    %4523 = vmatpush.msra.mxu0 %v2317
    %4524 = vmatpush.msra.mxu0 %v2316
    %4525 = vmatpush.msra.mxu0 %v2315
    %4526 = vmatpush.msra.mxu0 %v2314
    %4527 = vmatpush.msra.mxu0 %v2313
    %4528 = vmatpush.msra.mxu0 %v2312
    %4529 = vmatpush.msra.mxu0 %v2311
    %4530 = vmatpush.msra.mxu0 %v2310
    %4531 = vmatpush.msra.mxu0 %v2309
    %4532 = vmatpush.msra.mxu0 %v2308
    %4533 = vmatmul.f32.gmra.mxu0 %v4512
    %v4534 = vpop.f32.mrf.mxu0
    %v4535 = vadd.f32 0.0, %v4534
    %4536 = vdwg.mxu0
    %4537 = vmatpush.msra.mxu0 0.0
    %4538 = vmatpush.msra.mxu0 0.0
    %4539 = vmatpush.msra.mxu0 0.0
    %4540 = vmatpush.msra.mxu0 0.0
    %4541 = vmatpush.msra.mxu0 0.0
    %4542 = vmatpush.msra.mxu0 0.0
    %4543 = vmatpush.msra.mxu0 0.0
    %4544 = vmatpush.msra.mxu0 %v2343
    %4545 = vmatpush.msra.mxu0 %v2331
    %4546 = vmatpush.msra.mxu0 %v2330
    %4547 = vmatpush.msra.mxu0 %v2329
    %4548 = vmatpush.msra.mxu0 %v2328
    %4549 = vmatpush.msra.mxu0 %v2327
    %4550 = vmatpush.msra.mxu0 %v2326
    %4551 = vmatpush.msra.mxu0 %v2325
    %4552 = vmatpush.msra.mxu0 %v2324
    %4553 = vmatmul.f32.gmra.mxu0 %v4515
    %v4554 = vpop.f32.mrf.mxu0
    %v4555 = vadd.f32 %v4535, %v4554
    %4556 = vdwg.mxu0
    %s4557 = scalar_lea.vmem [#allocation13], 3200
    %v4558 = vld [vmem:[%s4557] sm:$0xff]
    %v4559 = vld [vmem:[%s4557 + $0x8] sm:$0xff]
    %v4560 = vld [vmem:[%s4557 + $0x10] sm:$0xff]
    %v4561 = vld [vmem:[%s4557 + $0x18] sm:$0xff]
    %v4562 = vld [vmem:[%s4557 + $0x20] sm:$0xff]
    %v4563 = vld [vmem:[%s4557 + $0x28] sm:$0xff]
    %v4564 = vld [vmem:[%s4557 + $0x30] sm:$0xff]
    %v4565 = vld [vmem:[%s4557 + $0x38] sm:$0xff]
    %v4566 = vld [vmem:[%s4557 + $0x40] sm:$0xff]
    %v4567 = vld [vmem:[%s4557 + $0x48] sm:$0xff]
    %v4568 = vld [vmem:[%s4557 + $0x50] sm:$0xff]
    %v4569 = vld [vmem:[%s4557 + $0x58] sm:$0xff]
    %v4570 = vld [vmem:[%s4557 + $0x60] sm:$0xff]
    %v4571 = vld [vmem:[%s4557 + $0x68] sm:$0xff]
    %v4572 = vld [vmem:[%s4557 + $0x70] sm:$0xff]
    %v4573 = vld [vmem:[%s4557 + $0x78] sm:$0xff]
    %4574 = vmatpush.msra.mxu0 %v4573
    %4575 = vmatpush.msra.mxu0 %v4572
    %4576 = vmatpush.msra.mxu0 %v4571
    %4577 = vmatpush.msra.mxu0 %v4570
    %4578 = vmatpush.msra.mxu0 %v4569
    %4579 = vmatpush.msra.mxu0 %v4568
    %4580 = vmatpush.msra.mxu0 %v4567
    %4581 = vmatpush.msra.mxu0 %v4566
    %4582 = vmatpush.msra.mxu0 %v4565
    %4583 = vmatpush.msra.mxu0 %v4564
    %4584 = vmatpush.msra.mxu0 %v4563
    %4585 = vmatpush.msra.mxu0 %v4562
    %4586 = vmatpush.msra.mxu0 %v4561
    %4587 = vmatpush.msra.mxu0 %v4560
    %4588 = vmatpush.msra.mxu0 %v4559
    %4589 = vmatpush.msra.mxu0 %v4558
    %4590 = vmatmul.f32.gmra.mxu0 %v4555
    %v4591 = vpop.f32.mrf.mxu0
    %v4592 = vadd.f32 0.0, %v4591
    %4593 = vdwg.mxu0
    %v4594 = vadd.f32 %v4507, %v4592
    %s4595 = scalar_lea.vmem [#allocation11], 208
    %v4596 = vld [vmem:[%s4595] sm:$0xff]
    %4598 = vst [vmem:[#allocation1] ss:$2 sm:$0xff] %v4596
    %v4599 = vld.sshfl [vmem:[#allocation1] sm:$0xff pattern:$0x75316420]
    %v4600 = vld.sshfl [vmem:[#allocation1 + $0x8] sm:$0xff pattern:$0x75316420]
    %v4602 = vsel %vm2339, %v4600, 0
    %4604 = vmatpush.msra.mxu0 %v2323
    %4605 = vmatpush.msra.mxu0 %v2322
    %4606 = vmatpush.msra.mxu0 %v2321
    %4607 = vmatpush.msra.mxu0 %v2320
    %4608 = vmatpush.msra.mxu0 %v2319
    %4609 = vmatpush.msra.mxu0 %v2318
    %4610 = vmatpush.msra.mxu0 %v2317
    %4611 = vmatpush.msra.mxu0 %v2316
    %4612 = vmatpush.msra.mxu0 %v2315
    %4613 = vmatpush.msra.mxu0 %v2314
    %4614 = vmatpush.msra.mxu0 %v2313
    %4615 = vmatpush.msra.mxu0 %v2312
    %4616 = vmatpush.msra.mxu0 %v2311
    %4617 = vmatpush.msra.mxu0 %v2310
    %4618 = vmatpush.msra.mxu0 %v2309
    %4619 = vmatpush.msra.mxu0 %v2308
    %4620 = vmatmul.f32.gmra.mxu0 %v4599
    %v4621 = vpop.f32.mrf.mxu0
    %v4622 = vadd.f32 0.0, %v4621
    %4623 = vdwg.mxu0
    %4624 = vmatpush.msra.mxu0 0.0
    %4625 = vmatpush.msra.mxu0 0.0
    %4626 = vmatpush.msra.mxu0 0.0
    %4627 = vmatpush.msra.mxu0 0.0
    %4628 = vmatpush.msra.mxu0 0.0
    %4629 = vmatpush.msra.mxu0 0.0
    %4630 = vmatpush.msra.mxu0 0.0
    %4631 = vmatpush.msra.mxu0 %v2343
    %4632 = vmatpush.msra.mxu0 %v2331
    %4633 = vmatpush.msra.mxu0 %v2330
    %4634 = vmatpush.msra.mxu0 %v2329
    %4635 = vmatpush.msra.mxu0 %v2328
    %4636 = vmatpush.msra.mxu0 %v2327
    %4637 = vmatpush.msra.mxu0 %v2326
    %4638 = vmatpush.msra.mxu0 %v2325
    %4639 = vmatpush.msra.mxu0 %v2324
    %4640 = vmatmul.f32.gmra.mxu0 %v4602
    %v4641 = vpop.f32.mrf.mxu0
    %v4642 = vadd.f32 %v4622, %v4641
    %4643 = vdwg.mxu0
    %s4644 = scalar_lea.vmem [#allocation13], 3328
    %v4645 = vld [vmem:[%s4644] sm:$0xff]
    %v4646 = vld [vmem:[%s4644 + $0x8] sm:$0xff]
    %v4647 = vld [vmem:[%s4644 + $0x10] sm:$0xff]
    %v4648 = vld [vmem:[%s4644 + $0x18] sm:$0xff]
    %v4649 = vld [vmem:[%s4644 + $0x20] sm:$0xff]
    %v4650 = vld [vmem:[%s4644 + $0x28] sm:$0xff]
    %v4651 = vld [vmem:[%s4644 + $0x30] sm:$0xff]
    %v4652 = vld [vmem:[%s4644 + $0x38] sm:$0xff]
    %v4653 = vld [vmem:[%s4644 + $0x40] sm:$0xff]
    %v4654 = vld [vmem:[%s4644 + $0x48] sm:$0xff]
    %v4655 = vld [vmem:[%s4644 + $0x50] sm:$0xff]
    %v4656 = vld [vmem:[%s4644 + $0x58] sm:$0xff]
    %v4657 = vld [vmem:[%s4644 + $0x60] sm:$0xff]
    %v4658 = vld [vmem:[%s4644 + $0x68] sm:$0xff]
    %v4659 = vld [vmem:[%s4644 + $0x70] sm:$0xff]
    %v4660 = vld [vmem:[%s4644 + $0x78] sm:$0xff]
    %4661 = vmatpush.msra.mxu0 %v4660
    %4662 = vmatpush.msra.mxu0 %v4659
    %4663 = vmatpush.msra.mxu0 %v4658
    %4664 = vmatpush.msra.mxu0 %v4657
    %4665 = vmatpush.msra.mxu0 %v4656
    %4666 = vmatpush.msra.mxu0 %v4655
    %4667 = vmatpush.msra.mxu0 %v4654
    %4668 = vmatpush.msra.mxu0 %v4653
    %4669 = vmatpush.msra.mxu0 %v4652
    %4670 = vmatpush.msra.mxu0 %v4651
    %4671 = vmatpush.msra.mxu0 %v4650
    %4672 = vmatpush.msra.mxu0 %v4649
    %4673 = vmatpush.msra.mxu0 %v4648
    %4674 = vmatpush.msra.mxu0 %v4647
    %4675 = vmatpush.msra.mxu0 %v4646
    %4676 = vmatpush.msra.mxu0 %v4645
    %4677 = vmatmul.f32.gmra.mxu0 %v4642
    %v4678 = vpop.f32.mrf.mxu0
    %v4679 = vadd.f32 0.0, %v4678
    %4680 = vdwg.mxu0
    %v4681 = vadd.f32 %v4594, %v4679
    %s4682 = scalar_lea.vmem [#allocation11], 216
    %v4683 = vld [vmem:[%s4682] sm:$0xff]
    %4685 = vst [vmem:[#allocation1] ss:$2 sm:$0xff] %v4683
    %v4686 = vld.sshfl [vmem:[#allocation1] sm:$0xff pattern:$0x75316420]
    %v4687 = vld.sshfl [vmem:[#allocation1 + $0x8] sm:$0xff pattern:$0x75316420]
    %v4689 = vsel %vm2339, %v4687, 0
    %4691 = vmatpush.msra.mxu0 %v2323
    %4692 = vmatpush.msra.mxu0 %v2322
    %4693 = vmatpush.msra.mxu0 %v2321
    %4694 = vmatpush.msra.mxu0 %v2320
    %4695 = vmatpush.msra.mxu0 %v2319
    %4696 = vmatpush.msra.mxu0 %v2318
    %4697 = vmatpush.msra.mxu0 %v2317
    %4698 = vmatpush.msra.mxu0 %v2316
    %4699 = vmatpush.msra.mxu0 %v2315
    %4700 = vmatpush.msra.mxu0 %v2314
    %4701 = vmatpush.msra.mxu0 %v2313
    %4702 = vmatpush.msra.mxu0 %v2312
    %4703 = vmatpush.msra.mxu0 %v2311
    %4704 = vmatpush.msra.mxu0 %v2310
    %4705 = vmatpush.msra.mxu0 %v2309
    %4706 = vmatpush.msra.mxu0 %v2308
    %4707 = vmatmul.f32.gmra.mxu0 %v4686
    %v4708 = vpop.f32.mrf.mxu0
    %v4709 = vadd.f32 0.0, %v4708
    %4710 = vdwg.mxu0
    %4711 = vmatpush.msra.mxu0 0.0
    %4712 = vmatpush.msra.mxu0 0.0
    %4713 = vmatpush.msra.mxu0 0.0
    %4714 = vmatpush.msra.mxu0 0.0
    %4715 = vmatpush.msra.mxu0 0.0
    %4716 = vmatpush.msra.mxu0 0.0
    %4717 = vmatpush.msra.mxu0 0.0
    %4718 = vmatpush.msra.mxu0 %v2343
    %4719 = vmatpush.msra.mxu0 %v2331
    %4720 = vmatpush.msra.mxu0 %v2330
    %4721 = vmatpush.msra.mxu0 %v2329
    %4722 = vmatpush.msra.mxu0 %v2328
    %4723 = vmatpush.msra.mxu0 %v2327
    %4724 = vmatpush.msra.mxu0 %v2326
    %4725 = vmatpush.msra.mxu0 %v2325
    %4726 = vmatpush.msra.mxu0 %v2324
    %4727 = vmatmul.f32.gmra.mxu0 %v4689
    %v4728 = vpop.f32.mrf.mxu0
    %v4729 = vadd.f32 %v4709, %v4728
    %4730 = vdwg.mxu0
    %s4731 = scalar_lea.vmem [#allocation13], 3456
    %v4732 = vld [vmem:[%s4731] sm:$0xff]
    %v4733 = vld [vmem:[%s4731 + $0x8] sm:$0xff]
    %v4734 = vld [vmem:[%s4731 + $0x10] sm:$0xff]
    %v4735 = vld [vmem:[%s4731 + $0x18] sm:$0xff]
    %v4736 = vld [vmem:[%s4731 + $0x20] sm:$0xff]
    %v4737 = vld [vmem:[%s4731 + $0x28] sm:$0xff]
    %v4738 = vld [vmem:[%s4731 + $0x30] sm:$0xff]
    %v4739 = vld [vmem:[%s4731 + $0x38] sm:$0xff]
    %v4740 = vld [vmem:[%s4731 + $0x40] sm:$0xff]
    %v4741 = vld [vmem:[%s4731 + $0x48] sm:$0xff]
    %v4742 = vld [vmem:[%s4731 + $0x50] sm:$0xff]
    %v4743 = vld [vmem:[%s4731 + $0x58] sm:$0xff]
    %v4744 = vld [vmem:[%s4731 + $0x60] sm:$0xff]
    %v4745 = vld [vmem:[%s4731 + $0x68] sm:$0xff]
    %v4746 = vld [vmem:[%s4731 + $0x70] sm:$0xff]
    %v4747 = vld [vmem:[%s4731 + $0x78] sm:$0xff]
    %4748 = vmatpush.msra.mxu0 %v4747
    %4749 = vmatpush.msra.mxu0 %v4746
    %4750 = vmatpush.msra.mxu0 %v4745
    %4751 = vmatpush.msra.mxu0 %v4744
    %4752 = vmatpush.msra.mxu0 %v4743
    %4753 = vmatpush.msra.mxu0 %v4742
    %4754 = vmatpush.msra.mxu0 %v4741
    %4755 = vmatpush.msra.mxu0 %v4740
    %4756 = vmatpush.msra.mxu0 %v4739
    %4757 = vmatpush.msra.mxu0 %v4738
    %4758 = vmatpush.msra.mxu0 %v4737
    %4759 = vmatpush.msra.mxu0 %v4736
    %4760 = vmatpush.msra.mxu0 %v4735
    %4761 = vmatpush.msra.mxu0 %v4734
    %4762 = vmatpush.msra.mxu0 %v4733
    %4763 = vmatpush.msra.mxu0 %v4732
    %4764 = vmatmul.f32.gmra.mxu0 %v4729
    %v4765 = vpop.f32.mrf.mxu0
    %v4766 = vadd.f32 0.0, %v4765
    %4767 = vdwg.mxu0
    %v4768 = vadd.f32 %v4681, %v4766
    %s4769 = scalar_lea.vmem [#allocation11], 224
    %v4770 = vld [vmem:[%s4769] sm:$0xff]
    %4772 = vst [vmem:[#allocation1] ss:$2 sm:$0xff] %v4770
    %v4773 = vld.sshfl [vmem:[#allocation1] sm:$0xff pattern:$0x75316420]
    %v4774 = vld.sshfl [vmem:[#allocation1 + $0x8] sm:$0xff pattern:$0x75316420]
    %v4776 = vsel %vm2339, %v4774, 0
    %4778 = vmatpush.msra.mxu0 %v2323
    %4779 = vmatpush.msra.mxu0 %v2322
    %4780 = vmatpush.msra.mxu0 %v2321
    %4781 = vmatpush.msra.mxu0 %v2320
    %4782 = vmatpush.msra.mxu0 %v2319
    %4783 = vmatpush.msra.mxu0 %v2318
    %4784 = vmatpush.msra.mxu0 %v2317
    %4785 = vmatpush.msra.mxu0 %v2316
    %4786 = vmatpush.msra.mxu0 %v2315
    %4787 = vmatpush.msra.mxu0 %v2314
    %4788 = vmatpush.msra.mxu0 %v2313
    %4789 = vmatpush.msra.mxu0 %v2312
    %4790 = vmatpush.msra.mxu0 %v2311
    %4791 = vmatpush.msra.mxu0 %v2310
    %4792 = vmatpush.msra.mxu0 %v2309
    %4793 = vmatpush.msra.mxu0 %v2308
    %4794 = vmatmul.f32.gmra.mxu0 %v4773
    %v4795 = vpop.f32.mrf.mxu0
    %v4796 = vadd.f32 0.0, %v4795
    %4797 = vdwg.mxu0
    %4798 = vmatpush.msra.mxu0 0.0
    %4799 = vmatpush.msra.mxu0 0.0
    %4800 = vmatpush.msra.mxu0 0.0
    %4801 = vmatpush.msra.mxu0 0.0
    %4802 = vmatpush.msra.mxu0 0.0
    %4803 = vmatpush.msra.mxu0 0.0
    %4804 = vmatpush.msra.mxu0 0.0
    %4805 = vmatpush.msra.mxu0 %v2343
    %4806 = vmatpush.msra.mxu0 %v2331
    %4807 = vmatpush.msra.mxu0 %v2330
    %4808 = vmatpush.msra.mxu0 %v2329
    %4809 = vmatpush.msra.mxu0 %v2328
    %4810 = vmatpush.msra.mxu0 %v2327
    %4811 = vmatpush.msra.mxu0 %v2326
    %4812 = vmatpush.msra.mxu0 %v2325
    %4813 = vmatpush.msra.mxu0 %v2324
    %4814 = vmatmul.f32.gmra.mxu0 %v4776
    %v4815 = vpop.f32.mrf.mxu0
    %v4816 = vadd.f32 %v4796, %v4815
    %4817 = vdwg.mxu0
    %s4818 = scalar_lea.vmem [#allocation13], 3584
    %v4819 = vld [vmem:[%s4818] sm:$0xff]
    %v4820 = vld [vmem:[%s4818 + $0x8] sm:$0xff]
    %v4821 = vld [vmem:[%s4818 + $0x10] sm:$0xff]
    %v4822 = vld [vmem:[%s4818 + $0x18] sm:$0xff]
    %v4823 = vld [vmem:[%s4818 + $0x20] sm:$0xff]
    %v4824 = vld [vmem:[%s4818 + $0x28] sm:$0xff]
    %v4825 = vld [vmem:[%s4818 + $0x30] sm:$0xff]
    %v4826 = vld [vmem:[%s4818 + $0x38] sm:$0xff]
    %v4827 = vld [vmem:[%s4818 + $0x40] sm:$0xff]
    %v4828 = vld [vmem:[%s4818 + $0x48] sm:$0xff]
    %v4829 = vld [vmem:[%s4818 + $0x50] sm:$0xff]
    %v4830 = vld [vmem:[%s4818 + $0x58] sm:$0xff]
    %v4831 = vld [vmem:[%s4818 + $0x60] sm:$0xff]
    %v4832 = vld [vmem:[%s4818 + $0x68] sm:$0xff]
    %v4833 = vld [vmem:[%s4818 + $0x70] sm:$0xff]
    %v4834 = vld [vmem:[%s4818 + $0x78] sm:$0xff]
    %4835 = vmatpush.msra.mxu0 %v4834
    %4836 = vmatpush.msra.mxu0 %v4833
    %4837 = vmatpush.msra.mxu0 %v4832
    %4838 = vmatpush.msra.mxu0 %v4831
    %4839 = vmatpush.msra.mxu0 %v4830
    %4840 = vmatpush.msra.mxu0 %v4829
    %4841 = vmatpush.msra.mxu0 %v4828
    %4842 = vmatpush.msra.mxu0 %v4827
    %4843 = vmatpush.msra.mxu0 %v4826
    %4844 = vmatpush.msra.mxu0 %v4825
    %4845 = vmatpush.msra.mxu0 %v4824
    %4846 = vmatpush.msra.mxu0 %v4823
    %4847 = vmatpush.msra.mxu0 %v4822
    %4848 = vmatpush.msra.mxu0 %v4821
    %4849 = vmatpush.msra.mxu0 %v4820
    %4850 = vmatpush.msra.mxu0 %v4819
    %4851 = vmatmul.f32.gmra.mxu0 %v4816
    %v4852 = vpop.f32.mrf.mxu0
    %v4853 = vadd.f32 0.0, %v4852
    %4854 = vdwg.mxu0
    %v4855 = vadd.f32 %v4768, %v4853
    %s4856 = scalar_lea.vmem [#allocation11], 232
    %v4857 = vld [vmem:[%s4856] sm:$0xff]
    %4859 = vst [vmem:[#allocation1] ss:$2 sm:$0xff] %v4857
    %v4860 = vld.sshfl [vmem:[#allocation1] sm:$0xff pattern:$0x75316420]
    %v4861 = vld.sshfl [vmem:[#allocation1 + $0x8] sm:$0xff pattern:$0x75316420]
    %v4863 = vsel %vm2339, %v4861, 0
    %4865 = vmatpush.msra.mxu0 %v2323
    %4866 = vmatpush.msra.mxu0 %v2322
    %4867 = vmatpush.msra.mxu0 %v2321
    %4868 = vmatpush.msra.mxu0 %v2320
    %4869 = vmatpush.msra.mxu0 %v2319
    %4870 = vmatpush.msra.mxu0 %v2318
    %4871 = vmatpush.msra.mxu0 %v2317
    %4872 = vmatpush.msra.mxu0 %v2316
    %4873 = vmatpush.msra.mxu0 %v2315
    %4874 = vmatpush.msra.mxu0 %v2314
    %4875 = vmatpush.msra.mxu0 %v2313
    %4876 = vmatpush.msra.mxu0 %v2312
    %4877 = vmatpush.msra.mxu0 %v2311
    %4878 = vmatpush.msra.mxu0 %v2310
    %4879 = vmatpush.msra.mxu0 %v2309
    %4880 = vmatpush.msra.mxu0 %v2308
    %4881 = vmatmul.f32.gmra.mxu0 %v4860
    %v4882 = vpop.f32.mrf.mxu0
    %v4883 = vadd.f32 0.0, %v4882
    %4884 = vdwg.mxu0
    %4885 = vmatpush.msra.mxu0 0.0
    %4886 = vmatpush.msra.mxu0 0.0
    %4887 = vmatpush.msra.mxu0 0.0
    %4888 = vmatpush.msra.mxu0 0.0
    %4889 = vmatpush.msra.mxu0 0.0
    %4890 = vmatpush.msra.mxu0 0.0
    %4891 = vmatpush.msra.mxu0 0.0
    %4892 = vmatpush.msra.mxu0 %v2343
    %4893 = vmatpush.msra.mxu0 %v2331
    %4894 = vmatpush.msra.mxu0 %v2330
    %4895 = vmatpush.msra.mxu0 %v2329
    %4896 = vmatpush.msra.mxu0 %v2328
    %4897 = vmatpush.msra.mxu0 %v2327
    %4898 = vmatpush.msra.mxu0 %v2326
    %4899 = vmatpush.msra.mxu0 %v2325
    %4900 = vmatpush.msra.mxu0 %v2324
    %4901 = vmatmul.f32.gmra.mxu0 %v4863
    %v4902 = vpop.f32.mrf.mxu0
    %v4903 = vadd.f32 %v4883, %v4902
    %4904 = vdwg.mxu0
    %s4905 = scalar_lea.vmem [#allocation13], 3712
    %v4906 = vld [vmem:[%s4905] sm:$0xff]
    %v4907 = vld [vmem:[%s4905 + $0x8] sm:$0xff]
    %v4908 = vld [vmem:[%s4905 + $0x10] sm:$0xff]
    %v4909 = vld [vmem:[%s4905 + $0x18] sm:$0xff]
    %v4910 = vld [vmem:[%s4905 + $0x20] sm:$0xff]
    %v4911 = vld [vmem:[%s4905 + $0x28] sm:$0xff]
    %v4912 = vld [vmem:[%s4905 + $0x30] sm:$0xff]
    %v4913 = vld [vmem:[%s4905 + $0x38] sm:$0xff]
    %v4914 = vld [vmem:[%s4905 + $0x40] sm:$0xff]
    %v4915 = vld [vmem:[%s4905 + $0x48] sm:$0xff]
    %v4916 = vld [vmem:[%s4905 + $0x50] sm:$0xff]
    %v4917 = vld [vmem:[%s4905 + $0x58] sm:$0xff]
    %v4918 = vld [vmem:[%s4905 + $0x60] sm:$0xff]
    %v4919 = vld [vmem:[%s4905 + $0x68] sm:$0xff]
    %v4920 = vld [vmem:[%s4905 + $0x70] sm:$0xff]
    %v4921 = vld [vmem:[%s4905 + $0x78] sm:$0xff]
    %4922 = vmatpush.msra.mxu0 %v4921
    %4923 = vmatpush.msra.mxu0 %v4920
    %4924 = vmatpush.msra.mxu0 %v4919
    %4925 = vmatpush.msra.mxu0 %v4918
    %4926 = vmatpush.msra.mxu0 %v4917
    %4927 = vmatpush.msra.mxu0 %v4916
    %4928 = vmatpush.msra.mxu0 %v4915
    %4929 = vmatpush.msra.mxu0 %v4914
    %4930 = vmatpush.msra.mxu0 %v4913
    %4931 = vmatpush.msra.mxu0 %v4912
    %4932 = vmatpush.msra.mxu0 %v4911
    %4933 = vmatpush.msra.mxu0 %v4910
    %4934 = vmatpush.msra.mxu0 %v4909
    %4935 = vmatpush.msra.mxu0 %v4908
    %4936 = vmatpush.msra.mxu0 %v4907
    %4937 = vmatpush.msra.mxu0 %v4906
    %4938 = vmatmul.f32.gmra.mxu0 %v4903
    %v4939 = vpop.f32.mrf.mxu0
    %v4940 = vadd.f32 0.0, %v4939
    %4941 = vdwg.mxu0
    %v4942 = vadd.f32 %v4855, %v4940
    %s4943 = scalar_lea.vmem [#allocation11], 240
    %v4944 = vld [vmem:[%s4943] sm:$0xff]
    %4946 = vst [vmem:[#allocation1] ss:$2 sm:$0xff] %v4944
    %v4947 = vld.sshfl [vmem:[#allocation1] sm:$0xff pattern:$0x75316420]
    %v4948 = vld.sshfl [vmem:[#allocation1 + $0x8] sm:$0xff pattern:$0x75316420]
    %v4950 = vsel %vm2339, %v4948, 0
    %4952 = vmatpush.msra.mxu0 %v2323
    %4953 = vmatpush.msra.mxu0 %v2322
    %4954 = vmatpush.msra.mxu0 %v2321
    %4955 = vmatpush.msra.mxu0 %v2320
    %4956 = vmatpush.msra.mxu0 %v2319
    %4957 = vmatpush.msra.mxu0 %v2318
    %4958 = vmatpush.msra.mxu0 %v2317
    %4959 = vmatpush.msra.mxu0 %v2316
    %4960 = vmatpush.msra.mxu0 %v2315
    %4961 = vmatpush.msra.mxu0 %v2314
    %4962 = vmatpush.msra.mxu0 %v2313
    %4963 = vmatpush.msra.mxu0 %v2312
    %4964 = vmatpush.msra.mxu0 %v2311
    %4965 = vmatpush.msra.mxu0 %v2310
    %4966 = vmatpush.msra.mxu0 %v2309
    %4967 = vmatpush.msra.mxu0 %v2308
    %4968 = vmatmul.f32.gmra.mxu0 %v4947
    %v4969 = vpop.f32.mrf.mxu0
    %v4970 = vadd.f32 0.0, %v4969
    %4971 = vdwg.mxu0
    %4972 = vmatpush.msra.mxu0 0.0
    %4973 = vmatpush.msra.mxu0 0.0
    %4974 = vmatpush.msra.mxu0 0.0
    %4975 = vmatpush.msra.mxu0 0.0
    %4976 = vmatpush.msra.mxu0 0.0
    %4977 = vmatpush.msra.mxu0 0.0
    %4978 = vmatpush.msra.mxu0 0.0
    %4979 = vmatpush.msra.mxu0 %v2343
    %4980 = vmatpush.msra.mxu0 %v2331
    %4981 = vmatpush.msra.mxu0 %v2330
    %4982 = vmatpush.msra.mxu0 %v2329
    %4983 = vmatpush.msra.mxu0 %v2328
    %4984 = vmatpush.msra.mxu0 %v2327
    %4985 = vmatpush.msra.mxu0 %v2326
    %4986 = vmatpush.msra.mxu0 %v2325
    %4987 = vmatpush.msra.mxu0 %v2324
    %4988 = vmatmul.f32.gmra.mxu0 %v4950
    %v4989 = vpop.f32.mrf.mxu0
    %v4990 = vadd.f32 %v4970, %v4989
    %4991 = vdwg.mxu0
    %s4992 = scalar_lea.vmem [#allocation13], 3840
    %v4993 = vld [vmem:[%s4992] sm:$0xff]
    %v4994 = vld [vmem:[%s4992 + $0x8] sm:$0xff]
    %v4995 = vld [vmem:[%s4992 + $0x10] sm:$0xff]
    %v4996 = vld [vmem:[%s4992 + $0x18] sm:$0xff]
    %v4997 = vld [vmem:[%s4992 + $0x20] sm:$0xff]
    %v4998 = vld [vmem:[%s4992 + $0x28] sm:$0xff]
    %v4999 = vld [vmem:[%s4992 + $0x30] sm:$0xff]
    %v5000 = vld [vmem:[%s4992 + $0x38] sm:$0xff]
    %v5001 = vld [vmem:[%s4992 + $0x40] sm:$0xff]
    %v5002 = vld [vmem:[%s4992 + $0x48] sm:$0xff]
    %v5003 = vld [vmem:[%s4992 + $0x50] sm:$0xff]
    %v5004 = vld [vmem:[%s4992 + $0x58] sm:$0xff]
    %v5005 = vld [vmem:[%s4992 + $0x60] sm:$0xff]
    %v5006 = vld [vmem:[%s4992 + $0x68] sm:$0xff]
    %v5007 = vld [vmem:[%s4992 + $0x70] sm:$0xff]
    %v5008 = vld [vmem:[%s4992 + $0x78] sm:$0xff]
    %5009 = vmatpush.msra.mxu0 %v5008
    %5010 = vmatpush.msra.mxu0 %v5007
    %5011 = vmatpush.msra.mxu0 %v5006
    %5012 = vmatpush.msra.mxu0 %v5005
    %5013 = vmatpush.msra.mxu0 %v5004
    %5014 = vmatpush.msra.mxu0 %v5003
    %5015 = vmatpush.msra.mxu0 %v5002
    %5016 = vmatpush.msra.mxu0 %v5001
    %5017 = vmatpush.msra.mxu0 %v5000
    %5018 = vmatpush.msra.mxu0 %v4999
    %5019 = vmatpush.msra.mxu0 %v4998
    %5020 = vmatpush.msra.mxu0 %v4997
    %5021 = vmatpush.msra.mxu0 %v4996
    %5022 = vmatpush.msra.mxu0 %v4995
    %5023 = vmatpush.msra.mxu0 %v4994
    %5024 = vmatpush.msra.mxu0 %v4993
    %5025 = vmatmul.f32.gmra.mxu0 %v4990
    %v5026 = vpop.f32.mrf.mxu0
    %v5027 = vadd.f32 0.0, %v5026
    %5028 = vdwg.mxu0
    %v5029 = vadd.f32 %v4942, %v5027
    %s5030 = scalar_lea.vmem [#allocation11], 248
    %v5031 = vld [vmem:[%s5030] sm:$0xff]
    %5033 = vst [vmem:[#allocation1] ss:$2 sm:$0xff] %v5031
    %v5034 = vld.sshfl [vmem:[#allocation1] sm:$0xff pattern:$0x75316420]
    %v5035 = vld.sshfl [vmem:[#allocation1 + $0x8] sm:$0xff pattern:$0x75316420]
    %v5037 = vsel %vm2339, %v5035, 0
    %5039 = vmatpush.msra.mxu0 %v2323
    %5040 = vmatpush.msra.mxu0 %v2322
    %5041 = vmatpush.msra.mxu0 %v2321
    %5042 = vmatpush.msra.mxu0 %v2320
    %5043 = vmatpush.msra.mxu0 %v2319
    %5044 = vmatpush.msra.mxu0 %v2318
    %5045 = vmatpush.msra.mxu0 %v2317
    %5046 = vmatpush.msra.mxu0 %v2316
    %5047 = vmatpush.msra.mxu0 %v2315
    %5048 = vmatpush.msra.mxu0 %v2314
    %5049 = vmatpush.msra.mxu0 %v2313
    %5050 = vmatpush.msra.mxu0 %v2312
    %5051 = vmatpush.msra.mxu0 %v2311
    %5052 = vmatpush.msra.mxu0 %v2310
    %5053 = vmatpush.msra.mxu0 %v2309
    %5054 = vmatpush.msra.mxu0 %v2308
    %5055 = vmatmul.f32.gmra.mxu0 %v5034
    %v5056 = vpop.f32.mrf.mxu0
    %v5057 = vadd.f32 0.0, %v5056
    %5058 = vdwg.mxu0
    %5059 = vmatpush.msra.mxu0 0.0
    %5060 = vmatpush.msra.mxu0 0.0
    %5061 = vmatpush.msra.mxu0 0.0
    %5062 = vmatpush.msra.mxu0 0.0
    %5063 = vmatpush.msra.mxu0 0.0
    %5064 = vmatpush.msra.mxu0 0.0
    %5065 = vmatpush.msra.mxu0 0.0
    %5066 = vmatpush.msra.mxu0 %v2343
    %5067 = vmatpush.msra.mxu0 %v2331
    %5068 = vmatpush.msra.mxu0 %v2330
    %5069 = vmatpush.msra.mxu0 %v2329
    %5070 = vmatpush.msra.mxu0 %v2328
    %5071 = vmatpush.msra.mxu0 %v2327
    %5072 = vmatpush.msra.mxu0 %v2326
    %5073 = vmatpush.msra.mxu0 %v2325
    %5074 = vmatpush.msra.mxu0 %v2324
    %5075 = vmatmul.f32.gmra.mxu0 %v5037
    %v5076 = vpop.f32.mrf.mxu0
    %v5077 = vadd.f32 %v5057, %v5076
    %5078 = vdwg.mxu0
    %s5079 = scalar_lea.vmem [#allocation13], 3968
    %v5080 = vld [vmem:[%s5079] sm:$0xff]
    %v5081 = vld [vmem:[%s5079 + $0x8] sm:$0xff]
    %v5082 = vld [vmem:[%s5079 + $0x10] sm:$0xff]
    %v5083 = vld [vmem:[%s5079 + $0x18] sm:$0xff]
    %v5084 = vld [vmem:[%s5079 + $0x20] sm:$0xff]
    %v5085 = vld [vmem:[%s5079 + $0x28] sm:$0xff]
    %v5086 = vld [vmem:[%s5079 + $0x30] sm:$0xff]
    %v5087 = vld [vmem:[%s5079 + $0x38] sm:$0xff]
    %v5088 = vld [vmem:[%s5079 + $0x40] sm:$0xff]
    %v5089 = vld [vmem:[%s5079 + $0x48] sm:$0xff]
    %v5090 = vld [vmem:[%s5079 + $0x50] sm:$0xff]
    %v5091 = vld [vmem:[%s5079 + $0x58] sm:$0xff]
    %v5092 = vld [vmem:[%s5079 + $0x60] sm:$0xff]
    %v5093 = vld [vmem:[%s5079 + $0x68] sm:$0xff]
    %v5094 = vld [vmem:[%s5079 + $0x70] sm:$0xff]
    %v5095 = vld [vmem:[%s5079 + $0x78] sm:$0xff]
    %5096 = vmatpush.msra.mxu0 %v5095
    %5097 = vmatpush.msra.mxu0 %v5094
    %5098 = vmatpush.msra.mxu0 %v5093
    %5099 = vmatpush.msra.mxu0 %v5092
    %5100 = vmatpush.msra.mxu0 %v5091
    %5101 = vmatpush.msra.mxu0 %v5090
    %5102 = vmatpush.msra.mxu0 %v5089
    %5103 = vmatpush.msra.mxu0 %v5088
    %5104 = vmatpush.msra.mxu0 %v5087
    %5105 = vmatpush.msra.mxu0 %v5086
    %5106 = vmatpush.msra.mxu0 %v5085
    %5107 = vmatpush.msra.mxu0 %v5084
    %5108 = vmatpush.msra.mxu0 %v5083
    %5109 = vmatpush.msra.mxu0 %v5082
    %5110 = vmatpush.msra.mxu0 %v5081
    %5111 = vmatpush.msra.mxu0 %v5080
    %5112 = vmatmul.f32.gmra.mxu0 %v5077
    %v5113 = vpop.f32.mrf.mxu0
    %v5114 = vadd.f32 0.0, %v5113
    %5115 = vdwg.mxu0
    %v5116 = vadd.f32 %v5029, %v5114
    %s5117 = scalar_lea.vmem [#allocation11], 256
    %v5118 = vld [vmem:[%s5117] sm:$0xff]
    %5120 = vst [vmem:[#allocation1] ss:$2 sm:$0xff] %v5118
    %v5121 = vld.sshfl [vmem:[#allocation1] sm:$0xff pattern:$0x75316420]
    %v5122 = vld.sshfl [vmem:[#allocation1 + $0x8] sm:$0xff pattern:$0x75316420]
    %v5124 = vsel %vm2339, %v5122, 0
    %5126 = vmatpush.msra.mxu0 %v2323
    %5127 = vmatpush.msra.mxu0 %v2322
    %5128 = vmatpush.msra.mxu0 %v2321
    %5129 = vmatpush.msra.mxu0 %v2320
    %5130 = vmatpush.msra.mxu0 %v2319
    %5131 = vmatpush.msra.mxu0 %v2318
    %5132 = vmatpush.msra.mxu0 %v2317
    %5133 = vmatpush.msra.mxu0 %v2316
    %5134 = vmatpush.msra.mxu0 %v2315
    %5135 = vmatpush.msra.mxu0 %v2314
    %5136 = vmatpush.msra.mxu0 %v2313
    %5137 = vmatpush.msra.mxu0 %v2312
    %5138 = vmatpush.msra.mxu0 %v2311
    %5139 = vmatpush.msra.mxu0 %v2310
    %5140 = vmatpush.msra.mxu0 %v2309
    %5141 = vmatpush.msra.mxu0 %v2308
    %5142 = vmatmul.f32.gmra.mxu0 %v5121
    %v5143 = vpop.f32.mrf.mxu0
    %v5144 = vadd.f32 0.0, %v5143
    %5145 = vdwg.mxu0
    %5146 = vmatpush.msra.mxu0 0.0
    %5147 = vmatpush.msra.mxu0 0.0
    %5148 = vmatpush.msra.mxu0 0.0
    %5149 = vmatpush.msra.mxu0 0.0
    %5150 = vmatpush.msra.mxu0 0.0
    %5151 = vmatpush.msra.mxu0 0.0
    %5152 = vmatpush.msra.mxu0 0.0
    %5153 = vmatpush.msra.mxu0 %v2343
    %5154 = vmatpush.msra.mxu0 %v2331
    %5155 = vmatpush.msra.mxu0 %v2330
    %5156 = vmatpush.msra.mxu0 %v2329
    %5157 = vmatpush.msra.mxu0 %v2328
    %5158 = vmatpush.msra.mxu0 %v2327
    %5159 = vmatpush.msra.mxu0 %v2326
    %5160 = vmatpush.msra.mxu0 %v2325
    %5161 = vmatpush.msra.mxu0 %v2324
    %5162 = vmatmul.f32.gmra.mxu0 %v5124
    %v5163 = vpop.f32.mrf.mxu0
    %v5164 = vadd.f32 %v5144, %v5163
    %5165 = vdwg.mxu0
    %s5166 = scalar_lea.vmem [#allocation13], 4096
    %v5167 = vld [vmem:[%s5166] sm:$0xff]
    %v5168 = vld [vmem:[%s5166 + $0x8] sm:$0xff]
    %v5169 = vld [vmem:[%s5166 + $0x10] sm:$0xff]
    %v5170 = vld [vmem:[%s5166 + $0x18] sm:$0xff]
    %v5171 = vld [vmem:[%s5166 + $0x20] sm:$0xff]
    %v5172 = vld [vmem:[%s5166 + $0x28] sm:$0xff]
    %v5173 = vld [vmem:[%s5166 + $0x30] sm:$0xff]
    %v5174 = vld [vmem:[%s5166 + $0x38] sm:$0xff]
    %v5175 = vld [vmem:[%s5166 + $0x40] sm:$0xff]
    %v5176 = vld [vmem:[%s5166 + $0x48] sm:$0xff]
    %v5177 = vld [vmem:[%s5166 + $0x50] sm:$0xff]
    %v5178 = vld [vmem:[%s5166 + $0x58] sm:$0xff]
    %v5179 = vld [vmem:[%s5166 + $0x60] sm:$0xff]
    %v5180 = vld [vmem:[%s5166 + $0x68] sm:$0xff]
    %v5181 = vld [vmem:[%s5166 + $0x70] sm:$0xff]
    %v5182 = vld [vmem:[%s5166 + $0x78] sm:$0xff]
    %5183 = vmatpush.msra.mxu0 %v5182
    %5184 = vmatpush.msra.mxu0 %v5181
    %5185 = vmatpush.msra.mxu0 %v5180
    %5186 = vmatpush.msra.mxu0 %v5179
    %5187 = vmatpush.msra.mxu0 %v5178
    %5188 = vmatpush.msra.mxu0 %v5177
    %5189 = vmatpush.msra.mxu0 %v5176
    %5190 = vmatpush.msra.mxu0 %v5175
    %5191 = vmatpush.msra.mxu0 %v5174
    %5192 = vmatpush.msra.mxu0 %v5173
    %5193 = vmatpush.msra.mxu0 %v5172
    %5194 = vmatpush.msra.mxu0 %v5171
    %5195 = vmatpush.msra.mxu0 %v5170
    %5196 = vmatpush.msra.mxu0 %v5169
    %5197 = vmatpush.msra.mxu0 %v5168
    %5198 = vmatpush.msra.mxu0 %v5167
    %5199 = vmatmul.f32.gmra.mxu0 %v5164
    %v5200 = vpop.f32.mrf.mxu0
    %v5201 = vadd.f32 0.0, %v5200
    %5202 = vdwg.mxu0
    %v5203 = vadd.f32 %v5116, %v5201
    %s5204 = scalar_lea.vmem [#allocation11], 264
    %v5205 = vld [vmem:[%s5204] sm:$0xff]
    %5207 = vst [vmem:[#allocation1] ss:$2 sm:$0xff] %v5205
    %v5208 = vld.sshfl [vmem:[#allocation1] sm:$0xff pattern:$0x75316420]
    %v5209 = vld.sshfl [vmem:[#allocation1 + $0x8] sm:$0xff pattern:$0x75316420]
    %v5211 = vsel %vm2339, %v5209, 0
    %5213 = vmatpush.msra.mxu0 %v2323
    %5214 = vmatpush.msra.mxu0 %v2322
    %5215 = vmatpush.msra.mxu0 %v2321
    %5216 = vmatpush.msra.mxu0 %v2320
    %5217 = vmatpush.msra.mxu0 %v2319
    %5218 = vmatpush.msra.mxu0 %v2318
    %5219 = vmatpush.msra.mxu0 %v2317
    %5220 = vmatpush.msra.mxu0 %v2316
    %5221 = vmatpush.msra.mxu0 %v2315
    %5222 = vmatpush.msra.mxu0 %v2314
    %5223 = vmatpush.msra.mxu0 %v2313
    %5224 = vmatpush.msra.mxu0 %v2312
    %5225 = vmatpush.msra.mxu0 %v2311
    %5226 = vmatpush.msra.mxu0 %v2310
    %5227 = vmatpush.msra.mxu0 %v2309
    %5228 = vmatpush.msra.mxu0 %v2308
    %5229 = vmatmul.f32.gmra.mxu0 %v5208
    %v5230 = vpop.f32.mrf.mxu0
    %v5231 = vadd.f32 0.0, %v5230
    %5232 = vdwg.mxu0
    %5233 = vmatpush.msra.mxu0 0.0
    %5234 = vmatpush.msra.mxu0 0.0
    %5235 = vmatpush.msra.mxu0 0.0
    %5236 = vmatpush.msra.mxu0 0.0
    %5237 = vmatpush.msra.mxu0 0.0
    %5238 = vmatpush.msra.mxu0 0.0
    %5239 = vmatpush.msra.mxu0 0.0
    %5240 = vmatpush.msra.mxu0 %v2343
    %5241 = vmatpush.msra.mxu0 %v2331
    %5242 = vmatpush.msra.mxu0 %v2330
    %5243 = vmatpush.msra.mxu0 %v2329
    %5244 = vmatpush.msra.mxu0 %v2328
    %5245 = vmatpush.msra.mxu0 %v2327
    %5246 = vmatpush.msra.mxu0 %v2326
    %5247 = vmatpush.msra.mxu0 %v2325
    %5248 = vmatpush.msra.mxu0 %v2324
    %5249 = vmatmul.f32.gmra.mxu0 %v5211
    %v5250 = vpop.f32.mrf.mxu0
    %v5251 = vadd.f32 %v5231, %v5250
    %5252 = vdwg.mxu0
    %s5253 = scalar_lea.vmem [#allocation13], 4224
    %v5254 = vld [vmem:[%s5253] sm:$0xff]
    %v5255 = vld [vmem:[%s5253 + $0x8] sm:$0xff]
    %v5256 = vld [vmem:[%s5253 + $0x10] sm:$0xff]
    %v5257 = vld [vmem:[%s5253 + $0x18] sm:$0xff]
    %v5258 = vld [vmem:[%s5253 + $0x20] sm:$0xff]
    %v5259 = vld [vmem:[%s5253 + $0x28] sm:$0xff]
    %v5260 = vld [vmem:[%s5253 + $0x30] sm:$0xff]
    %v5261 = vld [vmem:[%s5253 + $0x38] sm:$0xff]
    %v5262 = vld [vmem:[%s5253 + $0x40] sm:$0xff]
    %v5263 = vld [vmem:[%s5253 + $0x48] sm:$0xff]
    %v5264 = vld [vmem:[%s5253 + $0x50] sm:$0xff]
    %v5265 = vld [vmem:[%s5253 + $0x58] sm:$0xff]
    %v5266 = vld [vmem:[%s5253 + $0x60] sm:$0xff]
    %v5267 = vld [vmem:[%s5253 + $0x68] sm:$0xff]
    %v5268 = vld [vmem:[%s5253 + $0x70] sm:$0xff]
    %v5269 = vld [vmem:[%s5253 + $0x78] sm:$0xff]
    %5270 = vmatpush.msra.mxu0 %v5269
    %5271 = vmatpush.msra.mxu0 %v5268
    %5272 = vmatpush.msra.mxu0 %v5267
    %5273 = vmatpush.msra.mxu0 %v5266
    %5274 = vmatpush.msra.mxu0 %v5265
    %5275 = vmatpush.msra.mxu0 %v5264
    %5276 = vmatpush.msra.mxu0 %v5263
    %5277 = vmatpush.msra.mxu0 %v5262
    %5278 = vmatpush.msra.mxu0 %v5261
    %5279 = vmatpush.msra.mxu0 %v5260
    %5280 = vmatpush.msra.mxu0 %v5259
    %5281 = vmatpush.msra.mxu0 %v5258
    %5282 = vmatpush.msra.mxu0 %v5257
    %5283 = vmatpush.msra.mxu0 %v5256
    %5284 = vmatpush.msra.mxu0 %v5255
    %5285 = vmatpush.msra.mxu0 %v5254
    %5286 = vmatmul.f32.gmra.mxu0 %v5251
    %v5287 = vpop.f32.mrf.mxu0
    %v5288 = vadd.f32 0.0, %v5287
    %5289 = vdwg.mxu0
    %v5290 = vadd.f32 %v5203, %v5288
    %s5291 = scalar_lea.vmem [#allocation11], 272
    %v5292 = vld [vmem:[%s5291] sm:$0xff]
    %5294 = vst [vmem:[#allocation1] ss:$2 sm:$0xff] %v5292
    %v5295 = vld.sshfl [vmem:[#allocation1] sm:$0xff pattern:$0x75316420]
    %v5296 = vld.sshfl [vmem:[#allocation1 + $0x8] sm:$0xff pattern:$0x75316420]
    %v5298 = vsel %vm2339, %v5296, 0
    %5300 = vmatpush.msra.mxu0 %v2323
    %5301 = vmatpush.msra.mxu0 %v2322
    %5302 = vmatpush.msra.mxu0 %v2321
    %5303 = vmatpush.msra.mxu0 %v2320
    %5304 = vmatpush.msra.mxu0 %v2319
    %5305 = vmatpush.msra.mxu0 %v2318
    %5306 = vmatpush.msra.mxu0 %v2317
    %5307 = vmatpush.msra.mxu0 %v2316
    %5308 = vmatpush.msra.mxu0 %v2315
    %5309 = vmatpush.msra.mxu0 %v2314
    %5310 = vmatpush.msra.mxu0 %v2313
    %5311 = vmatpush.msra.mxu0 %v2312
    %5312 = vmatpush.msra.mxu0 %v2311
    %5313 = vmatpush.msra.mxu0 %v2310
    %5314 = vmatpush.msra.mxu0 %v2309
    %5315 = vmatpush.msra.mxu0 %v2308
    %5316 = vmatmul.f32.gmra.mxu0 %v5295
    %v5317 = vpop.f32.mrf.mxu0
    %v5318 = vadd.f32 0.0, %v5317
    %5319 = vdwg.mxu0
    %5320 = vmatpush.msra.mxu0 0.0
    %5321 = vmatpush.msra.mxu0 0.0
    %5322 = vmatpush.msra.mxu0 0.0
    %5323 = vmatpush.msra.mxu0 0.0
    %5324 = vmatpush.msra.mxu0 0.0
    %5325 = vmatpush.msra.mxu0 0.0
    %5326 = vmatpush.msra.mxu0 0.0
    %5327 = vmatpush.msra.mxu0 %v2343
    %5328 = vmatpush.msra.mxu0 %v2331
    %5329 = vmatpush.msra.mxu0 %v2330
    %5330 = vmatpush.msra.mxu0 %v2329
    %5331 = vmatpush.msra.mxu0 %v2328
    %5332 = vmatpush.msra.mxu0 %v2327
    %5333 = vmatpush.msra.mxu0 %v2326
    %5334 = vmatpush.msra.mxu0 %v2325
    %5335 = vmatpush.msra.mxu0 %v2324
    %5336 = vmatmul.f32.gmra.mxu0 %v5298
    %v5337 = vpop.f32.mrf.mxu0
    %v5338 = vadd.f32 %v5318, %v5337
    %5339 = vdwg.mxu0
    %s5340 = scalar_lea.vmem [#allocation13], 4352
    %v5341 = vld [vmem:[%s5340] sm:$0xff]
    %v5342 = vld [vmem:[%s5340 + $0x8] sm:$0xff]
    %v5343 = vld [vmem:[%s5340 + $0x10] sm:$0xff]
    %v5344 = vld [vmem:[%s5340 + $0x18] sm:$0xff]
    %v5345 = vld [vmem:[%s5340 + $0x20] sm:$0xff]
    %v5346 = vld [vmem:[%s5340 + $0x28] sm:$0xff]
    %v5347 = vld [vmem:[%s5340 + $0x30] sm:$0xff]
    %v5348 = vld [vmem:[%s5340 + $0x38] sm:$0xff]
    %v5349 = vld [vmem:[%s5340 + $0x40] sm:$0xff]
    %v5350 = vld [vmem:[%s5340 + $0x48] sm:$0xff]
    %v5351 = vld [vmem:[%s5340 + $0x50] sm:$0xff]
    %v5352 = vld [vmem:[%s5340 + $0x58] sm:$0xff]
    %v5353 = vld [vmem:[%s5340 + $0x60] sm:$0xff]
    %v5354 = vld [vmem:[%s5340 + $0x68] sm:$0xff]
    %v5355 = vld [vmem:[%s5340 + $0x70] sm:$0xff]
    %v5356 = vld [vmem:[%s5340 + $0x78] sm:$0xff]
    %5357 = vmatpush.msra.mxu0 %v5356
    %5358 = vmatpush.msra.mxu0 %v5355
    %5359 = vmatpush.msra.mxu0 %v5354
    %5360 = vmatpush.msra.mxu0 %v5353
    %5361 = vmatpush.msra.mxu0 %v5352
    %5362 = vmatpush.msra.mxu0 %v5351
    %5363 = vmatpush.msra.mxu0 %v5350
    %5364 = vmatpush.msra.mxu0 %v5349
    %5365 = vmatpush.msra.mxu0 %v5348
    %5366 = vmatpush.msra.mxu0 %v5347
    %5367 = vmatpush.msra.mxu0 %v5346
    %5368 = vmatpush.msra.mxu0 %v5345
    %5369 = vmatpush.msra.mxu0 %v5344
    %5370 = vmatpush.msra.mxu0 %v5343
    %5371 = vmatpush.msra.mxu0 %v5342
    %5372 = vmatpush.msra.mxu0 %v5341
    %5373 = vmatmul.f32.gmra.mxu0 %v5338
    %v5374 = vpop.f32.mrf.mxu0
    %v5375 = vadd.f32 0.0, %v5374
    %5376 = vdwg.mxu0
    %v5377 = vadd.f32 %v5290, %v5375
    %s5378 = scalar_lea.vmem [#allocation11], 280
    %v5379 = vld [vmem:[%s5378] sm:$0xff]
    %5381 = vst [vmem:[#allocation1] ss:$2 sm:$0xff] %v5379
    %v5382 = vld.sshfl [vmem:[#allocation1] sm:$0xff pattern:$0x75316420]
    %v5383 = vld.sshfl [vmem:[#allocation1 + $0x8] sm:$0xff pattern:$0x75316420]
    %v5385 = vsel %vm2339, %v5383, 0
    %5387 = vmatpush.msra.mxu0 %v2323
    %5388 = vmatpush.msra.mxu0 %v2322
    %5389 = vmatpush.msra.mxu0 %v2321
    %5390 = vmatpush.msra.mxu0 %v2320
    %5391 = vmatpush.msra.mxu0 %v2319
    %5392 = vmatpush.msra.mxu0 %v2318
    %5393 = vmatpush.msra.mxu0 %v2317
    %5394 = vmatpush.msra.mxu0 %v2316
    %5395 = vmatpush.msra.mxu0 %v2315
    %5396 = vmatpush.msra.mxu0 %v2314
    %5397 = vmatpush.msra.mxu0 %v2313
    %5398 = vmatpush.msra.mxu0 %v2312
    %5399 = vmatpush.msra.mxu0 %v2311
    %5400 = vmatpush.msra.mxu0 %v2310
    %5401 = vmatpush.msra.mxu0 %v2309
    %5402 = vmatpush.msra.mxu0 %v2308
    %5403 = vmatmul.f32.gmra.mxu0 %v5382
    %v5404 = vpop.f32.mrf.mxu0
    %v5405 = vadd.f32 0.0, %v5404
    %5406 = vdwg.mxu0
    %5407 = vmatpush.msra.mxu0 0.0
    %5408 = vmatpush.msra.mxu0 0.0
    %5409 = vmatpush.msra.mxu0 0.0
    %5410 = vmatpush.msra.mxu0 0.0
    %5411 = vmatpush.msra.mxu0 0.0
    %5412 = vmatpush.msra.mxu0 0.0
    %5413 = vmatpush.msra.mxu0 0.0
    %5414 = vmatpush.msra.mxu0 %v2343
    %5415 = vmatpush.msra.mxu0 %v2331
    %5416 = vmatpush.msra.mxu0 %v2330
    %5417 = vmatpush.msra.mxu0 %v2329
    %5418 = vmatpush.msra.mxu0 %v2328
    %5419 = vmatpush.msra.mxu0 %v2327
    %5420 = vmatpush.msra.mxu0 %v2326
    %5421 = vmatpush.msra.mxu0 %v2325
    %5422 = vmatpush.msra.mxu0 %v2324
    %5423 = vmatmul.f32.gmra.mxu0 %v5385
    %v5424 = vpop.f32.mrf.mxu0
    %v5425 = vadd.f32 %v5405, %v5424
    %5426 = vdwg.mxu0
    %s5427 = scalar_lea.vmem [#allocation13], 4480
    %v5428 = vld [vmem:[%s5427] sm:$0xff]
    %v5429 = vld [vmem:[%s5427 + $0x8] sm:$0xff]
    %v5430 = vld [vmem:[%s5427 + $0x10] sm:$0xff]
    %v5431 = vld [vmem:[%s5427 + $0x18] sm:$0xff]
    %v5432 = vld [vmem:[%s5427 + $0x20] sm:$0xff]
    %v5433 = vld [vmem:[%s5427 + $0x28] sm:$0xff]
    %v5434 = vld [vmem:[%s5427 + $0x30] sm:$0xff]
    %v5435 = vld [vmem:[%s5427 + $0x38] sm:$0xff]
    %v5436 = vld [vmem:[%s5427 + $0x40] sm:$0xff]
    %v5437 = vld [vmem:[%s5427 + $0x48] sm:$0xff]
    %v5438 = vld [vmem:[%s5427 + $0x50] sm:$0xff]
    %v5439 = vld [vmem:[%s5427 + $0x58] sm:$0xff]
    %v5440 = vld [vmem:[%s5427 + $0x60] sm:$0xff]
    %v5441 = vld [vmem:[%s5427 + $0x68] sm:$0xff]
    %v5442 = vld [vmem:[%s5427 + $0x70] sm:$0xff]
    %v5443 = vld [vmem:[%s5427 + $0x78] sm:$0xff]
    %5444 = vmatpush.msra.mxu0 %v5443
    %5445 = vmatpush.msra.mxu0 %v5442
    %5446 = vmatpush.msra.mxu0 %v5441
    %5447 = vmatpush.msra.mxu0 %v5440
    %5448 = vmatpush.msra.mxu0 %v5439
    %5449 = vmatpush.msra.mxu0 %v5438
    %5450 = vmatpush.msra.mxu0 %v5437
    %5451 = vmatpush.msra.mxu0 %v5436
    %5452 = vmatpush.msra.mxu0 %v5435
    %5453 = vmatpush.msra.mxu0 %v5434
    %5454 = vmatpush.msra.mxu0 %v5433
    %5455 = vmatpush.msra.mxu0 %v5432
    %5456 = vmatpush.msra.mxu0 %v5431
    %5457 = vmatpush.msra.mxu0 %v5430
    %5458 = vmatpush.msra.mxu0 %v5429
    %5459 = vmatpush.msra.mxu0 %v5428
    %5460 = vmatmul.f32.gmra.mxu0 %v5425
    %v5461 = vpop.f32.mrf.mxu0
    %v5462 = vadd.f32 0.0, %v5461
    %5463 = vdwg.mxu0
    %v5464 = vadd.f32 %v5377, %v5462
    %s5465 = scalar_lea.vmem [#allocation11], 288
    %v5466 = vld [vmem:[%s5465] sm:$0xff]
    %5468 = vst [vmem:[#allocation1] ss:$2 sm:$0xff] %v5466
    %v5469 = vld.sshfl [vmem:[#allocation1] sm:$0xff pattern:$0x75316420]
    %v5470 = vld.sshfl [vmem:[#allocation1 + $0x8] sm:$0xff pattern:$0x75316420]
    %v5472 = vsel %vm2339, %v5470, 0
    %5474 = vmatpush.msra.mxu0 %v2323
    %5475 = vmatpush.msra.mxu0 %v2322
    %5476 = vmatpush.msra.mxu0 %v2321
    %5477 = vmatpush.msra.mxu0 %v2320
    %5478 = vmatpush.msra.mxu0 %v2319
    %5479 = vmatpush.msra.mxu0 %v2318
    %5480 = vmatpush.msra.mxu0 %v2317
    %5481 = vmatpush.msra.mxu0 %v2316
    %5482 = vmatpush.msra.mxu0 %v2315
    %5483 = vmatpush.msra.mxu0 %v2314
    %5484 = vmatpush.msra.mxu0 %v2313
    %5485 = vmatpush.msra.mxu0 %v2312
    %5486 = vmatpush.msra.mxu0 %v2311
    %5487 = vmatpush.msra.mxu0 %v2310
    %5488 = vmatpush.msra.mxu0 %v2309
    %5489 = vmatpush.msra.mxu0 %v2308
    %5490 = vmatmul.f32.gmra.mxu0 %v5469
    %v5491 = vpop.f32.mrf.mxu0
    %v5492 = vadd.f32 0.0, %v5491
    %5493 = vdwg.mxu0
    %5494 = vmatpush.msra.mxu0 0.0
    %5495 = vmatpush.msra.mxu0 0.0
    %5496 = vmatpush.msra.mxu0 0.0
    %5497 = vmatpush.msra.mxu0 0.0
    %5498 = vmatpush.msra.mxu0 0.0
    %5499 = vmatpush.msra.mxu0 0.0
    %5500 = vmatpush.msra.mxu0 0.0
    %5501 = vmatpush.msra.mxu0 %v2343
    %5502 = vmatpush.msra.mxu0 %v2331
    %5503 = vmatpush.msra.mxu0 %v2330
    %5504 = vmatpush.msra.mxu0 %v2329
    %5505 = vmatpush.msra.mxu0 %v2328
    %5506 = vmatpush.msra.mxu0 %v2327
    %5507 = vmatpush.msra.mxu0 %v2326
    %5508 = vmatpush.msra.mxu0 %v2325
    %5509 = vmatpush.msra.mxu0 %v2324
    %5510 = vmatmul.f32.gmra.mxu0 %v5472
    %v5511 = vpop.f32.mrf.mxu0
    %v5512 = vadd.f32 %v5492, %v5511
    %5513 = vdwg.mxu0
    %s5514 = scalar_lea.vmem [#allocation13], 4608
    %v5515 = vld [vmem:[%s5514] sm:$0xff]
    %v5516 = vld [vmem:[%s5514 + $0x8] sm:$0xff]
    %v5517 = vld [vmem:[%s5514 + $0x10] sm:$0xff]
    %v5518 = vld [vmem:[%s5514 + $0x18] sm:$0xff]
    %v5519 = vld [vmem:[%s5514 + $0x20] sm:$0xff]
    %v5520 = vld [vmem:[%s5514 + $0x28] sm:$0xff]
    %v5521 = vld [vmem:[%s5514 + $0x30] sm:$0xff]
    %v5522 = vld [vmem:[%s5514 + $0x38] sm:$0xff]
    %v5523 = vld [vmem:[%s5514 + $0x40] sm:$0xff]
    %v5524 = vld [vmem:[%s5514 + $0x48] sm:$0xff]
    %v5525 = vld [vmem:[%s5514 + $0x50] sm:$0xff]
    %v5526 = vld [vmem:[%s5514 + $0x58] sm:$0xff]
    %v5527 = vld [vmem:[%s5514 + $0x60] sm:$0xff]
    %v5528 = vld [vmem:[%s5514 + $0x68] sm:$0xff]
    %v5529 = vld [vmem:[%s5514 + $0x70] sm:$0xff]
    %v5530 = vld [vmem:[%s5514 + $0x78] sm:$0xff]
    %5531 = vmatpush.msra.mxu0 %v5530
    %5532 = vmatpush.msra.mxu0 %v5529
    %5533 = vmatpush.msra.mxu0 %v5528
    %5534 = vmatpush.msra.mxu0 %v5527
    %5535 = vmatpush.msra.mxu0 %v5526
    %5536 = vmatpush.msra.mxu0 %v5525
    %5537 = vmatpush.msra.mxu0 %v5524
    %5538 = vmatpush.msra.mxu0 %v5523
    %5539 = vmatpush.msra.mxu0 %v5522
    %5540 = vmatpush.msra.mxu0 %v5521
    %5541 = vmatpush.msra.mxu0 %v5520
    %5542 = vmatpush.msra.mxu0 %v5519
    %5543 = vmatpush.msra.mxu0 %v5518
    %5544 = vmatpush.msra.mxu0 %v5517
    %5545 = vmatpush.msra.mxu0 %v5516
    %5546 = vmatpush.msra.mxu0 %v5515
    %5547 = vmatmul.f32.gmra.mxu0 %v5512
    %v5548 = vpop.f32.mrf.mxu0
    %v5549 = vadd.f32 0.0, %v5548
    %5550 = vdwg.mxu0
    %v5551 = vadd.f32 %v5464, %v5549
    %s5552 = scalar_lea.vmem [#allocation11], 296
    %v5553 = vld [vmem:[%s5552] sm:$0xff]
    %5555 = vst [vmem:[#allocation1] ss:$2 sm:$0xff] %v5553
    %v5556 = vld.sshfl [vmem:[#allocation1] sm:$0xff pattern:$0x75316420]
    %v5557 = vld.sshfl [vmem:[#allocation1 + $0x8] sm:$0xff pattern:$0x75316420]
    %v5559 = vsel %vm2339, %v5557, 0
    %5561 = vmatpush.msra.mxu0 %v2323
    %5562 = vmatpush.msra.mxu0 %v2322
    %5563 = vmatpush.msra.mxu0 %v2321
    %5564 = vmatpush.msra.mxu0 %v2320
    %5565 = vmatpush.msra.mxu0 %v2319
    %5566 = vmatpush.msra.mxu0 %v2318
    %5567 = vmatpush.msra.mxu0 %v2317
    %5568 = vmatpush.msra.mxu0 %v2316
    %5569 = vmatpush.msra.mxu0 %v2315
    %5570 = vmatpush.msra.mxu0 %v2314
    %5571 = vmatpush.msra.mxu0 %v2313
    %5572 = vmatpush.msra.mxu0 %v2312
    %5573 = vmatpush.msra.mxu0 %v2311
    %5574 = vmatpush.msra.mxu0 %v2310
    %5575 = vmatpush.msra.mxu0 %v2309
    %5576 = vmatpush.msra.mxu0 %v2308
    %5577 = vmatmul.f32.gmra.mxu0 %v5556
    %v5578 = vpop.f32.mrf.mxu0
    %v5579 = vadd.f32 0.0, %v5578
    %5580 = vdwg.mxu0
    %5581 = vmatpush.msra.mxu0 0.0
    %5582 = vmatpush.msra.mxu0 0.0
    %5583 = vmatpush.msra.mxu0 0.0
    %5584 = vmatpush.msra.mxu0 0.0
    %5585 = vmatpush.msra.mxu0 0.0
    %5586 = vmatpush.msra.mxu0 0.0
    %5587 = vmatpush.msra.mxu0 0.0
    %5588 = vmatpush.msra.mxu0 %v2343
    %5589 = vmatpush.msra.mxu0 %v2331
    %5590 = vmatpush.msra.mxu0 %v2330
    %5591 = vmatpush.msra.mxu0 %v2329
    %5592 = vmatpush.msra.mxu0 %v2328
    %5593 = vmatpush.msra.mxu0 %v2327
    %5594 = vmatpush.msra.mxu0 %v2326
    %5595 = vmatpush.msra.mxu0 %v2325
    %5596 = vmatpush.msra.mxu0 %v2324
    %5597 = vmatmul.f32.gmra.mxu0 %v5559
    %v5598 = vpop.f32.mrf.mxu0
    %v5599 = vadd.f32 %v5579, %v5598
    %5600 = vdwg.mxu0
    %s5601 = scalar_lea.vmem [#allocation13], 4736
    %v5602 = vld [vmem:[%s5601] sm:$0xff]
    %v5603 = vld [vmem:[%s5601 + $0x8] sm:$0xff]
    %v5604 = vld [vmem:[%s5601 + $0x10] sm:$0xff]
    %v5605 = vld [vmem:[%s5601 + $0x18] sm:$0xff]
    %v5606 = vld [vmem:[%s5601 + $0x20] sm:$0xff]
    %v5607 = vld [vmem:[%s5601 + $0x28] sm:$0xff]
    %v5608 = vld [vmem:[%s5601 + $0x30] sm:$0xff]
    %v5609 = vld [vmem:[%s5601 + $0x38] sm:$0xff]
    %v5610 = vld [vmem:[%s5601 + $0x40] sm:$0xff]
    %v5611 = vld [vmem:[%s5601 + $0x48] sm:$0xff]
    %v5612 = vld [vmem:[%s5601 + $0x50] sm:$0xff]
    %v5613 = vld [vmem:[%s5601 + $0x58] sm:$0xff]
    %v5614 = vld [vmem:[%s5601 + $0x60] sm:$0xff]
    %v5615 = vld [vmem:[%s5601 + $0x68] sm:$0xff]
    %v5616 = vld [vmem:[%s5601 + $0x70] sm:$0xff]
    %v5617 = vld [vmem:[%s5601 + $0x78] sm:$0xff]
    %5618 = vmatpush.msra.mxu0 %v5617
    %5619 = vmatpush.msra.mxu0 %v5616
    %5620 = vmatpush.msra.mxu0 %v5615
    %5621 = vmatpush.msra.mxu0 %v5614
    %5622 = vmatpush.msra.mxu0 %v5613
    %5623 = vmatpush.msra.mxu0 %v5612
    %5624 = vmatpush.msra.mxu0 %v5611
    %5625 = vmatpush.msra.mxu0 %v5610
    %5626 = vmatpush.msra.mxu0 %v5609
    %5627 = vmatpush.msra.mxu0 %v5608
    %5628 = vmatpush.msra.mxu0 %v5607
    %5629 = vmatpush.msra.mxu0 %v5606
    %5630 = vmatpush.msra.mxu0 %v5605
    %5631 = vmatpush.msra.mxu0 %v5604
    %5632 = vmatpush.msra.mxu0 %v5603
    %5633 = vmatpush.msra.mxu0 %v5602
    %5634 = vmatmul.f32.gmra.mxu0 %v5599
    %v5635 = vpop.f32.mrf.mxu0
    %v5636 = vadd.f32 0.0, %v5635
    %5637 = vdwg.mxu0
    %v5638 = vadd.f32 %v5551, %v5636
    %s5639 = scalar_lea.vmem [#allocation11], 304
    %v5640 = vld [vmem:[%s5639] sm:$0xff]
    %5642 = vst [vmem:[#allocation1] ss:$2 sm:$0xff] %v5640
    %v5643 = vld.sshfl [vmem:[#allocation1] sm:$0xff pattern:$0x75316420]
    %v5644 = vld.sshfl [vmem:[#allocation1 + $0x8] sm:$0xff pattern:$0x75316420]
    %v5646 = vsel %vm2339, %v5644, 0
    %5648 = vmatpush.msra.mxu0 %v2323
    %5649 = vmatpush.msra.mxu0 %v2322
    %5650 = vmatpush.msra.mxu0 %v2321
    %5651 = vmatpush.msra.mxu0 %v2320
    %5652 = vmatpush.msra.mxu0 %v2319
    %5653 = vmatpush.msra.mxu0 %v2318
    %5654 = vmatpush.msra.mxu0 %v2317
    %5655 = vmatpush.msra.mxu0 %v2316
    %5656 = vmatpush.msra.mxu0 %v2315
    %5657 = vmatpush.msra.mxu0 %v2314
    %5658 = vmatpush.msra.mxu0 %v2313
    %5659 = vmatpush.msra.mxu0 %v2312
    %5660 = vmatpush.msra.mxu0 %v2311
    %5661 = vmatpush.msra.mxu0 %v2310
    %5662 = vmatpush.msra.mxu0 %v2309
    %5663 = vmatpush.msra.mxu0 %v2308
    %5664 = vmatmul.f32.gmra.mxu0 %v5643
    %v5665 = vpop.f32.mrf.mxu0
    %v5666 = vadd.f32 0.0, %v5665
    %5667 = vdwg.mxu0
    %5668 = vmatpush.msra.mxu0 0.0
    %5669 = vmatpush.msra.mxu0 0.0
    %5670 = vmatpush.msra.mxu0 0.0
    %5671 = vmatpush.msra.mxu0 0.0
    %5672 = vmatpush.msra.mxu0 0.0
    %5673 = vmatpush.msra.mxu0 0.0
    %5674 = vmatpush.msra.mxu0 0.0
    %5675 = vmatpush.msra.mxu0 %v2343
    %5676 = vmatpush.msra.mxu0 %v2331
    %5677 = vmatpush.msra.mxu0 %v2330
    %5678 = vmatpush.msra.mxu0 %v2329
    %5679 = vmatpush.msra.mxu0 %v2328
    %5680 = vmatpush.msra.mxu0 %v2327
    %5681 = vmatpush.msra.mxu0 %v2326
    %5682 = vmatpush.msra.mxu0 %v2325
    %5683 = vmatpush.msra.mxu0 %v2324
    %5684 = vmatmul.f32.gmra.mxu0 %v5646
    %v5685 = vpop.f32.mrf.mxu0
    %v5686 = vadd.f32 %v5666, %v5685
    %5687 = vdwg.mxu0
    %s5688 = scalar_lea.vmem [#allocation13], 4864
    %v5689 = vld [vmem:[%s5688] sm:$0xff]
    %v5690 = vld [vmem:[%s5688 + $0x8] sm:$0xff]
    %v5691 = vld [vmem:[%s5688 + $0x10] sm:$0xff]
    %v5692 = vld [vmem:[%s5688 + $0x18] sm:$0xff]
    %v5693 = vld [vmem:[%s5688 + $0x20] sm:$0xff]
    %v5694 = vld [vmem:[%s5688 + $0x28] sm:$0xff]
    %v5695 = vld [vmem:[%s5688 + $0x30] sm:$0xff]
    %v5696 = vld [vmem:[%s5688 + $0x38] sm:$0xff]
    %v5697 = vld [vmem:[%s5688 + $0x40] sm:$0xff]
    %v5698 = vld [vmem:[%s5688 + $0x48] sm:$0xff]
    %v5699 = vld [vmem:[%s5688 + $0x50] sm:$0xff]
    %v5700 = vld [vmem:[%s5688 + $0x58] sm:$0xff]
    %v5701 = vld [vmem:[%s5688 + $0x60] sm:$0xff]
    %v5702 = vld [vmem:[%s5688 + $0x68] sm:$0xff]
    %v5703 = vld [vmem:[%s5688 + $0x70] sm:$0xff]
    %v5704 = vld [vmem:[%s5688 + $0x78] sm:$0xff]
    %5705 = vmatpush.msra.mxu0 %v5704
    %5706 = vmatpush.msra.mxu0 %v5703
    %5707 = vmatpush.msra.mxu0 %v5702
    %5708 = vmatpush.msra.mxu0 %v5701
    %5709 = vmatpush.msra.mxu0 %v5700
    %5710 = vmatpush.msra.mxu0 %v5699
    %5711 = vmatpush.msra.mxu0 %v5698
    %5712 = vmatpush.msra.mxu0 %v5697
    %5713 = vmatpush.msra.mxu0 %v5696
    %5714 = vmatpush.msra.mxu0 %v5695
    %5715 = vmatpush.msra.mxu0 %v5694
    %5716 = vmatpush.msra.mxu0 %v5693
    %5717 = vmatpush.msra.mxu0 %v5692
    %5718 = vmatpush.msra.mxu0 %v5691
    %5719 = vmatpush.msra.mxu0 %v5690
    %5720 = vmatpush.msra.mxu0 %v5689
    %5721 = vmatmul.f32.gmra.mxu0 %v5686
    %v5722 = vpop.f32.mrf.mxu0
    %v5723 = vadd.f32 0.0, %v5722
    %5724 = vdwg.mxu0
    %v5725 = vadd.f32 %v5638, %v5723
    %s5726 = scalar_lea.vmem [#allocation11], 312
    %v5727 = vld [vmem:[%s5726] sm:$0xff]
    %5729 = vst [vmem:[#allocation1] ss:$2 sm:$0xff] %v5727
    %v5730 = vld.sshfl [vmem:[#allocation1] sm:$0xff pattern:$0x75316420]
    %v5731 = vld.sshfl [vmem:[#allocation1 + $0x8] sm:$0xff pattern:$0x75316420]
    %v5733 = vsel %vm2339, %v5731, 0
    %5735 = vmatpush.msra.mxu0 %v2323
    %5736 = vmatpush.msra.mxu0 %v2322
    %5737 = vmatpush.msra.mxu0 %v2321
    %5738 = vmatpush.msra.mxu0 %v2320
    %5739 = vmatpush.msra.mxu0 %v2319
    %5740 = vmatpush.msra.mxu0 %v2318
    %5741 = vmatpush.msra.mxu0 %v2317
    %5742 = vmatpush.msra.mxu0 %v2316
    %5743 = vmatpush.msra.mxu0 %v2315
    %5744 = vmatpush.msra.mxu0 %v2314
    %5745 = vmatpush.msra.mxu0 %v2313
    %5746 = vmatpush.msra.mxu0 %v2312
    %5747 = vmatpush.msra.mxu0 %v2311
    %5748 = vmatpush.msra.mxu0 %v2310
    %5749 = vmatpush.msra.mxu0 %v2309
    %5750 = vmatpush.msra.mxu0 %v2308
    %5751 = vmatmul.f32.gmra.mxu0 %v5730
    %v5752 = vpop.f32.mrf.mxu0
    %v5753 = vadd.f32 0.0, %v5752
    %5754 = vdwg.mxu0
    %5755 = vmatpush.msra.mxu0 0.0
    %5756 = vmatpush.msra.mxu0 0.0
    %5757 = vmatpush.msra.mxu0 0.0
    %5758 = vmatpush.msra.mxu0 0.0
    %5759 = vmatpush.msra.mxu0 0.0
    %5760 = vmatpush.msra.mxu0 0.0
    %5761 = vmatpush.msra.mxu0 0.0
    %5762 = vmatpush.msra.mxu0 %v2343
    %5763 = vmatpush.msra.mxu0 %v2331
    %5764 = vmatpush.msra.mxu0 %v2330
    %5765 = vmatpush.msra.mxu0 %v2329
    %5766 = vmatpush.msra.mxu0 %v2328
    %5767 = vmatpush.msra.mxu0 %v2327
    %5768 = vmatpush.msra.mxu0 %v2326
    %5769 = vmatpush.msra.mxu0 %v2325
    %5770 = vmatpush.msra.mxu0 %v2324
    %5771 = vmatmul.f32.gmra.mxu0 %v5733
    %v5772 = vpop.f32.mrf.mxu0
    %v5773 = vadd.f32 %v5753, %v5772
    %5774 = vdwg.mxu0
    %s5775 = scalar_lea.vmem [#allocation13], 4992
    %v5776 = vld [vmem:[%s5775] sm:$0xff]
    %v5777 = vld [vmem:[%s5775 + $0x8] sm:$0xff]
    %v5778 = vld [vmem:[%s5775 + $0x10] sm:$0xff]
    %v5779 = vld [vmem:[%s5775 + $0x18] sm:$0xff]
    %v5780 = vld [vmem:[%s5775 + $0x20] sm:$0xff]
    %v5781 = vld [vmem:[%s5775 + $0x28] sm:$0xff]
    %v5782 = vld [vmem:[%s5775 + $0x30] sm:$0xff]
    %v5783 = vld [vmem:[%s5775 + $0x38] sm:$0xff]
    %v5784 = vld [vmem:[%s5775 + $0x40] sm:$0xff]
    %v5785 = vld [vmem:[%s5775 + $0x48] sm:$0xff]
    %v5786 = vld [vmem:[%s5775 + $0x50] sm:$0xff]
    %v5787 = vld [vmem:[%s5775 + $0x58] sm:$0xff]
    %v5788 = vld [vmem:[%s5775 + $0x60] sm:$0xff]
    %v5789 = vld [vmem:[%s5775 + $0x68] sm:$0xff]
    %v5790 = vld [vmem:[%s5775 + $0x70] sm:$0xff]
    %v5791 = vld [vmem:[%s5775 + $0x78] sm:$0xff]
    %5792 = vmatpush.msra.mxu0 %v5791
    %5793 = vmatpush.msra.mxu0 %v5790
    %5794 = vmatpush.msra.mxu0 %v5789
    %5795 = vmatpush.msra.mxu0 %v5788
    %5796 = vmatpush.msra.mxu0 %v5787
    %5797 = vmatpush.msra.mxu0 %v5786
    %5798 = vmatpush.msra.mxu0 %v5785
    %5799 = vmatpush.msra.mxu0 %v5784
    %5800 = vmatpush.msra.mxu0 %v5783
    %5801 = vmatpush.msra.mxu0 %v5782
    %5802 = vmatpush.msra.mxu0 %v5781
    %5803 = vmatpush.msra.mxu0 %v5780
    %5804 = vmatpush.msra.mxu0 %v5779
    %5805 = vmatpush.msra.mxu0 %v5778
    %5806 = vmatpush.msra.mxu0 %v5777
    %5807 = vmatpush.msra.mxu0 %v5776
    %5808 = vmatmul.f32.gmra.mxu0 %v5773
    %v5809 = vpop.f32.mrf.mxu0
    %v5810 = vadd.f32 0.0, %v5809
    %5811 = vdwg.mxu0
    %v5812 = vadd.f32 %v5725, %v5810
    %s5813 = scalar_lea.vmem [#allocation11], 320
    %v5814 = vld [vmem:[%s5813] sm:$0xff]
    %5816 = vst [vmem:[#allocation1] ss:$2 sm:$0xff] %v5814
    %v5817 = vld.sshfl [vmem:[#allocation1] sm:$0xff pattern:$0x75316420]
    %v5818 = vld.sshfl [vmem:[#allocation1 + $0x8] sm:$0xff pattern:$0x75316420]
    %v5820 = vsel %vm2339, %v5818, 0
    %5822 = vmatpush.msra.mxu0 %v2323
    %5823 = vmatpush.msra.mxu0 %v2322
    %5824 = vmatpush.msra.mxu0 %v2321
    %5825 = vmatpush.msra.mxu0 %v2320
    %5826 = vmatpush.msra.mxu0 %v2319
    %5827 = vmatpush.msra.mxu0 %v2318
    %5828 = vmatpush.msra.mxu0 %v2317
    %5829 = vmatpush.msra.mxu0 %v2316
    %5830 = vmatpush.msra.mxu0 %v2315
    %5831 = vmatpush.msra.mxu0 %v2314
    %5832 = vmatpush.msra.mxu0 %v2313
    %5833 = vmatpush.msra.mxu0 %v2312
    %5834 = vmatpush.msra.mxu0 %v2311
    %5835 = vmatpush.msra.mxu0 %v2310
    %5836 = vmatpush.msra.mxu0 %v2309
    %5837 = vmatpush.msra.mxu0 %v2308
    %5838 = vmatmul.f32.gmra.mxu0 %v5817
    %v5839 = vpop.f32.mrf.mxu0
    %v5840 = vadd.f32 0.0, %v5839
    %5841 = vdwg.mxu0
    %5842 = vmatpush.msra.mxu0 0.0
    %5843 = vmatpush.msra.mxu0 0.0
    %5844 = vmatpush.msra.mxu0 0.0
    %5845 = vmatpush.msra.mxu0 0.0
    %5846 = vmatpush.msra.mxu0 0.0
    %5847 = vmatpush.msra.mxu0 0.0
    %5848 = vmatpush.msra.mxu0 0.0
    %5849 = vmatpush.msra.mxu0 %v2343
    %5850 = vmatpush.msra.mxu0 %v2331
    %5851 = vmatpush.msra.mxu0 %v2330
    %5852 = vmatpush.msra.mxu0 %v2329
    %5853 = vmatpush.msra.mxu0 %v2328
    %5854 = vmatpush.msra.mxu0 %v2327
    %5855 = vmatpush.msra.mxu0 %v2326
    %5856 = vmatpush.msra.mxu0 %v2325
    %5857 = vmatpush.msra.mxu0 %v2324
    %5858 = vmatmul.f32.gmra.mxu0 %v5820
    %v5859 = vpop.f32.mrf.mxu0
    %v5860 = vadd.f32 %v5840, %v5859
    %5861 = vdwg.mxu0
    %s5862 = scalar_lea.vmem [#allocation13], 5120
    %v5863 = vld [vmem:[%s5862] sm:$0xff]
    %v5864 = vld [vmem:[%s5862 + $0x8] sm:$0xff]
    %v5865 = vld [vmem:[%s5862 + $0x10] sm:$0xff]
    %v5866 = vld [vmem:[%s5862 + $0x18] sm:$0xff]
    %v5867 = vld [vmem:[%s5862 + $0x20] sm:$0xff]
    %v5868 = vld [vmem:[%s5862 + $0x28] sm:$0xff]
    %v5869 = vld [vmem:[%s5862 + $0x30] sm:$0xff]
    %v5870 = vld [vmem:[%s5862 + $0x38] sm:$0xff]
    %v5871 = vld [vmem:[%s5862 + $0x40] sm:$0xff]
    %v5872 = vld [vmem:[%s5862 + $0x48] sm:$0xff]
    %v5873 = vld [vmem:[%s5862 + $0x50] sm:$0xff]
    %v5874 = vld [vmem:[%s5862 + $0x58] sm:$0xff]
    %v5875 = vld [vmem:[%s5862 + $0x60] sm:$0xff]
    %v5876 = vld [vmem:[%s5862 + $0x68] sm:$0xff]
    %v5877 = vld [vmem:[%s5862 + $0x70] sm:$0xff]
    %v5878 = vld [vmem:[%s5862 + $0x78] sm:$0xff]
    %5879 = vmatpush.msra.mxu0 %v5878
    %5880 = vmatpush.msra.mxu0 %v5877
    %5881 = vmatpush.msra.mxu0 %v5876
    %5882 = vmatpush.msra.mxu0 %v5875
    %5883 = vmatpush.msra.mxu0 %v5874
    %5884 = vmatpush.msra.mxu0 %v5873
    %5885 = vmatpush.msra.mxu0 %v5872
    %5886 = vmatpush.msra.mxu0 %v5871
    %5887 = vmatpush.msra.mxu0 %v5870
    %5888 = vmatpush.msra.mxu0 %v5869
    %5889 = vmatpush.msra.mxu0 %v5868
    %5890 = vmatpush.msra.mxu0 %v5867
    %5891 = vmatpush.msra.mxu0 %v5866
    %5892 = vmatpush.msra.mxu0 %v5865
    %5893 = vmatpush.msra.mxu0 %v5864
    %5894 = vmatpush.msra.mxu0 %v5863
    %5895 = vmatmul.f32.gmra.mxu0 %v5860
    %v5896 = vpop.f32.mrf.mxu0
    %v5897 = vadd.f32 0.0, %v5896
    %5898 = vdwg.mxu0
    %v5899 = vadd.f32 %v5812, %v5897
    %s5900 = scalar_lea.vmem [#allocation11], 328
    %v5901 = vld [vmem:[%s5900] sm:$0xff]
    %5903 = vst [vmem:[#allocation1] ss:$2 sm:$0xff] %v5901
    %v5904 = vld.sshfl [vmem:[#allocation1] sm:$0xff pattern:$0x75316420]
    %v5905 = vld.sshfl [vmem:[#allocation1 + $0x8] sm:$0xff pattern:$0x75316420]
    %v5907 = vsel %vm2339, %v5905, 0
    %5909 = vmatpush.msra.mxu0 %v2323
    %5910 = vmatpush.msra.mxu0 %v2322
    %5911 = vmatpush.msra.mxu0 %v2321
    %5912 = vmatpush.msra.mxu0 %v2320
    %5913 = vmatpush.msra.mxu0 %v2319
    %5914 = vmatpush.msra.mxu0 %v2318
    %5915 = vmatpush.msra.mxu0 %v2317
    %5916 = vmatpush.msra.mxu0 %v2316
    %5917 = vmatpush.msra.mxu0 %v2315
    %5918 = vmatpush.msra.mxu0 %v2314
    %5919 = vmatpush.msra.mxu0 %v2313
    %5920 = vmatpush.msra.mxu0 %v2312
    %5921 = vmatpush.msra.mxu0 %v2311
    %5922 = vmatpush.msra.mxu0 %v2310
    %5923 = vmatpush.msra.mxu0 %v2309
    %5924 = vmatpush.msra.mxu0 %v2308
    %5925 = vmatmul.f32.gmra.mxu0 %v5904
    %v5926 = vpop.f32.mrf.mxu0
    %v5927 = vadd.f32 0.0, %v5926
    %5928 = vdwg.mxu0
    %5929 = vmatpush.msra.mxu0 0.0
    %5930 = vmatpush.msra.mxu0 0.0
    %5931 = vmatpush.msra.mxu0 0.0
    %5932 = vmatpush.msra.mxu0 0.0
    %5933 = vmatpush.msra.mxu0 0.0
    %5934 = vmatpush.msra.mxu0 0.0
    %5935 = vmatpush.msra.mxu0 0.0
    %5936 = vmatpush.msra.mxu0 %v2343
    %5937 = vmatpush.msra.mxu0 %v2331
    %5938 = vmatpush.msra.mxu0 %v2330
    %5939 = vmatpush.msra.mxu0 %v2329
    %5940 = vmatpush.msra.mxu0 %v2328
    %5941 = vmatpush.msra.mxu0 %v2327
    %5942 = vmatpush.msra.mxu0 %v2326
    %5943 = vmatpush.msra.mxu0 %v2325
    %5944 = vmatpush.msra.mxu0 %v2324
    %5945 = vmatmul.f32.gmra.mxu0 %v5907
    %v5946 = vpop.f32.mrf.mxu0
    %v5947 = vadd.f32 %v5927, %v5946
    %5948 = vdwg.mxu0
    %s5949 = scalar_lea.vmem [#allocation13], 5248
    %v5950 = vld [vmem:[%s5949] sm:$0xff]
    %v5951 = vld [vmem:[%s5949 + $0x8] sm:$0xff]
    %v5952 = vld [vmem:[%s5949 + $0x10] sm:$0xff]
    %v5953 = vld [vmem:[%s5949 + $0x18] sm:$0xff]
    %v5954 = vld [vmem:[%s5949 + $0x20] sm:$0xff]
    %v5955 = vld [vmem:[%s5949 + $0x28] sm:$0xff]
    %v5956 = vld [vmem:[%s5949 + $0x30] sm:$0xff]
    %v5957 = vld [vmem:[%s5949 + $0x38] sm:$0xff]
    %v5958 = vld [vmem:[%s5949 + $0x40] sm:$0xff]
    %v5959 = vld [vmem:[%s5949 + $0x48] sm:$0xff]
    %v5960 = vld [vmem:[%s5949 + $0x50] sm:$0xff]
    %v5961 = vld [vmem:[%s5949 + $0x58] sm:$0xff]
    %v5962 = vld [vmem:[%s5949 + $0x60] sm:$0xff]
    %v5963 = vld [vmem:[%s5949 + $0x68] sm:$0xff]
    %v5964 = vld [vmem:[%s5949 + $0x70] sm:$0xff]
    %v5965 = vld [vmem:[%s5949 + $0x78] sm:$0xff]
    %5966 = vmatpush.msra.mxu0 %v5965
    %5967 = vmatpush.msra.mxu0 %v5964
    %5968 = vmatpush.msra.mxu0 %v5963
    %5969 = vmatpush.msra.mxu0 %v5962
    %5970 = vmatpush.msra.mxu0 %v5961
    %5971 = vmatpush.msra.mxu0 %v5960
    %5972 = vmatpush.msra.mxu0 %v5959
    %5973 = vmatpush.msra.mxu0 %v5958
    %5974 = vmatpush.msra.mxu0 %v5957
    %5975 = vmatpush.msra.mxu0 %v5956
    %5976 = vmatpush.msra.mxu0 %v5955
    %5977 = vmatpush.msra.mxu0 %v5954
    %5978 = vmatpush.msra.mxu0 %v5953
    %5979 = vmatpush.msra.mxu0 %v5952
    %5980 = vmatpush.msra.mxu0 %v5951
    %5981 = vmatpush.msra.mxu0 %v5950
    %5982 = vmatmul.f32.gmra.mxu0 %v5947
    %v5983 = vpop.f32.mrf.mxu0
    %v5984 = vadd.f32 0.0, %v5983
    %5985 = vdwg.mxu0
    %v5986 = vadd.f32 %v5899, %v5984
    %s5987 = scalar_lea.vmem [#allocation11], 336
    %v5988 = vld [vmem:[%s5987] sm:$0xff]
    %5990 = vst [vmem:[#allocation1] ss:$2 sm:$0xff] %v5988
    %v5991 = vld.sshfl [vmem:[#allocation1] sm:$0xff pattern:$0x75316420]
    %v5992 = vld.sshfl [vmem:[#allocation1 + $0x8] sm:$0xff pattern:$0x75316420]
    %v5994 = vsel %vm2339, %v5992, 0
    %5996 = vmatpush.msra.mxu0 %v2323
    %5997 = vmatpush.msra.mxu0 %v2322
    %5998 = vmatpush.msra.mxu0 %v2321
    %5999 = vmatpush.msra.mxu0 %v2320
    %6000 = vmatpush.msra.mxu0 %v2319
    %6001 = vmatpush.msra.mxu0 %v2318
    %6002 = vmatpush.msra.mxu0 %v2317
    %6003 = vmatpush.msra.mxu0 %v2316
    %6004 = vmatpush.msra.mxu0 %v2315
    %6005 = vmatpush.msra.mxu0 %v2314
    %6006 = vmatpush.msra.mxu0 %v2313
    %6007 = vmatpush.msra.mxu0 %v2312
    %6008 = vmatpush.msra.mxu0 %v2311
    %6009 = vmatpush.msra.mxu0 %v2310
    %6010 = vmatpush.msra.mxu0 %v2309
    %6011 = vmatpush.msra.mxu0 %v2308
    %6012 = vmatmul.f32.gmra.mxu0 %v5991
    %v6013 = vpop.f32.mrf.mxu0
    %v6014 = vadd.f32 0.0, %v6013
    %6015 = vdwg.mxu0
    %6016 = vmatpush.msra.mxu0 0.0
    %6017 = vmatpush.msra.mxu0 0.0
    %6018 = vmatpush.msra.mxu0 0.0
    %6019 = vmatpush.msra.mxu0 0.0
    %6020 = vmatpush.msra.mxu0 0.0
    %6021 = vmatpush.msra.mxu0 0.0
    %6022 = vmatpush.msra.mxu0 0.0
    %6023 = vmatpush.msra.mxu0 %v2343
    %6024 = vmatpush.msra.mxu0 %v2331
    %6025 = vmatpush.msra.mxu0 %v2330
    %6026 = vmatpush.msra.mxu0 %v2329
    %6027 = vmatpush.msra.mxu0 %v2328
    %6028 = vmatpush.msra.mxu0 %v2327
    %6029 = vmatpush.msra.mxu0 %v2326
    %6030 = vmatpush.msra.mxu0 %v2325
    %6031 = vmatpush.msra.mxu0 %v2324
    %6032 = vmatmul.f32.gmra.mxu0 %v5994
    %v6033 = vpop.f32.mrf.mxu0
    %v6034 = vadd.f32 %v6014, %v6033
    %6035 = vdwg.mxu0
    %s6036 = scalar_lea.vmem [#allocation13], 5376
    %v6037 = vld [vmem:[%s6036] sm:$0xff]
    %v6038 = vld [vmem:[%s6036 + $0x8] sm:$0xff]
    %v6039 = vld [vmem:[%s6036 + $0x10] sm:$0xff]
    %v6040 = vld [vmem:[%s6036 + $0x18] sm:$0xff]
    %v6041 = vld [vmem:[%s6036 + $0x20] sm:$0xff]
    %v6042 = vld [vmem:[%s6036 + $0x28] sm:$0xff]
    %v6043 = vld [vmem:[%s6036 + $0x30] sm:$0xff]
    %v6044 = vld [vmem:[%s6036 + $0x38] sm:$0xff]
    %v6045 = vld [vmem:[%s6036 + $0x40] sm:$0xff]
    %v6046 = vld [vmem:[%s6036 + $0x48] sm:$0xff]
    %v6047 = vld [vmem:[%s6036 + $0x50] sm:$0xff]
    %v6048 = vld [vmem:[%s6036 + $0x58] sm:$0xff]
    %v6049 = vld [vmem:[%s6036 + $0x60] sm:$0xff]
    %v6050 = vld [vmem:[%s6036 + $0x68] sm:$0xff]
    %v6051 = vld [vmem:[%s6036 + $0x70] sm:$0xff]
    %v6052 = vld [vmem:[%s6036 + $0x78] sm:$0xff]
    %6053 = vmatpush.msra.mxu0 %v6052
    %6054 = vmatpush.msra.mxu0 %v6051
    %6055 = vmatpush.msra.mxu0 %v6050
    %6056 = vmatpush.msra.mxu0 %v6049
    %6057 = vmatpush.msra.mxu0 %v6048
    %6058 = vmatpush.msra.mxu0 %v6047
    %6059 = vmatpush.msra.mxu0 %v6046
    %6060 = vmatpush.msra.mxu0 %v6045
    %6061 = vmatpush.msra.mxu0 %v6044
    %6062 = vmatpush.msra.mxu0 %v6043
    %6063 = vmatpush.msra.mxu0 %v6042
    %6064 = vmatpush.msra.mxu0 %v6041
    %6065 = vmatpush.msra.mxu0 %v6040
    %6066 = vmatpush.msra.mxu0 %v6039
    %6067 = vmatpush.msra.mxu0 %v6038
    %6068 = vmatpush.msra.mxu0 %v6037
    %6069 = vmatmul.f32.gmra.mxu0 %v6034
    %v6070 = vpop.f32.mrf.mxu0
    %v6071 = vadd.f32 0.0, %v6070
    %6072 = vdwg.mxu0
    %v6073 = vadd.f32 %v5986, %v6071
    %s6074 = scalar_lea.vmem [#allocation11], 344
    %v6075 = vld [vmem:[%s6074] sm:$0xff]
    %6077 = vst [vmem:[#allocation1] ss:$2 sm:$0xff] %v6075
    %v6078 = vld.sshfl [vmem:[#allocation1] sm:$0xff pattern:$0x75316420]
    %v6079 = vld.sshfl [vmem:[#allocation1 + $0x8] sm:$0xff pattern:$0x75316420]
    %v6081 = vsel %vm2339, %v6079, 0
    %6083 = vmatpush.msra.mxu0 %v2323
    %6084 = vmatpush.msra.mxu0 %v2322
    %6085 = vmatpush.msra.mxu0 %v2321
    %6086 = vmatpush.msra.mxu0 %v2320
    %6087 = vmatpush.msra.mxu0 %v2319
    %6088 = vmatpush.msra.mxu0 %v2318
    %6089 = vmatpush.msra.mxu0 %v2317
    %6090 = vmatpush.msra.mxu0 %v2316
    %6091 = vmatpush.msra.mxu0 %v2315
    %6092 = vmatpush.msra.mxu0 %v2314
    %6093 = vmatpush.msra.mxu0 %v2313
    %6094 = vmatpush.msra.mxu0 %v2312
    %6095 = vmatpush.msra.mxu0 %v2311
    %6096 = vmatpush.msra.mxu0 %v2310
    %6097 = vmatpush.msra.mxu0 %v2309
    %6098 = vmatpush.msra.mxu0 %v2308
    %6099 = vmatmul.f32.gmra.mxu0 %v6078
    %v6100 = vpop.f32.mrf.mxu0
    %v6101 = vadd.f32 0.0, %v6100
    %6102 = vdwg.mxu0
    %6103 = vmatpush.msra.mxu0 0.0
    %6104 = vmatpush.msra.mxu0 0.0
    %6105 = vmatpush.msra.mxu0 0.0
    %6106 = vmatpush.msra.mxu0 0.0
    %6107 = vmatpush.msra.mxu0 0.0
    %6108 = vmatpush.msra.mxu0 0.0
    %6109 = vmatpush.msra.mxu0 0.0
    %6110 = vmatpush.msra.mxu0 %v2343
    %6111 = vmatpush.msra.mxu0 %v2331
    %6112 = vmatpush.msra.mxu0 %v2330
    %6113 = vmatpush.msra.mxu0 %v2329
    %6114 = vmatpush.msra.mxu0 %v2328
    %6115 = vmatpush.msra.mxu0 %v2327
    %6116 = vmatpush.msra.mxu0 %v2326
    %6117 = vmatpush.msra.mxu0 %v2325
    %6118 = vmatpush.msra.mxu0 %v2324
    %6119 = vmatmul.f32.gmra.mxu0 %v6081
    %v6120 = vpop.f32.mrf.mxu0
    %v6121 = vadd.f32 %v6101, %v6120
    %6122 = vdwg.mxu0
    %s6123 = scalar_lea.vmem [#allocation13], 5504
    %v6124 = vld [vmem:[%s6123] sm:$0xff]
    %v6125 = vld [vmem:[%s6123 + $0x8] sm:$0xff]
    %v6126 = vld [vmem:[%s6123 + $0x10] sm:$0xff]
    %v6127 = vld [vmem:[%s6123 + $0x18] sm:$0xff]
    %v6128 = vld [vmem:[%s6123 + $0x20] sm:$0xff]
    %v6129 = vld [vmem:[%s6123 + $0x28] sm:$0xff]
    %v6130 = vld [vmem:[%s6123 + $0x30] sm:$0xff]
    %v6131 = vld [vmem:[%s6123 + $0x38] sm:$0xff]
    %v6132 = vld [vmem:[%s6123 + $0x40] sm:$0xff]
    %v6133 = vld [vmem:[%s6123 + $0x48] sm:$0xff]
    %v6134 = vld [vmem:[%s6123 + $0x50] sm:$0xff]
    %v6135 = vld [vmem:[%s6123 + $0x58] sm:$0xff]
    %v6136 = vld [vmem:[%s6123 + $0x60] sm:$0xff]
    %v6137 = vld [vmem:[%s6123 + $0x68] sm:$0xff]
    %v6138 = vld [vmem:[%s6123 + $0x70] sm:$0xff]
    %v6139 = vld [vmem:[%s6123 + $0x78] sm:$0xff]
    %6140 = vmatpush.msra.mxu0 %v6139
    %6141 = vmatpush.msra.mxu0 %v6138
    %6142 = vmatpush.msra.mxu0 %v6137
    %6143 = vmatpush.msra.mxu0 %v6136
    %6144 = vmatpush.msra.mxu0 %v6135
    %6145 = vmatpush.msra.mxu0 %v6134
    %6146 = vmatpush.msra.mxu0 %v6133
    %6147 = vmatpush.msra.mxu0 %v6132
    %6148 = vmatpush.msra.mxu0 %v6131
    %6149 = vmatpush.msra.mxu0 %v6130
    %6150 = vmatpush.msra.mxu0 %v6129
    %6151 = vmatpush.msra.mxu0 %v6128
    %6152 = vmatpush.msra.mxu0 %v6127
    %6153 = vmatpush.msra.mxu0 %v6126
    %6154 = vmatpush.msra.mxu0 %v6125
    %6155 = vmatpush.msra.mxu0 %v6124
    %6156 = vmatmul.f32.gmra.mxu0 %v6121
    %v6157 = vpop.f32.mrf.mxu0
    %v6158 = vadd.f32 0.0, %v6157
    %6159 = vdwg.mxu0
    %v6160 = vadd.f32 %v6073, %v6158
    %s6161 = scalar_lea.vmem [#allocation11], 352
    %v6162 = vld [vmem:[%s6161] sm:$0xff]
    %6164 = vst [vmem:[#allocation1] ss:$2 sm:$0xff] %v6162
    %v6165 = vld.sshfl [vmem:[#allocation1] sm:$0xff pattern:$0x75316420]
    %v6166 = vld.sshfl [vmem:[#allocation1 + $0x8] sm:$0xff pattern:$0x75316420]
    %v6168 = vsel %vm2339, %v6166, 0
    %6170 = vmatpush.msra.mxu0 %v2323
    %6171 = vmatpush.msra.mxu0 %v2322
    %6172 = vmatpush.msra.mxu0 %v2321
    %6173 = vmatpush.msra.mxu0 %v2320
    %6174 = vmatpush.msra.mxu0 %v2319
    %6175 = vmatpush.msra.mxu0 %v2318
    %6176 = vmatpush.msra.mxu0 %v2317
    %6177 = vmatpush.msra.mxu0 %v2316
    %6178 = vmatpush.msra.mxu0 %v2315
    %6179 = vmatpush.msra.mxu0 %v2314
    %6180 = vmatpush.msra.mxu0 %v2313
    %6181 = vmatpush.msra.mxu0 %v2312
    %6182 = vmatpush.msra.mxu0 %v2311
    %6183 = vmatpush.msra.mxu0 %v2310
    %6184 = vmatpush.msra.mxu0 %v2309
    %6185 = vmatpush.msra.mxu0 %v2308
    %6186 = vmatmul.f32.gmra.mxu0 %v6165
    %v6187 = vpop.f32.mrf.mxu0
    %v6188 = vadd.f32 0.0, %v6187
    %6189 = vdwg.mxu0
    %6190 = vmatpush.msra.mxu0 0.0
    %6191 = vmatpush.msra.mxu0 0.0
    %6192 = vmatpush.msra.mxu0 0.0
    %6193 = vmatpush.msra.mxu0 0.0
    %6194 = vmatpush.msra.mxu0 0.0
    %6195 = vmatpush.msra.mxu0 0.0
    %6196 = vmatpush.msra.mxu0 0.0
    %6197 = vmatpush.msra.mxu0 %v2343
    %6198 = vmatpush.msra.mxu0 %v2331
    %6199 = vmatpush.msra.mxu0 %v2330
    %6200 = vmatpush.msra.mxu0 %v2329
    %6201 = vmatpush.msra.mxu0 %v2328
    %6202 = vmatpush.msra.mxu0 %v2327
    %6203 = vmatpush.msra.mxu0 %v2326
    %6204 = vmatpush.msra.mxu0 %v2325
    %6205 = vmatpush.msra.mxu0 %v2324
    %6206 = vmatmul.f32.gmra.mxu0 %v6168
    %v6207 = vpop.f32.mrf.mxu0
    %v6208 = vadd.f32 %v6188, %v6207
    %6209 = vdwg.mxu0
    %s6210 = scalar_lea.vmem [#allocation13], 5632
    %v6211 = vld [vmem:[%s6210] sm:$0xff]
    %v6212 = vld [vmem:[%s6210 + $0x8] sm:$0xff]
    %v6213 = vld [vmem:[%s6210 + $0x10] sm:$0xff]
    %v6214 = vld [vmem:[%s6210 + $0x18] sm:$0xff]
    %v6215 = vld [vmem:[%s6210 + $0x20] sm:$0xff]
    %v6216 = vld [vmem:[%s6210 + $0x28] sm:$0xff]
    %v6217 = vld [vmem:[%s6210 + $0x30] sm:$0xff]
    %v6218 = vld [vmem:[%s6210 + $0x38] sm:$0xff]
    %v6219 = vld [vmem:[%s6210 + $0x40] sm:$0xff]
    %v6220 = vld [vmem:[%s6210 + $0x48] sm:$0xff]
    %v6221 = vld [vmem:[%s6210 + $0x50] sm:$0xff]
    %v6222 = vld [vmem:[%s6210 + $0x58] sm:$0xff]
    %v6223 = vld [vmem:[%s6210 + $0x60] sm:$0xff]
    %v6224 = vld [vmem:[%s6210 + $0x68] sm:$0xff]
    %v6225 = vld [vmem:[%s6210 + $0x70] sm:$0xff]
    %v6226 = vld [vmem:[%s6210 + $0x78] sm:$0xff]
    %6227 = vmatpush.msra.mxu0 %v6226
    %6228 = vmatpush.msra.mxu0 %v6225
    %6229 = vmatpush.msra.mxu0 %v6224
    %6230 = vmatpush.msra.mxu0 %v6223
    %6231 = vmatpush.msra.mxu0 %v6222
    %6232 = vmatpush.msra.mxu0 %v6221
    %6233 = vmatpush.msra.mxu0 %v6220
    %6234 = vmatpush.msra.mxu0 %v6219
    %6235 = vmatpush.msra.mxu0 %v6218
    %6236 = vmatpush.msra.mxu0 %v6217
    %6237 = vmatpush.msra.mxu0 %v6216
    %6238 = vmatpush.msra.mxu0 %v6215
    %6239 = vmatpush.msra.mxu0 %v6214
    %6240 = vmatpush.msra.mxu0 %v6213
    %6241 = vmatpush.msra.mxu0 %v6212
    %6242 = vmatpush.msra.mxu0 %v6211
    %6243 = vmatmul.f32.gmra.mxu0 %v6208
    %v6244 = vpop.f32.mrf.mxu0
    %v6245 = vadd.f32 0.0, %v6244
    %6246 = vdwg.mxu0
    %v6247 = vadd.f32 %v6160, %v6245
    %s6248 = scalar_lea.vmem [#allocation11], 360
    %v6249 = vld [vmem:[%s6248] sm:$0xff]
    %6251 = vst [vmem:[#allocation1] ss:$2 sm:$0xff] %v6249
    %v6252 = vld.sshfl [vmem:[#allocation1] sm:$0xff pattern:$0x75316420]
    %v6253 = vld.sshfl [vmem:[#allocation1 + $0x8] sm:$0xff pattern:$0x75316420]
    %v6255 = vsel %vm2339, %v6253, 0
    %6257 = vmatpush.msra.mxu0 %v2323
    %6258 = vmatpush.msra.mxu0 %v2322
    %6259 = vmatpush.msra.mxu0 %v2321
    %6260 = vmatpush.msra.mxu0 %v2320
    %6261 = vmatpush.msra.mxu0 %v2319
    %6262 = vmatpush.msra.mxu0 %v2318
    %6263 = vmatpush.msra.mxu0 %v2317
    %6264 = vmatpush.msra.mxu0 %v2316
    %6265 = vmatpush.msra.mxu0 %v2315
    %6266 = vmatpush.msra.mxu0 %v2314
    %6267 = vmatpush.msra.mxu0 %v2313
    %6268 = vmatpush.msra.mxu0 %v2312
    %6269 = vmatpush.msra.mxu0 %v2311
    %6270 = vmatpush.msra.mxu0 %v2310
    %6271 = vmatpush.msra.mxu0 %v2309
    %6272 = vmatpush.msra.mxu0 %v2308
    %6273 = vmatmul.f32.gmra.mxu0 %v6252
    %v6274 = vpop.f32.mrf.mxu0
    %v6275 = vadd.f32 0.0, %v6274
    %6276 = vdwg.mxu0
    %6277 = vmatpush.msra.mxu0 0.0
    %6278 = vmatpush.msra.mxu0 0.0
    %6279 = vmatpush.msra.mxu0 0.0
    %6280 = vmatpush.msra.mxu0 0.0
    %6281 = vmatpush.msra.mxu0 0.0
    %6282 = vmatpush.msra.mxu0 0.0
    %6283 = vmatpush.msra.mxu0 0.0
    %6284 = vmatpush.msra.mxu0 %v2343
    %6285 = vmatpush.msra.mxu0 %v2331
    %6286 = vmatpush.msra.mxu0 %v2330
    %6287 = vmatpush.msra.mxu0 %v2329
    %6288 = vmatpush.msra.mxu0 %v2328
    %6289 = vmatpush.msra.mxu0 %v2327
    %6290 = vmatpush.msra.mxu0 %v2326
    %6291 = vmatpush.msra.mxu0 %v2325
    %6292 = vmatpush.msra.mxu0 %v2324
    %6293 = vmatmul.f32.gmra.mxu0 %v6255
    %v6294 = vpop.f32.mrf.mxu0
    %v6295 = vadd.f32 %v6275, %v6294
    %6296 = vdwg.mxu0
    %s6297 = scalar_lea.vmem [#allocation13], 5760
    %v6298 = vld [vmem:[%s6297] sm:$0xff]
    %v6299 = vld [vmem:[%s6297 + $0x8] sm:$0xff]
    %v6300 = vld [vmem:[%s6297 + $0x10] sm:$0xff]
    %v6301 = vld [vmem:[%s6297 + $0x18] sm:$0xff]
    %v6302 = vld [vmem:[%s6297 + $0x20] sm:$0xff]
    %v6303 = vld [vmem:[%s6297 + $0x28] sm:$0xff]
    %v6304 = vld [vmem:[%s6297 + $0x30] sm:$0xff]
    %v6305 = vld [vmem:[%s6297 + $0x38] sm:$0xff]
    %v6306 = vld [vmem:[%s6297 + $0x40] sm:$0xff]
    %v6307 = vld [vmem:[%s6297 + $0x48] sm:$0xff]
    %v6308 = vld [vmem:[%s6297 + $0x50] sm:$0xff]
    %v6309 = vld [vmem:[%s6297 + $0x58] sm:$0xff]
    %v6310 = vld [vmem:[%s6297 + $0x60] sm:$0xff]
    %v6311 = vld [vmem:[%s6297 + $0x68] sm:$0xff]
    %v6312 = vld [vmem:[%s6297 + $0x70] sm:$0xff]
    %v6313 = vld [vmem:[%s6297 + $0x78] sm:$0xff]
    %6314 = vmatpush.msra.mxu0 %v6313
    %6315 = vmatpush.msra.mxu0 %v6312
    %6316 = vmatpush.msra.mxu0 %v6311
    %6317 = vmatpush.msra.mxu0 %v6310
    %6318 = vmatpush.msra.mxu0 %v6309
    %6319 = vmatpush.msra.mxu0 %v6308
    %6320 = vmatpush.msra.mxu0 %v6307
    %6321 = vmatpush.msra.mxu0 %v6306
    %6322 = vmatpush.msra.mxu0 %v6305
    %6323 = vmatpush.msra.mxu0 %v6304
    %6324 = vmatpush.msra.mxu0 %v6303
    %6325 = vmatpush.msra.mxu0 %v6302
    %6326 = vmatpush.msra.mxu0 %v6301
    %6327 = vmatpush.msra.mxu0 %v6300
    %6328 = vmatpush.msra.mxu0 %v6299
    %6329 = vmatpush.msra.mxu0 %v6298
    %6330 = vmatmul.f32.gmra.mxu0 %v6295
    %v6331 = vpop.f32.mrf.mxu0
    %v6332 = vadd.f32 0.0, %v6331
    %6333 = vdwg.mxu0
    %v6334 = vadd.f32 %v6247, %v6332
    %s6335 = scalar_lea.vmem [#allocation11], 368
    %v6336 = vld [vmem:[%s6335] sm:$0xff]
    %6338 = vst [vmem:[#allocation1] ss:$2 sm:$0xff] %v6336
    %v6339 = vld.sshfl [vmem:[#allocation1] sm:$0xff pattern:$0x75316420]
    %v6340 = vld.sshfl [vmem:[#allocation1 + $0x8] sm:$0xff pattern:$0x75316420]
    %v6342 = vsel %vm2339, %v6340, 0
    %6344 = vmatpush.msra.mxu0 %v2323
    %6345 = vmatpush.msra.mxu0 %v2322
    %6346 = vmatpush.msra.mxu0 %v2321
    %6347 = vmatpush.msra.mxu0 %v2320
    %6348 = vmatpush.msra.mxu0 %v2319
    %6349 = vmatpush.msra.mxu0 %v2318
    %6350 = vmatpush.msra.mxu0 %v2317
    %6351 = vmatpush.msra.mxu0 %v2316
    %6352 = vmatpush.msra.mxu0 %v2315
    %6353 = vmatpush.msra.mxu0 %v2314
    %6354 = vmatpush.msra.mxu0 %v2313
    %6355 = vmatpush.msra.mxu0 %v2312
    %6356 = vmatpush.msra.mxu0 %v2311
    %6357 = vmatpush.msra.mxu0 %v2310
    %6358 = vmatpush.msra.mxu0 %v2309
    %6359 = vmatpush.msra.mxu0 %v2308
    %6360 = vmatmul.f32.gmra.mxu0 %v6339
    %v6361 = vpop.f32.mrf.mxu0
    %v6362 = vadd.f32 0.0, %v6361
    %6363 = vdwg.mxu0
    %6364 = vmatpush.msra.mxu0 0.0
    %6365 = vmatpush.msra.mxu0 0.0
    %6366 = vmatpush.msra.mxu0 0.0
    %6367 = vmatpush.msra.mxu0 0.0
    %6368 = vmatpush.msra.mxu0 0.0
    %6369 = vmatpush.msra.mxu0 0.0
    %6370 = vmatpush.msra.mxu0 0.0
    %6371 = vmatpush.msra.mxu0 %v2343
    %6372 = vmatpush.msra.mxu0 %v2331
    %6373 = vmatpush.msra.mxu0 %v2330
    %6374 = vmatpush.msra.mxu0 %v2329
    %6375 = vmatpush.msra.mxu0 %v2328
    %6376 = vmatpush.msra.mxu0 %v2327
    %6377 = vmatpush.msra.mxu0 %v2326
    %6378 = vmatpush.msra.mxu0 %v2325
    %6379 = vmatpush.msra.mxu0 %v2324
    %6380 = vmatmul.f32.gmra.mxu0 %v6342
    %v6381 = vpop.f32.mrf.mxu0
    %v6382 = vadd.f32 %v6362, %v6381
    %6383 = vdwg.mxu0
    %s6384 = scalar_lea.vmem [#allocation13], 5888
    %v6385 = vld [vmem:[%s6384] sm:$0xff]
    %v6386 = vld [vmem:[%s6384 + $0x8] sm:$0xff]
    %v6387 = vld [vmem:[%s6384 + $0x10] sm:$0xff]
    %v6388 = vld [vmem:[%s6384 + $0x18] sm:$0xff]
    %v6389 = vld [vmem:[%s6384 + $0x20] sm:$0xff]
    %v6390 = vld [vmem:[%s6384 + $0x28] sm:$0xff]
    %v6391 = vld [vmem:[%s6384 + $0x30] sm:$0xff]
    %v6392 = vld [vmem:[%s6384 + $0x38] sm:$0xff]
    %v6393 = vld [vmem:[%s6384 + $0x40] sm:$0xff]
    %v6394 = vld [vmem:[%s6384 + $0x48] sm:$0xff]
    %v6395 = vld [vmem:[%s6384 + $0x50] sm:$0xff]
    %v6396 = vld [vmem:[%s6384 + $0x58] sm:$0xff]
    %v6397 = vld [vmem:[%s6384 + $0x60] sm:$0xff]
    %v6398 = vld [vmem:[%s6384 + $0x68] sm:$0xff]
    %v6399 = vld [vmem:[%s6384 + $0x70] sm:$0xff]
    %v6400 = vld [vmem:[%s6384 + $0x78] sm:$0xff]
    %6401 = vmatpush.msra.mxu0 %v6400
    %6402 = vmatpush.msra.mxu0 %v6399
    %6403 = vmatpush.msra.mxu0 %v6398
    %6404 = vmatpush.msra.mxu0 %v6397
    %6405 = vmatpush.msra.mxu0 %v6396
    %6406 = vmatpush.msra.mxu0 %v6395
    %6407 = vmatpush.msra.mxu0 %v6394
    %6408 = vmatpush.msra.mxu0 %v6393
    %6409 = vmatpush.msra.mxu0 %v6392
    %6410 = vmatpush.msra.mxu0 %v6391
    %6411 = vmatpush.msra.mxu0 %v6390
    %6412 = vmatpush.msra.mxu0 %v6389
    %6413 = vmatpush.msra.mxu0 %v6388
    %6414 = vmatpush.msra.mxu0 %v6387
    %6415 = vmatpush.msra.mxu0 %v6386
    %6416 = vmatpush.msra.mxu0 %v6385
    %6417 = vmatmul.f32.gmra.mxu0 %v6382
    %v6418 = vpop.f32.mrf.mxu0
    %v6419 = vadd.f32 0.0, %v6418
    %6420 = vdwg.mxu0
    %v6421 = vadd.f32 %v6334, %v6419
    %s6422 = scalar_lea.vmem [#allocation11], 376
    %v6423 = vld [vmem:[%s6422] sm:$0xff]
    %6425 = vst [vmem:[#allocation1] ss:$2 sm:$0xff] %v6423
    %v6426 = vld.sshfl [vmem:[#allocation1] sm:$0xff pattern:$0x75316420]
    %v6427 = vld.sshfl [vmem:[#allocation1 + $0x8] sm:$0xff pattern:$0x75316420]
    %v6429 = vsel %vm2339, %v6427, 0
    %6431 = vmatpush.msra.mxu0 %v2323
    %6432 = vmatpush.msra.mxu0 %v2322
    %6433 = vmatpush.msra.mxu0 %v2321
    %6434 = vmatpush.msra.mxu0 %v2320
    %6435 = vmatpush.msra.mxu0 %v2319
    %6436 = vmatpush.msra.mxu0 %v2318
    %6437 = vmatpush.msra.mxu0 %v2317
    %6438 = vmatpush.msra.mxu0 %v2316
    %6439 = vmatpush.msra.mxu0 %v2315
    %6440 = vmatpush.msra.mxu0 %v2314
    %6441 = vmatpush.msra.mxu0 %v2313
    %6442 = vmatpush.msra.mxu0 %v2312
    %6443 = vmatpush.msra.mxu0 %v2311
    %6444 = vmatpush.msra.mxu0 %v2310
    %6445 = vmatpush.msra.mxu0 %v2309
    %6446 = vmatpush.msra.mxu0 %v2308
    %6447 = vmatmul.f32.gmra.mxu0 %v6426
    %v6448 = vpop.f32.mrf.mxu0
    %v6449 = vadd.f32 0.0, %v6448
    %6450 = vdwg.mxu0
    %6451 = vmatpush.msra.mxu0 0.0
    %6452 = vmatpush.msra.mxu0 0.0
    %6453 = vmatpush.msra.mxu0 0.0
    %6454 = vmatpush.msra.mxu0 0.0
    %6455 = vmatpush.msra.mxu0 0.0
    %6456 = vmatpush.msra.mxu0 0.0
    %6457 = vmatpush.msra.mxu0 0.0
    %6458 = vmatpush.msra.mxu0 %v2343
    %6459 = vmatpush.msra.mxu0 %v2331
    %6460 = vmatpush.msra.mxu0 %v2330
    %6461 = vmatpush.msra.mxu0 %v2329
    %6462 = vmatpush.msra.mxu0 %v2328
    %6463 = vmatpush.msra.mxu0 %v2327
    %6464 = vmatpush.msra.mxu0 %v2326
    %6465 = vmatpush.msra.mxu0 %v2325
    %6466 = vmatpush.msra.mxu0 %v2324
    %6467 = vmatmul.f32.gmra.mxu0 %v6429
    %v6468 = vpop.f32.mrf.mxu0
    %v6469 = vadd.f32 %v6449, %v6468
    %6470 = vdwg.mxu0
    %s6471 = scalar_lea.vmem [#allocation13], 6016
    %v6472 = vld [vmem:[%s6471] sm:$0xff]
    %v6473 = vld [vmem:[%s6471 + $0x8] sm:$0xff]
    %v6474 = vld [vmem:[%s6471 + $0x10] sm:$0xff]
    %v6475 = vld [vmem:[%s6471 + $0x18] sm:$0xff]
    %v6476 = vld [vmem:[%s6471 + $0x20] sm:$0xff]
    %v6477 = vld [vmem:[%s6471 + $0x28] sm:$0xff]
    %v6478 = vld [vmem:[%s6471 + $0x30] sm:$0xff]
    %v6479 = vld [vmem:[%s6471 + $0x38] sm:$0xff]
    %v6480 = vld [vmem:[%s6471 + $0x40] sm:$0xff]
    %v6481 = vld [vmem:[%s6471 + $0x48] sm:$0xff]
    %v6482 = vld [vmem:[%s6471 + $0x50] sm:$0xff]
    %v6483 = vld [vmem:[%s6471 + $0x58] sm:$0xff]
    %v6484 = vld [vmem:[%s6471 + $0x60] sm:$0xff]
    %v6485 = vld [vmem:[%s6471 + $0x68] sm:$0xff]
    %v6486 = vld [vmem:[%s6471 + $0x70] sm:$0xff]
    %v6487 = vld [vmem:[%s6471 + $0x78] sm:$0xff]
    %6488 = vmatpush.msra.mxu0 %v6487
    %6489 = vmatpush.msra.mxu0 %v6486
    %6490 = vmatpush.msra.mxu0 %v6485
    %6491 = vmatpush.msra.mxu0 %v6484
    %6492 = vmatpush.msra.mxu0 %v6483
    %6493 = vmatpush.msra.mxu0 %v6482
    %6494 = vmatpush.msra.mxu0 %v6481
    %6495 = vmatpush.msra.mxu0 %v6480
    %6496 = vmatpush.msra.mxu0 %v6479
    %6497 = vmatpush.msra.mxu0 %v6478
    %6498 = vmatpush.msra.mxu0 %v6477
    %6499 = vmatpush.msra.mxu0 %v6476
    %6500 = vmatpush.msra.mxu0 %v6475
    %6501 = vmatpush.msra.mxu0 %v6474
    %6502 = vmatpush.msra.mxu0 %v6473
    %6503 = vmatpush.msra.mxu0 %v6472
    %6504 = vmatmul.f32.gmra.mxu0 %v6469
    %v6505 = vpop.f32.mrf.mxu0
    %v6506 = vadd.f32 0.0, %v6505
    %6507 = vdwg.mxu0
    %v6508 = vadd.f32 %v6421, %v6506
    %s6509 = scalar_lea.vmem [#allocation11], 384
    %v6510 = vld [vmem:[%s6509] sm:$0xff]
    %6512 = vst [vmem:[#allocation1] ss:$2 sm:$0xff] %v6510
    %v6513 = vld.sshfl [vmem:[#allocation1] sm:$0xff pattern:$0x75316420]
    %v6514 = vld.sshfl [vmem:[#allocation1 + $0x8] sm:$0xff pattern:$0x75316420]
    %v6516 = vsel %vm2339, %v6514, 0
    %6518 = vmatpush.msra.mxu0 %v2323
    %6519 = vmatpush.msra.mxu0 %v2322
    %6520 = vmatpush.msra.mxu0 %v2321
    %6521 = vmatpush.msra.mxu0 %v2320
    %6522 = vmatpush.msra.mxu0 %v2319
    %6523 = vmatpush.msra.mxu0 %v2318
    %6524 = vmatpush.msra.mxu0 %v2317
    %6525 = vmatpush.msra.mxu0 %v2316
    %6526 = vmatpush.msra.mxu0 %v2315
    %6527 = vmatpush.msra.mxu0 %v2314
    %6528 = vmatpush.msra.mxu0 %v2313
    %6529 = vmatpush.msra.mxu0 %v2312
    %6530 = vmatpush.msra.mxu0 %v2311
    %6531 = vmatpush.msra.mxu0 %v2310
    %6532 = vmatpush.msra.mxu0 %v2309
    %6533 = vmatpush.msra.mxu0 %v2308
    %6534 = vmatmul.f32.gmra.mxu0 %v6513
    %v6535 = vpop.f32.mrf.mxu0
    %v6536 = vadd.f32 0.0, %v6535
    %6537 = vdwg.mxu0
    %6538 = vmatpush.msra.mxu0 0.0
    %6539 = vmatpush.msra.mxu0 0.0
    %6540 = vmatpush.msra.mxu0 0.0
    %6541 = vmatpush.msra.mxu0 0.0
    %6542 = vmatpush.msra.mxu0 0.0
    %6543 = vmatpush.msra.mxu0 0.0
    %6544 = vmatpush.msra.mxu0 0.0
    %6545 = vmatpush.msra.mxu0 %v2343
    %6546 = vmatpush.msra.mxu0 %v2331
    %6547 = vmatpush.msra.mxu0 %v2330
    %6548 = vmatpush.msra.mxu0 %v2329
    %6549 = vmatpush.msra.mxu0 %v2328
    %6550 = vmatpush.msra.mxu0 %v2327
    %6551 = vmatpush.msra.mxu0 %v2326
    %6552 = vmatpush.msra.mxu0 %v2325
    %6553 = vmatpush.msra.mxu0 %v2324
    %6554 = vmatmul.f32.gmra.mxu0 %v6516
    %v6555 = vpop.f32.mrf.mxu0
    %v6556 = vadd.f32 %v6536, %v6555
    %6557 = vdwg.mxu0
    %s6558 = scalar_lea.vmem [#allocation13], 6144
    %v6559 = vld [vmem:[%s6558] sm:$0xff]
    %v6560 = vld [vmem:[%s6558 + $0x8] sm:$0xff]
    %v6561 = vld [vmem:[%s6558 + $0x10] sm:$0xff]
    %v6562 = vld [vmem:[%s6558 + $0x18] sm:$0xff]
    %v6563 = vld [vmem:[%s6558 + $0x20] sm:$0xff]
    %v6564 = vld [vmem:[%s6558 + $0x28] sm:$0xff]
    %v6565 = vld [vmem:[%s6558 + $0x30] sm:$0xff]
    %v6566 = vld [vmem:[%s6558 + $0x38] sm:$0xff]
    %v6567 = vld [vmem:[%s6558 + $0x40] sm:$0xff]
    %v6568 = vld [vmem:[%s6558 + $0x48] sm:$0xff]
    %v6569 = vld [vmem:[%s6558 + $0x50] sm:$0xff]
    %v6570 = vld [vmem:[%s6558 + $0x58] sm:$0xff]
    %v6571 = vld [vmem:[%s6558 + $0x60] sm:$0xff]
    %v6572 = vld [vmem:[%s6558 + $0x68] sm:$0xff]
    %v6573 = vld [vmem:[%s6558 + $0x70] sm:$0xff]
    %v6574 = vld [vmem:[%s6558 + $0x78] sm:$0xff]
    %6575 = vmatpush.msra.mxu0 %v6574
    %6576 = vmatpush.msra.mxu0 %v6573
    %6577 = vmatpush.msra.mxu0 %v6572
    %6578 = vmatpush.msra.mxu0 %v6571
    %6579 = vmatpush.msra.mxu0 %v6570
    %6580 = vmatpush.msra.mxu0 %v6569
    %6581 = vmatpush.msra.mxu0 %v6568
    %6582 = vmatpush.msra.mxu0 %v6567
    %6583 = vmatpush.msra.mxu0 %v6566
    %6584 = vmatpush.msra.mxu0 %v6565
    %6585 = vmatpush.msra.mxu0 %v6564
    %6586 = vmatpush.msra.mxu0 %v6563
    %6587 = vmatpush.msra.mxu0 %v6562
    %6588 = vmatpush.msra.mxu0 %v6561
    %6589 = vmatpush.msra.mxu0 %v6560
    %6590 = vmatpush.msra.mxu0 %v6559
    %6591 = vmatmul.f32.gmra.mxu0 %v6556
    %v6592 = vpop.f32.mrf.mxu0
    %v6593 = vadd.f32 0.0, %v6592
    %6594 = vdwg.mxu0
    %v6595 = vadd.f32 %v6508, %v6593
    %v6596 = vld [vmem:[#allocation14] sm:$0x1]
    %v6598 = vperm.slane %v6596, 0
    %v6600 = vadd.f32 %v6595, %v6598
    %v6601 = vmax.f32 %v6600, 0.0
    %v6602 = vld [vmem:[#allocation19] sm:$0x1]
    %v6603 = vld [vmem:[#allocation20] sm:$0x1]
    %v6604 = vsel %vm2170, %v6601, 0.0
    %v6605 = vrot.slane %v6604, 4
    %v6606 = vadd.f32 %v6604, %v6605
    %v6607 = vrot.slane %v6606, 2
    %v6608 = vadd.f32 %v6606, %v6607
    %v6609 = vrot.slane %v6608, 1
    %v6610 = vadd.f32 %v6608, %v6609
    %v6611 = vmul.f32 %v6610, 0.25
    %v6612 = vmul.f32 %v6601, %v6601
    %v6613 = vsel %vm2170, %v6612, 0.0
    %v6614 = vrot.slane %v6613, 4
    %v6615 = vadd.f32 %v6613, %v6614
    %v6616 = vrot.slane %v6615, 2
    %v6617 = vadd.f32 %v6615, %v6616
    %v6618 = vrot.slane %v6617, 1
    %v6619 = vadd.f32 %v6617, %v6618
    %v6620 = vmul.f32 %v6619, 0.25
    %v6621 = vmul.f32 %v6611, %v6611
    %v6622 = vsub.f32 %v6620, %v6621
    %v6623 = vmax.f32 %v6622, 0.0
    %v6624 = vsub.f32 %v6601, %v6611
    %v6625 = vadd.f32 %v6623, 1e-05
    %v6626 = vrsqrt.pop %v6625
    %v6627 = vmul.f32 %v6626, %v6625
    %v6628 = vmul.f32 %v6627, %v6626
    %v6629 = vmul.f32 0.5, %v6628
    %v6630 = vsub.f32 1.5, %v6629
    %v6631 = vmul.f32 %v6626, %v6630
    %vm6632 = vweird.f32 %v6625
    %vm6633 = vweird.f32 %v6626
    %vm6634 = vmor %vm6632, %vm6633
    %v6635 = vsel %vm6634, %v6626, %v6631
    %v6636 = vmul.f32 %v6602, %v6635
    %v6638 = vperm.slane %v6636, 0
    %v6640 = vmul.f32 %v6624, %v6638
    %v6642 = vperm.slane %v6603, 0
    %v6644 = vadd.f32 %v6640, %v6642
    %v6645 = vld [vmem:[#allocation22] sm:$0xff]
    %v6646 = vld [vmem:[#allocation22 + $0x8] sm:$0xff]
    %v6647 = vld [vmem:[#allocation22 + $0x10] sm:$0xff]
    %v6648 = vld [vmem:[#allocation22 + $0x18] sm:$0xff]
    %v6649 = vld [vmem:[#allocation22 + $0x20] sm:$0xff]
    %v6650 = vld [vmem:[#allocation22 + $0x28] sm:$0xff]
    %v6651 = vld [vmem:[#allocation22 + $0x30] sm:$0xff]
    %v6652 = vld [vmem:[#allocation22 + $0x38] sm:$0xff]
    %v6653 = vld [vmem:[#allocation22 + $0x40] sm:$0xff]
    %v6654 = vld [vmem:[#allocation22 + $0x48] sm:$0xff]
    %v6655 = vld [vmem:[#allocation22 + $0x50] sm:$0xff]
    %v6656 = vld [vmem:[#allocation22 + $0x58] sm:$0xff]
    %v6657 = vld [vmem:[#allocation22 + $0x60] sm:$0xff]
    %v6658 = vld [vmem:[#allocation22 + $0x68] sm:$0xff]
    %v6659 = vld [vmem:[#allocation22 + $0x70] sm:$0xff]
    %v6660 = vld [vmem:[#allocation22 + $0x78] sm:$0xff]
    %v6661 = vld [vmem:[#allocation23] sm:$0x1]
    %v6663 = vperm.slane %v6661, 0
    %6665 = vmatpush.msra.mxu0 %v6660
    %6666 = vmatpush.msra.mxu0 %v6659
    %6667 = vmatpush.msra.mxu0 %v6658
    %6668 = vmatpush.msra.mxu0 %v6657
    %6669 = vmatpush.msra.mxu0 %v6656
    %6670 = vmatpush.msra.mxu0 %v6655
    %6671 = vmatpush.msra.mxu0 %v6654
    %6672 = vmatpush.msra.mxu0 %v6653
    %6673 = vmatpush.msra.mxu0 %v6652
    %6674 = vmatpush.msra.mxu0 %v6651
    %6675 = vmatpush.msra.mxu0 %v6650
    %6676 = vmatpush.msra.mxu0 %v6649
    %6677 = vmatpush.msra.mxu0 %v6648
    %6678 = vmatpush.msra.mxu0 %v6647
    %6679 = vmatpush.msra.mxu0 %v6646
    %6680 = vmatpush.msra.mxu0 %v6645
    %6681 = vmatmul.f32.gmra.mxu0 %v6644
    %v6682 = vpop.f32.mrf.mxu0
    %v6683 = vadd.f32 %v6663, %v6682
    %6684 = vdwg.mxu0
    %v6685 = vld [vmem:[#allocation25] sm:$0xff]
    %v6686 = vld [vmem:[#allocation25 + $0x8] sm:$0xff]
    %v6687 = vld [vmem:[#allocation25 + $0x10] sm:$0xff]
    %v6688 = vld [vmem:[#allocation25 + $0x18] sm:$0xff]
    %v6689 = vld [vmem:[#allocation25 + $0x20] sm:$0xff]
    %v6690 = vld [vmem:[#allocation25 + $0x28] sm:$0xff]
    %v6691 = vld [vmem:[#allocation25 + $0x30] sm:$0xff]
    %v6692 = vld [vmem:[#allocation25 + $0x38] sm:$0xff]
    %v6693 = vld [vmem:[#allocation25 + $0x40] sm:$0xff]
    %v6694 = vld [vmem:[#allocation25 + $0x48] sm:$0xff]
    %v6695 = vld [vmem:[#allocation25 + $0x50] sm:$0xff]
    %v6696 = vld [vmem:[#allocation25 + $0x58] sm:$0xff]
    %v6697 = vld [vmem:[#allocation25 + $0x60] sm:$0xff]
    %v6698 = vld [vmem:[#allocation25 + $0x68] sm:$0xff]
    %v6699 = vld [vmem:[#allocation25 + $0x70] sm:$0xff]
    %v6700 = vld [vmem:[#allocation25 + $0x78] sm:$0xff]
    %v6701 = vld [vmem:[#allocation28] sm:$0x1]
    %v6703 = vperm.slane %v6701, 0
    %6705 = vmatpush.msra.mxu0 %v6700
    %6706 = vmatpush.msra.mxu0 %v6699
    %6707 = vmatpush.msra.mxu0 %v6698
    %6708 = vmatpush.msra.mxu0 %v6697
    %6709 = vmatpush.msra.mxu0 %v6696
    %6710 = vmatpush.msra.mxu0 %v6695
    %6711 = vmatpush.msra.mxu0 %v6694
    %6712 = vmatpush.msra.mxu0 %v6693
    %6713 = vmatpush.msra.mxu0 %v6692
    %6714 = vmatpush.msra.mxu0 %v6691
    %6715 = vmatpush.msra.mxu0 %v6690
    %6716 = vmatpush.msra.mxu0 %v6689
    %6717 = vmatpush.msra.mxu0 %v6688
    %6718 = vmatpush.msra.mxu0 %v6687
    %6719 = vmatpush.msra.mxu0 %v6686
    %6720 = vmatpush.msra.mxu0 %v6685
    %6721 = vmatmul.f32.gmra.mxu0 %v6683
    %v6722 = vpop.f32.mrf.mxu0
    %v6723 = vadd.f32 %v6703, %v6722
    %6724 = vdwg.mxu0
    %v6725 = vld [vmem:[#allocation29] sm:$0x1]
    %v6727 = vperm.slane %v6725, 0
    %v6729 = vadd.f32 %v6723, %v6727
    %v6730 = vld [vmem:[#allocation26] sm:$0xff]
    %v6731 = vld [vmem:[#allocation26 + $0x8] sm:$0xff]
    %v6732 = vld [vmem:[#allocation26 + $0x10] sm:$0xff]
    %v6733 = vld [vmem:[#allocation26 + $0x18] sm:$0xff]
    %v6734 = vld [vmem:[#allocation26 + $0x20] sm:$0xff]
    %v6735 = vld [vmem:[#allocation26 + $0x28] sm:$0xff]
    %v6736 = vld [vmem:[#allocation26 + $0x30] sm:$0xff]
    %v6737 = vld [vmem:[#allocation26 + $0x38] sm:$0xff]
    %v6738 = vld [vmem:[#allocation26 + $0x40] sm:$0xff]
    %v6739 = vld [vmem:[#allocation26 + $0x48] sm:$0xff]
    %v6740 = vld [vmem:[#allocation26 + $0x50] sm:$0xff]
    %v6741 = vld [vmem:[#allocation26 + $0x58] sm:$0xff]
    %v6742 = vld [vmem:[#allocation26 + $0x60] sm:$0xff]
    %v6743 = vld [vmem:[#allocation26 + $0x68] sm:$0xff]
    %v6744 = vld [vmem:[#allocation26 + $0x70] sm:$0xff]
    %v6745 = vld [vmem:[#allocation26 + $0x78] sm:$0xff]
    %v6746 = vld [vmem:[#allocation31] sm:$0x1]
    %6747 = vmatpush.msra.mxu0 %v6745
    %6748 = vmatpush.msra.mxu0 %v6744
    %6749 = vmatpush.msra.mxu0 %v6743
    %6750 = vmatpush.msra.mxu0 %v6742
    %6751 = vmatpush.msra.mxu0 %v6741
    %6752 = vmatpush.msra.mxu0 %v6740
    %6753 = vmatpush.msra.mxu0 %v6739
    %6754 = vmatpush.msra.mxu0 %v6738
    %6755 = vmatpush.msra.mxu0 %v6737
    %6756 = vmatpush.msra.mxu0 %v6736
    %6757 = vmatpush.msra.mxu0 %v6735
    %6758 = vmatpush.msra.mxu0 %v6734
    %6759 = vmatpush.msra.mxu0 %v6733
    %6760 = vmatpush.msra.mxu0 %v6732
    %6761 = vmatpush.msra.mxu0 %v6731
    %6762 = vmatpush.msra.mxu0 %v6730
    %6763 = vmatmul.f32.gmra.mxu0 %v6746
    %v6764 = vpop.f32.mrf.mxu0
    %v6765 = vadd.f32 0.0, %v6764
    %6766 = vdwg.mxu0
    %v6767 = vadd.f32 %v6729, %v6765
    %v6768 = vtanh.pop %v6767
    %6769 = vmatpush.msra.mxu0 %v6745
    %6770 = vmatpush.msra.mxu0 %v6744
    %6771 = vmatpush.msra.mxu0 %v6743
    %6772 = vmatpush.msra.mxu0 %v6742
    %6773 = vmatpush.msra.mxu0 %v6741
    %6774 = vmatpush.msra.mxu0 %v6740
    %6775 = vmatpush.msra.mxu0 %v6739
    %6776 = vmatpush.msra.mxu0 %v6738
    %6777 = vmatpush.msra.mxu0 %v6737
    %6778 = vmatpush.msra.mxu0 %v6736
    %6779 = vmatpush.msra.mxu0 %v6735
    %6780 = vmatpush.msra.mxu0 %v6734
    %6781 = vmatpush.msra.mxu0 %v6733
    %6782 = vmatpush.msra.mxu0 %v6732
    %6783 = vmatpush.msra.mxu0 %v6731
    %6784 = vmatpush.msra.mxu0 %v6730
    %6785 = vmatmul.f32.gmra.mxu0 %v6768
    %v6786 = vpop.f32.mrf.mxu0
    %v6787 = vadd.f32 0.0, %v6786
    %6788 = vdwg.mxu0
    %v6790 = vrot.slane %v6787, 7
    %v6792 = vadd.f32 %v6729, %v6790
    %v6793 = vtanh.pop %v6792
    %v6795 = vrot.slane %v6793, 1
    %6797 = vmatpush.msra.mxu0 %v6745
    %6798 = vmatpush.msra.mxu0 %v6744
    %6799 = vmatpush.msra.mxu0 %v6743
    %6800 = vmatpush.msra.mxu0 %v6742
    %6801 = vmatpush.msra.mxu0 %v6741
    %6802 = vmatpush.msra.mxu0 %v6740
    %6803 = vmatpush.msra.mxu0 %v6739
    %6804 = vmatpush.msra.mxu0 %v6738
    %6805 = vmatpush.msra.mxu0 %v6737
    %6806 = vmatpush.msra.mxu0 %v6736
    %6807 = vmatpush.msra.mxu0 %v6735
    %6808 = vmatpush.msra.mxu0 %v6734
    %6809 = vmatpush.msra.mxu0 %v6733
    %6810 = vmatpush.msra.mxu0 %v6732
    %6811 = vmatpush.msra.mxu0 %v6731
    %6812 = vmatpush.msra.mxu0 %v6730
    %6813 = vmatmul.f32.gmra.mxu0 %v6795
    %v6814 = vpop.f32.mrf.mxu0
    %v6815 = vadd.f32 0.0, %v6814
    %6816 = vdwg.mxu0
    %v6818 = vrot.slane %v6815, 6
    %v6820 = vadd.f32 %v6729, %v6818
    %v6821 = vtanh.pop %v6820
    %v6823 = vrot.slane %v6821, 2
    %6825 = vmatpush.msra.mxu0 %v6745
    %6826 = vmatpush.msra.mxu0 %v6744
    %6827 = vmatpush.msra.mxu0 %v6743
    %6828 = vmatpush.msra.mxu0 %v6742
    %6829 = vmatpush.msra.mxu0 %v6741
    %6830 = vmatpush.msra.mxu0 %v6740
    %6831 = vmatpush.msra.mxu0 %v6739
    %6832 = vmatpush.msra.mxu0 %v6738
    %6833 = vmatpush.msra.mxu0 %v6737
    %6834 = vmatpush.msra.mxu0 %v6736
    %6835 = vmatpush.msra.mxu0 %v6735
    %6836 = vmatpush.msra.mxu0 %v6734
    %6837 = vmatpush.msra.mxu0 %v6733
    %6838 = vmatpush.msra.mxu0 %v6732
    %6839 = vmatpush.msra.mxu0 %v6731
    %6840 = vmatpush.msra.mxu0 %v6730
    %6841 = vmatmul.f32.gmra.mxu0 %v6823
    %v6842 = vpop.f32.mrf.mxu0
    %v6843 = vadd.f32 0.0, %v6842
    %6844 = vdwg.mxu0
    %v6846 = vrot.slane %v6843, 5
    %v6848 = vadd.f32 %v6729, %v6846
    %v6849 = vtanh.pop %v6848
    %v6850 = vld [vmem:[#allocation35] sm:$0xff]
    %v6851 = vld [vmem:[#allocation35 + $0x8] sm:$0xff]
    %v6852 = vld [vmem:[#allocation35 + $0x10] sm:$0xff]
    %v6853 = vld [vmem:[#allocation35 + $0x18] sm:$0xff]
    %v6854 = vld [vmem:[#allocation35 + $0x20] sm:$0xff]
    %v6855 = vld [vmem:[#allocation35 + $0x28] sm:$0xff]
    %v6856 = vld [vmem:[#allocation35 + $0x30] sm:$0xff]
    %v6857 = vld [vmem:[#allocation35 + $0x38] sm:$0xff]
    %v6858 = vld [vmem:[#allocation35 + $0x40] sm:$0xff]
    %v6859 = vld [vmem:[#allocation35 + $0x48] sm:$0xff]
    %v6860 = vld [vmem:[#allocation35 + $0x50] sm:$0xff]
    %v6861 = vld [vmem:[#allocation35 + $0x58] sm:$0xff]
    %v6862 = vld [vmem:[#allocation35 + $0x60] sm:$0xff]
    %v6863 = vld [vmem:[#allocation35 + $0x68] sm:$0xff]
    %v6864 = vld [vmem:[#allocation35 + $0x70] sm:$0xff]
    %v6865 = vld [vmem:[#allocation35 + $0x78] sm:$0xff]
    %v6866 = vld [vmem:[#allocation37] sm:$0x1]
    %v6868 = vrot.slane %v6849, 3
    %6870 = vmatpush.msra.mxu0 %v6865
    %6871 = vmatpush.msra.mxu0 %v6864
    %6872 = vmatpush.msra.mxu0 %v6863
    %6873 = vmatpush.msra.mxu0 %v6862
    %6874 = vmatpush.msra.mxu0 %v6861
    %6875 = vmatpush.msra.mxu0 %v6860
    %6876 = vmatpush.msra.mxu0 %v6859
    %6877 = vmatpush.msra.mxu0 %v6858
    %6878 = vmatpush.msra.mxu0 %v6857
    %6879 = vmatpush.msra.mxu0 %v6856
    %6880 = vmatpush.msra.mxu0 %v6855
    %6881 = vmatpush.msra.mxu0 %v6854
    %6882 = vmatpush.msra.mxu0 %v6853
    %6883 = vmatpush.msra.mxu0 %v6852
    %6884 = vmatpush.msra.mxu0 %v6851
    %6885 = vmatpush.msra.mxu0 %v6850
    %6886 = vmatmul.f32.gmra.mxu0 %v6868
    %v6887 = vpop.f32.mrf.mxu0
    %v6888 = vadd.f32 %v6866, %v6887
    %6889 = vdwg.mxu0
    %6890 = vst [vmem:[#allocation38] sm:$0x1] %v6888
    %6891 = vst [vmem:[#allocation39 - $0x3] sm:$0x8] %v6849
    // Predicated region
    $region190: #{tpu_custom_call.1} parent=1 // pred_check
      _
    $region191: #{tpu_custom_call.1} parent=1 // pred_check_branch
      %6893 = sbr.rel (0) target = $region193
    $region192: #{tpu_custom_call.1} parent=1 // pred_region
      %6895 = vsyncadd [#allocation4], 0
      %s6897 = sshll.u32 [#allocation38], 4
      %s6898 = int_to_ptr.vmem [resolvable:$true] %s6897
      %s6899 = sshll.u32 %s24, 4
      %s6900 = int_to_ptr.hbm [resolvable:$true] %s6899
      %6902 = dma.vmem_to_hbm [thread:$0]  %s6898, 16, %s6900, [#allocation4]
    $region193: #{tpu_custom_call.1} parent=1 // pred_fallthru
      _
    // Predicated region
    $region194: #{tpu_custom_call.1} parent=1 // pred_check
      _
    $region195: #{tpu_custom_call.1} parent=1 // pred_check_branch
      %6904 = sbr.rel (0) target = $region197
    $region196: #{tpu_custom_call.1} parent=1 // pred_region
      %6906 = vsyncadd [#allocation40], 0
      %s6908 = sshll.u32 [#allocation39], 4
      %s6909 = int_to_ptr.vmem [resolvable:$true] %s6908
      %s6910 = sshll.u32 %s25, 4
      %s6911 = int_to_ptr.hbm [resolvable:$true] %s6910
      %6913 = dma.vmem_to_hbm [thread:$0]  %s6909, 16, %s6911, [#allocation40]
    $region197: #{tpu_custom_call.1} parent=1 // pred_fallthru
      _
    // Predicated region
    $region198: #{tpu_custom_call.1} parent=1 // pred_check
      _
    $region199: #{tpu_custom_call.1} parent=1 // pred_check_branch
      %6915 = sbr.rel (0) target = $region201
    $region200: #{tpu_custom_call.1} parent=1 // pred_region
      %6917 = dma.done [#allocation4], 16
    $region201: #{tpu_custom_call.1} parent=1 // pred_fallthru
      _
    // Predicated region
    $region202: #{tpu_custom_call.1} parent=1 // pred_check
      _
    $region203: #{tpu_custom_call.1} parent=1 // pred_check_branch
      %6919 = sbr.rel (0) target = $region205
    $region204: #{tpu_custom_call.1} parent=1 // pred_region
      %6921 = dma.done [#allocation40], 16
    $region205: #{tpu_custom_call.1} parent=1 // pred_fallthru
      _
    %6922 = vsyncpa [#allocation3], 1
    %6923 = vsyncpa [#allocation6], 1
    %6924 = vsyncpa [#allocation9], 1
    %6925 = vsyncpa [#allocation12], 1
    %6926 = vsyncpa [#allocation15], 1
    %6927 = vsyncpa [#allocation18], 1
    %6928 = vsyncpa [#allocation21], 1
    %6929 = vsyncpa [#allocation24], 1
    %6930 = vsyncpa [#allocation27], 1
    %6931 = vsyncpa [#allocation30], 1
    %6932 = vsyncpa [#allocation33], 1
    %6933 = vsyncpa [#allocation36], 1
    %6934 = vsyncpa [#allocation4], 1
    %6935 = vsyncpa [#allocation40], 1

</llo_original>
